<compile_context>
chip_gen: v7x
topology: tpu7x:2x2x1
jax: 0.10.0
libtpu: 0.0.40
codegen_flags: <defaults>
</compile_context>

<pallas_src>
import jax
import jax.numpy as jnp
from jax.experimental import pallas as pl
from jax.experimental.pallas import tpu as pltpu


def _round_up(x, m):
    return (x + m - 1) // m * m


def _num_tensorcores():
    """2 TensorCores per chip on v4/v5p/v7x, 1 on v5e/v6e; safe fallback = 1."""
    try:
        kind = jax.devices()[0].device_kind.lower()
    except Exception:
        return 1
    if "v7" in kind or "v4" in kind or "v5p" in kind:
        return 2
    return 1


def _mlp_kernel(x_ref,
                w1_ref, b1_ref, w2_ref, b2_ref, w3_ref, b3_ref,
                w4_ref, b4_ref, w5_ref, b5_ref,
                o_ref):
    """Whole 5-layer forward for one (batch_tile, d_in) tile, entirely in VMEM."""
    # f32 -> bf16 once on the VPU; every matmul is bf16 x bf16 with f32 accumulation (MXU).
    h = x_ref[...].astype(jnp.bfloat16)
    for w_ref, b_ref in ((w1_ref, b1_ref), (w2_ref, b2_ref),
                         (w3_ref, b3_ref), (w4_ref, b4_ref)):
        acc = jnp.dot(h, w_ref[...], preferred_element_type=jnp.float32) + b_ref[...]
        h = jnp.maximum(acc, 0.0).astype(jnp.bfloat16)   # bf16 inter-layer activations

    # Final linear: (tile, 128) f32 logits.  Pad lanes have zero weights and a -1e30 bias,
    # so they vanish in the max / logsumexp below (exp underflows to exactly 0).
    logits = jnp.dot(h, w5_ref[...], preferred_element_type=jnp.float32) + b5_ref[...]
    m = jnp.max(logits, axis=-1, keepdims=True)
    z = logits - m
    lse = jnp.log(jnp.sum(jnp.exp(z), axis=-1, keepdims=True))
    o_ref[...] = (z - lse).astype(o_ref.dtype)


def prepare_params(weights, biases, *, lane=128):
    """One-time param prep (hoisted out of the per-call path).

    weights[i]: (in_i, out_i) f32, biases[i]: (1, out_i) f32.
    Returns a flat tuple (w1, b1, ..., w5, b5):
      * weights cast to bf16, output dims zero-padded to multiples of 128
        (input dim of layer 0 is left unpadded; the kernel takes x unpadded),
      * biases kept f32; the LAST bias' pad lanes are filled with -1e30 so the kernel's
        log_softmax ignores the pad lanes with no extra masking work.
    """
    n = len(weights)
    flat = []
    for i, (w, b) in enumerate(zip(weights, biases)):
        in_d, out_d = w.shape
        in_p = in_d if i == 0 else _round_up(in_d, lane)
        out_p = _round_up(out_d, lane)
        wp = jnp.pad(w.astype(jnp.bfloat16),
                     ((0, in_p - in_d), (0, out_p - out_d)))
        pad_val = -1e30 if i == n - 1 else 0.0
        bp = jnp.pad(b.astype(jnp.float32), ((0, 0), (0, out_p - b.shape[1])),
                     constant_values=pad_val)
        flat += [wp, bp]
    return tuple(flat)


def mnist_forward(x, params, d_out, *, batch_tile=None, num_cores=None):
    """x: (B, d_in) f32 (unpadded).  params: output of prepare_params().  Returns (B, d_out) f32."""
    B, d_in = x.shape
    d_out_p = params[-1].shape[-1]

    if num_cores is None:
        num_cores = _num_tensorcores()
    if batch_tile is None:
        # Exactly one grid step per TensorCore (rounded up to the 8-row sublane rule),
        # capped so a huge batch still fits comfortably in VMEM.
        batch_tile = min(_round_up(pl.cdiv(B, num_cores), 8), 1024)
    assert batch_tile % 8 == 0, "batch_tile must be a multiple of 8 (sublane rule)"

    B_pad = _round_up(B, batch_tile)
    grid = (B_pad // batch_tile,)
    x_p = x if B_pad == B else jnp.pad(x, ((0, B_pad - B), (0, 0)))

    # x / out blocks: full feature dim (legal even when d_in % 128 != 0), lane-dense output.
    x_spec = pl.BlockSpec((batch_tile, d_in), lambda i: (i, 0))
    out_spec = pl.BlockSpec((batch_tile, d_out_p), lambda i: (i, 0))

    def run(param_pipeline_mode):
        # Constant (0, 0) index maps: the pipeline fetches each weight/bias once and does
        # not re-issue DMAs per batch tile; param_pipeline_mode=Buffered(1) additionally
        # drops the second pipeline buffer for these grid-constant operands.
        param_specs = [pl.BlockSpec(p.shape, lambda i: (0, 0),
                                    pipeline_mode=param_pipeline_mode)
                       for p in params]
        return pl.pallas_call(
            _mlp_kernel,
            out_shape=jax.ShapeDtypeStruct((B_pad, d_out_p), jnp.float32),
            grid=grid,
            in_specs=[x_spec] + param_specs,
            out_specs=out_spec,
            compiler_params=pltpu.CompilerParams(
                dimension_semantics=("parallel",),
                vmem_limit_bytes=16 * 1024 * 1024,  # ~6 MiB resident; leave headroom
            ),
        )(x_p, *params)

    try:
        out_p = run(pl.Buffered(buffer_count=1))
    except Exception:
        # Fallback if single-buffer pipeline_mode is unsupported by this jax version.
        out_p = run(None)

    return out_p[:B, :d_out]


def init_params(key, input_size, hidden_sizes, output_size):
    """Deterministic PyTorch-style init: U(-1/sqrt(fan_in), 1/sqrt(fan_in))."""
    dims = [input_size] + list(hidden_sizes) + [output_size]
    weights, biases = [], []
    for i in range(len(dims) - 1):
        fan_in, fan_out = dims[i], dims[i + 1]
        key, wk, bk = jax.random.split(key, 3)
        bound = 1.0 / jnp.sqrt(jnp.float32(fan_in))
        # stored as (in, out): PyTorch's (out, in) weight, transposed
        w = jax.random.uniform(wk, (fan_in, fan_out), jnp.float32, -bound, bound)
        b = jax.random.uniform(bk, (1, fan_out), jnp.float32, -bound, bound)
        weights.append(w)
        biases.append(b)
    return weights, biases


def reference_forward_bf16(x, weights, biases):
    """Same arithmetic as the kernel (bf16 matmul inputs, f32 accumulate, bf16 activations)."""
    h = x.astype(jnp.bfloat16)
    for w, b in zip(weights[:-1], biases[:-1]):
        acc = jnp.dot(h, w.astype(jnp.bfloat16),
                      preferred_element_type=jnp.float32) + b.astype(jnp.float32)
        h = jnp.maximum(acc, 0.0).astype(jnp.bfloat16)
    logits = jnp.dot(h, weights[-1].astype(jnp.bfloat16),
                     preferred_element_type=jnp.float32) + biases[-1].astype(jnp.float32)
    m = jnp.max(logits, axis=1, keepdims=True)
    z = logits - m
    return z - jnp.log(jnp.sum(jnp.exp(z), axis=1, keepdims=True))


def reference_forward_f32(x, weights, biases):
    h = x
    for w, b in zip(weights[:-1], biases[:-1]):
        h = jnp.maximum(h @ w + b, 0.0)
    logits = h @ weights[-1] + biases[-1]
    return jax.nn.log_softmax(logits, axis=1)


if __name__ == "__main__":
    # MNIST-flavoured sizes: 784 input features, 4 hidden layers of 128, 10 classes.
    B, INPUT, HIDDEN, OUTPUT = 512, 784, [128, 128, 128, 128], 10

    key = jax.random.PRNGKey(0)
    key, xk = jax.random.split(key)
    x = jax.random.normal(xk, (B, INPUT), jnp.float32)

    weights, biases = init_params(key, INPUT, HIDDEN, OUTPUT)

    # One-time param prep (pad + bf16 cast) -- hoisted out of the forward/call path.
    params = jax.block_until_ready(prepare_params(weights, biases))

    out = mnist_forward(x, params, OUTPUT)
    out = jax.block_until_ready(out)
    assert out.shape == (B, OUTPUT)

    # Exact-arithmetic reference (bf16 MXU inputs, f32 accumulation), tight tolerance.
    ref = reference_forward_bf16(x, weights, biases)
    assert jnp.allclose(out, ref, atol=1e-3, rtol=1e-3), "mismatch vs bf16-matched reference"

    # Full-f32 semantic reference, loose tolerance (bf16 matmul rounding only).
    ref32 = reference_forward_f32(x, weights, biases)
    assert jnp.allclose(out, ref32, atol=1e-1, rtol=1e-1), "mismatch vs f32 reference"

    print("KERNEL_OK")
</pallas_src>

<mosaic_0001>
module attributes {stable_mosaic.version = 11 : i64} {
  func.func @_mlp_kernel(%arg0: i32, %arg1: memref<512x784xf32, #tpu.memory_space<vmem>>, %arg2: memref<784x128xbf16, #tpu.memory_space<vmem>>, %arg3: memref<1x128xf32, #tpu.memory_space<vmem>>, %arg4: memref<128x128xbf16, #tpu.memory_space<vmem>>, %arg5: memref<1x128xf32, #tpu.memory_space<vmem>>, %arg6: memref<128x128xbf16, #tpu.memory_space<vmem>>, %arg7: memref<1x128xf32, #tpu.memory_space<vmem>>, %arg8: memref<128x128xbf16, #tpu.memory_space<vmem>>, %arg9: memref<1x128xf32, #tpu.memory_space<vmem>>, %arg10: memref<128x128xbf16, #tpu.memory_space<vmem>>, %arg11: memref<1x128xf32, #tpu.memory_space<vmem>>, %arg12: memref<512x128xf32, #tpu.memory_space<vmem>>) attributes {dimension_semantics = [#tpu.dimension_semantics<parallel>], iteration_bounds = array<i64: 1>, scalar_prefetch = 0 : i64, scratch_operands = 0 : i64, tpu.core_type = #tpu.core_type<tc>, window_params = [{transform_indices = @transform_0, window_bounds = array<i64: 512, 784>}, {pipeline_mode = #tpu.pipeline_mode<synchronous>, transform_indices = @transform_1, window_bounds = array<i64: 784, 128>}, {pipeline_mode = #tpu.pipeline_mode<synchronous>, transform_indices = @transform_2, window_bounds = array<i64: 1, 128>}, {pipeline_mode = #tpu.pipeline_mode<synchronous>, transform_indices = @transform_3, window_bounds = array<i64: 128, 128>}, {pipeline_mode = #tpu.pipeline_mode<synchronous>, transform_indices = @transform_4, window_bounds = array<i64: 1, 128>}, {pipeline_mode = #tpu.pipeline_mode<synchronous>, transform_indices = @transform_5, window_bounds = array<i64: 128, 128>}, {pipeline_mode = #tpu.pipeline_mode<synchronous>, transform_indices = @transform_6, window_bounds = array<i64: 1, 128>}, {pipeline_mode = #tpu.pipeline_mode<synchronous>, transform_indices = @transform_7, window_bounds = array<i64: 128, 128>}, {pipeline_mode = #tpu.pipeline_mode<synchronous>, transform_indices = @transform_8, window_bounds = array<i64: 1, 128>}, {pipeline_mode = #tpu.pipeline_mode<synchronous>, transform_indices = @transform_9, window_bounds = array<i64: 128, 128>}, {pipeline_mode = #tpu.pipeline_mode<synchronous>, transform_indices = @transform_10, window_bounds = array<i64: 1, 128>}, {transform_indices = @transform_11, window_bounds = array<i64: 512, 128>}]} {
    %c0 = arith.constant 0 : index
    %c0_0 = arith.constant 0 : index
    %0 = vector.load %arg1[%c0, %c0_0] : memref<512x784xf32, #tpu.memory_space<vmem>>, vector<512x784xf32>
    %1 = arith.truncf %0 : vector<512x784xf32> to vector<512x784xbf16>
    %c0_1 = arith.constant 0 : index
    %c0_2 = arith.constant 0 : index
    %2 = vector.load %arg2[%c0_1, %c0_2] : memref<784x128xbf16, #tpu.memory_space<vmem>>, vector<784x128xbf16>
    %cst = arith.constant dense<0.000000e+00> : vector<512x128xf32>
    %3 = tpu.matmul %1, %2, %cst {dimension_numbers = #tpu.dot_dimension_numbers<[1], [0], [0], [1], [0, 0, 1, 1], [], []>} : vector<512x784xbf16>, vector<784x128xbf16>, vector<512x128xf32> -> vector<512x128xf32>
    %c0_3 = arith.constant 0 : index
    %c0_4 = arith.constant 0 : index
    %4 = vector.load %arg3[%c0_3, %c0_4] : memref<1x128xf32, #tpu.memory_space<vmem>>, vector<1x128xf32>
    %5 = vector.broadcast %4 : vector<1x128xf32> to vector<512x128xf32>
    %6 = arith.addf %3, %5 : vector<512x128xf32>
    %cst_5 = arith.constant 0.000000e+00 : f32
    %7 = vector.broadcast %cst_5 : f32 to vector<512x128xf32>
    %8 = arith.maximumf %6, %7 : vector<512x128xf32>
    %9 = arith.truncf %8 : vector<512x128xf32> to vector<512x128xbf16>
    %c0_6 = arith.constant 0 : index
    %c0_7 = arith.constant 0 : index
    %10 = vector.load %arg4[%c0_6, %c0_7] : memref<128x128xbf16, #tpu.memory_space<vmem>>, vector<128x128xbf16>
    %cst_8 = arith.constant dense<0.000000e+00> : vector<512x128xf32>
    %11 = tpu.matmul %9, %10, %cst_8 {dimension_numbers = #tpu.dot_dimension_numbers<[1], [0], [0], [1], [0, 0, 1, 1], [], []>} : vector<512x128xbf16>, vector<128x128xbf16>, vector<512x128xf32> -> vector<512x128xf32>
    %c0_9 = arith.constant 0 : index
    %c0_10 = arith.constant 0 : index
    %12 = vector.load %arg5[%c0_9, %c0_10] : memref<1x128xf32, #tpu.memory_space<vmem>>, vector<1x128xf32>
    %13 = vector.broadcast %12 : vector<1x128xf32> to vector<512x128xf32>
    %14 = arith.addf %11, %13 : vector<512x128xf32>
    %cst_11 = arith.constant 0.000000e+00 : f32
    %15 = vector.broadcast %cst_11 : f32 to vector<512x128xf32>
    %16 = arith.maximumf %14, %15 : vector<512x128xf32>
    %17 = arith.truncf %16 : vector<512x128xf32> to vector<512x128xbf16>
    %c0_12 = arith.constant 0 : index
    %c0_13 = arith.constant 0 : index
    %18 = vector.load %arg6[%c0_12, %c0_13] : memref<128x128xbf16, #tpu.memory_space<vmem>>, vector<128x128xbf16>
    %cst_14 = arith.constant dense<0.000000e+00> : vector<512x128xf32>
    %19 = tpu.matmul %17, %18, %cst_14 {dimension_numbers = #tpu.dot_dimension_numbers<[1], [0], [0], [1], [0, 0, 1, 1], [], []>} : vector<512x128xbf16>, vector<128x128xbf16>, vector<512x128xf32> -> vector<512x128xf32>
    %c0_15 = arith.constant 0 : index
    %c0_16 = arith.constant 0 : index
    %20 = vector.load %arg7[%c0_15, %c0_16] : memref<1x128xf32, #tpu.memory_space<vmem>>, vector<1x128xf32>
    %21 = vector.broadcast %20 : vector<1x128xf32> to vector<512x128xf32>
    %22 = arith.addf %19, %21 : vector<512x128xf32>
    %cst_17 = arith.constant 0.000000e+00 : f32
    %23 = vector.broadcast %cst_17 : f32 to vector<512x128xf32>
    %24 = arith.maximumf %22, %23 : vector<512x128xf32>
    %25 = arith.truncf %24 : vector<512x128xf32> to vector<512x128xbf16>
    %c0_18 = arith.constant 0 : index
    %c0_19 = arith.constant 0 : index
    %26 = vector.load %arg8[%c0_18, %c0_19] : memref<128x128xbf16, #tpu.memory_space<vmem>>, vector<128x128xbf16>
    %cst_20 = arith.constant dense<0.000000e+00> : vector<512x128xf32>
    %27 = tpu.matmul %25, %26, %cst_20 {dimension_numbers = #tpu.dot_dimension_numbers<[1], [0], [0], [1], [0, 0, 1, 1], [], []>} : vector<512x128xbf16>, vector<128x128xbf16>, vector<512x128xf32> -> vector<512x128xf32>
    %c0_21 = arith.constant 0 : index
    %c0_22 = arith.constant 0 : index
    %28 = vector.load %arg9[%c0_21, %c0_22] : memref<1x128xf32, #tpu.memory_space<vmem>>, vector<1x128xf32>
    %29 = vector.broadcast %28 : vector<1x128xf32> to vector<512x128xf32>
    %30 = arith.addf %27, %29 : vector<512x128xf32>
    %cst_23 = arith.constant 0.000000e+00 : f32
    %31 = vector.broadcast %cst_23 : f32 to vector<512x128xf32>
    %32 = arith.maximumf %30, %31 : vector<512x128xf32>
    %33 = arith.truncf %32 : vector<512x128xf32> to vector<512x128xbf16>
    %c0_24 = arith.constant 0 : index
    %c0_25 = arith.constant 0 : index
    %34 = vector.load %arg10[%c0_24, %c0_25] : memref<128x128xbf16, #tpu.memory_space<vmem>>, vector<128x128xbf16>
    %cst_26 = arith.constant dense<0.000000e+00> : vector<512x128xf32>
    %35 = tpu.matmul %33, %34, %cst_26 {dimension_numbers = #tpu.dot_dimension_numbers<[1], [0], [0], [1], [0, 0, 1, 1], [], []>} : vector<512x128xbf16>, vector<128x128xbf16>, vector<512x128xf32> -> vector<512x128xf32>
    %c0_27 = arith.constant 0 : index
    %c0_28 = arith.constant 0 : index
    %36 = vector.load %arg11[%c0_27, %c0_28] : memref<1x128xf32, #tpu.memory_space<vmem>>, vector<1x128xf32>
    %37 = vector.broadcast %36 : vector<1x128xf32> to vector<512x128xf32>
    %38 = arith.addf %35, %37 : vector<512x128xf32>
    %cst_29 = arith.constant dense<0xFF800000> : vector<512xf32>
    %39 = vector.multi_reduction <maximumf>, %38, %cst_29 [1] : vector<512x128xf32> to vector<512xf32>
    %40 = vector.shape_cast %39 : vector<512xf32> to vector<512x1xf32>
    %41 = vector.broadcast %40 : vector<512x1xf32> to vector<512x128xf32>
    %42 = arith.subf %38, %41 : vector<512x128xf32>
    %43 = math.exp %42 : vector<512x128xf32>
    %cst_30 = arith.constant dense<0.000000e+00> : vector<512xf32>
    %44 = vector.multi_reduction <add>, %43, %cst_30 [1] : vector<512x128xf32> to vector<512xf32>
    %45 = vector.shape_cast %44 : vector<512xf32> to vector<512x1xf32>
    %46 = math.log %45 : vector<512x1xf32>
    %47 = vector.broadcast %46 : vector<512x1xf32> to vector<512x128xf32>
    %48 = arith.subf %42, %47 : vector<512x128xf32>
    %c0_31 = arith.constant 0 : index
    %c0_32 = arith.constant 0 : index
    %49 = vector.load %arg12[%c0_31, %c0_32] : memref<512x128xf32, #tpu.memory_space<vmem>>, vector<512x128xf32>
    tpu.vector_store %arg12[%c0_31, %c0_32], %48 {strides = array<i32>} : memref<512x128xf32, #tpu.memory_space<vmem>>, vector<512x128xf32>,
    return
  }
  func.func @transform_0(%arg0: i32) -> (i32, i32) {
    %c0_i32 = arith.constant 0 : i32
    %c0_i32_0 = arith.constant 0 : i32
    return %arg0, %c0_i32 : i32, i32
  }
  func.func @transform_1(%arg0: i32) -> (i32, i32) {
    %c0_i32 = arith.constant 0 : i32
    %c0_i32_0 = arith.constant 0 : i32
    %c0_i32_1 = arith.constant 0 : i32
    return %c0_i32, %c0_i32_0 : i32, i32
  }
  func.func @transform_2(%arg0: i32) -> (i32, i32) {
    %c0_i32 = arith.constant 0 : i32
    %c0_i32_0 = arith.constant 0 : i32
    %c0_i32_1 = arith.constant 0 : i32
    return %c0_i32, %c0_i32_0 : i32, i32
  }
  func.func @transform_3(%arg0: i32) -> (i32, i32) {
    %c0_i32 = arith.constant 0 : i32
    %c0_i32_0 = arith.constant 0 : i32
    %c0_i32_1 = arith.constant 0 : i32
    return %c0_i32, %c0_i32_0 : i32, i32
  }
  func.func @transform_4(%arg0: i32) -> (i32, i32) {
    %c0_i32 = arith.constant 0 : i32
    %c0_i32_0 = arith.constant 0 : i32
    %c0_i32_1 = arith.constant 0 : i32
    return %c0_i32, %c0_i32_0 : i32, i32
  }
  func.func @transform_5(%arg0: i32) -> (i32, i32) {
    %c0_i32 = arith.constant 0 : i32
    %c0_i32_0 = arith.constant 0 : i32
    %c0_i32_1 = arith.constant 0 : i32
    return %c0_i32, %c0_i32_0 : i32, i32
  }
  func.func @transform_6(%arg0: i32) -> (i32, i32) {
    %c0_i32 = arith.constant 0 : i32
    %c0_i32_0 = arith.constant 0 : i32
    %c0_i32_1 = arith.constant 0 : i32
    return %c0_i32, %c0_i32_0 : i32, i32
  }
  func.func @transform_7(%arg0: i32) -> (i32, i32) {
    %c0_i32 = arith.constant 0 : i32
    %c0_i32_0 = arith.constant 0 : i32
    %c0_i32_1 = arith.constant 0 : i32
    return %c0_i32, %c0_i32_0 : i32, i32
  }
  func.func @transform_8(%arg0: i32) -> (i32, i32) {
    %c0_i32 = arith.constant 0 : i32
    %c0_i32_0 = arith.constant 0 : i32
    %c0_i32_1 = arith.constant 0 : i32
    return %c0_i32, %c0_i32_0 : i32, i32
  }
  func.func @transform_9(%arg0: i32) -> (i32, i32) {
    %c0_i32 = arith.constant 0 : i32
    %c0_i32_0 = arith.constant 0 : i32
    %c0_i32_1 = arith.constant 0 : i32
    return %c0_i32, %c0_i32_0 : i32, i32
  }
  func.func @transform_10(%arg0: i32) -> (i32, i32) {
    %c0_i32 = arith.constant 0 : i32
    %c0_i32_0 = arith.constant 0 : i32
    %c0_i32_1 = arith.constant 0 : i32
    return %c0_i32, %c0_i32_0 : i32, i32
  }
  func.func @transform_11(%arg0: i32) -> (i32, i32) {
    %c0_i32 = arith.constant 0 : i32
    %c0_i32_0 = arith.constant 0 : i32
    return %arg0, %c0_i32 : i32, i32
  }
}

module attributes {stable_mosaic.version = 11 : i64} {
  func.func @_mlp_kernel(%arg0: i32, %arg1: memref<512x784xf32, #tpu.memory_space<vmem>>, %arg2: memref<784x128xbf16, #tpu.memory_space<vmem>>, %arg3: memref<1x128xf32, #tpu.memory_space<vmem>>, %arg4: memref<128x128xbf16, #tpu.memory_space<vmem>>, %arg5: memref<1x128xf32, #tpu.memory_space<vmem>>, %arg6: memref<128x128xbf16, #tpu.memory_space<vmem>>, %arg7: memref<1x128xf32, #tpu.memory_space<vmem>>, %arg8: memref<128x128xbf16, #tpu.memory_space<vmem>>, %arg9: memref<1x128xf32, #tpu.memory_space<vmem>>, %arg10: memref<128x128xbf16, #tpu.memory_space<vmem>>, %arg11: memref<1x128xf32, #tpu.memory_space<vmem>>, %arg12: memref<512x128xf32, #tpu.memory_space<vmem>>) attributes {dimension_semantics = [#tpu.dimension_semantics<parallel>], iteration_bounds = array<i64: 1>, scalar_prefetch = 0 : i64, scratch_operands = 0 : i64, tpu.core_type = #tpu.core_type<tc>, window_params = [{transform_indices = @transform_0, window_bounds = array<i64: 512, 784>}, {pipeline_mode = #tpu.pipeline_mode<synchronous>, transform_indices = @transform_1, window_bounds = array<i64: 784, 128>}, {pipeline_mode = #tpu.pipeline_mode<synchronous>, transform_indices = @transform_2, window_bounds = array<i64: 1, 128>}, {pipeline_mode = #tpu.pipeline_mode<synchronous>, transform_indices = @transform_3, window_bounds = array<i64: 128, 128>}, {pipeline_mode = #tpu.pipeline_mode<synchronous>, transform_indices = @transform_4, window_bounds = array<i64: 1, 128>}, {pipeline_mode = #tpu.pipeline_mode<synchronous>, transform_indices = @transform_5, window_bounds = array<i64: 128, 128>}, {pipeline_mode = #tpu.pipeline_mode<synchronous>, transform_indices = @transform_6, window_bounds = array<i64: 1, 128>}, {pipeline_mode = #tpu.pipeline_mode<synchronous>, transform_indices = @transform_7, window_bounds = array<i64: 128, 128>}, {pipeline_mode = #tpu.pipeline_mode<synchronous>, transform_indices = @transform_8, window_bounds = array<i64: 1, 128>}, {pipeline_mode = #tpu.pipeline_mode<synchronous>, transform_indices = @transform_9, window_bounds = array<i64: 128, 128>}, {pipeline_mode = #tpu.pipeline_mode<synchronous>, transform_indices = @transform_10, window_bounds = array<i64: 1, 128>}, {transform_indices = @transform_11, window_bounds = array<i64: 512, 128>}]} {
    %c0 = arith.constant 0 : index
    %c0_0 = arith.constant 0 : index
    %0 = vector.load %arg1[%c0, %c0_0] : memref<512x784xf32, #tpu.memory_space<vmem>>, vector<512x784xf32>
    %1 = arith.truncf %0 : vector<512x784xf32> to vector<512x784xbf16>
    %c0_1 = arith.constant 0 : index
    %c0_2 = arith.constant 0 : index
    %2 = vector.load %arg2[%c0_1, %c0_2] : memref<784x128xbf16, #tpu.memory_space<vmem>>, vector<784x128xbf16>
    %cst = arith.constant dense<0.000000e+00> : vector<512x128xf32>
    %3 = tpu.matmul %1, %2, %cst {dimension_numbers = #tpu.dot_dimension_numbers<[1], [0], [0], [1], [0, 0, 1, 1], [], []>} : vector<512x784xbf16>, vector<784x128xbf16>, vector<512x128xf32> -> vector<512x128xf32>
    %c0_3 = arith.constant 0 : index
    %c0_4 = arith.constant 0 : index
    %4 = vector.load %arg3[%c0_3, %c0_4] : memref<1x128xf32, #tpu.memory_space<vmem>>, vector<1x128xf32>
    %5 = vector.broadcast %4 : vector<1x128xf32> to vector<512x128xf32>
    %6 = arith.addf %3, %5 : vector<512x128xf32>
    %cst_5 = arith.constant 0.000000e+00 : f32
    %7 = vector.broadcast %cst_5 : f32 to vector<512x128xf32>
    %8 = arith.maximumf %6, %7 : vector<512x128xf32>
    %9 = arith.truncf %8 : vector<512x128xf32> to vector<512x128xbf16>
    %c0_6 = arith.constant 0 : index
    %c0_7 = arith.constant 0 : index
    %10 = vector.load %arg4[%c0_6, %c0_7] : memref<128x128xbf16, #tpu.memory_space<vmem>>, vector<128x128xbf16>
    %cst_8 = arith.constant dense<0.000000e+00> : vector<512x128xf32>
    %11 = tpu.matmul %9, %10, %cst_8 {dimension_numbers = #tpu.dot_dimension_numbers<[1], [0], [0], [1], [0, 0, 1, 1], [], []>} : vector<512x128xbf16>, vector<128x128xbf16>, vector<512x128xf32> -> vector<512x128xf32>
    %c0_9 = arith.constant 0 : index
    %c0_10 = arith.constant 0 : index
    %12 = vector.load %arg5[%c0_9, %c0_10] : memref<1x128xf32, #tpu.memory_space<vmem>>, vector<1x128xf32>
    %13 = vector.broadcast %12 : vector<1x128xf32> to vector<512x128xf32>
    %14 = arith.addf %11, %13 : vector<512x128xf32>
    %cst_11 = arith.constant 0.000000e+00 : f32
    %15 = vector.broadcast %cst_11 : f32 to vector<512x128xf32>
    %16 = arith.maximumf %14, %15 : vector<512x128xf32>
    %17 = arith.truncf %16 : vector<512x128xf32> to vector<512x128xbf16>
    %c0_12 = arith.constant 0 : index
    %c0_13 = arith.constant 0 : index
    %18 = vector.load %arg6[%c0_12, %c0_13] : memref<128x128xbf16, #tpu.memory_space<vmem>>, vector<128x128xbf16>
    %cst_14 = arith.constant dense<0.000000e+00> : vector<512x128xf32>
    %19 = tpu.matmul %17, %18, %cst_14 {dimension_numbers = #tpu.dot_dimension_numbers<[1], [0], [0], [1], [0, 0, 1, 1], [], []>} : vector<512x128xbf16>, vector<128x128xbf16>, vector<512x128xf32> -> vector<512x128xf32>
    %c0_15 = arith.constant 0 : index
    %c0_16 = arith.constant 0 : index
    %20 = vector.load %arg7[%c0_15, %c0_16] : memref<1x128xf32, #tpu.memory_space<vmem>>, vector<1x128xf32>
    %21 = vector.broadcast %20 : vector<1x128xf32> to vector<512x128xf32>
    %22 = arith.addf %19, %21 : vector<512x128xf32>
    %cst_17 = arith.constant 0.000000e+00 : f32
    %23 = vector.broadcast %cst_17 : f32 to vector<512x128xf32>
    %24 = arith.maximumf %22, %23 : vector<512x128xf32>
    %25 = arith.truncf %24 : vector<512x128xf32> to vector<512x128xbf16>
    %c0_18 = arith.constant 0 : index
    %c0_19 = arith.constant 0 : index
    %26 = vector.load %arg8[%c0_18, %c0_19] : memref<128x128xbf16, #tpu.memory_space<vmem>>, vector<128x128xbf16>
    %cst_20 = arith.constant dense<0.000000e+00> : vector<512x128xf32>
    %27 = tpu.matmul %25, %26, %cst_20 {dimension_numbers = #tpu.dot_dimension_numbers<[1], [0], [0], [1], [0, 0, 1, 1], [], []>} : vector<512x128xbf16>, vector<128x128xbf16>, vector<512x128xf32> -> vector<512x128xf32>
    %c0_21 = arith.constant 0 : index
    %c0_22 = arith.constant 0 : index
    %28 = vector.load %arg9[%c0_21, %c0_22] : memref<1x128xf32, #tpu.memory_space<vmem>>, vector<1x128xf32>
    %29 = vector.broadcast %28 : vector<1x128xf32> to vector<512x128xf32>
    %30 = arith.addf %27, %29 : vector<512x128xf32>
    %cst_23 = arith.constant 0.000000e+00 : f32
    %31 = vector.broadcast %cst_23 : f32 to vector<512x128xf32>
    %32 = arith.maximumf %30, %31 : vector<512x128xf32>
    %33 = arith.truncf %32 : vector<512x128xf32> to vector<512x128xbf16>
    %c0_24 = arith.constant 0 : index
    %c0_25 = arith.constant 0 : index
    %34 = vector.load %arg10[%c0_24, %c0_25] : memref<128x128xbf16, #tpu.memory_space<vmem>>, vector<128x128xbf16>
    %cst_26 = arith.constant dense<0.000000e+00> : vector<512x128xf32>
    %35 = tpu.matmul %33, %34, %cst_26 {dimension_numbers = #tpu.dot_dimension_numbers<[1], [0], [0], [1], [0, 0, 1, 1], [], []>} : vector<512x128xbf16>, vector<128x128xbf16>, vector<512x128xf32> -> vector<512x128xf32>
    %c0_27 = arith.constant 0 : index
    %c0_28 = arith.constant 0 : index
    %36 = vector.load %arg11[%c0_27, %c0_28] : memref<1x128xf32, #tpu.memory_space<vmem>>, vector<1x128xf32>
    %37 = vector.broadcast %36 : vector<1x128xf32> to vector<512x128xf32>
    %38 = arith.addf %35, %37 : vector<512x128xf32>
    %cst_29 = arith.constant dense<0xFF800000> : vector<512xf32>
    %39 = vector.multi_reduction <maximumf>, %38, %cst_29 [1] : vector<512x128xf32> to vector<512xf32>
    %40 = vector.shape_cast %39 : vector<512xf32> to vector<512x1xf32>
    %41 = vector.broadcast %40 : vector<512x1xf32> to vector<512x128xf32>
    %42 = arith.subf %38, %41 : vector<512x128xf32>
    %43 = math.exp %42 : vector<512x128xf32>
    %cst_30 = arith.constant dense<0.000000e+00> : vector<512xf32>
    %44 = vector.multi_reduction <add>, %43, %cst_30 [1] : vector<512x128xf32> to vector<512xf32>
    %45 = vector.shape_cast %44 : vector<512xf32> to vector<512x1xf32>
    %46 = math.log %45 : vector<512x1xf32>
    %47 = vector.broadcast %46 : vector<512x1xf32> to vector<512x128xf32>
    %48 = arith.subf %42, %47 : vector<512x128xf32>
    %c0_31 = arith.constant 0 : index
    %c0_32 = arith.constant 0 : index
    %49 = vector.load %arg12[%c0_31, %c0_32] : memref<512x128xf32, #tpu.memory_space<vmem>>, vector<512x128xf32>
    tpu.vector_store %arg12[%c0_31, %c0_32], %48 {strides = array<i32>} : memref<512x128xf32, #tpu.memory_space<vmem>>, vector<512x128xf32>,
    return
  }
  func.func @transform_0(%arg0: i32) -> (i32, i32) {
    %c0_i32 = arith.constant 0 : i32
    %c0_i32_0 = arith.constant 0 : i32
    return %arg0, %c0_i32 : i32, i32
  }
  func.func @transform_1(%arg0: i32) -> (i32, i32) {
    %c0_i32 = arith.constant 0 : i32
    %c0_i32_0 = arith.constant 0 : i32
    %c0_i32_1 = arith.constant 0 : i32
    return %c0_i32, %c0_i32_0 : i32, i32
  }
  func.func @transform_2(%arg0: i32) -> (i32, i32) {
    %c0_i32 = arith.constant 0 : i32
    %c0_i32_0 = arith.constant 0 : i32
    %c0_i32_1 = arith.constant 0 : i32
    return %c0_i32, %c0_i32_0 : i32, i32
  }
  func.func @transform_3(%arg0: i32) -> (i32, i32) {
    %c0_i32 = arith.constant 0 : i32
    %c0_i32_0 = arith.constant 0 : i32
    %c0_i32_1 = arith.constant 0 : i32
    return %c0_i32, %c0_i32_0 : i32, i32
  }
  func.func @transform_4(%arg0: i32) -> (i32, i32) {
    %c0_i32 = arith.constant 0 : i32
    %c0_i32_0 = arith.constant 0 : i32
    %c0_i32_1 = arith.constant 0 : i32
    return %c0_i32, %c0_i32_0 : i32, i32
  }
  func.func @transform_5(%arg0: i32) -> (i32, i32) {
    %c0_i32 = arith.constant 0 : i32
    %c0_i32_0 = arith.constant 0 : i32
    %c0_i32_1 = arith.constant 0 : i32
    return %c0_i32, %c0_i32_0 : i32, i32
  }
  func.func @transform_6(%arg0: i32) -> (i32, i32) {
    %c0_i32 = arith.constant 0 : i32
    %c0_i32_0 = arith.constant 0 : i32
    %c0_i32_1 = arith.constant 0 : i32
    return %c0_i32, %c0_i32_0 : i32, i32
  }
  func.func @transform_7(%arg0: i32) -> (i32, i32) {
    %c0_i32 = arith.constant 0 : i32
    %c0_i32_0 = arith.constant 0 : i32
    %c0_i32_1 = arith.constant 0 : i32
    return %c0_i32, %c0_i32_0 : i32, i32
  }
  func.func @transform_8(%arg0: i32) -> (i32, i32) {
    %c0_i32 = arith.constant 0 : i32
    %c0_i32_0 = arith.constant 0 : i32
    %c0_i32_1 = arith.constant 0 : i32
    return %c0_i32, %c0_i32_0 : i32, i32
  }
  func.func @transform_9(%arg0: i32) -> (i32, i32) {
    %c0_i32 = arith.constant 0 : i32
    %c0_i32_0 = arith.constant 0 : i32
    %c0_i32_1 = arith.constant 0 : i32
    return %c0_i32, %c0_i32_0 : i32, i32
  }
  func.func @transform_10(%arg0: i32) -> (i32, i32) {
    %c0_i32 = arith.constant 0 : i32
    %c0_i32_0 = arith.constant 0 : i32
    %c0_i32_1 = arith.constant 0 : i32
    return %c0_i32, %c0_i32_0 : i32, i32
  }
  func.func @transform_11(%arg0: i32) -> (i32, i32) {
    %c0_i32 = arith.constant 0 : i32
    %c0_i32_0 = arith.constant 0 : i32
    return %arg0, %c0_i32 : i32, i32
  }
}

</mosaic_0001>

<llo_original>
// kernel: tpu_custom_call.1
$region0: #{tpu_custom_call.1}
  #allocation0 [shape = 'u32[]', space=smem, size = 0x4, offset = 0x4, fixed_abs, tag = 'smem constant byte address 0x4 - core index']
  #allocation1 [shape = 'u32[144,128]{1,0:T(1,128)}', space=vmem, size = 0x12000, scoped, tag = 'internal scratch']
  %s0 = inlined_call_operand.vmem [shape: f32[512,784], index: 0, kind: input, shape index: {}]
  %s1 = inlined_call_operand.vmem [shape: bf16[784,128], index: 1, kind: input, shape index: {}]
  %s2 = inlined_call_operand.vmem [shape: f32[1,128], index: 2, kind: input, shape index: {}]
  %s3 = inlined_call_operand.vmem [shape: bf16[128,128], index: 3, kind: input, shape index: {}]
  %s4 = inlined_call_operand.vmem [shape: f32[1,128], index: 4, kind: input, shape index: {}]
  %s5 = inlined_call_operand.vmem [shape: bf16[128,128], index: 5, kind: input, shape index: {}]
  %s6 = inlined_call_operand.vmem [shape: f32[1,128], index: 6, kind: input, shape index: {}]
  %s7 = inlined_call_operand.vmem [shape: bf16[128,128], index: 7, kind: input, shape index: {}]
  %s8 = inlined_call_operand.vmem [shape: f32[1,128], index: 8, kind: input, shape index: {}]
  %s9 = inlined_call_operand.vmem [shape: bf16[128,128], index: 9, kind: input, shape index: {}]
  %s10 = inlined_call_operand.vmem [shape: f32[1,128], index: 10, kind: input, shape index: {}]
  %s11 = inlined_call_operand.hbm [shape: f32[512,128], index: 11, kind: output, shape index: {}]
  %s12 = sld [smem:[#allocation0]]
  $region54: #{tpu_custom_call.1} parent=0
    _
  %s14 = ssub.s32 1, %s12
  %s15 = scalar_select 0, %s14, %s12
  $region1: #{tpu_custom_call.1} parent=0
    #allocation2 [shape = 'u8[262144]{0}', space=vmem, size = 0x40000, scoped, tag = 'output window, operand 0, single buffered']
    #allocation3 [shape = 's32[1]{0}', space=sflag, size = 0x4, scoped, tag = 'scoped memory for tpu_custom_call.1']
    %16 = vsyncpa [#allocation3], 0
    // Predicated region
    $region2: #{tpu_custom_call.1} parent=1 // pred_check
      _
    $region3: #{tpu_custom_call.1} parent=1 // pred_check_branch
      %18 = sbr.rel (0) target = $region5
    $region4: #{tpu_custom_call.1} parent=1 // pred_region
      _
    $region5: #{tpu_custom_call.1} parent=1 // pred_fallthru
      _
    // Predicated region
    $region6: #{tpu_custom_call.1} parent=1 // pred_check
      _
    $region7: #{tpu_custom_call.1} parent=1 // pred_check_branch
      %20 = sbr.rel (0) target = $region9
    $region8: #{tpu_custom_call.1} parent=1 // pred_region
      _
    $region9: #{tpu_custom_call.1} parent=1 // pred_fallthru
      _
    // Predicated region
    $region10: #{tpu_custom_call.1} parent=1 // pred_check
      _
    $region11: #{tpu_custom_call.1} parent=1 // pred_check_branch
      %22 = sbr.rel (0) target = $region13
    $region12: #{tpu_custom_call.1} parent=1 // pred_region
      _
    $region13: #{tpu_custom_call.1} parent=1 // pred_fallthru
      _
    // Predicated region
    $region14: #{tpu_custom_call.1} parent=1 // pred_check
      _
    $region15: #{tpu_custom_call.1} parent=1 // pred_check_branch
      %24 = sbr.rel (0) target = $region17
    $region16: #{tpu_custom_call.1} parent=1 // pred_region
      _
    $region17: #{tpu_custom_call.1} parent=1 // pred_fallthru
      _
    // Predicated region
    $region18: #{tpu_custom_call.1} parent=1 // pred_check
      _
    $region19: #{tpu_custom_call.1} parent=1 // pred_check_branch
      %26 = sbr.rel (0) target = $region21
    $region20: #{tpu_custom_call.1} parent=1 // pred_region
      _
    $region21: #{tpu_custom_call.1} parent=1 // pred_fallthru
      _
    // Predicated region
    $region22: #{tpu_custom_call.1} parent=1 // pred_check
      _
    $region23: #{tpu_custom_call.1} parent=1 // pred_check_branch
      %28 = sbr.rel (0) target = $region25
    $region24: #{tpu_custom_call.1} parent=1 // pred_region
      _
    $region25: #{tpu_custom_call.1} parent=1 // pred_fallthru
      _
    // Predicated region
    $region26: #{tpu_custom_call.1} parent=1 // pred_check
      _
    $region27: #{tpu_custom_call.1} parent=1 // pred_check_branch
      %30 = sbr.rel (0) target = $region29
    $region28: #{tpu_custom_call.1} parent=1 // pred_region
      _
    $region29: #{tpu_custom_call.1} parent=1 // pred_fallthru
      _
    // Predicated region
    $region30: #{tpu_custom_call.1} parent=1 // pred_check
      _
    $region31: #{tpu_custom_call.1} parent=1 // pred_check_branch
      %32 = sbr.rel (0) target = $region33
    $region32: #{tpu_custom_call.1} parent=1 // pred_region
      _
    $region33: #{tpu_custom_call.1} parent=1 // pred_fallthru
      _
    // Predicated region
    $region34: #{tpu_custom_call.1} parent=1 // pred_check
      _
    $region35: #{tpu_custom_call.1} parent=1 // pred_check_branch
      %34 = sbr.rel (0) target = $region37
    $region36: #{tpu_custom_call.1} parent=1 // pred_region
      _
    $region37: #{tpu_custom_call.1} parent=1 // pred_fallthru
      _
    // Predicated region
    $region38: #{tpu_custom_call.1} parent=1 // pred_check
      _
    $region39: #{tpu_custom_call.1} parent=1 // pred_check_branch
      %36 = sbr.rel (0) target = $region41
    $region40: #{tpu_custom_call.1} parent=1 // pred_region
      _
    $region41: #{tpu_custom_call.1} parent=1 // pred_fallthru
      _
    // Predicated region
    $region42: #{tpu_custom_call.1} parent=1 // pred_check
      _
    $region43: #{tpu_custom_call.1} parent=1 // pred_check_branch
      %38 = sbr.rel (0) target = $region45
    $region44: #{tpu_custom_call.1} parent=1 // pred_region
      _
    $region45: #{tpu_custom_call.1} parent=1 // pred_fallthru
      _
    %v40 = vld [vmem:[%s0] sm:$0xff]
    %v41 = vld [vmem:[%s0 + $0x8] sm:$0xff]
    %v42 = vld [vmem:[%s0 + $0x10] sm:$0xff]
    %v43 = vld [vmem:[%s0 + $0x18] sm:$0xff]
    %v44 = vld [vmem:[%s0 + $0x20] sm:$0xff]
    %v45 = vld [vmem:[%s0 + $0x28] sm:$0xff]
    %v46 = vld [vmem:[%s0 + $0x30] sm:$0xff]
    %v47 = vld [vmem:[%s0 + $0x38] sm:$0xff]
    %v48 = vld [vmem:[%s0 + $0x40] sm:$0xff]
    %v49 = vld [vmem:[%s0 + $0x48] sm:$0xff]
    %v50 = vld [vmem:[%s0 + $0x50] sm:$0xff]
    %v51 = vld [vmem:[%s0 + $0x58] sm:$0xff]
    %v52 = vld [vmem:[%s0 + $0x60] sm:$0xff]
    %v53 = vld [vmem:[%s0 + $0x68] sm:$0xff]
    %v54 = vld [vmem:[%s0 + $0x70] sm:$0xff]
    %v55 = vld [vmem:[%s0 + $0x78] sm:$0xff]
    %v56 = vld [vmem:[%s0 + $0x80] sm:$0xff]
    %v57 = vld [vmem:[%s0 + $0x88] sm:$0xff]
    %v58 = vld [vmem:[%s0 + $0x90] sm:$0xff]
    %v59 = vld [vmem:[%s0 + $0x98] sm:$0xff]
    %v60 = vld [vmem:[%s0 + $0xa0] sm:$0xff]
    %v61 = vld [vmem:[%s0 + $0xa8] sm:$0xff]
    %v62 = vld [vmem:[%s0 + $0xb0] sm:$0xff]
    %v63 = vld [vmem:[%s0 + $0xb8] sm:$0xff]
    %v64 = vld [vmem:[%s0 + $0xc0] sm:$0xff]
    %v65 = vld [vmem:[%s0 + $0xc8] sm:$0xff]
    %v66 = vld [vmem:[%s0 + $0xd0] sm:$0xff]
    %v67 = vld [vmem:[%s0 + $0xd8] sm:$0xff]
    %v68 = vld [vmem:[%s0 + $0xe0] sm:$0xff]
    %v69 = vld [vmem:[%s0 + $0xe8] sm:$0xff]
    %v70 = vld [vmem:[%s0 + $0xf0] sm:$0xff]
    %v71 = vld [vmem:[%s0 + $0xf8] sm:$0xff]
    %v72 = vld [vmem:[%s0 + $0x100] sm:$0xff]
    %v73 = vld [vmem:[%s0 + $0x108] sm:$0xff]
    %v74 = vld [vmem:[%s0 + $0x110] sm:$0xff]
    %v75 = vld [vmem:[%s0 + $0x118] sm:$0xff]
    %v76 = vld [vmem:[%s0 + $0x120] sm:$0xff]
    %v77 = vld [vmem:[%s0 + $0x128] sm:$0xff]
    %v78 = vld [vmem:[%s0 + $0x130] sm:$0xff]
    %v79 = vld [vmem:[%s0 + $0x138] sm:$0xff]
    %v80 = vld [vmem:[%s0 + $0x140] sm:$0xff]
    %v81 = vld [vmem:[%s0 + $0x148] sm:$0xff]
    %v82 = vld [vmem:[%s0 + $0x150] sm:$0xff]
    %v83 = vld [vmem:[%s0 + $0x158] sm:$0xff]
    %v84 = vld [vmem:[%s0 + $0x160] sm:$0xff]
    %v85 = vld [vmem:[%s0 + $0x168] sm:$0xff]
    %v86 = vld [vmem:[%s0 + $0x170] sm:$0xff]
    %v87 = vld [vmem:[%s0 + $0x178] sm:$0xff]
    %v88 = vld [vmem:[%s0 + $0x180] sm:$0xff]
    %v89 = vld [vmem:[%s0 + $0x188] sm:$0xff]
    %v90 = vld [vmem:[%s0 + $0x190] sm:$0xff]
    %v91 = vld [vmem:[%s0 + $0x198] sm:$0xff]
    %v92 = vld [vmem:[%s0 + $0x1a0] sm:$0xff]
    %v93 = vld [vmem:[%s0 + $0x1a8] sm:$0xff]
    %v94 = vld [vmem:[%s0 + $0x1b0] sm:$0xff]
    %v95 = vld [vmem:[%s0 + $0x1b8] sm:$0xff]
    %v96 = vld [vmem:[%s0 + $0x1c0] sm:$0xff]
    %v97 = vld [vmem:[%s0 + $0x1c8] sm:$0xff]
    %v98 = vld [vmem:[%s0 + $0x1d0] sm:$0xff]
    %v99 = vld [vmem:[%s0 + $0x1d8] sm:$0xff]
    %v100 = vld [vmem:[%s0 + $0x1e0] sm:$0xff]
    %v101 = vld [vmem:[%s0 + $0x1e8] sm:$0xff]
    %v102 = vld [vmem:[%s0 + $0x1f0] sm:$0xff]
    %v103 = vld [vmem:[%s0 + $0x1f8] sm:$0xff]
    %v104 = vld [vmem:[%s0 + $0x200] sm:$0xff]
    %v105 = vld [vmem:[%s0 + $0x208] sm:$0xff]
    %v106 = vld [vmem:[%s0 + $0x210] sm:$0xff]
    %v107 = vld [vmem:[%s0 + $0x218] sm:$0xff]
    %v108 = vld [vmem:[%s0 + $0x220] sm:$0xff]
    %v109 = vld [vmem:[%s0 + $0x228] sm:$0xff]
    %v110 = vld [vmem:[%s0 + $0x230] sm:$0xff]
    %v111 = vld [vmem:[%s0 + $0x238] sm:$0xff]
    %v112 = vld [vmem:[%s0 + $0x240] sm:$0xff]
    %v113 = vld [vmem:[%s0 + $0x248] sm:$0xff]
    %v114 = vld [vmem:[%s0 + $0x250] sm:$0xff]
    %v115 = vld [vmem:[%s0 + $0x258] sm:$0xff]
    %v116 = vld [vmem:[%s0 + $0x260] sm:$0xff]
    %v117 = vld [vmem:[%s0 + $0x268] sm:$0xff]
    %v118 = vld [vmem:[%s0 + $0x270] sm:$0xff]
    %v119 = vld [vmem:[%s0 + $0x278] sm:$0xff]
    %v120 = vld [vmem:[%s0 + $0x280] sm:$0xff]
    %v121 = vld [vmem:[%s0 + $0x288] sm:$0xff]
    %v122 = vld [vmem:[%s0 + $0x290] sm:$0xff]
    %v123 = vld [vmem:[%s0 + $0x298] sm:$0xff]
    %v124 = vld [vmem:[%s0 + $0x2a0] sm:$0xff]
    %v125 = vld [vmem:[%s0 + $0x2a8] sm:$0xff]
    %v126 = vld [vmem:[%s0 + $0x2b0] sm:$0xff]
    %v127 = vld [vmem:[%s0 + $0x2b8] sm:$0xff]
    %v128 = vld [vmem:[%s0 + $0x2c0] sm:$0xff]
    %v129 = vld [vmem:[%s0 + $0x2c8] sm:$0xff]
    %v130 = vld [vmem:[%s0 + $0x2d0] sm:$0xff]
    %v131 = vld [vmem:[%s0 + $0x2d8] sm:$0xff]
    %v132 = vld [vmem:[%s0 + $0x2e0] sm:$0xff]
    %v133 = vld [vmem:[%s0 + $0x2e8] sm:$0xff]
    %v134 = vld [vmem:[%s0 + $0x2f0] sm:$0xff]
    %v135 = vld [vmem:[%s0 + $0x2f8] sm:$0xff]
    %v136 = vld [vmem:[%s0 + $0x300] sm:$0xff]
    %v137 = vld [vmem:[%s0 + $0x308] sm:$0xff]
    %v138 = vld [vmem:[%s0 + $0x310] sm:$0xff]
    %v139 = vld [vmem:[%s0 + $0x318] sm:$0xff]
    %v140 = vld [vmem:[%s0 + $0x320] sm:$0xff]
    %v141 = vld [vmem:[%s0 + $0x328] sm:$0xff]
    %v142 = vld [vmem:[%s0 + $0x330] sm:$0xff]
    %v143 = vld [vmem:[%s0 + $0x338] sm:$0xff]
    %v144 = vld [vmem:[%s0 + $0x340] sm:$0xff]
    %v145 = vld [vmem:[%s0 + $0x348] sm:$0xff]
    %v146 = vld [vmem:[%s0 + $0x350] sm:$0xff]
    %v147 = vld [vmem:[%s0 + $0x358] sm:$0xff]
    %v148 = vld [vmem:[%s0 + $0x360] sm:$0xff]
    %v149 = vld [vmem:[%s0 + $0x368] sm:$0xff]
    %v150 = vld [vmem:[%s0 + $0x370] sm:$0xff]
    %v151 = vld [vmem:[%s0 + $0x378] sm:$0xff]
    %v152 = vld [vmem:[%s0 + $0x380] sm:$0xff]
    %v153 = vld [vmem:[%s0 + $0x388] sm:$0xff]
    %v154 = vld [vmem:[%s0 + $0x390] sm:$0xff]
    %v155 = vld [vmem:[%s0 + $0x398] sm:$0xff]
    %v156 = vld [vmem:[%s0 + $0x3a0] sm:$0xff]
    %v157 = vld [vmem:[%s0 + $0x3a8] sm:$0xff]
    %v158 = vld [vmem:[%s0 + $0x3b0] sm:$0xff]
    %v159 = vld [vmem:[%s0 + $0x3b8] sm:$0xff]
    %v160 = vld [vmem:[%s0 + $0x3c0] sm:$0xff]
    %v161 = vld [vmem:[%s0 + $0x3c8] sm:$0xff]
    %v162 = vld [vmem:[%s0 + $0x3d0] sm:$0xff]
    %v163 = vld [vmem:[%s0 + $0x3d8] sm:$0xff]
    %v164 = vld [vmem:[%s0 + $0x3e0] sm:$0xff]
    %v165 = vld [vmem:[%s0 + $0x3e8] sm:$0xff]
    %v166 = vld [vmem:[%s0 + $0x3f0] sm:$0xff]
    %v167 = vld [vmem:[%s0 + $0x3f8] sm:$0xff]
    %v168 = vld [vmem:[%s0 + $0x400] sm:$0xff]
    %v169 = vld [vmem:[%s0 + $0x408] sm:$0xff]
    %v170 = vld [vmem:[%s0 + $0x410] sm:$0xff]
    %v171 = vld [vmem:[%s0 + $0x418] sm:$0xff]
    %v172 = vld [vmem:[%s0 + $0x420] sm:$0xff]
    %v173 = vld [vmem:[%s0 + $0x428] sm:$0xff]
    %v174 = vld [vmem:[%s0 + $0x430] sm:$0xff]
    %v175 = vld [vmem:[%s0 + $0x438] sm:$0xff]
    %v176 = vld [vmem:[%s0 + $0x440] sm:$0xff]
    %v177 = vld [vmem:[%s0 + $0x448] sm:$0xff]
    %v178 = vld [vmem:[%s0 + $0x450] sm:$0xff]
    %v179 = vld [vmem:[%s0 + $0x458] sm:$0xff]
    %v180 = vld [vmem:[%s0 + $0x460] sm:$0xff]
    %v181 = vld [vmem:[%s0 + $0x468] sm:$0xff]
    %v182 = vld [vmem:[%s0 + $0x470] sm:$0xff]
    %v183 = vld [vmem:[%s0 + $0x478] sm:$0xff]
    %v184 = vld [vmem:[%s0 + $0x480] sm:$0xff]
    %v185 = vld [vmem:[%s0 + $0x488] sm:$0xff]
    %v186 = vld [vmem:[%s0 + $0x490] sm:$0xff]
    %v187 = vld [vmem:[%s0 + $0x498] sm:$0xff]
    %v188 = vld [vmem:[%s0 + $0x4a0] sm:$0xff]
    %v189 = vld [vmem:[%s0 + $0x4a8] sm:$0xff]
    %v190 = vld [vmem:[%s0 + $0x4b0] sm:$0xff]
    %v191 = vld [vmem:[%s0 + $0x4b8] sm:$0xff]
    %v192 = vld [vmem:[%s0 + $0x4c0] sm:$0xff]
    %v193 = vld [vmem:[%s0 + $0x4c8] sm:$0xff]
    %v194 = vld [vmem:[%s0 + $0x4d0] sm:$0xff]
    %v195 = vld [vmem:[%s0 + $0x4d8] sm:$0xff]
    %v196 = vld [vmem:[%s0 + $0x4e0] sm:$0xff]
    %v197 = vld [vmem:[%s0 + $0x4e8] sm:$0xff]
    %v198 = vld [vmem:[%s0 + $0x4f0] sm:$0xff]
    %v199 = vld [vmem:[%s0 + $0x4f8] sm:$0xff]
    %v200 = vld [vmem:[%s0 + $0x500] sm:$0xff]
    %v201 = vld [vmem:[%s0 + $0x508] sm:$0xff]
    %v202 = vld [vmem:[%s0 + $0x510] sm:$0xff]
    %v203 = vld [vmem:[%s0 + $0x518] sm:$0xff]
    %v204 = vld [vmem:[%s0 + $0x520] sm:$0xff]
    %v205 = vld [vmem:[%s0 + $0x528] sm:$0xff]
    %v206 = vld [vmem:[%s0 + $0x530] sm:$0xff]
    %v207 = vld [vmem:[%s0 + $0x538] sm:$0xff]
    %v208 = vld [vmem:[%s0 + $0x540] sm:$0xff]
    %v209 = vld [vmem:[%s0 + $0x548] sm:$0xff]
    %v210 = vld [vmem:[%s0 + $0x550] sm:$0xff]
    %v211 = vld [vmem:[%s0 + $0x558] sm:$0xff]
    %v212 = vld [vmem:[%s0 + $0x560] sm:$0xff]
    %v213 = vld [vmem:[%s0 + $0x568] sm:$0xff]
    %v214 = vld [vmem:[%s0 + $0x570] sm:$0xff]
    %v215 = vld [vmem:[%s0 + $0x578] sm:$0xff]
    %v216 = vld [vmem:[%s0 + $0x580] sm:$0xff]
    %v217 = vld [vmem:[%s0 + $0x588] sm:$0xff]
    %v218 = vld [vmem:[%s0 + $0x590] sm:$0xff]
    %v219 = vld [vmem:[%s0 + $0x598] sm:$0xff]
    %v220 = vld [vmem:[%s0 + $0x5a0] sm:$0xff]
    %v221 = vld [vmem:[%s0 + $0x5a8] sm:$0xff]
    %v222 = vld [vmem:[%s0 + $0x5b0] sm:$0xff]
    %v223 = vld [vmem:[%s0 + $0x5b8] sm:$0xff]
    %v224 = vld [vmem:[%s0 + $0x5c0] sm:$0xff]
    %v225 = vld [vmem:[%s0 + $0x5c8] sm:$0xff]
    %v226 = vld [vmem:[%s0 + $0x5d0] sm:$0xff]
    %v227 = vld [vmem:[%s0 + $0x5d8] sm:$0xff]
    %v228 = vld [vmem:[%s0 + $0x5e0] sm:$0xff]
    %v229 = vld [vmem:[%s0 + $0x5e8] sm:$0xff]
    %v230 = vld [vmem:[%s0 + $0x5f0] sm:$0xff]
    %v231 = vld [vmem:[%s0 + $0x5f8] sm:$0xff]
    %v232 = vld [vmem:[%s0 + $0x600] sm:$0xff]
    %v233 = vld [vmem:[%s0 + $0x608] sm:$0xff]
    %v234 = vld [vmem:[%s0 + $0x610] sm:$0xff]
    %v235 = vld [vmem:[%s0 + $0x618] sm:$0xff]
    %v236 = vld [vmem:[%s0 + $0x620] sm:$0xff]
    %v237 = vld [vmem:[%s0 + $0x628] sm:$0xff]
    %v238 = vld [vmem:[%s0 + $0x630] sm:$0xff]
    %v239 = vld [vmem:[%s0 + $0x638] sm:$0xff]
    %v240 = vld [vmem:[%s0 + $0x640] sm:$0xff]
    %v241 = vld [vmem:[%s0 + $0x648] sm:$0xff]
    %v242 = vld [vmem:[%s0 + $0x650] sm:$0xff]
    %v243 = vld [vmem:[%s0 + $0x658] sm:$0xff]
    %v244 = vld [vmem:[%s0 + $0x660] sm:$0xff]
    %v245 = vld [vmem:[%s0 + $0x668] sm:$0xff]
    %v246 = vld [vmem:[%s0 + $0x670] sm:$0xff]
    %v247 = vld [vmem:[%s0 + $0x678] sm:$0xff]
    %v248 = vld [vmem:[%s0 + $0x680] sm:$0xff]
    %v249 = vld [vmem:[%s0 + $0x688] sm:$0xff]
    %v250 = vld [vmem:[%s0 + $0x690] sm:$0xff]
    %v251 = vld [vmem:[%s0 + $0x698] sm:$0xff]
    %v252 = vld [vmem:[%s0 + $0x6a0] sm:$0xff]
    %v253 = vld [vmem:[%s0 + $0x6a8] sm:$0xff]
    %v254 = vld [vmem:[%s0 + $0x6b0] sm:$0xff]
    %v255 = vld [vmem:[%s0 + $0x6b8] sm:$0xff]
    %v256 = vld [vmem:[%s0 + $0x6c0] sm:$0xff]
    %v257 = vld [vmem:[%s0 + $0x6c8] sm:$0xff]
    %v258 = vld [vmem:[%s0 + $0x6d0] sm:$0xff]
    %v259 = vld [vmem:[%s0 + $0x6d8] sm:$0xff]
    %v260 = vld [vmem:[%s0 + $0x6e0] sm:$0xff]
    %v261 = vld [vmem:[%s0 + $0x6e8] sm:$0xff]
    %v262 = vld [vmem:[%s0 + $0x6f0] sm:$0xff]
    %v263 = vld [vmem:[%s0 + $0x6f8] sm:$0xff]
    %v264 = vld [vmem:[%s0 + $0x700] sm:$0xff]
    %v265 = vld [vmem:[%s0 + $0x708] sm:$0xff]
    %v266 = vld [vmem:[%s0 + $0x710] sm:$0xff]
    %v267 = vld [vmem:[%s0 + $0x718] sm:$0xff]
    %v268 = vld [vmem:[%s0 + $0x720] sm:$0xff]
    %v269 = vld [vmem:[%s0 + $0x728] sm:$0xff]
    %v270 = vld [vmem:[%s0 + $0x730] sm:$0xff]
    %v271 = vld [vmem:[%s0 + $0x738] sm:$0xff]
    %v272 = vld [vmem:[%s0 + $0x740] sm:$0xff]
    %v273 = vld [vmem:[%s0 + $0x748] sm:$0xff]
    %v274 = vld [vmem:[%s0 + $0x750] sm:$0xff]
    %v275 = vld [vmem:[%s0 + $0x758] sm:$0xff]
    %v276 = vld [vmem:[%s0 + $0x760] sm:$0xff]
    %v277 = vld [vmem:[%s0 + $0x768] sm:$0xff]
    %v278 = vld [vmem:[%s0 + $0x770] sm:$0xff]
    %v279 = vld [vmem:[%s0 + $0x778] sm:$0xff]
    %v280 = vld [vmem:[%s0 + $0x780] sm:$0xff]
    %v281 = vld [vmem:[%s0 + $0x788] sm:$0xff]
    %v282 = vld [vmem:[%s0 + $0x790] sm:$0xff]
    %v283 = vld [vmem:[%s0 + $0x798] sm:$0xff]
    %v284 = vld [vmem:[%s0 + $0x7a0] sm:$0xff]
    %v285 = vld [vmem:[%s0 + $0x7a8] sm:$0xff]
    %v286 = vld [vmem:[%s0 + $0x7b0] sm:$0xff]
    %v287 = vld [vmem:[%s0 + $0x7b8] sm:$0xff]
    %v288 = vld [vmem:[%s0 + $0x7c0] sm:$0xff]
    %v289 = vld [vmem:[%s0 + $0x7c8] sm:$0xff]
    %v290 = vld [vmem:[%s0 + $0x7d0] sm:$0xff]
    %v291 = vld [vmem:[%s0 + $0x7d8] sm:$0xff]
    %v292 = vld [vmem:[%s0 + $0x7e0] sm:$0xff]
    %v293 = vld [vmem:[%s0 + $0x7e8] sm:$0xff]
    %v294 = vld [vmem:[%s0 + $0x7f0] sm:$0xff]
    %v295 = vld [vmem:[%s0 + $0x7f8] sm:$0xff]
    %v296 = vld [vmem:[%s0 + $0x800] sm:$0xff]
    %v297 = vld [vmem:[%s0 + $0x808] sm:$0xff]
    %v298 = vld [vmem:[%s0 + $0x810] sm:$0xff]
    %v299 = vld [vmem:[%s0 + $0x818] sm:$0xff]
    %v300 = vld [vmem:[%s0 + $0x820] sm:$0xff]
    %v301 = vld [vmem:[%s0 + $0x828] sm:$0xff]
    %v302 = vld [vmem:[%s0 + $0x830] sm:$0xff]
    %v303 = vld [vmem:[%s0 + $0x838] sm:$0xff]
    %v304 = vld [vmem:[%s0 + $0x840] sm:$0xff]
    %v305 = vld [vmem:[%s0 + $0x848] sm:$0xff]
    %v306 = vld [vmem:[%s0 + $0x850] sm:$0xff]
    %v307 = vld [vmem:[%s0 + $0x858] sm:$0xff]
    %v308 = vld [vmem:[%s0 + $0x860] sm:$0xff]
    %v309 = vld [vmem:[%s0 + $0x868] sm:$0xff]
    %v310 = vld [vmem:[%s0 + $0x870] sm:$0xff]
    %v311 = vld [vmem:[%s0 + $0x878] sm:$0xff]
    %v312 = vld [vmem:[%s0 + $0x880] sm:$0xff]
    %v313 = vld [vmem:[%s0 + $0x888] sm:$0xff]
    %v314 = vld [vmem:[%s0 + $0x890] sm:$0xff]
    %v315 = vld [vmem:[%s0 + $0x898] sm:$0xff]
    %v316 = vld [vmem:[%s0 + $0x8a0] sm:$0xff]
    %v317 = vld [vmem:[%s0 + $0x8a8] sm:$0xff]
    %v318 = vld [vmem:[%s0 + $0x8b0] sm:$0xff]
    %v319 = vld [vmem:[%s0 + $0x8b8] sm:$0xff]
    %v320 = vld [vmem:[%s0 + $0x8c0] sm:$0xff]
    %v321 = vld [vmem:[%s0 + $0x8c8] sm:$0xff]
    %v322 = vld [vmem:[%s0 + $0x8d0] sm:$0xff]
    %v323 = vld [vmem:[%s0 + $0x8d8] sm:$0xff]
    %v324 = vld [vmem:[%s0 + $0x8e0] sm:$0xff]
    %v325 = vld [vmem:[%s0 + $0x8e8] sm:$0xff]
    %v326 = vld [vmem:[%s0 + $0x8f0] sm:$0xff]
    %v327 = vld [vmem:[%s0 + $0x8f8] sm:$0xff]
    %v328 = vld [vmem:[%s0 + $0x900] sm:$0xff]
    %v329 = vld [vmem:[%s0 + $0x908] sm:$0xff]
    %v330 = vld [vmem:[%s0 + $0x910] sm:$0xff]
    %v331 = vld [vmem:[%s0 + $0x918] sm:$0xff]
    %v332 = vld [vmem:[%s0 + $0x920] sm:$0xff]
    %v333 = vld [vmem:[%s0 + $0x928] sm:$0xff]
    %v334 = vld [vmem:[%s0 + $0x930] sm:$0xff]
    %v335 = vld [vmem:[%s0 + $0x938] sm:$0xff]
    %v336 = vld [vmem:[%s0 + $0x940] sm:$0xff]
    %v337 = vld [vmem:[%s0 + $0x948] sm:$0xff]
    %v338 = vld [vmem:[%s0 + $0x950] sm:$0xff]
    %v339 = vld [vmem:[%s0 + $0x958] sm:$0xff]
    %v340 = vld [vmem:[%s0 + $0x960] sm:$0xff]
    %v341 = vld [vmem:[%s0 + $0x968] sm:$0xff]
    %v342 = vld [vmem:[%s0 + $0x970] sm:$0xff]
    %v343 = vld [vmem:[%s0 + $0x978] sm:$0xff]
    %v344 = vld [vmem:[%s0 + $0x980] sm:$0xff]
    %v345 = vld [vmem:[%s0 + $0x988] sm:$0xff]
    %v346 = vld [vmem:[%s0 + $0x990] sm:$0xff]
    %v347 = vld [vmem:[%s0 + $0x998] sm:$0xff]
    %v348 = vld [vmem:[%s0 + $0x9a0] sm:$0xff]
    %v349 = vld [vmem:[%s0 + $0x9a8] sm:$0xff]
    %v350 = vld [vmem:[%s0 + $0x9b0] sm:$0xff]
    %v351 = vld [vmem:[%s0 + $0x9b8] sm:$0xff]
    %v352 = vld [vmem:[%s0 + $0x9c0] sm:$0xff]
    %v353 = vld [vmem:[%s0 + $0x9c8] sm:$0xff]
    %v354 = vld [vmem:[%s0 + $0x9d0] sm:$0xff]
    %v355 = vld [vmem:[%s0 + $0x9d8] sm:$0xff]
    %v356 = vld [vmem:[%s0 + $0x9e0] sm:$0xff]
    %v357 = vld [vmem:[%s0 + $0x9e8] sm:$0xff]
    %v358 = vld [vmem:[%s0 + $0x9f0] sm:$0xff]
    %v359 = vld [vmem:[%s0 + $0x9f8] sm:$0xff]
    %v360 = vld [vmem:[%s0 + $0xa00] sm:$0xff]
    %v361 = vld [vmem:[%s0 + $0xa08] sm:$0xff]
    %v362 = vld [vmem:[%s0 + $0xa10] sm:$0xff]
    %v363 = vld [vmem:[%s0 + $0xa18] sm:$0xff]
    %v364 = vld [vmem:[%s0 + $0xa20] sm:$0xff]
    %v365 = vld [vmem:[%s0 + $0xa28] sm:$0xff]
    %v366 = vld [vmem:[%s0 + $0xa30] sm:$0xff]
    %v367 = vld [vmem:[%s0 + $0xa38] sm:$0xff]
    %v368 = vld [vmem:[%s0 + $0xa40] sm:$0xff]
    %v369 = vld [vmem:[%s0 + $0xa48] sm:$0xff]
    %v370 = vld [vmem:[%s0 + $0xa50] sm:$0xff]
    %v371 = vld [vmem:[%s0 + $0xa58] sm:$0xff]
    %v372 = vld [vmem:[%s0 + $0xa60] sm:$0xff]
    %v373 = vld [vmem:[%s0 + $0xa68] sm:$0xff]
    %v374 = vld [vmem:[%s0 + $0xa70] sm:$0xff]
    %v375 = vld [vmem:[%s0 + $0xa78] sm:$0xff]
    %v376 = vld [vmem:[%s0 + $0xa80] sm:$0xff]
    %v377 = vld [vmem:[%s0 + $0xa88] sm:$0xff]
    %v378 = vld [vmem:[%s0 + $0xa90] sm:$0xff]
    %v379 = vld [vmem:[%s0 + $0xa98] sm:$0xff]
    %v380 = vld [vmem:[%s0 + $0xaa0] sm:$0xff]
    %v381 = vld [vmem:[%s0 + $0xaa8] sm:$0xff]
    %v382 = vld [vmem:[%s0 + $0xab0] sm:$0xff]
    %v383 = vld [vmem:[%s0 + $0xab8] sm:$0xff]
    %v384 = vld [vmem:[%s0 + $0xac0] sm:$0xff]
    %v385 = vld [vmem:[%s0 + $0xac8] sm:$0xff]
    %v386 = vld [vmem:[%s0 + $0xad0] sm:$0xff]
    %v387 = vld [vmem:[%s0 + $0xad8] sm:$0xff]
    %v388 = vld [vmem:[%s0 + $0xae0] sm:$0xff]
    %v389 = vld [vmem:[%s0 + $0xae8] sm:$0xff]
    %v390 = vld [vmem:[%s0 + $0xaf0] sm:$0xff]
    %v391 = vld [vmem:[%s0 + $0xaf8] sm:$0xff]
    %v392 = vld [vmem:[%s0 + $0xb00] sm:$0xff]
    %v393 = vld [vmem:[%s0 + $0xb08] sm:$0xff]
    %v394 = vld [vmem:[%s0 + $0xb10] sm:$0xff]
    %v395 = vld [vmem:[%s0 + $0xb18] sm:$0xff]
    %v396 = vld [vmem:[%s0 + $0xb20] sm:$0xff]
    %v397 = vld [vmem:[%s0 + $0xb28] sm:$0xff]
    %v398 = vld [vmem:[%s0 + $0xb30] sm:$0xff]
    %v399 = vld [vmem:[%s0 + $0xb38] sm:$0xff]
    %v400 = vld [vmem:[%s0 + $0xb40] sm:$0xff]
    %v401 = vld [vmem:[%s0 + $0xb48] sm:$0xff]
    %v402 = vld [vmem:[%s0 + $0xb50] sm:$0xff]
    %v403 = vld [vmem:[%s0 + $0xb58] sm:$0xff]
    %v404 = vld [vmem:[%s0 + $0xb60] sm:$0xff]
    %v405 = vld [vmem:[%s0 + $0xb68] sm:$0xff]
    %v406 = vld [vmem:[%s0 + $0xb70] sm:$0xff]
    %v407 = vld [vmem:[%s0 + $0xb78] sm:$0xff]
    %v408 = vld [vmem:[%s0 + $0xb80] sm:$0xff]
    %v409 = vld [vmem:[%s0 + $0xb88] sm:$0xff]
    %v410 = vld [vmem:[%s0 + $0xb90] sm:$0xff]
    %v411 = vld [vmem:[%s0 + $0xb98] sm:$0xff]
    %v412 = vld [vmem:[%s0 + $0xba0] sm:$0xff]
    %v413 = vld [vmem:[%s0 + $0xba8] sm:$0xff]
    %v414 = vld [vmem:[%s0 + $0xbb0] sm:$0xff]
    %v415 = vld [vmem:[%s0 + $0xbb8] sm:$0xff]
    %v416 = vld [vmem:[%s0 + $0xbc0] sm:$0xff]
    %v417 = vld [vmem:[%s0 + $0xbc8] sm:$0xff]
    %v418 = vld [vmem:[%s0 + $0xbd0] sm:$0xff]
    %v419 = vld [vmem:[%s0 + $0xbd8] sm:$0xff]
    %v420 = vld [vmem:[%s0 + $0xbe0] sm:$0xff]
    %v421 = vld [vmem:[%s0 + $0xbe8] sm:$0xff]
    %v422 = vld [vmem:[%s0 + $0xbf0] sm:$0xff]
    %v423 = vld [vmem:[%s0 + $0xbf8] sm:$0xff]
    %v424 = vld [vmem:[%s0 + $0xc00] sm:$0xff]
    %v425 = vld [vmem:[%s0 + $0xc08] sm:$0xff]
    %v426 = vld [vmem:[%s0 + $0xc10] sm:$0xff]
    %v427 = vld [vmem:[%s0 + $0xc18] sm:$0xff]
    %v428 = vld [vmem:[%s0 + $0xc20] sm:$0xff]
    %v429 = vld [vmem:[%s0 + $0xc28] sm:$0xff]
    %v430 = vld [vmem:[%s0 + $0xc30] sm:$0xff]
    %v431 = vld [vmem:[%s0 + $0xc38] sm:$0xff]
    %v432 = vld [vmem:[%s0 + $0xc40] sm:$0xff]
    %v433 = vld [vmem:[%s0 + $0xc48] sm:$0xff]
    %v434 = vld [vmem:[%s0 + $0xc50] sm:$0xff]
    %v435 = vld [vmem:[%s0 + $0xc58] sm:$0xff]
    %v436 = vld [vmem:[%s0 + $0xc60] sm:$0xff]
    %v437 = vld [vmem:[%s0 + $0xc68] sm:$0xff]
    %v438 = vld [vmem:[%s0 + $0xc70] sm:$0xff]
    %v439 = vld [vmem:[%s0 + $0xc78] sm:$0xff]
    %v440 = vld [vmem:[%s0 + $0xc80] sm:$0xff]
    %v441 = vld [vmem:[%s0 + $0xc88] sm:$0xff]
    %v442 = vld [vmem:[%s0 + $0xc90] sm:$0xff]
    %v443 = vld [vmem:[%s0 + $0xc98] sm:$0xff]
    %v444 = vld [vmem:[%s0 + $0xca0] sm:$0xff]
    %v445 = vld [vmem:[%s0 + $0xca8] sm:$0xff]
    %v446 = vld [vmem:[%s0 + $0xcb0] sm:$0xff]
    %v447 = vld [vmem:[%s0 + $0xcb8] sm:$0xff]
    %v448 = vld [vmem:[%s0 + $0xcc0] sm:$0xff]
    %v449 = vld [vmem:[%s0 + $0xcc8] sm:$0xff]
    %v450 = vld [vmem:[%s0 + $0xcd0] sm:$0xff]
    %v451 = vld [vmem:[%s0 + $0xcd8] sm:$0xff]
    %v452 = vld [vmem:[%s0 + $0xce0] sm:$0xff]
    %v453 = vld [vmem:[%s0 + $0xce8] sm:$0xff]
    %v454 = vld [vmem:[%s0 + $0xcf0] sm:$0xff]
    %v455 = vld [vmem:[%s0 + $0xcf8] sm:$0xff]
    %v456 = vld [vmem:[%s0 + $0xd00] sm:$0xff]
    %v457 = vld [vmem:[%s0 + $0xd08] sm:$0xff]
    %v458 = vld [vmem:[%s0 + $0xd10] sm:$0xff]
    %v459 = vld [vmem:[%s0 + $0xd18] sm:$0xff]
    %v460 = vld [vmem:[%s0 + $0xd20] sm:$0xff]
    %v461 = vld [vmem:[%s0 + $0xd28] sm:$0xff]
    %v462 = vld [vmem:[%s0 + $0xd30] sm:$0xff]
    %v463 = vld [vmem:[%s0 + $0xd38] sm:$0xff]
    %v464 = vld [vmem:[%s0 + $0xd40] sm:$0xff]
    %v465 = vld [vmem:[%s0 + $0xd48] sm:$0xff]
    %v466 = vld [vmem:[%s0 + $0xd50] sm:$0xff]
    %v467 = vld [vmem:[%s0 + $0xd58] sm:$0xff]
    %v468 = vld [vmem:[%s0 + $0xd60] sm:$0xff]
    %v469 = vld [vmem:[%s0 + $0xd68] sm:$0xff]
    %v470 = vld [vmem:[%s0 + $0xd70] sm:$0xff]
    %v471 = vld [vmem:[%s0 + $0xd78] sm:$0xff]
    %v472 = vld [vmem:[%s0 + $0xd80] sm:$0xff]
    %v473 = vld [vmem:[%s0 + $0xd88] sm:$0xff]
    %v474 = vld [vmem:[%s0 + $0xd90] sm:$0xff]
    %v475 = vld [vmem:[%s0 + $0xd98] sm:$0xff]
    %v476 = vld [vmem:[%s0 + $0xda0] sm:$0xff]
    %v477 = vld [vmem:[%s0 + $0xda8] sm:$0xff]
    %v478 = vld [vmem:[%s0 + $0xdb0] sm:$0xff]
    %v479 = vld [vmem:[%s0 + $0xdb8] sm:$0xff]
    %v480 = vld [vmem:[%s0 + $0xdc0] sm:$0xff]
    %v481 = vld [vmem:[%s0 + $0xdc8] sm:$0xff]
    %v482 = vld [vmem:[%s0 + $0xdd0] sm:$0xff]
    %v483 = vld [vmem:[%s0 + $0xdd8] sm:$0xff]
    %v484 = vld [vmem:[%s0 + $0xde0] sm:$0xff]
    %v485 = vld [vmem:[%s0 + $0xde8] sm:$0xff]
    %v486 = vld [vmem:[%s0 + $0xdf0] sm:$0xff]
    %v487 = vld [vmem:[%s0 + $0xdf8] sm:$0xff]
    %v488 = vpack.c.bf16 %v47, %v40
    %v489 = vpack.c.bf16 %v48, %v41
    %v490 = vpack.c.bf16 %v49, %v42
    %v491 = vpack.c.bf16 %v50, %v43
    %v492 = vpack.c.bf16 %v51, %v44
    %v493 = vpack.c.bf16 %v52, %v45
    %v494 = vpack.c.bf16 %v53, %v46
    %v495 = vpack.c.bf16 %v61, %v54
    %v496 = vpack.c.bf16 %v62, %v55
    %v497 = vpack.c.bf16 %v63, %v56
    %v498 = vpack.c.bf16 %v64, %v57
    %v499 = vpack.c.bf16 %v65, %v58
    %v500 = vpack.c.bf16 %v66, %v59
    %v501 = vpack.c.bf16 %v67, %v60
    %v502 = vpack.c.bf16 %v75, %v68
    %v503 = vpack.c.bf16 %v76, %v69
    %v504 = vpack.c.bf16 %v77, %v70
    %v505 = vpack.c.bf16 %v78, %v71
    %v506 = vpack.c.bf16 %v79, %v72
    %v507 = vpack.c.bf16 %v80, %v73
    %v508 = vpack.c.bf16 %v81, %v74
    %v509 = vpack.c.bf16 %v89, %v82
    %v510 = vpack.c.bf16 %v90, %v83
    %v511 = vpack.c.bf16 %v91, %v84
    %v512 = vpack.c.bf16 %v92, %v85
    %v513 = vpack.c.bf16 %v93, %v86
    %v514 = vpack.c.bf16 %v94, %v87
    %v515 = vpack.c.bf16 %v95, %v88
    %v516 = vpack.c.bf16 %v103, %v96
    %v517 = vpack.c.bf16 %v104, %v97
    %v518 = vpack.c.bf16 %v105, %v98
    %v519 = vpack.c.bf16 %v106, %v99
    %v520 = vpack.c.bf16 %v107, %v100
    %v521 = vpack.c.bf16 %v108, %v101
    %v522 = vpack.c.bf16 %v109, %v102
    %v523 = vpack.c.bf16 %v117, %v110
    %v524 = vpack.c.bf16 %v118, %v111
    %v525 = vpack.c.bf16 %v119, %v112
    %v526 = vpack.c.bf16 %v120, %v113
    %v527 = vpack.c.bf16 %v121, %v114
    %v528 = vpack.c.bf16 %v122, %v115
    %v529 = vpack.c.bf16 %v123, %v116
    %v530 = vpack.c.bf16 %v131, %v124
    %v531 = vpack.c.bf16 %v132, %v125
    %v532 = vpack.c.bf16 %v133, %v126
    %v533 = vpack.c.bf16 %v134, %v127
    %v534 = vpack.c.bf16 %v135, %v128
    %v535 = vpack.c.bf16 %v136, %v129
    %v536 = vpack.c.bf16 %v137, %v130
    %v537 = vpack.c.bf16 %v145, %v138
    %v538 = vpack.c.bf16 %v146, %v139
    %v539 = vpack.c.bf16 %v147, %v140
    %v540 = vpack.c.bf16 %v148, %v141
    %v541 = vpack.c.bf16 %v149, %v142
    %v542 = vpack.c.bf16 %v150, %v143
    %v543 = vpack.c.bf16 %v151, %v144
    %v544 = vpack.c.bf16 %v159, %v152
    %v545 = vpack.c.bf16 %v160, %v153
    %v546 = vpack.c.bf16 %v161, %v154
    %v547 = vpack.c.bf16 %v162, %v155
    %v548 = vpack.c.bf16 %v163, %v156
    %v549 = vpack.c.bf16 %v164, %v157
    %v550 = vpack.c.bf16 %v165, %v158
    %v551 = vpack.c.bf16 %v173, %v166
    %v552 = vpack.c.bf16 %v174, %v167
    %v553 = vpack.c.bf16 %v175, %v168
    %v554 = vpack.c.bf16 %v176, %v169
    %v555 = vpack.c.bf16 %v177, %v170
    %v556 = vpack.c.bf16 %v178, %v171
    %v557 = vpack.c.bf16 %v179, %v172
    %v558 = vpack.c.bf16 %v187, %v180
    %v559 = vpack.c.bf16 %v188, %v181
    %v560 = vpack.c.bf16 %v189, %v182
    %v561 = vpack.c.bf16 %v190, %v183
    %v562 = vpack.c.bf16 %v191, %v184
    %v563 = vpack.c.bf16 %v192, %v185
    %v564 = vpack.c.bf16 %v193, %v186
    %v565 = vpack.c.bf16 %v201, %v194
    %v566 = vpack.c.bf16 %v202, %v195
    %v567 = vpack.c.bf16 %v203, %v196
    %v568 = vpack.c.bf16 %v204, %v197
    %v569 = vpack.c.bf16 %v205, %v198
    %v570 = vpack.c.bf16 %v206, %v199
    %v571 = vpack.c.bf16 %v207, %v200
    %v572 = vpack.c.bf16 %v215, %v208
    %v573 = vpack.c.bf16 %v216, %v209
    %v574 = vpack.c.bf16 %v217, %v210
    %v575 = vpack.c.bf16 %v218, %v211
    %v576 = vpack.c.bf16 %v219, %v212
    %v577 = vpack.c.bf16 %v220, %v213
    %v578 = vpack.c.bf16 %v221, %v214
    %v579 = vpack.c.bf16 %v229, %v222
    %v580 = vpack.c.bf16 %v230, %v223
    %v581 = vpack.c.bf16 %v231, %v224
    %v582 = vpack.c.bf16 %v232, %v225
    %v583 = vpack.c.bf16 %v233, %v226
    %v584 = vpack.c.bf16 %v234, %v227
    %v585 = vpack.c.bf16 %v235, %v228
    %v586 = vpack.c.bf16 %v243, %v236
    %v587 = vpack.c.bf16 %v244, %v237
    %v588 = vpack.c.bf16 %v245, %v238
    %v589 = vpack.c.bf16 %v246, %v239
    %v590 = vpack.c.bf16 %v247, %v240
    %v591 = vpack.c.bf16 %v248, %v241
    %v592 = vpack.c.bf16 %v249, %v242
    %v593 = vpack.c.bf16 %v257, %v250
    %v594 = vpack.c.bf16 %v258, %v251
    %v595 = vpack.c.bf16 %v259, %v252
    %v596 = vpack.c.bf16 %v260, %v253
    %v597 = vpack.c.bf16 %v261, %v254
    %v598 = vpack.c.bf16 %v262, %v255
    %v599 = vpack.c.bf16 %v263, %v256
    %v600 = vpack.c.bf16 %v271, %v264
    %v601 = vpack.c.bf16 %v272, %v265
    %v602 = vpack.c.bf16 %v273, %v266
    %v603 = vpack.c.bf16 %v274, %v267
    %v604 = vpack.c.bf16 %v275, %v268
    %v605 = vpack.c.bf16 %v276, %v269
    %v606 = vpack.c.bf16 %v277, %v270
    %v607 = vpack.c.bf16 %v285, %v278
    %v608 = vpack.c.bf16 %v286, %v279
    %v609 = vpack.c.bf16 %v287, %v280
    %v610 = vpack.c.bf16 %v288, %v281
    %v611 = vpack.c.bf16 %v289, %v282
    %v612 = vpack.c.bf16 %v290, %v283
    %v613 = vpack.c.bf16 %v291, %v284
    %v614 = vpack.c.bf16 %v299, %v292
    %v615 = vpack.c.bf16 %v300, %v293
    %v616 = vpack.c.bf16 %v301, %v294
    %v617 = vpack.c.bf16 %v302, %v295
    %v618 = vpack.c.bf16 %v303, %v296
    %v619 = vpack.c.bf16 %v304, %v297
    %v620 = vpack.c.bf16 %v305, %v298
    %v621 = vpack.c.bf16 %v313, %v306
    %v622 = vpack.c.bf16 %v314, %v307
    %v623 = vpack.c.bf16 %v315, %v308
    %v624 = vpack.c.bf16 %v316, %v309
    %v625 = vpack.c.bf16 %v317, %v310
    %v626 = vpack.c.bf16 %v318, %v311
    %v627 = vpack.c.bf16 %v319, %v312
    %v628 = vpack.c.bf16 %v327, %v320
    %v629 = vpack.c.bf16 %v328, %v321
    %v630 = vpack.c.bf16 %v329, %v322
    %v631 = vpack.c.bf16 %v330, %v323
    %v632 = vpack.c.bf16 %v331, %v324
    %v633 = vpack.c.bf16 %v332, %v325
    %v634 = vpack.c.bf16 %v333, %v326
    %v635 = vpack.c.bf16 %v341, %v334
    %v636 = vpack.c.bf16 %v342, %v335
    %v637 = vpack.c.bf16 %v343, %v336
    %v638 = vpack.c.bf16 %v344, %v337
    %v639 = vpack.c.bf16 %v345, %v338
    %v640 = vpack.c.bf16 %v346, %v339
    %v641 = vpack.c.bf16 %v347, %v340
    %v642 = vpack.c.bf16 %v355, %v348
    %v643 = vpack.c.bf16 %v356, %v349
    %v644 = vpack.c.bf16 %v357, %v350
    %v645 = vpack.c.bf16 %v358, %v351
    %v646 = vpack.c.bf16 %v359, %v352
    %v647 = vpack.c.bf16 %v360, %v353
    %v648 = vpack.c.bf16 %v361, %v354
    %v649 = vpack.c.bf16 %v369, %v362
    %v650 = vpack.c.bf16 %v370, %v363
    %v651 = vpack.c.bf16 %v371, %v364
    %v652 = vpack.c.bf16 %v372, %v365
    %v653 = vpack.c.bf16 %v373, %v366
    %v654 = vpack.c.bf16 %v374, %v367
    %v655 = vpack.c.bf16 %v375, %v368
    %v656 = vpack.c.bf16 %v383, %v376
    %v657 = vpack.c.bf16 %v384, %v377
    %v658 = vpack.c.bf16 %v385, %v378
    %v659 = vpack.c.bf16 %v386, %v379
    %v660 = vpack.c.bf16 %v387, %v380
    %v661 = vpack.c.bf16 %v388, %v381
    %v662 = vpack.c.bf16 %v389, %v382
    %v663 = vpack.c.bf16 %v397, %v390
    %v664 = vpack.c.bf16 %v398, %v391
    %v665 = vpack.c.bf16 %v399, %v392
    %v666 = vpack.c.bf16 %v400, %v393
    %v667 = vpack.c.bf16 %v401, %v394
    %v668 = vpack.c.bf16 %v402, %v395
    %v669 = vpack.c.bf16 %v403, %v396
    %v670 = vpack.c.bf16 %v411, %v404
    %v671 = vpack.c.bf16 %v412, %v405
    %v672 = vpack.c.bf16 %v413, %v406
    %v673 = vpack.c.bf16 %v414, %v407
    %v674 = vpack.c.bf16 %v415, %v408
    %v675 = vpack.c.bf16 %v416, %v409
    %v676 = vpack.c.bf16 %v417, %v410
    %v677 = vpack.c.bf16 %v425, %v418
    %v678 = vpack.c.bf16 %v426, %v419
    %v679 = vpack.c.bf16 %v427, %v420
    %v680 = vpack.c.bf16 %v428, %v421
    %v681 = vpack.c.bf16 %v429, %v422
    %v682 = vpack.c.bf16 %v430, %v423
    %v683 = vpack.c.bf16 %v431, %v424
    %v684 = vpack.c.bf16 %v439, %v432
    %v685 = vpack.c.bf16 %v440, %v433
    %v686 = vpack.c.bf16 %v441, %v434
    %v687 = vpack.c.bf16 %v442, %v435
    %v688 = vpack.c.bf16 %v443, %v436
    %v689 = vpack.c.bf16 %v444, %v437
    %v690 = vpack.c.bf16 %v445, %v438
    %v691 = vpack.c.bf16 %v453, %v446
    %v692 = vpack.c.bf16 %v454, %v447
    %v693 = vpack.c.bf16 %v455, %v448
    %v694 = vpack.c.bf16 %v456, %v449
    %v695 = vpack.c.bf16 %v457, %v450
    %v696 = vpack.c.bf16 %v458, %v451
    %v697 = vpack.c.bf16 %v459, %v452
    %v698 = vpack.c.bf16 %v467, %v460
    %v699 = vpack.c.bf16 %v468, %v461
    %v700 = vpack.c.bf16 %v469, %v462
    %v701 = vpack.c.bf16 %v470, %v463
    %v702 = vpack.c.bf16 %v471, %v464
    %v703 = vpack.c.bf16 %v472, %v465
    %v704 = vpack.c.bf16 %v473, %v466
    %v705 = vpack.c.bf16 %v481, %v474
    %v706 = vpack.c.bf16 %v482, %v475
    %v707 = vpack.c.bf16 %v483, %v476
    %v708 = vpack.c.bf16 %v484, %v477
    %v709 = vpack.c.bf16 %v485, %v478
    %v710 = vpack.c.bf16 %v486, %v479
    %v711 = vpack.c.bf16 %v487, %v480
    %v712 = vld [vmem:[%s1] sm:$0xf]
    %v713 = vld [vmem:[%s1 + $0x4] sm:$0xf]
    %v714 = vld [vmem:[%s1 + $0x8] sm:$0xf]
    %v715 = vld [vmem:[%s1 + $0xc] sm:$0xf]
    %v716 = vld [vmem:[%s1 + $0x10] sm:$0xf]
    %v717 = vld [vmem:[%s1 + $0x14] sm:$0xf]
    %v718 = vld [vmem:[%s1 + $0x18] sm:$0xf]
    %v719 = vld [vmem:[%s1 + $0x1c] sm:$0xf]
    %v720 = vld [vmem:[%s1 + $0x20] sm:$0xf]
    %v721 = vld [vmem:[%s1 + $0x24] sm:$0xf]
    %v722 = vld [vmem:[%s1 + $0x28] sm:$0xf]
    %v723 = vld [vmem:[%s1 + $0x2c] sm:$0xf]
    %v724 = vld [vmem:[%s1 + $0x30] sm:$0xf]
    %v725 = vld [vmem:[%s1 + $0x34] sm:$0xf]
    %v726 = vld [vmem:[%s1 + $0x38] sm:$0xf]
    %v727 = vld [vmem:[%s1 + $0x3c] sm:$0xf]
    %v728 = vld [vmem:[%s1 + $0x40] sm:$0xf]
    %v729 = vld [vmem:[%s1 + $0x44] sm:$0xf]
    %v730 = vld [vmem:[%s1 + $0x48] sm:$0xf]
    %v731 = vld [vmem:[%s1 + $0x4c] sm:$0xf]
    %v732 = vld [vmem:[%s1 + $0x50] sm:$0xf]
    %v733 = vld [vmem:[%s1 + $0x54] sm:$0xf]
    %v734 = vld [vmem:[%s1 + $0x58] sm:$0xf]
    %v735 = vld [vmem:[%s1 + $0x5c] sm:$0xf]
    %v736 = vld [vmem:[%s1 + $0x60] sm:$0xf]
    %v737 = vld [vmem:[%s1 + $0x64] sm:$0xf]
    %v738 = vld [vmem:[%s1 + $0x68] sm:$0xf]
    %v739 = vld [vmem:[%s1 + $0x6c] sm:$0xf]
    %v740 = vld [vmem:[%s1 + $0x70] sm:$0xf]
    %v741 = vld [vmem:[%s1 + $0x74] sm:$0xf]
    %v742 = vld [vmem:[%s1 + $0x78] sm:$0xf]
    %v743 = vld [vmem:[%s1 + $0x7c] sm:$0xf]
    %v744 = vld [vmem:[%s1 + $0x80] sm:$0xf]
    %v745 = vld [vmem:[%s1 + $0x84] sm:$0xf]
    %v746 = vld [vmem:[%s1 + $0x88] sm:$0xf]
    %v747 = vld [vmem:[%s1 + $0x8c] sm:$0xf]
    %v748 = vld [vmem:[%s1 + $0x90] sm:$0xf]
    %v749 = vld [vmem:[%s1 + $0x94] sm:$0xf]
    %v750 = vld [vmem:[%s1 + $0x98] sm:$0xf]
    %v751 = vld [vmem:[%s1 + $0x9c] sm:$0xf]
    %v752 = vld [vmem:[%s1 + $0xa0] sm:$0xf]
    %v753 = vld [vmem:[%s1 + $0xa4] sm:$0xf]
    %v754 = vld [vmem:[%s1 + $0xa8] sm:$0xf]
    %v755 = vld [vmem:[%s1 + $0xac] sm:$0xf]
    %v756 = vld [vmem:[%s1 + $0xb0] sm:$0xf]
    %v757 = vld [vmem:[%s1 + $0xb4] sm:$0xf]
    %v758 = vld [vmem:[%s1 + $0xb8] sm:$0xf]
    %v759 = vld [vmem:[%s1 + $0xbc] sm:$0xf]
    %v760 = vld [vmem:[%s1 + $0xc0] sm:$0xf]
    %v761 = vld [vmem:[%s1 + $0xc4] sm:$0xf]
    %v762 = vld [vmem:[%s1 + $0xc8] sm:$0xf]
    %v763 = vld [vmem:[%s1 + $0xcc] sm:$0xf]
    %v764 = vld [vmem:[%s1 + $0xd0] sm:$0xf]
    %v765 = vld [vmem:[%s1 + $0xd4] sm:$0xf]
    %v766 = vld [vmem:[%s1 + $0xd8] sm:$0xf]
    %v767 = vld [vmem:[%s1 + $0xdc] sm:$0xf]
    %v768 = vld [vmem:[%s1 + $0xe0] sm:$0xf]
    %v769 = vld [vmem:[%s1 + $0xe4] sm:$0xf]
    %v770 = vld [vmem:[%s1 + $0xe8] sm:$0xf]
    %v771 = vld [vmem:[%s1 + $0xec] sm:$0xf]
    %v772 = vld [vmem:[%s1 + $0xf0] sm:$0xf]
    %v773 = vld [vmem:[%s1 + $0xf4] sm:$0xf]
    %v774 = vld [vmem:[%s1 + $0xf8] sm:$0xf]
    %v775 = vld [vmem:[%s1 + $0xfc] sm:$0xf]
    %v776 = vld [vmem:[%s1 + $0x100] sm:$0xf]
    %v777 = vld [vmem:[%s1 + $0x104] sm:$0xf]
    %v778 = vld [vmem:[%s1 + $0x108] sm:$0xf]
    %v779 = vld [vmem:[%s1 + $0x10c] sm:$0xf]
    %v780 = vld [vmem:[%s1 + $0x110] sm:$0xf]
    %v781 = vld [vmem:[%s1 + $0x114] sm:$0xf]
    %v782 = vld [vmem:[%s1 + $0x118] sm:$0xf]
    %v783 = vld [vmem:[%s1 + $0x11c] sm:$0xf]
    %v784 = vld [vmem:[%s1 + $0x120] sm:$0xf]
    %v785 = vld [vmem:[%s1 + $0x124] sm:$0xf]
    %v786 = vld [vmem:[%s1 + $0x128] sm:$0xf]
    %v787 = vld [vmem:[%s1 + $0x12c] sm:$0xf]
    %v788 = vld [vmem:[%s1 + $0x130] sm:$0xf]
    %v789 = vld [vmem:[%s1 + $0x134] sm:$0xf]
    %v790 = vld [vmem:[%s1 + $0x138] sm:$0xf]
    %v791 = vld [vmem:[%s1 + $0x13c] sm:$0xf]
    %v792 = vld [vmem:[%s1 + $0x140] sm:$0xf]
    %v793 = vld [vmem:[%s1 + $0x144] sm:$0xf]
    %v794 = vld [vmem:[%s1 + $0x148] sm:$0xf]
    %v795 = vld [vmem:[%s1 + $0x14c] sm:$0xf]
    %v796 = vld [vmem:[%s1 + $0x150] sm:$0xf]
    %v797 = vld [vmem:[%s1 + $0x154] sm:$0xf]
    %v798 = vld [vmem:[%s1 + $0x158] sm:$0xf]
    %v799 = vld [vmem:[%s1 + $0x15c] sm:$0xf]
    %v800 = vld [vmem:[%s1 + $0x160] sm:$0xf]
    %v801 = vld [vmem:[%s1 + $0x164] sm:$0xf]
    %v802 = vld [vmem:[%s1 + $0x168] sm:$0xf]
    %v803 = vld [vmem:[%s1 + $0x16c] sm:$0xf]
    %v804 = vld [vmem:[%s1 + $0x170] sm:$0xf]
    %v805 = vld [vmem:[%s1 + $0x174] sm:$0xf]
    %v806 = vld [vmem:[%s1 + $0x178] sm:$0xf]
    %v807 = vld [vmem:[%s1 + $0x17c] sm:$0xf]
    %v808 = vld [vmem:[%s1 + $0x180] sm:$0xf]
    %v809 = vld [vmem:[%s1 + $0x184] sm:$0xf]
    %v810 = vld [vmem:[%s2] sm:$0x1]
    %v812 = vlaneseq
    %v813 = vshrl.u32 %v812, 7
    %v814 = vsub.s32 0, %v813
    %v815 = vrot.slane %v810, %v814
    %v915 = vunpack.c.l.b16 %v712
    %v916 = vunpack.c.l.b16 %v713
    %v917 = vunpack.c.l.b16 %v714
    %v918 = vunpack.c.l.b16 %v715
    %v919 = vunpack.c.l.b16 %v716
    %v920 = vunpack.c.l.b16 %v717
    %v921 = vunpack.c.l.b16 %v718
    %v922 = vunpack.c.l.b16 %v719
    %v923 = vunpack.c.l.b16 %v720
    %v924 = vunpack.c.l.b16 %v721
    %v925 = vunpack.c.l.b16 %v722
    %v926 = vunpack.c.l.b16 %v723
    %v927 = vunpack.c.l.b16 %v724
    %v928 = vunpack.c.l.b16 %v725
    %v929 = vunpack.c.l.b16 %v726
    %v930 = vunpack.c.l.b16 %v727
    %v931 = vunpack.c.l.b16 %v728
    %v932 = vunpack.c.l.b16 %v729
    %v933 = vunpack.c.l.b16 %v730
    %v934 = vunpack.c.l.b16 %v731
    %v935 = vunpack.c.l.b16 %v732
    %v936 = vunpack.c.l.b16 %v733
    %v937 = vunpack.c.l.b16 %v734
    %v938 = vunpack.c.l.b16 %v735
    %v939 = vunpack.c.l.b16 %v736
    %v940 = vunpack.c.l.b16 %v737
    %v941 = vunpack.c.l.b16 %v738
    %v942 = vunpack.c.l.b16 %v739
    %v943 = vunpack.c.l.b16 %v740
    %v944 = vunpack.c.l.b16 %v741
    %v945 = vunpack.c.l.b16 %v742
    %v946 = vunpack.c.l.b16 %v743
    %v947 = vunpack.c.l.b16 %v744
    %v948 = vunpack.c.l.b16 %v745
    %v949 = vunpack.c.l.b16 %v746
    %v950 = vunpack.c.l.b16 %v747
    %v951 = vunpack.c.l.b16 %v748
    %v952 = vunpack.c.l.b16 %v749
    %v953 = vunpack.c.l.b16 %v750
    %v954 = vunpack.c.l.b16 %v751
    %v955 = vunpack.c.l.b16 %v752
    %v956 = vunpack.c.l.b16 %v753
    %v957 = vunpack.c.l.b16 %v754
    %v958 = vunpack.c.l.b16 %v755
    %v959 = vunpack.c.l.b16 %v756
    %v960 = vunpack.c.l.b16 %v757
    %v961 = vunpack.c.l.b16 %v758
    %v962 = vunpack.c.l.b16 %v759
    %v963 = vunpack.c.l.b16 %v760
    %v964 = vunpack.c.l.b16 %v761
    %v965 = vunpack.c.l.b16 %v762
    %v966 = vunpack.c.l.b16 %v763
    %v967 = vunpack.c.l.b16 %v764
    %v968 = vunpack.c.l.b16 %v765
    %v969 = vunpack.c.l.b16 %v766
    %v970 = vunpack.c.l.b16 %v767
    %v971 = vunpack.c.l.b16 %v768
    %v972 = vunpack.c.l.b16 %v769
    %v973 = vunpack.c.l.b16 %v770
    %v974 = vunpack.c.l.b16 %v771
    %v975 = vunpack.c.l.b16 %v772
    %v976 = vunpack.c.l.b16 %v773
    %v977 = vunpack.c.l.b16 %v774
    %v978 = vunpack.c.l.b16 %v775
    %v979 = vunpack.c.l.b16 %v776
    %v980 = vunpack.c.l.b16 %v777
    %v981 = vunpack.c.l.b16 %v778
    %v982 = vunpack.c.l.b16 %v779
    %v983 = vunpack.c.l.b16 %v780
    %v984 = vunpack.c.l.b16 %v781
    %v985 = vunpack.c.l.b16 %v782
    %v986 = vunpack.c.l.b16 %v783
    %v987 = vunpack.c.l.b16 %v784
    %v988 = vunpack.c.l.b16 %v785
    %v989 = vunpack.c.l.b16 %v786
    %v990 = vunpack.c.l.b16 %v787
    %v991 = vunpack.c.l.b16 %v788
    %v992 = vunpack.c.l.b16 %v789
    %v993 = vunpack.c.l.b16 %v790
    %v994 = vunpack.c.l.b16 %v791
    %v995 = vunpack.c.l.b16 %v792
    %v996 = vunpack.c.l.b16 %v793
    %v997 = vunpack.c.l.b16 %v794
    %v998 = vunpack.c.l.b16 %v795
    %v999 = vunpack.c.l.b16 %v796
    %v1000 = vunpack.c.l.b16 %v797
    %v1001 = vunpack.c.l.b16 %v798
    %v1002 = vunpack.c.l.b16 %v799
    %v1003 = vunpack.c.l.b16 %v800
    %v1004 = vunpack.c.l.b16 %v801
    %v1005 = vunpack.c.l.b16 %v802
    %v1006 = vunpack.c.l.b16 %v803
    %v1007 = vunpack.c.l.b16 %v804
    %v1008 = vunpack.c.l.b16 %v805
    %v1009 = vunpack.c.l.b16 %v806
    %v1010 = vunpack.c.l.b16 %v807
    %v1011 = vunpack.c.l.b16 %v808
    %v1012 = vunpack.c.l.b16 %v809
    %v1013 = vpack.c.b16 %v916, %v915
    %v1014 = vpack.c.b16 %v918, %v917
    %v1015 = vpack.c.b16 %v920, %v919
    %v1016 = vpack.c.b16 %v922, %v921
    %v1017 = vpack.c.b16 %v924, %v923
    %v1018 = vpack.c.b16 %v926, %v925
    %v1019 = vpack.c.b16 %v928, %v927
    %v1020 = vpack.c.b16 %v930, %v929
    %v1021 = vpack.c.b16 %v932, %v931
    %v1022 = vpack.c.b16 %v934, %v933
    %v1023 = vpack.c.b16 %v936, %v935
    %v1024 = vpack.c.b16 %v938, %v937
    %v1025 = vpack.c.b16 %v940, %v939
    %v1026 = vpack.c.b16 %v942, %v941
    %v1027 = vpack.c.b16 %v944, %v943
    %v1028 = vpack.c.b16 %v946, %v945
    %v1029 = vpack.c.b16 %v948, %v947
    %v1030 = vpack.c.b16 %v950, %v949
    %v1031 = vpack.c.b16 %v952, %v951
    %v1032 = vpack.c.b16 %v954, %v953
    %v1033 = vpack.c.b16 %v956, %v955
    %v1034 = vpack.c.b16 %v958, %v957
    %v1035 = vpack.c.b16 %v960, %v959
    %v1036 = vpack.c.b16 %v962, %v961
    %v1037 = vpack.c.b16 %v964, %v963
    %v1038 = vpack.c.b16 %v966, %v965
    %v1039 = vpack.c.b16 %v968, %v967
    %v1040 = vpack.c.b16 %v970, %v969
    %v1041 = vpack.c.b16 %v972, %v971
    %v1042 = vpack.c.b16 %v974, %v973
    %v1043 = vpack.c.b16 %v976, %v975
    %v1044 = vpack.c.b16 %v978, %v977
    %v1045 = vpack.c.b16 %v980, %v979
    %v1046 = vpack.c.b16 %v982, %v981
    %v1047 = vpack.c.b16 %v984, %v983
    %v1048 = vpack.c.b16 %v986, %v985
    %v1049 = vpack.c.b16 %v988, %v987
    %v1050 = vpack.c.b16 %v990, %v989
    %v1051 = vpack.c.b16 %v992, %v991
    %v1052 = vpack.c.b16 %v994, %v993
    %v1053 = vpack.c.b16 %v996, %v995
    %v1054 = vpack.c.b16 %v998, %v997
    %v1055 = vpack.c.b16 %v1000, %v999
    %v1056 = vpack.c.b16 %v1002, %v1001
    %v1057 = vpack.c.b16 %v1004, %v1003
    %v1058 = vpack.c.b16 %v1006, %v1005
    %v1059 = vpack.c.b16 %v1008, %v1007
    %v1060 = vpack.c.b16 %v1010, %v1009
    %v1061 = vpack.c.b16 %v1012, %v1011
    %vm1111 = vcmask 130048
    %v1113 = vsel %vm1111, %v494, 0
    %v1116 = vsel %vm1111, %v501, 0
    %v1119 = vsel %vm1111, %v508, 0
    %v1122 = vsel %vm1111, %v515, 0
    %v1125 = vsel %vm1111, %v522, 0
    %v1128 = vsel %vm1111, %v529, 0
    %v1131 = vsel %vm1111, %v536, 0
    %v1134 = vsel %vm1111, %v543, 0
    %v1137 = vsel %vm1111, %v550, 0
    %v1140 = vsel %vm1111, %v557, 0
    %v1143 = vsel %vm1111, %v564, 0
    %v1146 = vsel %vm1111, %v571, 0
    %v1149 = vsel %vm1111, %v578, 0
    %v1152 = vsel %vm1111, %v585, 0
    %v1155 = vsel %vm1111, %v592, 0
    %v1158 = vsel %vm1111, %v599, 0
    %v1161 = vsel %vm1111, %v606, 0
    %v1164 = vsel %vm1111, %v613, 0
    %v1167 = vsel %vm1111, %v620, 0
    %v1170 = vsel %vm1111, %v627, 0
    %v1173 = vsel %vm1111, %v634, 0
    %v1176 = vsel %vm1111, %v641, 0
    %v1179 = vsel %vm1111, %v648, 0
    %v1182 = vsel %vm1111, %v655, 0
    %v1185 = vsel %vm1111, %v662, 0
    %v1188 = vsel %vm1111, %v669, 0
    %v1191 = vsel %vm1111, %v676, 0
    %v1194 = vsel %vm1111, %v683, 0
    %v1197 = vsel %vm1111, %v690, 0
    %v1200 = vsel %vm1111, %v697, 0
    %v1203 = vsel %vm1111, %v704, 0
    %v1206 = vsel %vm1111, %v711, 0
    %1208 = vmatprep.subr.bf16.mxu0 0
    %1209 = vmatpush1.bf16.msra.mxu0 %v1013
    %1210 = vmatprep.subr.bf16.mxu0 0
    %1211 = vmatpush1.bf16.msra.mxu0 %v1014
    %1212 = vmatprep.subr.bf16.mxu0 0
    %1213 = vmatpush1.bf16.msra.mxu0 %v1015
    %1214 = vmatprep.subr.bf16.mxu0 0
    %1215 = vmatpush1.bf16.msra.mxu0 %v1016
    %1216 = vmatprep.subr.bf16.mxu0 0
    %1217 = vmatpush1.bf16.msra.mxu0 %v1017
    %1218 = vmatprep.subr.bf16.mxu0 0
    %1219 = vmatpush1.bf16.msra.mxu0 %v1018
    %1220 = vmatprep.subr.bf16.mxu0 0
    %1221 = vmatpush1.bf16.msra.mxu0 %v1019
    %1222 = vmatprep.subr.bf16.mxu0 0
    %1223 = vmatpush1.bf16.msra.mxu0 %v1020
    %1224 = vmatprep.subr.bf16.mxu0 0
    %1225 = vmatpush1.bf16.msra.mxu0 %v1021
    %1226 = vmatprep.subr.bf16.mxu0 0
    %1227 = vmatpush1.bf16.msra.mxu0 %v1022
    %1228 = vmatprep.subr.bf16.mxu0 0
    %1229 = vmatpush1.bf16.msra.mxu0 %v1023
    %1230 = vmatprep.subr.bf16.mxu0 0
    %1231 = vmatpush1.bf16.msra.mxu0 %v1024
    %1232 = vmatprep.subr.bf16.mxu0 0
    %1233 = vmatpush1.bf16.msra.mxu0 %v1025
    %1234 = vmatprep.subr.bf16.mxu0 0
    %1235 = vmatpush1.bf16.msra.mxu0 %v1026
    %1236 = vmatprep.subr.bf16.mxu0 0
    %1237 = vmatpush1.bf16.msra.mxu0 %v1027
    %1238 = vmatprep.subr.bf16.mxu0 0
    %1239 = vmatpush1.bf16.msra.mxu0 %v1028
    %1240 = vmatprep.mubr.bf16.mxu0 %v489
    %1241 = vmatmul.mubr.bf16.gmra.mrb[0].mxu0 %v488
    %v1242 = vpop.f32.mrb[0].mxu0
    %v1243 = vadd.f32 %v815, %v1242
    %v1244 = vpop.f32.mrb[0].mxu0
    %v1245 = vpop.f32.mrb[0].mxu0
    %v1246 = vadd.f32 %v815, %v1245
    %v1247 = vpop.f32.mrb[0].mxu0
    %1248 = vmatprep.mubr.bf16.mxu0 %v496
    %1249 = vmatmul.mubr.bf16.gmra.mrb[0].mxu0 %v495
    %v1250 = vpop.f32.mrb[0].mxu0
    %v1251 = vadd.f32 %v815, %v1250
    %v1252 = vpop.f32.mrb[0].mxu0
    %v1253 = vpop.f32.mrb[0].mxu0
    %v1254 = vadd.f32 %v815, %v1253
    %v1255 = vpop.f32.mrb[0].mxu0
    %1256 = vmatprep.mubr.bf16.mxu0 %v503
    %1257 = vmatmul.mubr.bf16.gmra.mrb[0].mxu0 %v502
    %v1258 = vpop.f32.mrb[0].mxu0
    %v1259 = vadd.f32 %v815, %v1258
    %v1260 = vpop.f32.mrb[0].mxu0
    %v1261 = vpop.f32.mrb[0].mxu0
    %v1262 = vadd.f32 %v815, %v1261
    %v1263 = vpop.f32.mrb[0].mxu0
    %1264 = vmatprep.mubr.bf16.mxu0 %v510
    %1265 = vmatmul.mubr.bf16.gmra.mrb[0].mxu0 %v509
    %v1266 = vpop.f32.mrb[0].mxu0
    %v1267 = vadd.f32 %v815, %v1266
    %v1268 = vpop.f32.mrb[0].mxu0
    %v1269 = vpop.f32.mrb[0].mxu0
    %v1270 = vadd.f32 %v815, %v1269
    %v1271 = vpop.f32.mrb[0].mxu0
    %1272 = vmatprep.mubr.bf16.mxu0 %v517
    %1273 = vmatmul.mubr.bf16.gmra.mrb[0].mxu0 %v516
    %v1274 = vpop.f32.mrb[0].mxu0
    %v1275 = vadd.f32 %v815, %v1274
    %v1276 = vpop.f32.mrb[0].mxu0
    %v1277 = vpop.f32.mrb[0].mxu0
    %v1278 = vadd.f32 %v815, %v1277
    %v1279 = vpop.f32.mrb[0].mxu0
    %1280 = vmatprep.mubr.bf16.mxu0 %v524
    %1281 = vmatmul.mubr.bf16.gmra.mrb[0].mxu0 %v523
    %v1282 = vpop.f32.mrb[0].mxu0
    %v1283 = vadd.f32 %v815, %v1282
    %v1284 = vpop.f32.mrb[0].mxu0
    %v1285 = vpop.f32.mrb[0].mxu0
    %v1286 = vadd.f32 %v815, %v1285
    %v1287 = vpop.f32.mrb[0].mxu0
    %1288 = vmatprep.mubr.bf16.mxu0 %v531
    %1289 = vmatmul.mubr.bf16.gmra.mrb[0].mxu0 %v530
    %v1290 = vpop.f32.mrb[0].mxu0
    %v1291 = vadd.f32 %v815, %v1290
    %v1292 = vpop.f32.mrb[0].mxu0
    %v1293 = vpop.f32.mrb[0].mxu0
    %v1294 = vadd.f32 %v815, %v1293
    %v1295 = vpop.f32.mrb[0].mxu0
    %1296 = vmatprep.mubr.bf16.mxu0 %v538
    %1297 = vmatmul.mubr.bf16.gmra.mrb[0].mxu0 %v537
    %v1298 = vpop.f32.mrb[0].mxu0
    %v1299 = vadd.f32 %v815, %v1298
    %v1300 = vpop.f32.mrb[0].mxu0
    %v1301 = vpop.f32.mrb[0].mxu0
    %v1302 = vadd.f32 %v815, %v1301
    %v1303 = vpop.f32.mrb[0].mxu0
    %1304 = vmatprep.mubr.bf16.mxu0 %v545
    %1305 = vmatmul.mubr.bf16.gmra.mrb[0].mxu0 %v544
    %v1306 = vpop.f32.mrb[0].mxu0
    %v1307 = vadd.f32 %v815, %v1306
    %v1308 = vpop.f32.mrb[0].mxu0
    %v1309 = vpop.f32.mrb[0].mxu0
    %v1310 = vadd.f32 %v815, %v1309
    %v1311 = vpop.f32.mrb[0].mxu0
    %1312 = vmatprep.mubr.bf16.mxu0 %v552
    %1313 = vmatmul.mubr.bf16.gmra.mrb[0].mxu0 %v551
    %v1314 = vpop.f32.mrb[0].mxu0
    %v1315 = vadd.f32 %v815, %v1314
    %v1316 = vpop.f32.mrb[0].mxu0
    %v1317 = vpop.f32.mrb[0].mxu0
    %v1318 = vadd.f32 %v815, %v1317
    %v1319 = vpop.f32.mrb[0].mxu0
    %1320 = vmatprep.mubr.bf16.mxu0 %v559
    %1321 = vmatmul.mubr.bf16.gmra.mrb[0].mxu0 %v558
    %v1322 = vpop.f32.mrb[0].mxu0
    %v1323 = vadd.f32 %v815, %v1322
    %v1324 = vpop.f32.mrb[0].mxu0
    %v1325 = vpop.f32.mrb[0].mxu0
    %v1326 = vadd.f32 %v815, %v1325
    %v1327 = vpop.f32.mrb[0].mxu0
    %1328 = vmatprep.mubr.bf16.mxu0 %v566
    %1329 = vmatmul.mubr.bf16.gmra.mrb[0].mxu0 %v565
    %v1330 = vpop.f32.mrb[0].mxu0
    %v1331 = vadd.f32 %v815, %v1330
    %v1332 = vpop.f32.mrb[0].mxu0
    %v1333 = vpop.f32.mrb[0].mxu0
    %v1334 = vadd.f32 %v815, %v1333
    %v1335 = vpop.f32.mrb[0].mxu0
    %1336 = vmatprep.mubr.bf16.mxu0 %v573
    %1337 = vmatmul.mubr.bf16.gmra.mrb[0].mxu0 %v572
    %v1338 = vpop.f32.mrb[0].mxu0
    %v1339 = vadd.f32 %v815, %v1338
    %v1340 = vpop.f32.mrb[0].mxu0
    %v1341 = vpop.f32.mrb[0].mxu0
    %v1342 = vadd.f32 %v815, %v1341
    %v1343 = vpop.f32.mrb[0].mxu0
    %1344 = vmatprep.mubr.bf16.mxu0 %v580
    %1345 = vmatmul.mubr.bf16.gmra.mrb[0].mxu0 %v579
    %v1346 = vpop.f32.mrb[0].mxu0
    %v1347 = vadd.f32 %v815, %v1346
    %v1348 = vpop.f32.mrb[0].mxu0
    %v1349 = vpop.f32.mrb[0].mxu0
    %v1350 = vadd.f32 %v815, %v1349
    %v1351 = vpop.f32.mrb[0].mxu0
    %1352 = vmatprep.mubr.bf16.mxu0 %v587
    %1353 = vmatmul.mubr.bf16.gmra.mrb[0].mxu0 %v586
    %v1354 = vpop.f32.mrb[0].mxu0
    %v1355 = vadd.f32 %v815, %v1354
    %v1356 = vpop.f32.mrb[0].mxu0
    %v1357 = vpop.f32.mrb[0].mxu0
    %v1358 = vadd.f32 %v815, %v1357
    %v1359 = vpop.f32.mrb[0].mxu0
    %1360 = vmatprep.mubr.bf16.mxu0 %v594
    %1361 = vmatmul.mubr.bf16.gmra.mrb[0].mxu0 %v593
    %v1362 = vpop.f32.mrb[0].mxu0
    %v1363 = vadd.f32 %v815, %v1362
    %v1364 = vpop.f32.mrb[0].mxu0
    %v1365 = vpop.f32.mrb[0].mxu0
    %v1366 = vadd.f32 %v815, %v1365
    %v1367 = vpop.f32.mrb[0].mxu0
    %1368 = vmatprep.mubr.bf16.mxu0 %v601
    %1369 = vmatmul.mubr.bf16.gmra.mrb[0].mxu0 %v600
    %v1370 = vpop.f32.mrb[0].mxu0
    %v1371 = vadd.f32 %v815, %v1370
    %v1372 = vpop.f32.mrb[0].mxu0
    %v1373 = vpop.f32.mrb[0].mxu0
    %v1374 = vadd.f32 %v815, %v1373
    %v1375 = vpop.f32.mrb[0].mxu0
    %1376 = vmatprep.mubr.bf16.mxu0 %v608
    %1377 = vmatmul.mubr.bf16.gmra.mrb[0].mxu0 %v607
    %v1378 = vpop.f32.mrb[0].mxu0
    %v1379 = vadd.f32 %v815, %v1378
    %v1380 = vpop.f32.mrb[0].mxu0
    %v1381 = vpop.f32.mrb[0].mxu0
    %v1382 = vadd.f32 %v815, %v1381
    %v1383 = vpop.f32.mrb[0].mxu0
    %1384 = vmatprep.mubr.bf16.mxu0 %v615
    %1385 = vmatmul.mubr.bf16.gmra.mrb[0].mxu0 %v614
    %v1386 = vpop.f32.mrb[0].mxu0
    %v1387 = vadd.f32 %v815, %v1386
    %v1388 = vpop.f32.mrb[0].mxu0
    %v1389 = vpop.f32.mrb[0].mxu0
    %v1390 = vadd.f32 %v815, %v1389
    %v1391 = vpop.f32.mrb[0].mxu0
    %1392 = vmatprep.mubr.bf16.mxu0 %v622
    %1393 = vmatmul.mubr.bf16.gmra.mrb[0].mxu0 %v621
    %v1394 = vpop.f32.mrb[0].mxu0
    %v1395 = vadd.f32 %v815, %v1394
    %v1396 = vpop.f32.mrb[0].mxu0
    %v1397 = vpop.f32.mrb[0].mxu0
    %v1398 = vadd.f32 %v815, %v1397
    %v1399 = vpop.f32.mrb[0].mxu0
    %1400 = vmatprep.mubr.bf16.mxu0 %v629
    %1401 = vmatmul.mubr.bf16.gmra.mrb[0].mxu0 %v628
    %v1402 = vpop.f32.mrb[0].mxu0
    %v1403 = vadd.f32 %v815, %v1402
    %v1404 = vpop.f32.mrb[0].mxu0
    %v1405 = vpop.f32.mrb[0].mxu0
    %v1406 = vadd.f32 %v815, %v1405
    %v1407 = vpop.f32.mrb[0].mxu0
    %1408 = vmatprep.mubr.bf16.mxu0 %v636
    %1409 = vmatmul.mubr.bf16.gmra.mrb[0].mxu0 %v635
    %v1410 = vpop.f32.mrb[0].mxu0
    %v1411 = vadd.f32 %v815, %v1410
    %v1412 = vpop.f32.mrb[0].mxu0
    %v1413 = vpop.f32.mrb[0].mxu0
    %v1414 = vadd.f32 %v815, %v1413
    %v1415 = vpop.f32.mrb[0].mxu0
    %1416 = vmatprep.mubr.bf16.mxu0 %v643
    %1417 = vmatmul.mubr.bf16.gmra.mrb[0].mxu0 %v642
    %v1418 = vpop.f32.mrb[0].mxu0
    %v1419 = vadd.f32 %v815, %v1418
    %v1420 = vpop.f32.mrb[0].mxu0
    %v1421 = vpop.f32.mrb[0].mxu0
    %v1422 = vadd.f32 %v815, %v1421
    %v1423 = vpop.f32.mrb[0].mxu0
    %1424 = vmatprep.mubr.bf16.mxu0 %v650
    %1425 = vmatmul.mubr.bf16.gmra.mrb[0].mxu0 %v649
    %v1426 = vpop.f32.mrb[0].mxu0
    %v1427 = vadd.f32 %v815, %v1426
    %v1428 = vpop.f32.mrb[0].mxu0
    %v1429 = vpop.f32.mrb[0].mxu0
    %v1430 = vadd.f32 %v815, %v1429
    %v1431 = vpop.f32.mrb[0].mxu0
    %1432 = vmatprep.mubr.bf16.mxu0 %v657
    %1433 = vmatmul.mubr.bf16.gmra.mrb[0].mxu0 %v656
    %v1434 = vpop.f32.mrb[0].mxu0
    %v1435 = vadd.f32 %v815, %v1434
    %v1436 = vpop.f32.mrb[0].mxu0
    %v1437 = vpop.f32.mrb[0].mxu0
    %v1438 = vadd.f32 %v815, %v1437
    %v1439 = vpop.f32.mrb[0].mxu0
    %1440 = vmatprep.mubr.bf16.mxu0 %v664
    %1441 = vmatmul.mubr.bf16.gmra.mrb[0].mxu0 %v663
    %v1442 = vpop.f32.mrb[0].mxu0
    %v1443 = vadd.f32 %v815, %v1442
    %v1444 = vpop.f32.mrb[0].mxu0
    %v1445 = vpop.f32.mrb[0].mxu0
    %v1446 = vadd.f32 %v815, %v1445
    %v1447 = vpop.f32.mrb[0].mxu0
    %1448 = vmatprep.mubr.bf16.mxu0 %v671
    %1449 = vmatmul.mubr.bf16.gmra.mrb[0].mxu0 %v670
    %v1450 = vpop.f32.mrb[0].mxu0
    %v1451 = vadd.f32 %v815, %v1450
    %v1452 = vpop.f32.mrb[0].mxu0
    %v1453 = vpop.f32.mrb[0].mxu0
    %v1454 = vadd.f32 %v815, %v1453
    %v1455 = vpop.f32.mrb[0].mxu0
    %1456 = vmatprep.mubr.bf16.mxu0 %v678
    %1457 = vmatmul.mubr.bf16.gmra.mrb[0].mxu0 %v677
    %v1458 = vpop.f32.mrb[0].mxu0
    %v1459 = vadd.f32 %v815, %v1458
    %v1460 = vpop.f32.mrb[0].mxu0
    %v1461 = vpop.f32.mrb[0].mxu0
    %v1462 = vadd.f32 %v815, %v1461
    %v1463 = vpop.f32.mrb[0].mxu0
    %1464 = vmatprep.mubr.bf16.mxu0 %v685
    %1465 = vmatmul.mubr.bf16.gmra.mrb[0].mxu0 %v684
    %v1466 = vpop.f32.mrb[0].mxu0
    %v1467 = vadd.f32 %v815, %v1466
    %v1468 = vpop.f32.mrb[0].mxu0
    %v1469 = vpop.f32.mrb[0].mxu0
    %v1470 = vadd.f32 %v815, %v1469
    %v1471 = vpop.f32.mrb[0].mxu0
    %1472 = vmatprep.mubr.bf16.mxu0 %v692
    %1473 = vmatmul.mubr.bf16.gmra.mrb[0].mxu0 %v691
    %v1474 = vpop.f32.mrb[0].mxu0
    %v1475 = vadd.f32 %v815, %v1474
    %v1476 = vpop.f32.mrb[0].mxu0
    %v1477 = vpop.f32.mrb[0].mxu0
    %v1478 = vadd.f32 %v815, %v1477
    %v1479 = vpop.f32.mrb[0].mxu0
    %1480 = vmatprep.mubr.bf16.mxu0 %v699
    %1481 = vmatmul.mubr.bf16.gmra.mrb[0].mxu0 %v698
    %v1482 = vpop.f32.mrb[0].mxu0
    %v1483 = vadd.f32 %v815, %v1482
    %v1484 = vpop.f32.mrb[0].mxu0
    %v1485 = vpop.f32.mrb[0].mxu0
    %v1486 = vadd.f32 %v815, %v1485
    %v1487 = vpop.f32.mrb[0].mxu0
    %1488 = vmatprep.mubr.bf16.mxu0 %v706
    %1489 = vmatmul.mubr.bf16.gmra.mrb[0].mxu0 %v705
    %v1490 = vpop.f32.mrb[0].mxu0
    %v1491 = vadd.f32 %v815, %v1490
    %v1492 = vpop.f32.mrb[0].mxu0
    %v1493 = vpop.f32.mrb[0].mxu0
    %v1494 = vadd.f32 %v815, %v1493
    %v1495 = vpop.f32.mrb[0].mxu0
    %1496 = vdwg.mxu0
    %1497 = vmatprep.subr.bf16.mxu0 0
    %1498 = vmatpush1.bf16.msra.mxu0 %v1029
    %1499 = vmatprep.subr.bf16.mxu0 0
    %1500 = vmatpush1.bf16.msra.mxu0 %v1030
    %1501 = vmatprep.subr.bf16.mxu0 0
    %1502 = vmatpush1.bf16.msra.mxu0 %v1031
    %1503 = vmatprep.subr.bf16.mxu0 0
    %1504 = vmatpush1.bf16.msra.mxu0 %v1032
    %1505 = vmatprep.subr.bf16.mxu0 0
    %1506 = vmatpush1.bf16.msra.mxu0 %v1033
    %1507 = vmatprep.subr.bf16.mxu0 0
    %1508 = vmatpush1.bf16.msra.mxu0 %v1034
    %1509 = vmatprep.subr.bf16.mxu0 0
    %1510 = vmatpush1.bf16.msra.mxu0 %v1035
    %1511 = vmatprep.subr.bf16.mxu0 0
    %1512 = vmatpush1.bf16.msra.mxu0 %v1036
    %1513 = vmatprep.subr.bf16.mxu0 0
    %1514 = vmatpush1.bf16.msra.mxu0 %v1037
    %1515 = vmatprep.subr.bf16.mxu0 0
    %1516 = vmatpush1.bf16.msra.mxu0 %v1038
    %1517 = vmatprep.subr.bf16.mxu0 0
    %1518 = vmatpush1.bf16.msra.mxu0 %v1039
    %1519 = vmatprep.subr.bf16.mxu0 0
    %1520 = vmatpush1.bf16.msra.mxu0 %v1040
    %1521 = vmatprep.subr.bf16.mxu0 0
    %1522 = vmatpush1.bf16.msra.mxu0 %v1041
    %1523 = vmatprep.subr.bf16.mxu0 0
    %1524 = vmatpush1.bf16.msra.mxu0 %v1042
    %1525 = vmatprep.subr.bf16.mxu0 0
    %1526 = vmatpush1.bf16.msra.mxu0 %v1043
    %1527 = vmatprep.subr.bf16.mxu0 0
    %1528 = vmatpush1.bf16.msra.mxu0 %v1044
    %1529 = vmatprep.mubr.bf16.mxu0 %v491
    %1530 = vmatmul.mubr.bf16.gmra.mrb[0].mxu0 %v490
    %v1531 = vpop.f32.mrb[0].mxu0
    %v1532 = vadd.f32 %v1243, %v1531
    %v1533 = vpop.f32.mrb[0].mxu0
    %v1534 = vpop.f32.mrb[0].mxu0
    %v1535 = vadd.f32 %v1246, %v1534
    %v1536 = vpop.f32.mrb[0].mxu0
    %1537 = vmatprep.mubr.bf16.mxu0 %v498
    %1538 = vmatmul.mubr.bf16.gmra.mrb[0].mxu0 %v497
    %v1539 = vpop.f32.mrb[0].mxu0
    %v1540 = vadd.f32 %v1251, %v1539
    %v1541 = vpop.f32.mrb[0].mxu0
    %v1542 = vpop.f32.mrb[0].mxu0
    %v1543 = vadd.f32 %v1254, %v1542
    %v1544 = vpop.f32.mrb[0].mxu0
    %1545 = vmatprep.mubr.bf16.mxu0 %v505
    %1546 = vmatmul.mubr.bf16.gmra.mrb[0].mxu0 %v504
    %v1547 = vpop.f32.mrb[0].mxu0
    %v1548 = vadd.f32 %v1259, %v1547
    %v1549 = vpop.f32.mrb[0].mxu0
    %v1550 = vpop.f32.mrb[0].mxu0
    %v1551 = vadd.f32 %v1262, %v1550
    %v1552 = vpop.f32.mrb[0].mxu0
    %1553 = vmatprep.mubr.bf16.mxu0 %v512
    %1554 = vmatmul.mubr.bf16.gmra.mrb[0].mxu0 %v511
    %v1555 = vpop.f32.mrb[0].mxu0
    %v1556 = vadd.f32 %v1267, %v1555
    %v1557 = vpop.f32.mrb[0].mxu0
    %v1558 = vpop.f32.mrb[0].mxu0
    %v1559 = vadd.f32 %v1270, %v1558
    %v1560 = vpop.f32.mrb[0].mxu0
    %1561 = vmatprep.mubr.bf16.mxu0 %v519
    %1562 = vmatmul.mubr.bf16.gmra.mrb[0].mxu0 %v518
    %v1563 = vpop.f32.mrb[0].mxu0
    %v1564 = vadd.f32 %v1275, %v1563
    %v1565 = vpop.f32.mrb[0].mxu0
    %v1566 = vpop.f32.mrb[0].mxu0
    %v1567 = vadd.f32 %v1278, %v1566
    %v1568 = vpop.f32.mrb[0].mxu0
    %1569 = vmatprep.mubr.bf16.mxu0 %v526
    %1570 = vmatmul.mubr.bf16.gmra.mrb[0].mxu0 %v525
    %v1571 = vpop.f32.mrb[0].mxu0
    %v1572 = vadd.f32 %v1283, %v1571
    %v1573 = vpop.f32.mrb[0].mxu0
    %v1574 = vpop.f32.mrb[0].mxu0
    %v1575 = vadd.f32 %v1286, %v1574
    %v1576 = vpop.f32.mrb[0].mxu0
    %1577 = vmatprep.mubr.bf16.mxu0 %v533
    %1578 = vmatmul.mubr.bf16.gmra.mrb[0].mxu0 %v532
    %v1579 = vpop.f32.mrb[0].mxu0
    %v1580 = vadd.f32 %v1291, %v1579
    %v1581 = vpop.f32.mrb[0].mxu0
    %v1582 = vpop.f32.mrb[0].mxu0
    %v1583 = vadd.f32 %v1294, %v1582
    %v1584 = vpop.f32.mrb[0].mxu0
    %1585 = vmatprep.mubr.bf16.mxu0 %v540
    %1586 = vmatmul.mubr.bf16.gmra.mrb[0].mxu0 %v539
    %v1587 = vpop.f32.mrb[0].mxu0
    %v1588 = vadd.f32 %v1299, %v1587
    %v1589 = vpop.f32.mrb[0].mxu0
    %v1590 = vpop.f32.mrb[0].mxu0
    %v1591 = vadd.f32 %v1302, %v1590
    %v1592 = vpop.f32.mrb[0].mxu0
    %1593 = vmatprep.mubr.bf16.mxu0 %v547
    %1594 = vmatmul.mubr.bf16.gmra.mrb[0].mxu0 %v546
    %v1595 = vpop.f32.mrb[0].mxu0
    %v1596 = vadd.f32 %v1307, %v1595
    %v1597 = vpop.f32.mrb[0].mxu0
    %v1598 = vpop.f32.mrb[0].mxu0
    %v1599 = vadd.f32 %v1310, %v1598
    %v1600 = vpop.f32.mrb[0].mxu0
    %1601 = vmatprep.mubr.bf16.mxu0 %v554
    %1602 = vmatmul.mubr.bf16.gmra.mrb[0].mxu0 %v553
    %v1603 = vpop.f32.mrb[0].mxu0
    %v1604 = vadd.f32 %v1315, %v1603
    %v1605 = vpop.f32.mrb[0].mxu0
    %v1606 = vpop.f32.mrb[0].mxu0
    %v1607 = vadd.f32 %v1318, %v1606
    %v1608 = vpop.f32.mrb[0].mxu0
    %1609 = vmatprep.mubr.bf16.mxu0 %v561
    %1610 = vmatmul.mubr.bf16.gmra.mrb[0].mxu0 %v560
    %v1611 = vpop.f32.mrb[0].mxu0
    %v1612 = vadd.f32 %v1323, %v1611
    %v1613 = vpop.f32.mrb[0].mxu0
    %v1614 = vpop.f32.mrb[0].mxu0
    %v1615 = vadd.f32 %v1326, %v1614
    %v1616 = vpop.f32.mrb[0].mxu0
    %1617 = vmatprep.mubr.bf16.mxu0 %v568
    %1618 = vmatmul.mubr.bf16.gmra.mrb[0].mxu0 %v567
    %v1619 = vpop.f32.mrb[0].mxu0
    %v1620 = vadd.f32 %v1331, %v1619
    %v1621 = vpop.f32.mrb[0].mxu0
    %v1622 = vpop.f32.mrb[0].mxu0
    %v1623 = vadd.f32 %v1334, %v1622
    %v1624 = vpop.f32.mrb[0].mxu0
    %1625 = vmatprep.mubr.bf16.mxu0 %v575
    %1626 = vmatmul.mubr.bf16.gmra.mrb[0].mxu0 %v574
    %v1627 = vpop.f32.mrb[0].mxu0
    %v1628 = vadd.f32 %v1339, %v1627
    %v1629 = vpop.f32.mrb[0].mxu0
    %v1630 = vpop.f32.mrb[0].mxu0
    %v1631 = vadd.f32 %v1342, %v1630
    %v1632 = vpop.f32.mrb[0].mxu0
    %1633 = vmatprep.mubr.bf16.mxu0 %v582
    %1634 = vmatmul.mubr.bf16.gmra.mrb[0].mxu0 %v581
    %v1635 = vpop.f32.mrb[0].mxu0
    %v1636 = vadd.f32 %v1347, %v1635
    %v1637 = vpop.f32.mrb[0].mxu0
    %v1638 = vpop.f32.mrb[0].mxu0
    %v1639 = vadd.f32 %v1350, %v1638
    %v1640 = vpop.f32.mrb[0].mxu0
    %1641 = vmatprep.mubr.bf16.mxu0 %v589
    %1642 = vmatmul.mubr.bf16.gmra.mrb[0].mxu0 %v588
    %v1643 = vpop.f32.mrb[0].mxu0
    %v1644 = vadd.f32 %v1355, %v1643
    %v1645 = vpop.f32.mrb[0].mxu0
    %v1646 = vpop.f32.mrb[0].mxu0
    %v1647 = vadd.f32 %v1358, %v1646
    %v1648 = vpop.f32.mrb[0].mxu0
    %1649 = vmatprep.mubr.bf16.mxu0 %v596
    %1650 = vmatmul.mubr.bf16.gmra.mrb[0].mxu0 %v595
    %v1651 = vpop.f32.mrb[0].mxu0
    %v1652 = vadd.f32 %v1363, %v1651
    %v1653 = vpop.f32.mrb[0].mxu0
    %v1654 = vpop.f32.mrb[0].mxu0
    %v1655 = vadd.f32 %v1366, %v1654
    %v1656 = vpop.f32.mrb[0].mxu0
    %1657 = vmatprep.mubr.bf16.mxu0 %v603
    %1658 = vmatmul.mubr.bf16.gmra.mrb[0].mxu0 %v602
    %v1659 = vpop.f32.mrb[0].mxu0
    %v1660 = vadd.f32 %v1371, %v1659
    %v1661 = vpop.f32.mrb[0].mxu0
    %v1662 = vpop.f32.mrb[0].mxu0
    %v1663 = vadd.f32 %v1374, %v1662
    %v1664 = vpop.f32.mrb[0].mxu0
    %1665 = vmatprep.mubr.bf16.mxu0 %v610
    %1666 = vmatmul.mubr.bf16.gmra.mrb[0].mxu0 %v609
    %v1667 = vpop.f32.mrb[0].mxu0
    %v1668 = vadd.f32 %v1379, %v1667
    %v1669 = vpop.f32.mrb[0].mxu0
    %v1670 = vpop.f32.mrb[0].mxu0
    %v1671 = vadd.f32 %v1382, %v1670
    %v1672 = vpop.f32.mrb[0].mxu0
    %1673 = vmatprep.mubr.bf16.mxu0 %v617
    %1674 = vmatmul.mubr.bf16.gmra.mrb[0].mxu0 %v616
    %v1675 = vpop.f32.mrb[0].mxu0
    %v1676 = vadd.f32 %v1387, %v1675
    %v1677 = vpop.f32.mrb[0].mxu0
    %v1678 = vpop.f32.mrb[0].mxu0
    %v1679 = vadd.f32 %v1390, %v1678
    %v1680 = vpop.f32.mrb[0].mxu0
    %1681 = vmatprep.mubr.bf16.mxu0 %v624
    %1682 = vmatmul.mubr.bf16.gmra.mrb[0].mxu0 %v623
    %v1683 = vpop.f32.mrb[0].mxu0
    %v1684 = vadd.f32 %v1395, %v1683
    %v1685 = vpop.f32.mrb[0].mxu0
    %v1686 = vpop.f32.mrb[0].mxu0
    %v1687 = vadd.f32 %v1398, %v1686
    %v1688 = vpop.f32.mrb[0].mxu0
    %1689 = vmatprep.mubr.bf16.mxu0 %v631
    %1690 = vmatmul.mubr.bf16.gmra.mrb[0].mxu0 %v630
    %v1691 = vpop.f32.mrb[0].mxu0
    %v1692 = vadd.f32 %v1403, %v1691
    %v1693 = vpop.f32.mrb[0].mxu0
    %v1694 = vpop.f32.mrb[0].mxu0
    %v1695 = vadd.f32 %v1406, %v1694
    %v1696 = vpop.f32.mrb[0].mxu0
    %1697 = vmatprep.mubr.bf16.mxu0 %v638
    %1698 = vmatmul.mubr.bf16.gmra.mrb[0].mxu0 %v637
    %v1699 = vpop.f32.mrb[0].mxu0
    %v1700 = vadd.f32 %v1411, %v1699
    %v1701 = vpop.f32.mrb[0].mxu0
    %v1702 = vpop.f32.mrb[0].mxu0
    %v1703 = vadd.f32 %v1414, %v1702
    %v1704 = vpop.f32.mrb[0].mxu0
    %1705 = vmatprep.mubr.bf16.mxu0 %v645
    %1706 = vmatmul.mubr.bf16.gmra.mrb[0].mxu0 %v644
    %v1707 = vpop.f32.mrb[0].mxu0
    %v1708 = vadd.f32 %v1419, %v1707
    %v1709 = vpop.f32.mrb[0].mxu0
    %v1710 = vpop.f32.mrb[0].mxu0
    %v1711 = vadd.f32 %v1422, %v1710
    %v1712 = vpop.f32.mrb[0].mxu0
    %1713 = vmatprep.mubr.bf16.mxu0 %v652
    %1714 = vmatmul.mubr.bf16.gmra.mrb[0].mxu0 %v651
    %v1715 = vpop.f32.mrb[0].mxu0
    %v1716 = vadd.f32 %v1427, %v1715
    %v1717 = vpop.f32.mrb[0].mxu0
    %v1718 = vpop.f32.mrb[0].mxu0
    %v1719 = vadd.f32 %v1430, %v1718
    %v1720 = vpop.f32.mrb[0].mxu0
    %1721 = vmatprep.mubr.bf16.mxu0 %v659
    %1722 = vmatmul.mubr.bf16.gmra.mrb[0].mxu0 %v658
    %v1723 = vpop.f32.mrb[0].mxu0
    %v1724 = vadd.f32 %v1435, %v1723
    %v1725 = vpop.f32.mrb[0].mxu0
    %v1726 = vpop.f32.mrb[0].mxu0
    %v1727 = vadd.f32 %v1438, %v1726
    %v1728 = vpop.f32.mrb[0].mxu0
    %1729 = vmatprep.mubr.bf16.mxu0 %v666
    %1730 = vmatmul.mubr.bf16.gmra.mrb[0].mxu0 %v665
    %v1731 = vpop.f32.mrb[0].mxu0
    %v1732 = vadd.f32 %v1443, %v1731
    %v1733 = vpop.f32.mrb[0].mxu0
    %v1734 = vpop.f32.mrb[0].mxu0
    %v1735 = vadd.f32 %v1446, %v1734
    %v1736 = vpop.f32.mrb[0].mxu0
    %1737 = vmatprep.mubr.bf16.mxu0 %v673
    %1738 = vmatmul.mubr.bf16.gmra.mrb[0].mxu0 %v672
    %v1739 = vpop.f32.mrb[0].mxu0
    %v1740 = vadd.f32 %v1451, %v1739
    %v1741 = vpop.f32.mrb[0].mxu0
    %v1742 = vpop.f32.mrb[0].mxu0
    %v1743 = vadd.f32 %v1454, %v1742
    %v1744 = vpop.f32.mrb[0].mxu0
    %1745 = vmatprep.mubr.bf16.mxu0 %v680
    %1746 = vmatmul.mubr.bf16.gmra.mrb[0].mxu0 %v679
    %v1747 = vpop.f32.mrb[0].mxu0
    %v1748 = vadd.f32 %v1459, %v1747
    %v1749 = vpop.f32.mrb[0].mxu0
    %v1750 = vpop.f32.mrb[0].mxu0
    %v1751 = vadd.f32 %v1462, %v1750
    %v1752 = vpop.f32.mrb[0].mxu0
    %1753 = vmatprep.mubr.bf16.mxu0 %v687
    %1754 = vmatmul.mubr.bf16.gmra.mrb[0].mxu0 %v686
    %v1755 = vpop.f32.mrb[0].mxu0
    %v1756 = vadd.f32 %v1467, %v1755
    %v1757 = vpop.f32.mrb[0].mxu0
    %v1758 = vpop.f32.mrb[0].mxu0
    %v1759 = vadd.f32 %v1470, %v1758
    %v1760 = vpop.f32.mrb[0].mxu0
    %1761 = vmatprep.mubr.bf16.mxu0 %v694
    %1762 = vmatmul.mubr.bf16.gmra.mrb[0].mxu0 %v693
    %v1763 = vpop.f32.mrb[0].mxu0
    %v1764 = vadd.f32 %v1475, %v1763
    %v1765 = vpop.f32.mrb[0].mxu0
    %v1766 = vpop.f32.mrb[0].mxu0
    %v1767 = vadd.f32 %v1478, %v1766
    %v1768 = vpop.f32.mrb[0].mxu0
    %1769 = vmatprep.mubr.bf16.mxu0 %v701
    %1770 = vmatmul.mubr.bf16.gmra.mrb[0].mxu0 %v700
    %v1771 = vpop.f32.mrb[0].mxu0
    %v1772 = vadd.f32 %v1483, %v1771
    %v1773 = vpop.f32.mrb[0].mxu0
    %v1774 = vpop.f32.mrb[0].mxu0
    %v1775 = vadd.f32 %v1486, %v1774
    %v1776 = vpop.f32.mrb[0].mxu0
    %1777 = vmatprep.mubr.bf16.mxu0 %v708
    %1778 = vmatmul.mubr.bf16.gmra.mrb[0].mxu0 %v707
    %v1779 = vpop.f32.mrb[0].mxu0
    %v1780 = vadd.f32 %v1491, %v1779
    %v1781 = vpop.f32.mrb[0].mxu0
    %v1782 = vpop.f32.mrb[0].mxu0
    %v1783 = vadd.f32 %v1494, %v1782
    %v1784 = vpop.f32.mrb[0].mxu0
    %1785 = vdwg.mxu0
    %1786 = vmatprep.subr.bf16.mxu0 0
    %1787 = vmatpush1.bf16.msra.mxu0 %v1045
    %1788 = vmatprep.subr.bf16.mxu0 0
    %1789 = vmatpush1.bf16.msra.mxu0 %v1046
    %1790 = vmatprep.subr.bf16.mxu0 0
    %1791 = vmatpush1.bf16.msra.mxu0 %v1047
    %1792 = vmatprep.subr.bf16.mxu0 0
    %1793 = vmatpush1.bf16.msra.mxu0 %v1048
    %1794 = vmatprep.subr.bf16.mxu0 0
    %1795 = vmatpush1.bf16.msra.mxu0 %v1049
    %1796 = vmatprep.subr.bf16.mxu0 0
    %1797 = vmatpush1.bf16.msra.mxu0 %v1050
    %1798 = vmatprep.subr.bf16.mxu0 0
    %1799 = vmatpush1.bf16.msra.mxu0 %v1051
    %1800 = vmatprep.subr.bf16.mxu0 0
    %1801 = vmatpush1.bf16.msra.mxu0 %v1052
    %1802 = vmatprep.subr.bf16.mxu0 0
    %1803 = vmatpush1.bf16.msra.mxu0 %v1053
    %1804 = vmatprep.subr.bf16.mxu0 0
    %1805 = vmatpush1.bf16.msra.mxu0 %v1054
    %1806 = vmatprep.subr.bf16.mxu0 0
    %1807 = vmatpush1.bf16.msra.mxu0 %v1055
    %1808 = vmatprep.subr.bf16.mxu0 0
    %1809 = vmatpush1.bf16.msra.mxu0 %v1056
    %1810 = vmatprep.subr.bf16.mxu0 0
    %1811 = vmatpush1.bf16.msra.mxu0 %v1057
    %1812 = vmatprep.subr.bf16.mxu0 0
    %1813 = vmatpush1.bf16.msra.mxu0 %v1058
    %1814 = vmatprep.subr.bf16.mxu0 0
    %1815 = vmatpush1.bf16.msra.mxu0 %v1059
    %1816 = vmatprep.subr.bf16.mxu0 0
    %1817 = vmatpush1.bf16.msra.mxu0 %v1060
    %1818 = vmatprep.mubr.bf16.mxu0 %v493
    %1819 = vmatmul.mubr.bf16.gmra.mrb[0].mxu0 %v492
    %v1820 = vpop.f32.mrb[0].mxu0
    %v1821 = vadd.f32 %v1532, %v1820
    %v1822 = vpop.f32.mrb[0].mxu0
    %v1823 = vpop.f32.mrb[0].mxu0
    %v1824 = vadd.f32 %v1535, %v1823
    %v1825 = vpop.f32.mrb[0].mxu0
    %1826 = vmatprep.mubr.bf16.mxu0 %v500
    %1827 = vmatmul.mubr.bf16.gmra.mrb[0].mxu0 %v499
    %v1828 = vpop.f32.mrb[0].mxu0
    %v1829 = vadd.f32 %v1540, %v1828
    %v1830 = vpop.f32.mrb[0].mxu0
    %v1831 = vpop.f32.mrb[0].mxu0
    %v1832 = vadd.f32 %v1543, %v1831
    %v1833 = vpop.f32.mrb[0].mxu0
    %1834 = vmatprep.mubr.bf16.mxu0 %v507
    %1835 = vmatmul.mubr.bf16.gmra.mrb[0].mxu0 %v506
    %v1836 = vpop.f32.mrb[0].mxu0
    %v1837 = vadd.f32 %v1548, %v1836
    %v1838 = vpop.f32.mrb[0].mxu0
    %v1839 = vpop.f32.mrb[0].mxu0
    %v1840 = vadd.f32 %v1551, %v1839
    %v1841 = vpop.f32.mrb[0].mxu0
    %1842 = vmatprep.mubr.bf16.mxu0 %v514
    %1843 = vmatmul.mubr.bf16.gmra.mrb[0].mxu0 %v513
    %v1844 = vpop.f32.mrb[0].mxu0
    %v1845 = vadd.f32 %v1556, %v1844
    %v1846 = vpop.f32.mrb[0].mxu0
    %v1847 = vpop.f32.mrb[0].mxu0
    %v1848 = vadd.f32 %v1559, %v1847
    %v1849 = vpop.f32.mrb[0].mxu0
    %1850 = vmatprep.mubr.bf16.mxu0 %v521
    %1851 = vmatmul.mubr.bf16.gmra.mrb[0].mxu0 %v520
    %v1852 = vpop.f32.mrb[0].mxu0
    %v1853 = vadd.f32 %v1564, %v1852
    %v1854 = vpop.f32.mrb[0].mxu0
    %v1855 = vpop.f32.mrb[0].mxu0
    %v1856 = vadd.f32 %v1567, %v1855
    %v1857 = vpop.f32.mrb[0].mxu0
    %1858 = vmatprep.mubr.bf16.mxu0 %v528
    %1859 = vmatmul.mubr.bf16.gmra.mrb[0].mxu0 %v527
    %v1860 = vpop.f32.mrb[0].mxu0
    %v1861 = vadd.f32 %v1572, %v1860
    %v1862 = vpop.f32.mrb[0].mxu0
    %v1863 = vpop.f32.mrb[0].mxu0
    %v1864 = vadd.f32 %v1575, %v1863
    %v1865 = vpop.f32.mrb[0].mxu0
    %1866 = vmatprep.mubr.bf16.mxu0 %v535
    %1867 = vmatmul.mubr.bf16.gmra.mrb[0].mxu0 %v534
    %v1868 = vpop.f32.mrb[0].mxu0
    %v1869 = vadd.f32 %v1580, %v1868
    %v1870 = vpop.f32.mrb[0].mxu0
    %v1871 = vpop.f32.mrb[0].mxu0
    %v1872 = vadd.f32 %v1583, %v1871
    %v1873 = vpop.f32.mrb[0].mxu0
    %1874 = vmatprep.mubr.bf16.mxu0 %v542
    %1875 = vmatmul.mubr.bf16.gmra.mrb[0].mxu0 %v541
    %v1876 = vpop.f32.mrb[0].mxu0
    %v1877 = vadd.f32 %v1588, %v1876
    %v1878 = vpop.f32.mrb[0].mxu0
    %v1879 = vpop.f32.mrb[0].mxu0
    %v1880 = vadd.f32 %v1591, %v1879
    %v1881 = vpop.f32.mrb[0].mxu0
    %1882 = vmatprep.mubr.bf16.mxu0 %v549
    %1883 = vmatmul.mubr.bf16.gmra.mrb[0].mxu0 %v548
    %v1884 = vpop.f32.mrb[0].mxu0
    %v1885 = vadd.f32 %v1596, %v1884
    %v1886 = vpop.f32.mrb[0].mxu0
    %v1887 = vpop.f32.mrb[0].mxu0
    %v1888 = vadd.f32 %v1599, %v1887
    %v1889 = vpop.f32.mrb[0].mxu0
    %1890 = vmatprep.mubr.bf16.mxu0 %v556
    %1891 = vmatmul.mubr.bf16.gmra.mrb[0].mxu0 %v555
    %v1892 = vpop.f32.mrb[0].mxu0
    %v1893 = vadd.f32 %v1604, %v1892
    %v1894 = vpop.f32.mrb[0].mxu0
    %v1895 = vpop.f32.mrb[0].mxu0
    %v1896 = vadd.f32 %v1607, %v1895
    %v1897 = vpop.f32.mrb[0].mxu0
    %1898 = vmatprep.mubr.bf16.mxu0 %v563
    %1899 = vmatmul.mubr.bf16.gmra.mrb[0].mxu0 %v562
    %v1900 = vpop.f32.mrb[0].mxu0
    %v1901 = vadd.f32 %v1612, %v1900
    %v1902 = vpop.f32.mrb[0].mxu0
    %v1903 = vpop.f32.mrb[0].mxu0
    %v1904 = vadd.f32 %v1615, %v1903
    %v1905 = vpop.f32.mrb[0].mxu0
    %1906 = vmatprep.mubr.bf16.mxu0 %v570
    %1907 = vmatmul.mubr.bf16.gmra.mrb[0].mxu0 %v569
    %v1908 = vpop.f32.mrb[0].mxu0
    %v1909 = vadd.f32 %v1620, %v1908
    %v1910 = vpop.f32.mrb[0].mxu0
    %v1911 = vpop.f32.mrb[0].mxu0
    %v1912 = vadd.f32 %v1623, %v1911
    %v1913 = vpop.f32.mrb[0].mxu0
    %1914 = vmatprep.mubr.bf16.mxu0 %v577
    %1915 = vmatmul.mubr.bf16.gmra.mrb[0].mxu0 %v576
    %v1916 = vpop.f32.mrb[0].mxu0
    %v1917 = vadd.f32 %v1628, %v1916
    %v1918 = vpop.f32.mrb[0].mxu0
    %v1919 = vpop.f32.mrb[0].mxu0
    %v1920 = vadd.f32 %v1631, %v1919
    %v1921 = vpop.f32.mrb[0].mxu0
    %1922 = vmatprep.mubr.bf16.mxu0 %v584
    %1923 = vmatmul.mubr.bf16.gmra.mrb[0].mxu0 %v583
    %v1924 = vpop.f32.mrb[0].mxu0
    %v1925 = vadd.f32 %v1636, %v1924
    %v1926 = vpop.f32.mrb[0].mxu0
    %v1927 = vpop.f32.mrb[0].mxu0
    %v1928 = vadd.f32 %v1639, %v1927
    %v1929 = vpop.f32.mrb[0].mxu0
    %1930 = vmatprep.mubr.bf16.mxu0 %v591
    %1931 = vmatmul.mubr.bf16.gmra.mrb[0].mxu0 %v590
    %v1932 = vpop.f32.mrb[0].mxu0
    %v1933 = vadd.f32 %v1644, %v1932
    %v1934 = vpop.f32.mrb[0].mxu0
    %v1935 = vpop.f32.mrb[0].mxu0
    %v1936 = vadd.f32 %v1647, %v1935
    %v1937 = vpop.f32.mrb[0].mxu0
    %1938 = vmatprep.mubr.bf16.mxu0 %v598
    %1939 = vmatmul.mubr.bf16.gmra.mrb[0].mxu0 %v597
    %v1940 = vpop.f32.mrb[0].mxu0
    %v1941 = vadd.f32 %v1652, %v1940
    %v1942 = vpop.f32.mrb[0].mxu0
    %v1943 = vpop.f32.mrb[0].mxu0
    %v1944 = vadd.f32 %v1655, %v1943
    %v1945 = vpop.f32.mrb[0].mxu0
    %1946 = vmatprep.mubr.bf16.mxu0 %v605
    %1947 = vmatmul.mubr.bf16.gmra.mrb[0].mxu0 %v604
    %v1948 = vpop.f32.mrb[0].mxu0
    %v1949 = vadd.f32 %v1660, %v1948
    %v1950 = vpop.f32.mrb[0].mxu0
    %v1951 = vpop.f32.mrb[0].mxu0
    %v1952 = vadd.f32 %v1663, %v1951
    %v1953 = vpop.f32.mrb[0].mxu0
    %1954 = vmatprep.mubr.bf16.mxu0 %v612
    %1955 = vmatmul.mubr.bf16.gmra.mrb[0].mxu0 %v611
    %v1956 = vpop.f32.mrb[0].mxu0
    %v1957 = vadd.f32 %v1668, %v1956
    %v1958 = vpop.f32.mrb[0].mxu0
    %v1959 = vpop.f32.mrb[0].mxu0
    %v1960 = vadd.f32 %v1671, %v1959
    %v1961 = vpop.f32.mrb[0].mxu0
    %1962 = vmatprep.mubr.bf16.mxu0 %v619
    %1963 = vmatmul.mubr.bf16.gmra.mrb[0].mxu0 %v618
    %v1964 = vpop.f32.mrb[0].mxu0
    %v1965 = vadd.f32 %v1676, %v1964
    %v1966 = vpop.f32.mrb[0].mxu0
    %v1967 = vpop.f32.mrb[0].mxu0
    %v1968 = vadd.f32 %v1679, %v1967
    %v1969 = vpop.f32.mrb[0].mxu0
    %1970 = vmatprep.mubr.bf16.mxu0 %v626
    %1971 = vmatmul.mubr.bf16.gmra.mrb[0].mxu0 %v625
    %v1972 = vpop.f32.mrb[0].mxu0
    %v1973 = vadd.f32 %v1684, %v1972
    %v1974 = vpop.f32.mrb[0].mxu0
    %v1975 = vpop.f32.mrb[0].mxu0
    %v1976 = vadd.f32 %v1687, %v1975
    %v1977 = vpop.f32.mrb[0].mxu0
    %1978 = vmatprep.mubr.bf16.mxu0 %v633
    %1979 = vmatmul.mubr.bf16.gmra.mrb[0].mxu0 %v632
    %v1980 = vpop.f32.mrb[0].mxu0
    %v1981 = vadd.f32 %v1692, %v1980
    %v1982 = vpop.f32.mrb[0].mxu0
    %v1983 = vpop.f32.mrb[0].mxu0
    %v1984 = vadd.f32 %v1695, %v1983
    %v1985 = vpop.f32.mrb[0].mxu0
    %1986 = vmatprep.mubr.bf16.mxu0 %v640
    %1987 = vmatmul.mubr.bf16.gmra.mrb[0].mxu0 %v639
    %v1988 = vpop.f32.mrb[0].mxu0
    %v1989 = vadd.f32 %v1700, %v1988
    %v1990 = vpop.f32.mrb[0].mxu0
    %v1991 = vpop.f32.mrb[0].mxu0
    %v1992 = vadd.f32 %v1703, %v1991
    %v1993 = vpop.f32.mrb[0].mxu0
    %1994 = vmatprep.mubr.bf16.mxu0 %v647
    %1995 = vmatmul.mubr.bf16.gmra.mrb[0].mxu0 %v646
    %v1996 = vpop.f32.mrb[0].mxu0
    %v1997 = vadd.f32 %v1708, %v1996
    %v1998 = vpop.f32.mrb[0].mxu0
    %v1999 = vpop.f32.mrb[0].mxu0
    %v2000 = vadd.f32 %v1711, %v1999
    %v2001 = vpop.f32.mrb[0].mxu0
    %2002 = vmatprep.mubr.bf16.mxu0 %v654
    %2003 = vmatmul.mubr.bf16.gmra.mrb[0].mxu0 %v653
    %v2004 = vpop.f32.mrb[0].mxu0
    %v2005 = vadd.f32 %v1716, %v2004
    %v2006 = vpop.f32.mrb[0].mxu0
    %v2007 = vpop.f32.mrb[0].mxu0
    %v2008 = vadd.f32 %v1719, %v2007
    %v2009 = vpop.f32.mrb[0].mxu0
    %2010 = vmatprep.mubr.bf16.mxu0 %v661
    %2011 = vmatmul.mubr.bf16.gmra.mrb[0].mxu0 %v660
    %v2012 = vpop.f32.mrb[0].mxu0
    %v2013 = vadd.f32 %v1724, %v2012
    %v2014 = vpop.f32.mrb[0].mxu0
    %v2015 = vpop.f32.mrb[0].mxu0
    %v2016 = vadd.f32 %v1727, %v2015
    %v2017 = vpop.f32.mrb[0].mxu0
    %2018 = vmatprep.mubr.bf16.mxu0 %v668
    %2019 = vmatmul.mubr.bf16.gmra.mrb[0].mxu0 %v667
    %v2020 = vpop.f32.mrb[0].mxu0
    %v2021 = vadd.f32 %v1732, %v2020
    %v2022 = vpop.f32.mrb[0].mxu0
    %v2023 = vpop.f32.mrb[0].mxu0
    %v2024 = vadd.f32 %v1735, %v2023
    %v2025 = vpop.f32.mrb[0].mxu0
    %2026 = vmatprep.mubr.bf16.mxu0 %v675
    %2027 = vmatmul.mubr.bf16.gmra.mrb[0].mxu0 %v674
    %v2028 = vpop.f32.mrb[0].mxu0
    %v2029 = vadd.f32 %v1740, %v2028
    %v2030 = vpop.f32.mrb[0].mxu0
    %v2031 = vpop.f32.mrb[0].mxu0
    %v2032 = vadd.f32 %v1743, %v2031
    %v2033 = vpop.f32.mrb[0].mxu0
    %2034 = vmatprep.mubr.bf16.mxu0 %v682
    %2035 = vmatmul.mubr.bf16.gmra.mrb[0].mxu0 %v681
    %v2036 = vpop.f32.mrb[0].mxu0
    %v2037 = vadd.f32 %v1748, %v2036
    %v2038 = vpop.f32.mrb[0].mxu0
    %v2039 = vpop.f32.mrb[0].mxu0
    %v2040 = vadd.f32 %v1751, %v2039
    %v2041 = vpop.f32.mrb[0].mxu0
    %2042 = vmatprep.mubr.bf16.mxu0 %v689
    %2043 = vmatmul.mubr.bf16.gmra.mrb[0].mxu0 %v688
    %v2044 = vpop.f32.mrb[0].mxu0
    %v2045 = vadd.f32 %v1756, %v2044
    %v2046 = vpop.f32.mrb[0].mxu0
    %v2047 = vpop.f32.mrb[0].mxu0
    %v2048 = vadd.f32 %v1759, %v2047
    %v2049 = vpop.f32.mrb[0].mxu0
    %2050 = vmatprep.mubr.bf16.mxu0 %v696
    %2051 = vmatmul.mubr.bf16.gmra.mrb[0].mxu0 %v695
    %v2052 = vpop.f32.mrb[0].mxu0
    %v2053 = vadd.f32 %v1764, %v2052
    %v2054 = vpop.f32.mrb[0].mxu0
    %v2055 = vpop.f32.mrb[0].mxu0
    %v2056 = vadd.f32 %v1767, %v2055
    %v2057 = vpop.f32.mrb[0].mxu0
    %2058 = vmatprep.mubr.bf16.mxu0 %v703
    %2059 = vmatmul.mubr.bf16.gmra.mrb[0].mxu0 %v702
    %v2060 = vpop.f32.mrb[0].mxu0
    %v2061 = vadd.f32 %v1772, %v2060
    %v2062 = vpop.f32.mrb[0].mxu0
    %v2063 = vpop.f32.mrb[0].mxu0
    %v2064 = vadd.f32 %v1775, %v2063
    %v2065 = vpop.f32.mrb[0].mxu0
    %2066 = vmatprep.mubr.bf16.mxu0 %v710
    %2067 = vmatmul.mubr.bf16.gmra.mrb[0].mxu0 %v709
    %v2068 = vpop.f32.mrb[0].mxu0
    %v2069 = vadd.f32 %v1780, %v2068
    %v2070 = vpop.f32.mrb[0].mxu0
    %v2071 = vpop.f32.mrb[0].mxu0
    %v2072 = vadd.f32 %v1783, %v2071
    %v2073 = vpop.f32.mrb[0].mxu0
    %2074 = vdwg.mxu0
    %2075 = vmatprep.subr.bf16.mxu0 0
    %2076 = vmatpush1.bf16.msra.mxu0 %v1061
    %2077 = vmatprep.subr.bf16.mxu0 0
    %2078 = vmatpush1.bf16.msra.mxu0 0
    %2079 = vmatprep.subr.bf16.mxu0 0
    %2080 = vmatpush1.bf16.msra.mxu0 0
    %2081 = vmatprep.subr.bf16.mxu0 0
    %2082 = vmatpush1.bf16.msra.mxu0 0
    %2083 = vmatprep.subr.bf16.mxu0 0
    %2084 = vmatpush1.bf16.msra.mxu0 0
    %2085 = vmatprep.subr.bf16.mxu0 0
    %2086 = vmatpush1.bf16.msra.mxu0 0
    %2087 = vmatprep.subr.bf16.mxu0 0
    %2088 = vmatpush1.bf16.msra.mxu0 0
    %2089 = vmatprep.subr.bf16.mxu0 0
    %2090 = vmatpush1.bf16.msra.mxu0 0
    %2091 = vmatprep.subr.bf16.mxu0 0
    %2092 = vmatpush1.bf16.msra.mxu0 0
    %2093 = vmatprep.subr.bf16.mxu0 0
    %2094 = vmatpush1.bf16.msra.mxu0 0
    %2095 = vmatprep.subr.bf16.mxu0 0
    %2096 = vmatpush1.bf16.msra.mxu0 0
    %2097 = vmatprep.subr.bf16.mxu0 0
    %2098 = vmatpush1.bf16.msra.mxu0 0
    %2099 = vmatprep.subr.bf16.mxu0 0
    %2100 = vmatpush1.bf16.msra.mxu0 0
    %2101 = vmatprep.subr.bf16.mxu0 0
    %2102 = vmatpush1.bf16.msra.mxu0 0
    %2103 = vmatprep.subr.bf16.mxu0 0
    %2104 = vmatpush1.bf16.msra.mxu0 0
    %2105 = vmatprep.subr.bf16.mxu0 0
    %2106 = vmatpush1.bf16.msra.mxu0 0
    %2107 = vmatprep.mubr.bf16.mxu0 0
    %2108 = vmatmul.mubr.bf16.gmra.mrb[0].mxu0 %v1113
    %v2109 = vpop.f32.mrb[0].mxu0
    %v2110 = vadd.f32 %v1821, %v2109
    %v2111 = vpop.f32.mrb[0].mxu0
    %v2112 = vpop.f32.mrb[0].mxu0
    %v2113 = vadd.f32 %v1824, %v2112
    %v2114 = vpop.f32.mrb[0].mxu0
    %2115 = vmatprep.mubr.bf16.mxu0 0
    %2116 = vmatmul.mubr.bf16.gmra.mrb[0].mxu0 %v1116
    %v2117 = vpop.f32.mrb[0].mxu0
    %v2118 = vadd.f32 %v1829, %v2117
    %v2119 = vpop.f32.mrb[0].mxu0
    %v2120 = vpop.f32.mrb[0].mxu0
    %v2121 = vadd.f32 %v1832, %v2120
    %v2122 = vpop.f32.mrb[0].mxu0
    %2123 = vmatprep.mubr.bf16.mxu0 0
    %2124 = vmatmul.mubr.bf16.gmra.mrb[0].mxu0 %v1119
    %v2125 = vpop.f32.mrb[0].mxu0
    %v2126 = vadd.f32 %v1837, %v2125
    %v2127 = vpop.f32.mrb[0].mxu0
    %v2128 = vpop.f32.mrb[0].mxu0
    %v2129 = vadd.f32 %v1840, %v2128
    %v2130 = vpop.f32.mrb[0].mxu0
    %2131 = vmatprep.mubr.bf16.mxu0 0
    %2132 = vmatmul.mubr.bf16.gmra.mrb[0].mxu0 %v1122
    %v2133 = vpop.f32.mrb[0].mxu0
    %v2134 = vadd.f32 %v1845, %v2133
    %v2135 = vpop.f32.mrb[0].mxu0
    %v2136 = vpop.f32.mrb[0].mxu0
    %v2137 = vadd.f32 %v1848, %v2136
    %v2138 = vpop.f32.mrb[0].mxu0
    %2139 = vmatprep.mubr.bf16.mxu0 0
    %2140 = vmatmul.mubr.bf16.gmra.mrb[0].mxu0 %v1125
    %v2141 = vpop.f32.mrb[0].mxu0
    %v2142 = vadd.f32 %v1853, %v2141
    %v2143 = vpop.f32.mrb[0].mxu0
    %v2144 = vpop.f32.mrb[0].mxu0
    %v2145 = vadd.f32 %v1856, %v2144
    %v2146 = vpop.f32.mrb[0].mxu0
    %2147 = vmatprep.mubr.bf16.mxu0 0
    %2148 = vmatmul.mubr.bf16.gmra.mrb[0].mxu0 %v1128
    %v2149 = vpop.f32.mrb[0].mxu0
    %v2150 = vadd.f32 %v1861, %v2149
    %v2151 = vpop.f32.mrb[0].mxu0
    %v2152 = vpop.f32.mrb[0].mxu0
    %v2153 = vadd.f32 %v1864, %v2152
    %v2154 = vpop.f32.mrb[0].mxu0
    %2155 = vmatprep.mubr.bf16.mxu0 0
    %2156 = vmatmul.mubr.bf16.gmra.mrb[0].mxu0 %v1131
    %v2157 = vpop.f32.mrb[0].mxu0
    %v2158 = vadd.f32 %v1869, %v2157
    %v2159 = vpop.f32.mrb[0].mxu0
    %v2160 = vpop.f32.mrb[0].mxu0
    %v2161 = vadd.f32 %v1872, %v2160
    %v2162 = vpop.f32.mrb[0].mxu0
    %2163 = vmatprep.mubr.bf16.mxu0 0
    %2164 = vmatmul.mubr.bf16.gmra.mrb[0].mxu0 %v1134
    %v2165 = vpop.f32.mrb[0].mxu0
    %v2166 = vadd.f32 %v1877, %v2165
    %v2167 = vpop.f32.mrb[0].mxu0
    %v2168 = vpop.f32.mrb[0].mxu0
    %v2169 = vadd.f32 %v1880, %v2168
    %v2170 = vpop.f32.mrb[0].mxu0
    %2171 = vmatprep.mubr.bf16.mxu0 0
    %2172 = vmatmul.mubr.bf16.gmra.mrb[0].mxu0 %v1137
    %v2173 = vpop.f32.mrb[0].mxu0
    %v2174 = vadd.f32 %v1885, %v2173
    %v2175 = vpop.f32.mrb[0].mxu0
    %v2176 = vpop.f32.mrb[0].mxu0
    %v2177 = vadd.f32 %v1888, %v2176
    %v2178 = vpop.f32.mrb[0].mxu0
    %2179 = vmatprep.mubr.bf16.mxu0 0
    %2180 = vmatmul.mubr.bf16.gmra.mrb[0].mxu0 %v1140
    %v2181 = vpop.f32.mrb[0].mxu0
    %v2182 = vadd.f32 %v1893, %v2181
    %v2183 = vpop.f32.mrb[0].mxu0
    %v2184 = vpop.f32.mrb[0].mxu0
    %v2185 = vadd.f32 %v1896, %v2184
    %v2186 = vpop.f32.mrb[0].mxu0
    %2187 = vmatprep.mubr.bf16.mxu0 0
    %2188 = vmatmul.mubr.bf16.gmra.mrb[0].mxu0 %v1143
    %v2189 = vpop.f32.mrb[0].mxu0
    %v2190 = vadd.f32 %v1901, %v2189
    %v2191 = vpop.f32.mrb[0].mxu0
    %v2192 = vpop.f32.mrb[0].mxu0
    %v2193 = vadd.f32 %v1904, %v2192
    %v2194 = vpop.f32.mrb[0].mxu0
    %2195 = vmatprep.mubr.bf16.mxu0 0
    %2196 = vmatmul.mubr.bf16.gmra.mrb[0].mxu0 %v1146
    %v2197 = vpop.f32.mrb[0].mxu0
    %v2198 = vadd.f32 %v1909, %v2197
    %v2199 = vpop.f32.mrb[0].mxu0
    %v2200 = vpop.f32.mrb[0].mxu0
    %v2201 = vadd.f32 %v1912, %v2200
    %v2202 = vpop.f32.mrb[0].mxu0
    %2203 = vmatprep.mubr.bf16.mxu0 0
    %2204 = vmatmul.mubr.bf16.gmra.mrb[0].mxu0 %v1149
    %v2205 = vpop.f32.mrb[0].mxu0
    %v2206 = vadd.f32 %v1917, %v2205
    %v2207 = vpop.f32.mrb[0].mxu0
    %v2208 = vpop.f32.mrb[0].mxu0
    %v2209 = vadd.f32 %v1920, %v2208
    %v2210 = vpop.f32.mrb[0].mxu0
    %2211 = vmatprep.mubr.bf16.mxu0 0
    %2212 = vmatmul.mubr.bf16.gmra.mrb[0].mxu0 %v1152
    %v2213 = vpop.f32.mrb[0].mxu0
    %v2214 = vadd.f32 %v1925, %v2213
    %v2215 = vpop.f32.mrb[0].mxu0
    %v2216 = vpop.f32.mrb[0].mxu0
    %v2217 = vadd.f32 %v1928, %v2216
    %v2218 = vpop.f32.mrb[0].mxu0
    %2219 = vmatprep.mubr.bf16.mxu0 0
    %2220 = vmatmul.mubr.bf16.gmra.mrb[0].mxu0 %v1155
    %v2221 = vpop.f32.mrb[0].mxu0
    %v2222 = vadd.f32 %v1933, %v2221
    %v2223 = vpop.f32.mrb[0].mxu0
    %v2224 = vpop.f32.mrb[0].mxu0
    %v2225 = vadd.f32 %v1936, %v2224
    %v2226 = vpop.f32.mrb[0].mxu0
    %2227 = vmatprep.mubr.bf16.mxu0 0
    %2228 = vmatmul.mubr.bf16.gmra.mrb[0].mxu0 %v1158
    %v2229 = vpop.f32.mrb[0].mxu0
    %v2230 = vadd.f32 %v1941, %v2229
    %v2231 = vpop.f32.mrb[0].mxu0
    %v2232 = vpop.f32.mrb[0].mxu0
    %v2233 = vadd.f32 %v1944, %v2232
    %v2234 = vpop.f32.mrb[0].mxu0
    %2235 = vmatprep.mubr.bf16.mxu0 0
    %2236 = vmatmul.mubr.bf16.gmra.mrb[0].mxu0 %v1161
    %v2237 = vpop.f32.mrb[0].mxu0
    %v2238 = vadd.f32 %v1949, %v2237
    %v2239 = vpop.f32.mrb[0].mxu0
    %v2240 = vpop.f32.mrb[0].mxu0
    %v2241 = vadd.f32 %v1952, %v2240
    %v2242 = vpop.f32.mrb[0].mxu0
    %2243 = vmatprep.mubr.bf16.mxu0 0
    %2244 = vmatmul.mubr.bf16.gmra.mrb[0].mxu0 %v1164
    %v2245 = vpop.f32.mrb[0].mxu0
    %v2246 = vadd.f32 %v1957, %v2245
    %v2247 = vpop.f32.mrb[0].mxu0
    %v2248 = vpop.f32.mrb[0].mxu0
    %v2249 = vadd.f32 %v1960, %v2248
    %v2250 = vpop.f32.mrb[0].mxu0
    %2251 = vmatprep.mubr.bf16.mxu0 0
    %2252 = vmatmul.mubr.bf16.gmra.mrb[0].mxu0 %v1167
    %v2253 = vpop.f32.mrb[0].mxu0
    %v2254 = vadd.f32 %v1965, %v2253
    %v2255 = vpop.f32.mrb[0].mxu0
    %v2256 = vpop.f32.mrb[0].mxu0
    %v2257 = vadd.f32 %v1968, %v2256
    %v2258 = vpop.f32.mrb[0].mxu0
    %2259 = vmatprep.mubr.bf16.mxu0 0
    %2260 = vmatmul.mubr.bf16.gmra.mrb[0].mxu0 %v1170
    %v2261 = vpop.f32.mrb[0].mxu0
    %v2262 = vadd.f32 %v1973, %v2261
    %v2263 = vpop.f32.mrb[0].mxu0
    %v2264 = vpop.f32.mrb[0].mxu0
    %v2265 = vadd.f32 %v1976, %v2264
    %v2266 = vpop.f32.mrb[0].mxu0
    %2267 = vmatprep.mubr.bf16.mxu0 0
    %2268 = vmatmul.mubr.bf16.gmra.mrb[0].mxu0 %v1173
    %v2269 = vpop.f32.mrb[0].mxu0
    %v2270 = vadd.f32 %v1981, %v2269
    %v2271 = vpop.f32.mrb[0].mxu0
    %v2272 = vpop.f32.mrb[0].mxu0
    %v2273 = vadd.f32 %v1984, %v2272
    %v2274 = vpop.f32.mrb[0].mxu0
    %2275 = vmatprep.mubr.bf16.mxu0 0
    %2276 = vmatmul.mubr.bf16.gmra.mrb[0].mxu0 %v1176
    %v2277 = vpop.f32.mrb[0].mxu0
    %v2278 = vadd.f32 %v1989, %v2277
    %v2279 = vpop.f32.mrb[0].mxu0
    %v2280 = vpop.f32.mrb[0].mxu0
    %v2281 = vadd.f32 %v1992, %v2280
    %v2282 = vpop.f32.mrb[0].mxu0
    %2283 = vmatprep.mubr.bf16.mxu0 0
    %2284 = vmatmul.mubr.bf16.gmra.mrb[0].mxu0 %v1179
    %v2285 = vpop.f32.mrb[0].mxu0
    %v2286 = vadd.f32 %v1997, %v2285
    %v2287 = vpop.f32.mrb[0].mxu0
    %v2288 = vpop.f32.mrb[0].mxu0
    %v2289 = vadd.f32 %v2000, %v2288
    %v2290 = vpop.f32.mrb[0].mxu0
    %2291 = vmatprep.mubr.bf16.mxu0 0
    %2292 = vmatmul.mubr.bf16.gmra.mrb[0].mxu0 %v1182
    %v2293 = vpop.f32.mrb[0].mxu0
    %v2294 = vadd.f32 %v2005, %v2293
    %v2295 = vpop.f32.mrb[0].mxu0
    %v2296 = vpop.f32.mrb[0].mxu0
    %v2297 = vadd.f32 %v2008, %v2296
    %v2298 = vpop.f32.mrb[0].mxu0
    %2299 = vmatprep.mubr.bf16.mxu0 0
    %2300 = vmatmul.mubr.bf16.gmra.mrb[0].mxu0 %v1185
    %v2301 = vpop.f32.mrb[0].mxu0
    %v2302 = vadd.f32 %v2013, %v2301
    %v2303 = vpop.f32.mrb[0].mxu0
    %v2304 = vpop.f32.mrb[0].mxu0
    %v2305 = vadd.f32 %v2016, %v2304
    %v2306 = vpop.f32.mrb[0].mxu0
    %2307 = vmatprep.mubr.bf16.mxu0 0
    %2308 = vmatmul.mubr.bf16.gmra.mrb[0].mxu0 %v1188
    %v2309 = vpop.f32.mrb[0].mxu0
    %v2310 = vadd.f32 %v2021, %v2309
    %v2311 = vpop.f32.mrb[0].mxu0
    %v2312 = vpop.f32.mrb[0].mxu0
    %v2313 = vadd.f32 %v2024, %v2312
    %v2314 = vpop.f32.mrb[0].mxu0
    %2315 = vmatprep.mubr.bf16.mxu0 0
    %2316 = vmatmul.mubr.bf16.gmra.mrb[0].mxu0 %v1191
    %v2317 = vpop.f32.mrb[0].mxu0
    %v2318 = vadd.f32 %v2029, %v2317
    %v2319 = vpop.f32.mrb[0].mxu0
    %v2320 = vpop.f32.mrb[0].mxu0
    %v2321 = vadd.f32 %v2032, %v2320
    %v2322 = vpop.f32.mrb[0].mxu0
    %2323 = vmatprep.mubr.bf16.mxu0 0
    %2324 = vmatmul.mubr.bf16.gmra.mrb[0].mxu0 %v1194
    %v2325 = vpop.f32.mrb[0].mxu0
    %v2326 = vadd.f32 %v2037, %v2325
    %v2327 = vpop.f32.mrb[0].mxu0
    %v2328 = vpop.f32.mrb[0].mxu0
    %v2329 = vadd.f32 %v2040, %v2328
    %v2330 = vpop.f32.mrb[0].mxu0
    %2331 = vmatprep.mubr.bf16.mxu0 0
    %2332 = vmatmul.mubr.bf16.gmra.mrb[0].mxu0 %v1197
    %v2333 = vpop.f32.mrb[0].mxu0
    %v2334 = vadd.f32 %v2045, %v2333
    %v2335 = vpop.f32.mrb[0].mxu0
    %v2336 = vpop.f32.mrb[0].mxu0
    %v2337 = vadd.f32 %v2048, %v2336
    %v2338 = vpop.f32.mrb[0].mxu0
    %2339 = vmatprep.mubr.bf16.mxu0 0
    %2340 = vmatmul.mubr.bf16.gmra.mrb[0].mxu0 %v1200
    %v2341 = vpop.f32.mrb[0].mxu0
    %v2342 = vadd.f32 %v2053, %v2341
    %v2343 = vpop.f32.mrb[0].mxu0
    %v2344 = vpop.f32.mrb[0].mxu0
    %v2345 = vadd.f32 %v2056, %v2344
    %v2346 = vpop.f32.mrb[0].mxu0
    %2347 = vmatprep.mubr.bf16.mxu0 0
    %2348 = vmatmul.mubr.bf16.gmra.mrb[0].mxu0 %v1203
    %v2349 = vpop.f32.mrb[0].mxu0
    %v2350 = vadd.f32 %v2061, %v2349
    %v2351 = vpop.f32.mrb[0].mxu0
    %v2352 = vpop.f32.mrb[0].mxu0
    %v2353 = vadd.f32 %v2064, %v2352
    %v2354 = vpop.f32.mrb[0].mxu0
    %2355 = vmatprep.mubr.bf16.mxu0 0
    %2356 = vmatmul.mubr.bf16.gmra.mrb[0].mxu0 %v1206
    %v2357 = vpop.f32.mrb[0].mxu0
    %v2358 = vadd.f32 %v2069, %v2357
    %v2359 = vpop.f32.mrb[0].mxu0
    %v2360 = vpop.f32.mrb[0].mxu0
    %v2361 = vadd.f32 %v2072, %v2360
    %v2362 = vpop.f32.mrb[0].mxu0
    %2363 = vdwg.mxu0
    %v2364 = vmax.f32 %v2110, 0.0
    %v2365 = vmax.f32 %v2113, 0.0
    %v2366 = vmax.f32 %v2118, 0.0
    %v2367 = vmax.f32 %v2121, 0.0
    %v2368 = vmax.f32 %v2126, 0.0
    %v2369 = vmax.f32 %v2129, 0.0
    %v2370 = vmax.f32 %v2134, 0.0
    %v2371 = vmax.f32 %v2137, 0.0
    %v2372 = vmax.f32 %v2142, 0.0
    %v2373 = vmax.f32 %v2145, 0.0
    %v2374 = vmax.f32 %v2150, 0.0
    %v2375 = vmax.f32 %v2153, 0.0
    %v2376 = vmax.f32 %v2158, 0.0
    %v2377 = vmax.f32 %v2161, 0.0
    %v2378 = vmax.f32 %v2166, 0.0
    %v2379 = vmax.f32 %v2169, 0.0
    %v2380 = vmax.f32 %v2174, 0.0
    %v2381 = vmax.f32 %v2177, 0.0
    %v2382 = vmax.f32 %v2182, 0.0
    %v2383 = vmax.f32 %v2185, 0.0
    %v2384 = vmax.f32 %v2190, 0.0
    %v2385 = vmax.f32 %v2193, 0.0
    %v2386 = vmax.f32 %v2198, 0.0
    %v2387 = vmax.f32 %v2201, 0.0
    %v2388 = vmax.f32 %v2206, 0.0
    %v2389 = vmax.f32 %v2209, 0.0
    %v2390 = vmax.f32 %v2214, 0.0
    %v2391 = vmax.f32 %v2217, 0.0
    %v2392 = vmax.f32 %v2222, 0.0
    %v2393 = vmax.f32 %v2225, 0.0
    %v2394 = vmax.f32 %v2230, 0.0
    %v2395 = vmax.f32 %v2233, 0.0
    %v2396 = vmax.f32 %v2238, 0.0
    %v2397 = vmax.f32 %v2241, 0.0
    %v2398 = vmax.f32 %v2246, 0.0
    %v2399 = vmax.f32 %v2249, 0.0
    %v2400 = vmax.f32 %v2254, 0.0
    %v2401 = vmax.f32 %v2257, 0.0
    %v2402 = vmax.f32 %v2262, 0.0
    %v2403 = vmax.f32 %v2265, 0.0
    %v2404 = vmax.f32 %v2270, 0.0
    %v2405 = vmax.f32 %v2273, 0.0
    %v2406 = vmax.f32 %v2278, 0.0
    %v2407 = vmax.f32 %v2281, 0.0
    %v2408 = vmax.f32 %v2286, 0.0
    %v2409 = vmax.f32 %v2289, 0.0
    %v2410 = vmax.f32 %v2294, 0.0
    %v2411 = vmax.f32 %v2297, 0.0
    %v2412 = vmax.f32 %v2302, 0.0
    %v2413 = vmax.f32 %v2305, 0.0
    %v2414 = vmax.f32 %v2310, 0.0
    %v2415 = vmax.f32 %v2313, 0.0
    %v2416 = vmax.f32 %v2318, 0.0
    %v2417 = vmax.f32 %v2321, 0.0
    %v2418 = vmax.f32 %v2326, 0.0
    %v2419 = vmax.f32 %v2329, 0.0
    %v2420 = vmax.f32 %v2334, 0.0
    %v2421 = vmax.f32 %v2337, 0.0
    %v2422 = vmax.f32 %v2342, 0.0
    %v2423 = vmax.f32 %v2345, 0.0
    %v2424 = vmax.f32 %v2350, 0.0
    %v2425 = vmax.f32 %v2353, 0.0
    %v2426 = vmax.f32 %v2358, 0.0
    %v2427 = vmax.f32 %v2361, 0.0
    %v2428 = vpack.c.bf16 %v2365, %v2364
    %v2429 = vpack.c.bf16 %v2367, %v2366
    %v2430 = vpack.c.bf16 %v2369, %v2368
    %v2431 = vpack.c.bf16 %v2371, %v2370
    %v2432 = vpack.c.bf16 %v2373, %v2372
    %v2433 = vpack.c.bf16 %v2375, %v2374
    %v2434 = vpack.c.bf16 %v2377, %v2376
    %v2435 = vpack.c.bf16 %v2379, %v2378
    %v2436 = vpack.c.bf16 %v2381, %v2380
    %v2437 = vpack.c.bf16 %v2383, %v2382
    %v2438 = vpack.c.bf16 %v2385, %v2384
    %v2439 = vpack.c.bf16 %v2387, %v2386
    %v2440 = vpack.c.bf16 %v2389, %v2388
    %v2441 = vpack.c.bf16 %v2391, %v2390
    %v2442 = vpack.c.bf16 %v2393, %v2392
    %v2443 = vpack.c.bf16 %v2395, %v2394
    %v2444 = vpack.c.bf16 %v2397, %v2396
    %v2445 = vpack.c.bf16 %v2399, %v2398
    %v2446 = vpack.c.bf16 %v2401, %v2400
    %v2447 = vpack.c.bf16 %v2403, %v2402
    %v2448 = vpack.c.bf16 %v2405, %v2404
    %v2449 = vpack.c.bf16 %v2407, %v2406
    %v2450 = vpack.c.bf16 %v2409, %v2408
    %v2451 = vpack.c.bf16 %v2411, %v2410
    %v2452 = vpack.c.bf16 %v2413, %v2412
    %v2453 = vpack.c.bf16 %v2415, %v2414
    %v2454 = vpack.c.bf16 %v2417, %v2416
    %v2455 = vpack.c.bf16 %v2419, %v2418
    %v2456 = vpack.c.bf16 %v2421, %v2420
    %v2457 = vpack.c.bf16 %v2423, %v2422
    %v2458 = vpack.c.bf16 %v2425, %v2424
    %v2459 = vpack.c.bf16 %v2427, %v2426
    %v2460 = vld [vmem:[%s3] sm:$0xf]
    %v2461 = vld [vmem:[%s3 + $0x4] sm:$0xf]
    %v2462 = vld [vmem:[%s3 + $0x8] sm:$0xf]
    %v2463 = vld [vmem:[%s3 + $0xc] sm:$0xf]
    %v2464 = vld [vmem:[%s3 + $0x10] sm:$0xf]
    %v2465 = vld [vmem:[%s3 + $0x14] sm:$0xf]
    %v2466 = vld [vmem:[%s3 + $0x18] sm:$0xf]
    %v2467 = vld [vmem:[%s3 + $0x1c] sm:$0xf]
    %v2468 = vld [vmem:[%s3 + $0x20] sm:$0xf]
    %v2469 = vld [vmem:[%s3 + $0x24] sm:$0xf]
    %v2470 = vld [vmem:[%s3 + $0x28] sm:$0xf]
    %v2471 = vld [vmem:[%s3 + $0x2c] sm:$0xf]
    %v2472 = vld [vmem:[%s3 + $0x30] sm:$0xf]
    %v2473 = vld [vmem:[%s3 + $0x34] sm:$0xf]
    %v2474 = vld [vmem:[%s3 + $0x38] sm:$0xf]
    %v2475 = vld [vmem:[%s3 + $0x3c] sm:$0xf]
    %v2476 = vld [vmem:[%s4] sm:$0x1]
    %v2478 = vlaneseq
    %v2479 = vshrl.u32 %v2478, 7
    %v2480 = vsub.s32 0, %v2479
    %v2481 = vrot.slane %v2476, %v2480
    %v2499 = vunpack.c.l.b16 %v2460
    %v2500 = vunpack.c.l.b16 %v2461
    %v2501 = vunpack.c.l.b16 %v2462
    %v2502 = vunpack.c.l.b16 %v2463
    %v2503 = vunpack.c.l.b16 %v2464
    %v2504 = vunpack.c.l.b16 %v2465
    %v2505 = vunpack.c.l.b16 %v2466
    %v2506 = vunpack.c.l.b16 %v2467
    %v2507 = vunpack.c.l.b16 %v2468
    %v2508 = vunpack.c.l.b16 %v2469
    %v2509 = vunpack.c.l.b16 %v2470
    %v2510 = vunpack.c.l.b16 %v2471
    %v2511 = vunpack.c.l.b16 %v2472
    %v2512 = vunpack.c.l.b16 %v2473
    %v2513 = vunpack.c.l.b16 %v2474
    %v2514 = vunpack.c.l.b16 %v2475
    %v2515 = vpack.c.b16 %v2500, %v2499
    %v2516 = vpack.c.b16 %v2502, %v2501
    %v2517 = vpack.c.b16 %v2504, %v2503
    %v2518 = vpack.c.b16 %v2506, %v2505
    %v2519 = vpack.c.b16 %v2508, %v2507
    %v2520 = vpack.c.b16 %v2510, %v2509
    %v2521 = vpack.c.b16 %v2512, %v2511
    %v2522 = vpack.c.b16 %v2514, %v2513
    %2531 = vmatprep.subr.bf16.mxu0 0
    %2532 = vmatpush1.bf16.msra.mxu0 %v2515
    %2533 = vmatprep.subr.bf16.mxu0 0
    %2534 = vmatpush1.bf16.msra.mxu0 %v2516
    %2535 = vmatprep.subr.bf16.mxu0 0
    %2536 = vmatpush1.bf16.msra.mxu0 %v2517
    %2537 = vmatprep.subr.bf16.mxu0 0
    %2538 = vmatpush1.bf16.msra.mxu0 %v2518
    %2539 = vmatprep.subr.bf16.mxu0 0
    %2540 = vmatpush1.bf16.msra.mxu0 %v2519
    %2541 = vmatprep.subr.bf16.mxu0 0
    %2542 = vmatpush1.bf16.msra.mxu0 %v2520
    %2543 = vmatprep.subr.bf16.mxu0 0
    %2544 = vmatpush1.bf16.msra.mxu0 %v2521
    %2545 = vmatprep.subr.bf16.mxu0 0
    %2546 = vmatpush1.bf16.msra.mxu0 %v2522
    %2547 = vmatprep.subr.bf16.mxu0 0
    %2548 = vmatpush1.bf16.msra.mxu0 0
    %2549 = vmatprep.subr.bf16.mxu0 0
    %2550 = vmatpush1.bf16.msra.mxu0 0
    %2551 = vmatprep.subr.bf16.mxu0 0
    %2552 = vmatpush1.bf16.msra.mxu0 0
    %2553 = vmatprep.subr.bf16.mxu0 0
    %2554 = vmatpush1.bf16.msra.mxu0 0
    %2555 = vmatprep.subr.bf16.mxu0 0
    %2556 = vmatpush1.bf16.msra.mxu0 0
    %2557 = vmatprep.subr.bf16.mxu0 0
    %2558 = vmatpush1.bf16.msra.mxu0 0
    %2559 = vmatprep.subr.bf16.mxu0 0
    %2560 = vmatpush1.bf16.msra.mxu0 0
    %2561 = vmatprep.subr.bf16.mxu0 0
    %2562 = vmatpush1.bf16.msra.mxu0 0
    %2563 = vmatprep.mubr.bf16.mxu0 0
    %2564 = vmatmul.mubr.bf16.gmra.mrb[0].mxu0 %v2428
    %v2565 = vpop.f32.mrb[0].mxu0
    %v2566 = vadd.f32 %v2481, %v2565
    %v2567 = vpop.f32.mrb[0].mxu0
    %v2568 = vpop.f32.mrb[0].mxu0
    %v2569 = vadd.f32 %v2481, %v2568
    %v2570 = vpop.f32.mrb[0].mxu0
    %2571 = vmatprep.mubr.bf16.mxu0 0
    %2572 = vmatmul.mubr.bf16.gmra.mrb[0].mxu0 %v2429
    %v2573 = vpop.f32.mrb[0].mxu0
    %v2574 = vadd.f32 %v2481, %v2573
    %v2575 = vpop.f32.mrb[0].mxu0
    %v2576 = vpop.f32.mrb[0].mxu0
    %v2577 = vadd.f32 %v2481, %v2576
    %v2578 = vpop.f32.mrb[0].mxu0
    %2579 = vmatprep.mubr.bf16.mxu0 0
    %2580 = vmatmul.mubr.bf16.gmra.mrb[0].mxu0 %v2430
    %v2581 = vpop.f32.mrb[0].mxu0
    %v2582 = vadd.f32 %v2481, %v2581
    %v2583 = vpop.f32.mrb[0].mxu0
    %v2584 = vpop.f32.mrb[0].mxu0
    %v2585 = vadd.f32 %v2481, %v2584
    %v2586 = vpop.f32.mrb[0].mxu0
    %2587 = vmatprep.mubr.bf16.mxu0 0
    %2588 = vmatmul.mubr.bf16.gmra.mrb[0].mxu0 %v2431
    %v2589 = vpop.f32.mrb[0].mxu0
    %v2590 = vadd.f32 %v2481, %v2589
    %v2591 = vpop.f32.mrb[0].mxu0
    %v2592 = vpop.f32.mrb[0].mxu0
    %v2593 = vadd.f32 %v2481, %v2592
    %v2594 = vpop.f32.mrb[0].mxu0
    %2595 = vmatprep.mubr.bf16.mxu0 0
    %2596 = vmatmul.mubr.bf16.gmra.mrb[0].mxu0 %v2432
    %v2597 = vpop.f32.mrb[0].mxu0
    %v2598 = vadd.f32 %v2481, %v2597
    %v2599 = vpop.f32.mrb[0].mxu0
    %v2600 = vpop.f32.mrb[0].mxu0
    %v2601 = vadd.f32 %v2481, %v2600
    %v2602 = vpop.f32.mrb[0].mxu0
    %2603 = vmatprep.mubr.bf16.mxu0 0
    %2604 = vmatmul.mubr.bf16.gmra.mrb[0].mxu0 %v2433
    %v2605 = vpop.f32.mrb[0].mxu0
    %v2606 = vadd.f32 %v2481, %v2605
    %v2607 = vpop.f32.mrb[0].mxu0
    %v2608 = vpop.f32.mrb[0].mxu0
    %v2609 = vadd.f32 %v2481, %v2608
    %v2610 = vpop.f32.mrb[0].mxu0
    %2611 = vmatprep.mubr.bf16.mxu0 0
    %2612 = vmatmul.mubr.bf16.gmra.mrb[0].mxu0 %v2434
    %v2613 = vpop.f32.mrb[0].mxu0
    %v2614 = vadd.f32 %v2481, %v2613
    %v2615 = vpop.f32.mrb[0].mxu0
    %v2616 = vpop.f32.mrb[0].mxu0
    %v2617 = vadd.f32 %v2481, %v2616
    %v2618 = vpop.f32.mrb[0].mxu0
    %2619 = vmatprep.mubr.bf16.mxu0 0
    %2620 = vmatmul.mubr.bf16.gmra.mrb[0].mxu0 %v2435
    %v2621 = vpop.f32.mrb[0].mxu0
    %v2622 = vadd.f32 %v2481, %v2621
    %v2623 = vpop.f32.mrb[0].mxu0
    %v2624 = vpop.f32.mrb[0].mxu0
    %v2625 = vadd.f32 %v2481, %v2624
    %v2626 = vpop.f32.mrb[0].mxu0
    %2627 = vmatprep.mubr.bf16.mxu0 0
    %2628 = vmatmul.mubr.bf16.gmra.mrb[0].mxu0 %v2436
    %v2629 = vpop.f32.mrb[0].mxu0
    %v2630 = vadd.f32 %v2481, %v2629
    %v2631 = vpop.f32.mrb[0].mxu0
    %v2632 = vpop.f32.mrb[0].mxu0
    %v2633 = vadd.f32 %v2481, %v2632
    %v2634 = vpop.f32.mrb[0].mxu0
    %2635 = vmatprep.mubr.bf16.mxu0 0
    %2636 = vmatmul.mubr.bf16.gmra.mrb[0].mxu0 %v2437
    %v2637 = vpop.f32.mrb[0].mxu0
    %v2638 = vadd.f32 %v2481, %v2637
    %v2639 = vpop.f32.mrb[0].mxu0
    %v2640 = vpop.f32.mrb[0].mxu0
    %v2641 = vadd.f32 %v2481, %v2640
    %v2642 = vpop.f32.mrb[0].mxu0
    %2643 = vmatprep.mubr.bf16.mxu0 0
    %2644 = vmatmul.mubr.bf16.gmra.mrb[0].mxu0 %v2438
    %v2645 = vpop.f32.mrb[0].mxu0
    %v2646 = vadd.f32 %v2481, %v2645
    %v2647 = vpop.f32.mrb[0].mxu0
    %v2648 = vpop.f32.mrb[0].mxu0
    %v2649 = vadd.f32 %v2481, %v2648
    %v2650 = vpop.f32.mrb[0].mxu0
    %2651 = vmatprep.mubr.bf16.mxu0 0
    %2652 = vmatmul.mubr.bf16.gmra.mrb[0].mxu0 %v2439
    %v2653 = vpop.f32.mrb[0].mxu0
    %v2654 = vadd.f32 %v2481, %v2653
    %v2655 = vpop.f32.mrb[0].mxu0
    %v2656 = vpop.f32.mrb[0].mxu0
    %v2657 = vadd.f32 %v2481, %v2656
    %v2658 = vpop.f32.mrb[0].mxu0
    %2659 = vmatprep.mubr.bf16.mxu0 0
    %2660 = vmatmul.mubr.bf16.gmra.mrb[0].mxu0 %v2440
    %v2661 = vpop.f32.mrb[0].mxu0
    %v2662 = vadd.f32 %v2481, %v2661
    %v2663 = vpop.f32.mrb[0].mxu0
    %v2664 = vpop.f32.mrb[0].mxu0
    %v2665 = vadd.f32 %v2481, %v2664
    %v2666 = vpop.f32.mrb[0].mxu0
    %2667 = vmatprep.mubr.bf16.mxu0 0
    %2668 = vmatmul.mubr.bf16.gmra.mrb[0].mxu0 %v2441
    %v2669 = vpop.f32.mrb[0].mxu0
    %v2670 = vadd.f32 %v2481, %v2669
    %v2671 = vpop.f32.mrb[0].mxu0
    %v2672 = vpop.f32.mrb[0].mxu0
    %v2673 = vadd.f32 %v2481, %v2672
    %v2674 = vpop.f32.mrb[0].mxu0
    %2675 = vmatprep.mubr.bf16.mxu0 0
    %2676 = vmatmul.mubr.bf16.gmra.mrb[0].mxu0 %v2442
    %v2677 = vpop.f32.mrb[0].mxu0
    %v2678 = vadd.f32 %v2481, %v2677
    %v2679 = vpop.f32.mrb[0].mxu0
    %v2680 = vpop.f32.mrb[0].mxu0
    %v2681 = vadd.f32 %v2481, %v2680
    %v2682 = vpop.f32.mrb[0].mxu0
    %2683 = vmatprep.mubr.bf16.mxu0 0
    %2684 = vmatmul.mubr.bf16.gmra.mrb[0].mxu0 %v2443
    %v2685 = vpop.f32.mrb[0].mxu0
    %v2686 = vadd.f32 %v2481, %v2685
    %v2687 = vpop.f32.mrb[0].mxu0
    %v2688 = vpop.f32.mrb[0].mxu0
    %v2689 = vadd.f32 %v2481, %v2688
    %v2690 = vpop.f32.mrb[0].mxu0
    %2691 = vmatprep.mubr.bf16.mxu0 0
    %2692 = vmatmul.mubr.bf16.gmra.mrb[0].mxu0 %v2444
    %v2693 = vpop.f32.mrb[0].mxu0
    %v2694 = vadd.f32 %v2481, %v2693
    %v2695 = vpop.f32.mrb[0].mxu0
    %v2696 = vpop.f32.mrb[0].mxu0
    %v2697 = vadd.f32 %v2481, %v2696
    %v2698 = vpop.f32.mrb[0].mxu0
    %2699 = vmatprep.mubr.bf16.mxu0 0
    %2700 = vmatmul.mubr.bf16.gmra.mrb[0].mxu0 %v2445
    %v2701 = vpop.f32.mrb[0].mxu0
    %v2702 = vadd.f32 %v2481, %v2701
    %v2703 = vpop.f32.mrb[0].mxu0
    %v2704 = vpop.f32.mrb[0].mxu0
    %v2705 = vadd.f32 %v2481, %v2704
    %v2706 = vpop.f32.mrb[0].mxu0
    %2707 = vmatprep.mubr.bf16.mxu0 0
    %2708 = vmatmul.mubr.bf16.gmra.mrb[0].mxu0 %v2446
    %v2709 = vpop.f32.mrb[0].mxu0
    %v2710 = vadd.f32 %v2481, %v2709
    %v2711 = vpop.f32.mrb[0].mxu0
    %v2712 = vpop.f32.mrb[0].mxu0
    %v2713 = vadd.f32 %v2481, %v2712
    %v2714 = vpop.f32.mrb[0].mxu0
    %2715 = vmatprep.mubr.bf16.mxu0 0
    %2716 = vmatmul.mubr.bf16.gmra.mrb[0].mxu0 %v2447
    %v2717 = vpop.f32.mrb[0].mxu0
    %v2718 = vadd.f32 %v2481, %v2717
    %v2719 = vpop.f32.mrb[0].mxu0
    %v2720 = vpop.f32.mrb[0].mxu0
    %v2721 = vadd.f32 %v2481, %v2720
    %v2722 = vpop.f32.mrb[0].mxu0
    %2723 = vmatprep.mubr.bf16.mxu0 0
    %2724 = vmatmul.mubr.bf16.gmra.mrb[0].mxu0 %v2448
    %v2725 = vpop.f32.mrb[0].mxu0
    %v2726 = vadd.f32 %v2481, %v2725
    %v2727 = vpop.f32.mrb[0].mxu0
    %v2728 = vpop.f32.mrb[0].mxu0
    %v2729 = vadd.f32 %v2481, %v2728
    %v2730 = vpop.f32.mrb[0].mxu0
    %2731 = vmatprep.mubr.bf16.mxu0 0
    %2732 = vmatmul.mubr.bf16.gmra.mrb[0].mxu0 %v2449
    %v2733 = vpop.f32.mrb[0].mxu0
    %v2734 = vadd.f32 %v2481, %v2733
    %v2735 = vpop.f32.mrb[0].mxu0
    %v2736 = vpop.f32.mrb[0].mxu0
    %v2737 = vadd.f32 %v2481, %v2736
    %v2738 = vpop.f32.mrb[0].mxu0
    %2739 = vmatprep.mubr.bf16.mxu0 0
    %2740 = vmatmul.mubr.bf16.gmra.mrb[0].mxu0 %v2450
    %v2741 = vpop.f32.mrb[0].mxu0
    %v2742 = vadd.f32 %v2481, %v2741
    %v2743 = vpop.f32.mrb[0].mxu0
    %v2744 = vpop.f32.mrb[0].mxu0
    %v2745 = vadd.f32 %v2481, %v2744
    %v2746 = vpop.f32.mrb[0].mxu0
    %2747 = vmatprep.mubr.bf16.mxu0 0
    %2748 = vmatmul.mubr.bf16.gmra.mrb[0].mxu0 %v2451
    %v2749 = vpop.f32.mrb[0].mxu0
    %v2750 = vadd.f32 %v2481, %v2749
    %v2751 = vpop.f32.mrb[0].mxu0
    %v2752 = vpop.f32.mrb[0].mxu0
    %v2753 = vadd.f32 %v2481, %v2752
    %v2754 = vpop.f32.mrb[0].mxu0
    %2755 = vmatprep.mubr.bf16.mxu0 0
    %2756 = vmatmul.mubr.bf16.gmra.mrb[0].mxu0 %v2452
    %v2757 = vpop.f32.mrb[0].mxu0
    %v2758 = vadd.f32 %v2481, %v2757
    %v2759 = vpop.f32.mrb[0].mxu0
    %v2760 = vpop.f32.mrb[0].mxu0
    %v2761 = vadd.f32 %v2481, %v2760
    %v2762 = vpop.f32.mrb[0].mxu0
    %2763 = vmatprep.mubr.bf16.mxu0 0
    %2764 = vmatmul.mubr.bf16.gmra.mrb[0].mxu0 %v2453
    %v2765 = vpop.f32.mrb[0].mxu0
    %v2766 = vadd.f32 %v2481, %v2765
    %v2767 = vpop.f32.mrb[0].mxu0
    %v2768 = vpop.f32.mrb[0].mxu0
    %v2769 = vadd.f32 %v2481, %v2768
    %v2770 = vpop.f32.mrb[0].mxu0
    %2771 = vmatprep.mubr.bf16.mxu0 0
    %2772 = vmatmul.mubr.bf16.gmra.mrb[0].mxu0 %v2454
    %v2773 = vpop.f32.mrb[0].mxu0
    %v2774 = vadd.f32 %v2481, %v2773
    %v2775 = vpop.f32.mrb[0].mxu0
    %v2776 = vpop.f32.mrb[0].mxu0
    %v2777 = vadd.f32 %v2481, %v2776
    %v2778 = vpop.f32.mrb[0].mxu0
    %2779 = vmatprep.mubr.bf16.mxu0 0
    %2780 = vmatmul.mubr.bf16.gmra.mrb[0].mxu0 %v2455
    %v2781 = vpop.f32.mrb[0].mxu0
    %v2782 = vadd.f32 %v2481, %v2781
    %v2783 = vpop.f32.mrb[0].mxu0
    %v2784 = vpop.f32.mrb[0].mxu0
    %v2785 = vadd.f32 %v2481, %v2784
    %v2786 = vpop.f32.mrb[0].mxu0
    %2787 = vmatprep.mubr.bf16.mxu0 0
    %2788 = vmatmul.mubr.bf16.gmra.mrb[0].mxu0 %v2456
    %v2789 = vpop.f32.mrb[0].mxu0
    %v2790 = vadd.f32 %v2481, %v2789
    %v2791 = vpop.f32.mrb[0].mxu0
    %v2792 = vpop.f32.mrb[0].mxu0
    %v2793 = vadd.f32 %v2481, %v2792
    %v2794 = vpop.f32.mrb[0].mxu0
    %2795 = vmatprep.mubr.bf16.mxu0 0
    %2796 = vmatmul.mubr.bf16.gmra.mrb[0].mxu0 %v2457
    %v2797 = vpop.f32.mrb[0].mxu0
    %v2798 = vadd.f32 %v2481, %v2797
    %v2799 = vpop.f32.mrb[0].mxu0
    %v2800 = vpop.f32.mrb[0].mxu0
    %v2801 = vadd.f32 %v2481, %v2800
    %v2802 = vpop.f32.mrb[0].mxu0
    %2803 = vmatprep.mubr.bf16.mxu0 0
    %2804 = vmatmul.mubr.bf16.gmra.mrb[0].mxu0 %v2458
    %v2805 = vpop.f32.mrb[0].mxu0
    %v2806 = vadd.f32 %v2481, %v2805
    %v2807 = vpop.f32.mrb[0].mxu0
    %v2808 = vpop.f32.mrb[0].mxu0
    %v2809 = vadd.f32 %v2481, %v2808
    %v2810 = vpop.f32.mrb[0].mxu0
    %2811 = vmatprep.mubr.bf16.mxu0 0
    %2812 = vmatmul.mubr.bf16.gmra.mrb[0].mxu0 %v2459
    %v2813 = vpop.f32.mrb[0].mxu0
    %v2814 = vadd.f32 %v2481, %v2813
    %v2815 = vpop.f32.mrb[0].mxu0
    %v2816 = vpop.f32.mrb[0].mxu0
    %v2817 = vadd.f32 %v2481, %v2816
    %v2818 = vpop.f32.mrb[0].mxu0
    %2819 = vdwg.mxu0
    %v2820 = vmax.f32 %v2566, 0.0
    %v2821 = vmax.f32 %v2569, 0.0
    %v2822 = vmax.f32 %v2574, 0.0
    %v2823 = vmax.f32 %v2577, 0.0
    %v2824 = vmax.f32 %v2582, 0.0
    %v2825 = vmax.f32 %v2585, 0.0
    %v2826 = vmax.f32 %v2590, 0.0
    %v2827 = vmax.f32 %v2593, 0.0
    %v2828 = vmax.f32 %v2598, 0.0
    %v2829 = vmax.f32 %v2601, 0.0
    %v2830 = vmax.f32 %v2606, 0.0
    %v2831 = vmax.f32 %v2609, 0.0
    %v2832 = vmax.f32 %v2614, 0.0
    %v2833 = vmax.f32 %v2617, 0.0
    %v2834 = vmax.f32 %v2622, 0.0
    %v2835 = vmax.f32 %v2625, 0.0
    %v2836 = vmax.f32 %v2630, 0.0
    %v2837 = vmax.f32 %v2633, 0.0
    %v2838 = vmax.f32 %v2638, 0.0
    %v2839 = vmax.f32 %v2641, 0.0
    %v2840 = vmax.f32 %v2646, 0.0
    %v2841 = vmax.f32 %v2649, 0.0
    %v2842 = vmax.f32 %v2654, 0.0
    %v2843 = vmax.f32 %v2657, 0.0
    %v2844 = vmax.f32 %v2662, 0.0
    %v2845 = vmax.f32 %v2665, 0.0
    %v2846 = vmax.f32 %v2670, 0.0
    %v2847 = vmax.f32 %v2673, 0.0
    %v2848 = vmax.f32 %v2678, 0.0
    %v2849 = vmax.f32 %v2681, 0.0
    %v2850 = vmax.f32 %v2686, 0.0
    %v2851 = vmax.f32 %v2689, 0.0
    %v2852 = vmax.f32 %v2694, 0.0
    %v2853 = vmax.f32 %v2697, 0.0
    %v2854 = vmax.f32 %v2702, 0.0
    %v2855 = vmax.f32 %v2705, 0.0
    %v2856 = vmax.f32 %v2710, 0.0
    %v2857 = vmax.f32 %v2713, 0.0
    %v2858 = vmax.f32 %v2718, 0.0
    %v2859 = vmax.f32 %v2721, 0.0
    %v2860 = vmax.f32 %v2726, 0.0
    %v2861 = vmax.f32 %v2729, 0.0
    %v2862 = vmax.f32 %v2734, 0.0
    %v2863 = vmax.f32 %v2737, 0.0
    %v2864 = vmax.f32 %v2742, 0.0
    %v2865 = vmax.f32 %v2745, 0.0
    %v2866 = vmax.f32 %v2750, 0.0
    %v2867 = vmax.f32 %v2753, 0.0
    %v2868 = vmax.f32 %v2758, 0.0
    %v2869 = vmax.f32 %v2761, 0.0
    %v2870 = vmax.f32 %v2766, 0.0
    %v2871 = vmax.f32 %v2769, 0.0
    %v2872 = vmax.f32 %v2774, 0.0
    %v2873 = vmax.f32 %v2777, 0.0
    %v2874 = vmax.f32 %v2782, 0.0
    %v2875 = vmax.f32 %v2785, 0.0
    %v2876 = vmax.f32 %v2790, 0.0
    %v2877 = vmax.f32 %v2793, 0.0
    %v2878 = vmax.f32 %v2798, 0.0
    %v2879 = vmax.f32 %v2801, 0.0
    %v2880 = vmax.f32 %v2806, 0.0
    %v2881 = vmax.f32 %v2809, 0.0
    %v2882 = vmax.f32 %v2814, 0.0
    %v2883 = vmax.f32 %v2817, 0.0
    %v2884 = vpack.c.bf16 %v2821, %v2820
    %v2885 = vpack.c.bf16 %v2823, %v2822
    %v2886 = vpack.c.bf16 %v2825, %v2824
    %v2887 = vpack.c.bf16 %v2827, %v2826
    %v2888 = vpack.c.bf16 %v2829, %v2828
    %v2889 = vpack.c.bf16 %v2831, %v2830
    %v2890 = vpack.c.bf16 %v2833, %v2832
    %v2891 = vpack.c.bf16 %v2835, %v2834
    %v2892 = vpack.c.bf16 %v2837, %v2836
    %v2893 = vpack.c.bf16 %v2839, %v2838
    %v2894 = vpack.c.bf16 %v2841, %v2840
    %v2895 = vpack.c.bf16 %v2843, %v2842
    %v2896 = vpack.c.bf16 %v2845, %v2844
    %v2897 = vpack.c.bf16 %v2847, %v2846
    %v2898 = vpack.c.bf16 %v2849, %v2848
    %v2899 = vpack.c.bf16 %v2851, %v2850
    %v2900 = vpack.c.bf16 %v2853, %v2852
    %v2901 = vpack.c.bf16 %v2855, %v2854
    %v2902 = vpack.c.bf16 %v2857, %v2856
    %v2903 = vpack.c.bf16 %v2859, %v2858
    %v2904 = vpack.c.bf16 %v2861, %v2860
    %v2905 = vpack.c.bf16 %v2863, %v2862
    %v2906 = vpack.c.bf16 %v2865, %v2864
    %v2907 = vpack.c.bf16 %v2867, %v2866
    %v2908 = vpack.c.bf16 %v2869, %v2868
    %v2909 = vpack.c.bf16 %v2871, %v2870
    %v2910 = vpack.c.bf16 %v2873, %v2872
    %v2911 = vpack.c.bf16 %v2875, %v2874
    %v2912 = vpack.c.bf16 %v2877, %v2876
    %v2913 = vpack.c.bf16 %v2879, %v2878
    %v2914 = vpack.c.bf16 %v2881, %v2880
    %v2915 = vpack.c.bf16 %v2883, %v2882
    %v2916 = vld [vmem:[%s5] sm:$0xf]
    %v2917 = vld [vmem:[%s5 + $0x4] sm:$0xf]
    %v2918 = vld [vmem:[%s5 + $0x8] sm:$0xf]
    %v2919 = vld [vmem:[%s5 + $0xc] sm:$0xf]
    %v2920 = vld [vmem:[%s5 + $0x10] sm:$0xf]
    %v2921 = vld [vmem:[%s5 + $0x14] sm:$0xf]
    %v2922 = vld [vmem:[%s5 + $0x18] sm:$0xf]
    %v2923 = vld [vmem:[%s5 + $0x1c] sm:$0xf]
    %v2924 = vld [vmem:[%s5 + $0x20] sm:$0xf]
    %v2925 = vld [vmem:[%s5 + $0x24] sm:$0xf]
    %v2926 = vld [vmem:[%s5 + $0x28] sm:$0xf]
    %v2927 = vld [vmem:[%s5 + $0x2c] sm:$0xf]
    %v2928 = vld [vmem:[%s5 + $0x30] sm:$0xf]
    %v2929 = vld [vmem:[%s5 + $0x34] sm:$0xf]
    %v2930 = vld [vmem:[%s5 + $0x38] sm:$0xf]
    %v2931 = vld [vmem:[%s5 + $0x3c] sm:$0xf]
    %v2932 = vld [vmem:[%s6] sm:$0x1]
    %v2934 = vlaneseq
    %v2935 = vshrl.u32 %v2934, 7
    %v2936 = vsub.s32 0, %v2935
    %v2937 = vrot.slane %v2932, %v2936
    %v2955 = vunpack.c.l.b16 %v2916
    %v2956 = vunpack.c.l.b16 %v2917
    %v2957 = vunpack.c.l.b16 %v2918
    %v2958 = vunpack.c.l.b16 %v2919
    %v2959 = vunpack.c.l.b16 %v2920
    %v2960 = vunpack.c.l.b16 %v2921
    %v2961 = vunpack.c.l.b16 %v2922
    %v2962 = vunpack.c.l.b16 %v2923
    %v2963 = vunpack.c.l.b16 %v2924
    %v2964 = vunpack.c.l.b16 %v2925
    %v2965 = vunpack.c.l.b16 %v2926
    %v2966 = vunpack.c.l.b16 %v2927
    %v2967 = vunpack.c.l.b16 %v2928
    %v2968 = vunpack.c.l.b16 %v2929
    %v2969 = vunpack.c.l.b16 %v2930
    %v2970 = vunpack.c.l.b16 %v2931
    %v2971 = vpack.c.b16 %v2956, %v2955
    %v2972 = vpack.c.b16 %v2958, %v2957
    %v2973 = vpack.c.b16 %v2960, %v2959
    %v2974 = vpack.c.b16 %v2962, %v2961
    %v2975 = vpack.c.b16 %v2964, %v2963
    %v2976 = vpack.c.b16 %v2966, %v2965
    %v2977 = vpack.c.b16 %v2968, %v2967
    %v2978 = vpack.c.b16 %v2970, %v2969
    %2987 = vmatprep.subr.bf16.mxu0 0
    %2988 = vmatpush1.bf16.msra.mxu0 %v2971
    %2989 = vmatprep.subr.bf16.mxu0 0
    %2990 = vmatpush1.bf16.msra.mxu0 %v2972
    %2991 = vmatprep.subr.bf16.mxu0 0
    %2992 = vmatpush1.bf16.msra.mxu0 %v2973
    %2993 = vmatprep.subr.bf16.mxu0 0
    %2994 = vmatpush1.bf16.msra.mxu0 %v2974
    %2995 = vmatprep.subr.bf16.mxu0 0
    %2996 = vmatpush1.bf16.msra.mxu0 %v2975
    %2997 = vmatprep.subr.bf16.mxu0 0
    %2998 = vmatpush1.bf16.msra.mxu0 %v2976
    %2999 = vmatprep.subr.bf16.mxu0 0
    %3000 = vmatpush1.bf16.msra.mxu0 %v2977
    %3001 = vmatprep.subr.bf16.mxu0 0
    %3002 = vmatpush1.bf16.msra.mxu0 %v2978
    %3003 = vmatprep.subr.bf16.mxu0 0
    %3004 = vmatpush1.bf16.msra.mxu0 0
    %3005 = vmatprep.subr.bf16.mxu0 0
    %3006 = vmatpush1.bf16.msra.mxu0 0
    %3007 = vmatprep.subr.bf16.mxu0 0
    %3008 = vmatpush1.bf16.msra.mxu0 0
    %3009 = vmatprep.subr.bf16.mxu0 0
    %3010 = vmatpush1.bf16.msra.mxu0 0
    %3011 = vmatprep.subr.bf16.mxu0 0
    %3012 = vmatpush1.bf16.msra.mxu0 0
    %3013 = vmatprep.subr.bf16.mxu0 0
    %3014 = vmatpush1.bf16.msra.mxu0 0
    %3015 = vmatprep.subr.bf16.mxu0 0
    %3016 = vmatpush1.bf16.msra.mxu0 0
    %3017 = vmatprep.subr.bf16.mxu0 0
    %3018 = vmatpush1.bf16.msra.mxu0 0
    %3019 = vmatprep.mubr.bf16.mxu0 0
    %3020 = vmatmul.mubr.bf16.gmra.mrb[0].mxu0 %v2884
    %v3021 = vpop.f32.mrb[0].mxu0
    %v3022 = vadd.f32 %v2937, %v3021
    %v3023 = vpop.f32.mrb[0].mxu0
    %v3024 = vpop.f32.mrb[0].mxu0
    %v3025 = vadd.f32 %v2937, %v3024
    %v3026 = vpop.f32.mrb[0].mxu0
    %3027 = vmatprep.mubr.bf16.mxu0 0
    %3028 = vmatmul.mubr.bf16.gmra.mrb[0].mxu0 %v2885
    %v3029 = vpop.f32.mrb[0].mxu0
    %v3030 = vadd.f32 %v2937, %v3029
    %v3031 = vpop.f32.mrb[0].mxu0
    %v3032 = vpop.f32.mrb[0].mxu0
    %v3033 = vadd.f32 %v2937, %v3032
    %v3034 = vpop.f32.mrb[0].mxu0
    %3035 = vmatprep.mubr.bf16.mxu0 0
    %3036 = vmatmul.mubr.bf16.gmra.mrb[0].mxu0 %v2886
    %v3037 = vpop.f32.mrb[0].mxu0
    %v3038 = vadd.f32 %v2937, %v3037
    %v3039 = vpop.f32.mrb[0].mxu0
    %v3040 = vpop.f32.mrb[0].mxu0
    %v3041 = vadd.f32 %v2937, %v3040
    %v3042 = vpop.f32.mrb[0].mxu0
    %3043 = vmatprep.mubr.bf16.mxu0 0
    %3044 = vmatmul.mubr.bf16.gmra.mrb[0].mxu0 %v2887
    %v3045 = vpop.f32.mrb[0].mxu0
    %v3046 = vadd.f32 %v2937, %v3045
    %v3047 = vpop.f32.mrb[0].mxu0
    %v3048 = vpop.f32.mrb[0].mxu0
    %v3049 = vadd.f32 %v2937, %v3048
    %v3050 = vpop.f32.mrb[0].mxu0
    %3051 = vmatprep.mubr.bf16.mxu0 0
    %3052 = vmatmul.mubr.bf16.gmra.mrb[0].mxu0 %v2888
    %v3053 = vpop.f32.mrb[0].mxu0
    %v3054 = vadd.f32 %v2937, %v3053
    %v3055 = vpop.f32.mrb[0].mxu0
    %v3056 = vpop.f32.mrb[0].mxu0
    %v3057 = vadd.f32 %v2937, %v3056
    %v3058 = vpop.f32.mrb[0].mxu0
    %3059 = vmatprep.mubr.bf16.mxu0 0
    %3060 = vmatmul.mubr.bf16.gmra.mrb[0].mxu0 %v2889
    %v3061 = vpop.f32.mrb[0].mxu0
    %v3062 = vadd.f32 %v2937, %v3061
    %v3063 = vpop.f32.mrb[0].mxu0
    %v3064 = vpop.f32.mrb[0].mxu0
    %v3065 = vadd.f32 %v2937, %v3064
    %v3066 = vpop.f32.mrb[0].mxu0
    %3067 = vmatprep.mubr.bf16.mxu0 0
    %3068 = vmatmul.mubr.bf16.gmra.mrb[0].mxu0 %v2890
    %v3069 = vpop.f32.mrb[0].mxu0
    %v3070 = vadd.f32 %v2937, %v3069
    %v3071 = vpop.f32.mrb[0].mxu0
    %v3072 = vpop.f32.mrb[0].mxu0
    %v3073 = vadd.f32 %v2937, %v3072
    %v3074 = vpop.f32.mrb[0].mxu0
    %3075 = vmatprep.mubr.bf16.mxu0 0
    %3076 = vmatmul.mubr.bf16.gmra.mrb[0].mxu0 %v2891
    %v3077 = vpop.f32.mrb[0].mxu0
    %v3078 = vadd.f32 %v2937, %v3077
    %v3079 = vpop.f32.mrb[0].mxu0
    %v3080 = vpop.f32.mrb[0].mxu0
    %v3081 = vadd.f32 %v2937, %v3080
    %v3082 = vpop.f32.mrb[0].mxu0
    %3083 = vmatprep.mubr.bf16.mxu0 0
    %3084 = vmatmul.mubr.bf16.gmra.mrb[0].mxu0 %v2892
    %v3085 = vpop.f32.mrb[0].mxu0
    %v3086 = vadd.f32 %v2937, %v3085
    %v3087 = vpop.f32.mrb[0].mxu0
    %v3088 = vpop.f32.mrb[0].mxu0
    %v3089 = vadd.f32 %v2937, %v3088
    %v3090 = vpop.f32.mrb[0].mxu0
    %3091 = vmatprep.mubr.bf16.mxu0 0
    %3092 = vmatmul.mubr.bf16.gmra.mrb[0].mxu0 %v2893
    %v3093 = vpop.f32.mrb[0].mxu0
    %v3094 = vadd.f32 %v2937, %v3093
    %v3095 = vpop.f32.mrb[0].mxu0
    %v3096 = vpop.f32.mrb[0].mxu0
    %v3097 = vadd.f32 %v2937, %v3096
    %v3098 = vpop.f32.mrb[0].mxu0
    %3099 = vmatprep.mubr.bf16.mxu0 0
    %3100 = vmatmul.mubr.bf16.gmra.mrb[0].mxu0 %v2894
    %v3101 = vpop.f32.mrb[0].mxu0
    %v3102 = vadd.f32 %v2937, %v3101
    %v3103 = vpop.f32.mrb[0].mxu0
    %v3104 = vpop.f32.mrb[0].mxu0
    %v3105 = vadd.f32 %v2937, %v3104
    %v3106 = vpop.f32.mrb[0].mxu0
    %3107 = vmatprep.mubr.bf16.mxu0 0
    %3108 = vmatmul.mubr.bf16.gmra.mrb[0].mxu0 %v2895
    %v3109 = vpop.f32.mrb[0].mxu0
    %v3110 = vadd.f32 %v2937, %v3109
    %v3111 = vpop.f32.mrb[0].mxu0
    %v3112 = vpop.f32.mrb[0].mxu0
    %v3113 = vadd.f32 %v2937, %v3112
    %v3114 = vpop.f32.mrb[0].mxu0
    %3115 = vmatprep.mubr.bf16.mxu0 0
    %3116 = vmatmul.mubr.bf16.gmra.mrb[0].mxu0 %v2896
    %v3117 = vpop.f32.mrb[0].mxu0
    %v3118 = vadd.f32 %v2937, %v3117
    %v3119 = vpop.f32.mrb[0].mxu0
    %v3120 = vpop.f32.mrb[0].mxu0
    %v3121 = vadd.f32 %v2937, %v3120
    %v3122 = vpop.f32.mrb[0].mxu0
    %3123 = vmatprep.mubr.bf16.mxu0 0
    %3124 = vmatmul.mubr.bf16.gmra.mrb[0].mxu0 %v2897
    %v3125 = vpop.f32.mrb[0].mxu0
    %v3126 = vadd.f32 %v2937, %v3125
    %v3127 = vpop.f32.mrb[0].mxu0
    %v3128 = vpop.f32.mrb[0].mxu0
    %v3129 = vadd.f32 %v2937, %v3128
    %v3130 = vpop.f32.mrb[0].mxu0
    %3131 = vmatprep.mubr.bf16.mxu0 0
    %3132 = vmatmul.mubr.bf16.gmra.mrb[0].mxu0 %v2898
    %v3133 = vpop.f32.mrb[0].mxu0
    %v3134 = vadd.f32 %v2937, %v3133
    %v3135 = vpop.f32.mrb[0].mxu0
    %v3136 = vpop.f32.mrb[0].mxu0
    %v3137 = vadd.f32 %v2937, %v3136
    %v3138 = vpop.f32.mrb[0].mxu0
    %3139 = vmatprep.mubr.bf16.mxu0 0
    %3140 = vmatmul.mubr.bf16.gmra.mrb[0].mxu0 %v2899
    %v3141 = vpop.f32.mrb[0].mxu0
    %v3142 = vadd.f32 %v2937, %v3141
    %v3143 = vpop.f32.mrb[0].mxu0
    %v3144 = vpop.f32.mrb[0].mxu0
    %v3145 = vadd.f32 %v2937, %v3144
    %v3146 = vpop.f32.mrb[0].mxu0
    %3147 = vmatprep.mubr.bf16.mxu0 0
    %3148 = vmatmul.mubr.bf16.gmra.mrb[0].mxu0 %v2900
    %v3149 = vpop.f32.mrb[0].mxu0
    %v3150 = vadd.f32 %v2937, %v3149
    %v3151 = vpop.f32.mrb[0].mxu0
    %v3152 = vpop.f32.mrb[0].mxu0
    %v3153 = vadd.f32 %v2937, %v3152
    %v3154 = vpop.f32.mrb[0].mxu0
    %3155 = vmatprep.mubr.bf16.mxu0 0
    %3156 = vmatmul.mubr.bf16.gmra.mrb[0].mxu0 %v2901
    %v3157 = vpop.f32.mrb[0].mxu0
    %v3158 = vadd.f32 %v2937, %v3157
    %v3159 = vpop.f32.mrb[0].mxu0
    %v3160 = vpop.f32.mrb[0].mxu0
    %v3161 = vadd.f32 %v2937, %v3160
    %v3162 = vpop.f32.mrb[0].mxu0
    %3163 = vmatprep.mubr.bf16.mxu0 0
    %3164 = vmatmul.mubr.bf16.gmra.mrb[0].mxu0 %v2902
    %v3165 = vpop.f32.mrb[0].mxu0
    %v3166 = vadd.f32 %v2937, %v3165
    %v3167 = vpop.f32.mrb[0].mxu0
    %v3168 = vpop.f32.mrb[0].mxu0
    %v3169 = vadd.f32 %v2937, %v3168
    %v3170 = vpop.f32.mrb[0].mxu0
    %3171 = vmatprep.mubr.bf16.mxu0 0
    %3172 = vmatmul.mubr.bf16.gmra.mrb[0].mxu0 %v2903
    %v3173 = vpop.f32.mrb[0].mxu0
    %v3174 = vadd.f32 %v2937, %v3173
    %v3175 = vpop.f32.mrb[0].mxu0
    %v3176 = vpop.f32.mrb[0].mxu0
    %v3177 = vadd.f32 %v2937, %v3176
    %v3178 = vpop.f32.mrb[0].mxu0
    %3179 = vmatprep.mubr.bf16.mxu0 0
    %3180 = vmatmul.mubr.bf16.gmra.mrb[0].mxu0 %v2904
    %v3181 = vpop.f32.mrb[0].mxu0
    %v3182 = vadd.f32 %v2937, %v3181
    %v3183 = vpop.f32.mrb[0].mxu0
    %v3184 = vpop.f32.mrb[0].mxu0
    %v3185 = vadd.f32 %v2937, %v3184
    %v3186 = vpop.f32.mrb[0].mxu0
    %3187 = vmatprep.mubr.bf16.mxu0 0
    %3188 = vmatmul.mubr.bf16.gmra.mrb[0].mxu0 %v2905
    %v3189 = vpop.f32.mrb[0].mxu0
    %v3190 = vadd.f32 %v2937, %v3189
    %v3191 = vpop.f32.mrb[0].mxu0
    %v3192 = vpop.f32.mrb[0].mxu0
    %v3193 = vadd.f32 %v2937, %v3192
    %v3194 = vpop.f32.mrb[0].mxu0
    %3195 = vmatprep.mubr.bf16.mxu0 0
    %3196 = vmatmul.mubr.bf16.gmra.mrb[0].mxu0 %v2906
    %v3197 = vpop.f32.mrb[0].mxu0
    %v3198 = vadd.f32 %v2937, %v3197
    %v3199 = vpop.f32.mrb[0].mxu0
    %v3200 = vpop.f32.mrb[0].mxu0
    %v3201 = vadd.f32 %v2937, %v3200
    %v3202 = vpop.f32.mrb[0].mxu0
    %3203 = vmatprep.mubr.bf16.mxu0 0
    %3204 = vmatmul.mubr.bf16.gmra.mrb[0].mxu0 %v2907
    %v3205 = vpop.f32.mrb[0].mxu0
    %v3206 = vadd.f32 %v2937, %v3205
    %v3207 = vpop.f32.mrb[0].mxu0
    %v3208 = vpop.f32.mrb[0].mxu0
    %v3209 = vadd.f32 %v2937, %v3208
    %v3210 = vpop.f32.mrb[0].mxu0
    %3211 = vmatprep.mubr.bf16.mxu0 0
    %3212 = vmatmul.mubr.bf16.gmra.mrb[0].mxu0 %v2908
    %v3213 = vpop.f32.mrb[0].mxu0
    %v3214 = vadd.f32 %v2937, %v3213
    %v3215 = vpop.f32.mrb[0].mxu0
    %v3216 = vpop.f32.mrb[0].mxu0
    %v3217 = vadd.f32 %v2937, %v3216
    %v3218 = vpop.f32.mrb[0].mxu0
    %3219 = vmatprep.mubr.bf16.mxu0 0
    %3220 = vmatmul.mubr.bf16.gmra.mrb[0].mxu0 %v2909
    %v3221 = vpop.f32.mrb[0].mxu0
    %v3222 = vadd.f32 %v2937, %v3221
    %v3223 = vpop.f32.mrb[0].mxu0
    %v3224 = vpop.f32.mrb[0].mxu0
    %v3225 = vadd.f32 %v2937, %v3224
    %v3226 = vpop.f32.mrb[0].mxu0
    %3227 = vmatprep.mubr.bf16.mxu0 0
    %3228 = vmatmul.mubr.bf16.gmra.mrb[0].mxu0 %v2910
    %v3229 = vpop.f32.mrb[0].mxu0
    %v3230 = vadd.f32 %v2937, %v3229
    %v3231 = vpop.f32.mrb[0].mxu0
    %v3232 = vpop.f32.mrb[0].mxu0
    %v3233 = vadd.f32 %v2937, %v3232
    %v3234 = vpop.f32.mrb[0].mxu0
    %3235 = vmatprep.mubr.bf16.mxu0 0
    %3236 = vmatmul.mubr.bf16.gmra.mrb[0].mxu0 %v2911
    %v3237 = vpop.f32.mrb[0].mxu0
    %v3238 = vadd.f32 %v2937, %v3237
    %v3239 = vpop.f32.mrb[0].mxu0
    %v3240 = vpop.f32.mrb[0].mxu0
    %v3241 = vadd.f32 %v2937, %v3240
    %v3242 = vpop.f32.mrb[0].mxu0
    %3243 = vmatprep.mubr.bf16.mxu0 0
    %3244 = vmatmul.mubr.bf16.gmra.mrb[0].mxu0 %v2912
    %v3245 = vpop.f32.mrb[0].mxu0
    %v3246 = vadd.f32 %v2937, %v3245
    %v3247 = vpop.f32.mrb[0].mxu0
    %v3248 = vpop.f32.mrb[0].mxu0
    %v3249 = vadd.f32 %v2937, %v3248
    %v3250 = vpop.f32.mrb[0].mxu0
    %3251 = vmatprep.mubr.bf16.mxu0 0
    %3252 = vmatmul.mubr.bf16.gmra.mrb[0].mxu0 %v2913
    %v3253 = vpop.f32.mrb[0].mxu0
    %v3254 = vadd.f32 %v2937, %v3253
    %v3255 = vpop.f32.mrb[0].mxu0
    %v3256 = vpop.f32.mrb[0].mxu0
    %v3257 = vadd.f32 %v2937, %v3256
    %v3258 = vpop.f32.mrb[0].mxu0
    %3259 = vmatprep.mubr.bf16.mxu0 0
    %3260 = vmatmul.mubr.bf16.gmra.mrb[0].mxu0 %v2914
    %v3261 = vpop.f32.mrb[0].mxu0
    %v3262 = vadd.f32 %v2937, %v3261
    %v3263 = vpop.f32.mrb[0].mxu0
    %v3264 = vpop.f32.mrb[0].mxu0
    %v3265 = vadd.f32 %v2937, %v3264
    %v3266 = vpop.f32.mrb[0].mxu0
    %3267 = vmatprep.mubr.bf16.mxu0 0
    %3268 = vmatmul.mubr.bf16.gmra.mrb[0].mxu0 %v2915
    %v3269 = vpop.f32.mrb[0].mxu0
    %v3270 = vadd.f32 %v2937, %v3269
    %v3271 = vpop.f32.mrb[0].mxu0
    %v3272 = vpop.f32.mrb[0].mxu0
    %v3273 = vadd.f32 %v2937, %v3272
    %v3274 = vpop.f32.mrb[0].mxu0
    %3275 = vdwg.mxu0
    %v3276 = vmax.f32 %v3022, 0.0
    %v3277 = vmax.f32 %v3025, 0.0
    %v3278 = vmax.f32 %v3030, 0.0
    %v3279 = vmax.f32 %v3033, 0.0
    %v3280 = vmax.f32 %v3038, 0.0
    %v3281 = vmax.f32 %v3041, 0.0
    %v3282 = vmax.f32 %v3046, 0.0
    %v3283 = vmax.f32 %v3049, 0.0
    %v3284 = vmax.f32 %v3054, 0.0
    %v3285 = vmax.f32 %v3057, 0.0
    %v3286 = vmax.f32 %v3062, 0.0
    %v3287 = vmax.f32 %v3065, 0.0
    %v3288 = vmax.f32 %v3070, 0.0
    %v3289 = vmax.f32 %v3073, 0.0
    %v3290 = vmax.f32 %v3078, 0.0
    %v3291 = vmax.f32 %v3081, 0.0
    %v3292 = vmax.f32 %v3086, 0.0
    %v3293 = vmax.f32 %v3089, 0.0
    %v3294 = vmax.f32 %v3094, 0.0
    %v3295 = vmax.f32 %v3097, 0.0
    %v3296 = vmax.f32 %v3102, 0.0
    %v3297 = vmax.f32 %v3105, 0.0
    %v3298 = vmax.f32 %v3110, 0.0
    %v3299 = vmax.f32 %v3113, 0.0
    %v3300 = vmax.f32 %v3118, 0.0
    %v3301 = vmax.f32 %v3121, 0.0
    %v3302 = vmax.f32 %v3126, 0.0
    %v3303 = vmax.f32 %v3129, 0.0
    %v3304 = vmax.f32 %v3134, 0.0
    %v3305 = vmax.f32 %v3137, 0.0
    %v3306 = vmax.f32 %v3142, 0.0
    %v3307 = vmax.f32 %v3145, 0.0
    %v3308 = vmax.f32 %v3150, 0.0
    %v3309 = vmax.f32 %v3153, 0.0
    %v3310 = vmax.f32 %v3158, 0.0
    %v3311 = vmax.f32 %v3161, 0.0
    %v3312 = vmax.f32 %v3166, 0.0
    %v3313 = vmax.f32 %v3169, 0.0
    %v3314 = vmax.f32 %v3174, 0.0
    %v3315 = vmax.f32 %v3177, 0.0
    %v3316 = vmax.f32 %v3182, 0.0
    %v3317 = vmax.f32 %v3185, 0.0
    %v3318 = vmax.f32 %v3190, 0.0
    %v3319 = vmax.f32 %v3193, 0.0
    %v3320 = vmax.f32 %v3198, 0.0
    %v3321 = vmax.f32 %v3201, 0.0
    %v3322 = vmax.f32 %v3206, 0.0
    %v3323 = vmax.f32 %v3209, 0.0
    %v3324 = vmax.f32 %v3214, 0.0
    %v3325 = vmax.f32 %v3217, 0.0
    %v3326 = vmax.f32 %v3222, 0.0
    %v3327 = vmax.f32 %v3225, 0.0
    %v3328 = vmax.f32 %v3230, 0.0
    %v3329 = vmax.f32 %v3233, 0.0
    %v3330 = vmax.f32 %v3238, 0.0
    %v3331 = vmax.f32 %v3241, 0.0
    %v3332 = vmax.f32 %v3246, 0.0
    %v3333 = vmax.f32 %v3249, 0.0
    %v3334 = vmax.f32 %v3254, 0.0
    %v3335 = vmax.f32 %v3257, 0.0
    %v3336 = vmax.f32 %v3262, 0.0
    %v3337 = vmax.f32 %v3265, 0.0
    %v3338 = vmax.f32 %v3270, 0.0
    %v3339 = vmax.f32 %v3273, 0.0
    %v3340 = vpack.c.bf16 %v3277, %v3276
    %v3341 = vpack.c.bf16 %v3279, %v3278
    %v3342 = vpack.c.bf16 %v3281, %v3280
    %v3343 = vpack.c.bf16 %v3283, %v3282
    %v3344 = vpack.c.bf16 %v3285, %v3284
    %v3345 = vpack.c.bf16 %v3287, %v3286
    %v3346 = vpack.c.bf16 %v3289, %v3288
    %v3347 = vpack.c.bf16 %v3291, %v3290
    %v3348 = vpack.c.bf16 %v3293, %v3292
    %v3349 = vpack.c.bf16 %v3295, %v3294
    %v3350 = vpack.c.bf16 %v3297, %v3296
    %v3351 = vpack.c.bf16 %v3299, %v3298
    %v3352 = vpack.c.bf16 %v3301, %v3300
    %v3353 = vpack.c.bf16 %v3303, %v3302
    %v3354 = vpack.c.bf16 %v3305, %v3304
    %v3355 = vpack.c.bf16 %v3307, %v3306
    %v3356 = vpack.c.bf16 %v3309, %v3308
    %v3357 = vpack.c.bf16 %v3311, %v3310
    %v3358 = vpack.c.bf16 %v3313, %v3312
    %v3359 = vpack.c.bf16 %v3315, %v3314
    %v3360 = vpack.c.bf16 %v3317, %v3316
    %v3361 = vpack.c.bf16 %v3319, %v3318
    %v3362 = vpack.c.bf16 %v3321, %v3320
    %v3363 = vpack.c.bf16 %v3323, %v3322
    %v3364 = vpack.c.bf16 %v3325, %v3324
    %v3365 = vpack.c.bf16 %v3327, %v3326
    %v3366 = vpack.c.bf16 %v3329, %v3328
    %v3367 = vpack.c.bf16 %v3331, %v3330
    %v3368 = vpack.c.bf16 %v3333, %v3332
    %v3369 = vpack.c.bf16 %v3335, %v3334
    %v3370 = vpack.c.bf16 %v3337, %v3336
    %v3371 = vpack.c.bf16 %v3339, %v3338
    %v3372 = vld [vmem:[%s7] sm:$0xf]
    %v3373 = vld [vmem:[%s7 + $0x4] sm:$0xf]
    %v3374 = vld [vmem:[%s7 + $0x8] sm:$0xf]
    %v3375 = vld [vmem:[%s7 + $0xc] sm:$0xf]
    %v3376 = vld [vmem:[%s7 + $0x10] sm:$0xf]
    %v3377 = vld [vmem:[%s7 + $0x14] sm:$0xf]
    %v3378 = vld [vmem:[%s7 + $0x18] sm:$0xf]
    %v3379 = vld [vmem:[%s7 + $0x1c] sm:$0xf]
    %v3380 = vld [vmem:[%s7 + $0x20] sm:$0xf]
    %v3381 = vld [vmem:[%s7 + $0x24] sm:$0xf]
    %v3382 = vld [vmem:[%s7 + $0x28] sm:$0xf]
    %v3383 = vld [vmem:[%s7 + $0x2c] sm:$0xf]
    %v3384 = vld [vmem:[%s7 + $0x30] sm:$0xf]
    %v3385 = vld [vmem:[%s7 + $0x34] sm:$0xf]
    %v3386 = vld [vmem:[%s7 + $0x38] sm:$0xf]
    %v3387 = vld [vmem:[%s7 + $0x3c] sm:$0xf]
    %v3388 = vld [vmem:[%s8] sm:$0x1]
    %v3390 = vlaneseq
    %v3391 = vshrl.u32 %v3390, 7
    %v3392 = vsub.s32 0, %v3391
    %v3393 = vrot.slane %v3388, %v3392
    %v3411 = vunpack.c.l.b16 %v3372
    %v3412 = vunpack.c.l.b16 %v3373
    %v3413 = vunpack.c.l.b16 %v3374
    %v3414 = vunpack.c.l.b16 %v3375
    %v3415 = vunpack.c.l.b16 %v3376
    %v3416 = vunpack.c.l.b16 %v3377
    %v3417 = vunpack.c.l.b16 %v3378
    %v3418 = vunpack.c.l.b16 %v3379
    %v3419 = vunpack.c.l.b16 %v3380
    %v3420 = vunpack.c.l.b16 %v3381
    %v3421 = vunpack.c.l.b16 %v3382
    %v3422 = vunpack.c.l.b16 %v3383
    %v3423 = vunpack.c.l.b16 %v3384
    %v3424 = vunpack.c.l.b16 %v3385
    %v3425 = vunpack.c.l.b16 %v3386
    %v3426 = vunpack.c.l.b16 %v3387
    %v3427 = vpack.c.b16 %v3412, %v3411
    %v3428 = vpack.c.b16 %v3414, %v3413
    %v3429 = vpack.c.b16 %v3416, %v3415
    %v3430 = vpack.c.b16 %v3418, %v3417
    %v3431 = vpack.c.b16 %v3420, %v3419
    %v3432 = vpack.c.b16 %v3422, %v3421
    %v3433 = vpack.c.b16 %v3424, %v3423
    %v3434 = vpack.c.b16 %v3426, %v3425
    %3443 = vmatprep.subr.bf16.mxu0 0
    %3444 = vmatpush1.bf16.msra.mxu0 %v3427
    %3445 = vmatprep.subr.bf16.mxu0 0
    %3446 = vmatpush1.bf16.msra.mxu0 %v3428
    %3447 = vmatprep.subr.bf16.mxu0 0
    %3448 = vmatpush1.bf16.msra.mxu0 %v3429
    %3449 = vmatprep.subr.bf16.mxu0 0
    %3450 = vmatpush1.bf16.msra.mxu0 %v3430
    %3451 = vmatprep.subr.bf16.mxu0 0
    %3452 = vmatpush1.bf16.msra.mxu0 %v3431
    %3453 = vmatprep.subr.bf16.mxu0 0
    %3454 = vmatpush1.bf16.msra.mxu0 %v3432
    %3455 = vmatprep.subr.bf16.mxu0 0
    %3456 = vmatpush1.bf16.msra.mxu0 %v3433
    %3457 = vmatprep.subr.bf16.mxu0 0
    %3458 = vmatpush1.bf16.msra.mxu0 %v3434
    %3459 = vmatprep.subr.bf16.mxu0 0
    %3460 = vmatpush1.bf16.msra.mxu0 0
    %3461 = vmatprep.subr.bf16.mxu0 0
    %3462 = vmatpush1.bf16.msra.mxu0 0
    %3463 = vmatprep.subr.bf16.mxu0 0
    %3464 = vmatpush1.bf16.msra.mxu0 0
    %3465 = vmatprep.subr.bf16.mxu0 0
    %3466 = vmatpush1.bf16.msra.mxu0 0
    %3467 = vmatprep.subr.bf16.mxu0 0
    %3468 = vmatpush1.bf16.msra.mxu0 0
    %3469 = vmatprep.subr.bf16.mxu0 0
    %3470 = vmatpush1.bf16.msra.mxu0 0
    %3471 = vmatprep.subr.bf16.mxu0 0
    %3472 = vmatpush1.bf16.msra.mxu0 0
    %3473 = vmatprep.subr.bf16.mxu0 0
    %3474 = vmatpush1.bf16.msra.mxu0 0
    %3475 = vmatprep.mubr.bf16.mxu0 0
    %3476 = vmatmul.mubr.bf16.gmra.mrb[0].mxu0 %v3340
    %v3477 = vpop.f32.mrb[0].mxu0
    %v3478 = vadd.f32 %v3393, %v3477
    %v3479 = vpop.f32.mrb[0].mxu0
    %v3480 = vpop.f32.mrb[0].mxu0
    %v3481 = vadd.f32 %v3393, %v3480
    %v3482 = vpop.f32.mrb[0].mxu0
    %3483 = vmatprep.mubr.bf16.mxu0 0
    %3484 = vmatmul.mubr.bf16.gmra.mrb[0].mxu0 %v3341
    %v3485 = vpop.f32.mrb[0].mxu0
    %v3486 = vadd.f32 %v3393, %v3485
    %v3487 = vpop.f32.mrb[0].mxu0
    %v3488 = vpop.f32.mrb[0].mxu0
    %v3489 = vadd.f32 %v3393, %v3488
    %v3490 = vpop.f32.mrb[0].mxu0
    %3491 = vmatprep.mubr.bf16.mxu0 0
    %3492 = vmatmul.mubr.bf16.gmra.mrb[0].mxu0 %v3342
    %v3493 = vpop.f32.mrb[0].mxu0
    %v3494 = vadd.f32 %v3393, %v3493
    %v3495 = vpop.f32.mrb[0].mxu0
    %v3496 = vpop.f32.mrb[0].mxu0
    %v3497 = vadd.f32 %v3393, %v3496
    %v3498 = vpop.f32.mrb[0].mxu0
    %3499 = vmatprep.mubr.bf16.mxu0 0
    %3500 = vmatmul.mubr.bf16.gmra.mrb[0].mxu0 %v3343
    %v3501 = vpop.f32.mrb[0].mxu0
    %v3502 = vadd.f32 %v3393, %v3501
    %v3503 = vpop.f32.mrb[0].mxu0
    %v3504 = vpop.f32.mrb[0].mxu0
    %v3505 = vadd.f32 %v3393, %v3504
    %v3506 = vpop.f32.mrb[0].mxu0
    %3507 = vmatprep.mubr.bf16.mxu0 0
    %3508 = vmatmul.mubr.bf16.gmra.mrb[0].mxu0 %v3344
    %v3509 = vpop.f32.mrb[0].mxu0
    %v3510 = vadd.f32 %v3393, %v3509
    %v3511 = vpop.f32.mrb[0].mxu0
    %v3512 = vpop.f32.mrb[0].mxu0
    %v3513 = vadd.f32 %v3393, %v3512
    %v3514 = vpop.f32.mrb[0].mxu0
    %3515 = vmatprep.mubr.bf16.mxu0 0
    %3516 = vmatmul.mubr.bf16.gmra.mrb[0].mxu0 %v3345
    %v3517 = vpop.f32.mrb[0].mxu0
    %v3518 = vadd.f32 %v3393, %v3517
    %v3519 = vpop.f32.mrb[0].mxu0
    %v3520 = vpop.f32.mrb[0].mxu0
    %v3521 = vadd.f32 %v3393, %v3520
    %v3522 = vpop.f32.mrb[0].mxu0
    %3523 = vmatprep.mubr.bf16.mxu0 0
    %3524 = vmatmul.mubr.bf16.gmra.mrb[0].mxu0 %v3346
    %v3525 = vpop.f32.mrb[0].mxu0
    %v3526 = vadd.f32 %v3393, %v3525
    %v3527 = vpop.f32.mrb[0].mxu0
    %v3528 = vpop.f32.mrb[0].mxu0
    %v3529 = vadd.f32 %v3393, %v3528
    %v3530 = vpop.f32.mrb[0].mxu0
    %3531 = vmatprep.mubr.bf16.mxu0 0
    %3532 = vmatmul.mubr.bf16.gmra.mrb[0].mxu0 %v3347
    %v3533 = vpop.f32.mrb[0].mxu0
    %v3534 = vadd.f32 %v3393, %v3533
    %v3535 = vpop.f32.mrb[0].mxu0
    %v3536 = vpop.f32.mrb[0].mxu0
    %v3537 = vadd.f32 %v3393, %v3536
    %v3538 = vpop.f32.mrb[0].mxu0
    %3539 = vmatprep.mubr.bf16.mxu0 0
    %3540 = vmatmul.mubr.bf16.gmra.mrb[0].mxu0 %v3348
    %v3541 = vpop.f32.mrb[0].mxu0
    %v3542 = vadd.f32 %v3393, %v3541
    %v3543 = vpop.f32.mrb[0].mxu0
    %v3544 = vpop.f32.mrb[0].mxu0
    %v3545 = vadd.f32 %v3393, %v3544
    %v3546 = vpop.f32.mrb[0].mxu0
    %3547 = vmatprep.mubr.bf16.mxu0 0
    %3548 = vmatmul.mubr.bf16.gmra.mrb[0].mxu0 %v3349
    %v3549 = vpop.f32.mrb[0].mxu0
    %v3550 = vadd.f32 %v3393, %v3549
    %v3551 = vpop.f32.mrb[0].mxu0
    %v3552 = vpop.f32.mrb[0].mxu0
    %v3553 = vadd.f32 %v3393, %v3552
    %v3554 = vpop.f32.mrb[0].mxu0
    %3555 = vmatprep.mubr.bf16.mxu0 0
    %3556 = vmatmul.mubr.bf16.gmra.mrb[0].mxu0 %v3350
    %v3557 = vpop.f32.mrb[0].mxu0
    %v3558 = vadd.f32 %v3393, %v3557
    %v3559 = vpop.f32.mrb[0].mxu0
    %v3560 = vpop.f32.mrb[0].mxu0
    %v3561 = vadd.f32 %v3393, %v3560
    %v3562 = vpop.f32.mrb[0].mxu0
    %3563 = vmatprep.mubr.bf16.mxu0 0
    %3564 = vmatmul.mubr.bf16.gmra.mrb[0].mxu0 %v3351
    %v3565 = vpop.f32.mrb[0].mxu0
    %v3566 = vadd.f32 %v3393, %v3565
    %v3567 = vpop.f32.mrb[0].mxu0
    %v3568 = vpop.f32.mrb[0].mxu0
    %v3569 = vadd.f32 %v3393, %v3568
    %v3570 = vpop.f32.mrb[0].mxu0
    %3571 = vmatprep.mubr.bf16.mxu0 0
    %3572 = vmatmul.mubr.bf16.gmra.mrb[0].mxu0 %v3352
    %v3573 = vpop.f32.mrb[0].mxu0
    %v3574 = vadd.f32 %v3393, %v3573
    %v3575 = vpop.f32.mrb[0].mxu0
    %v3576 = vpop.f32.mrb[0].mxu0
    %v3577 = vadd.f32 %v3393, %v3576
    %v3578 = vpop.f32.mrb[0].mxu0
    %3579 = vmatprep.mubr.bf16.mxu0 0
    %3580 = vmatmul.mubr.bf16.gmra.mrb[0].mxu0 %v3353
    %v3581 = vpop.f32.mrb[0].mxu0
    %v3582 = vadd.f32 %v3393, %v3581
    %v3583 = vpop.f32.mrb[0].mxu0
    %v3584 = vpop.f32.mrb[0].mxu0
    %v3585 = vadd.f32 %v3393, %v3584
    %v3586 = vpop.f32.mrb[0].mxu0
    %3587 = vmatprep.mubr.bf16.mxu0 0
    %3588 = vmatmul.mubr.bf16.gmra.mrb[0].mxu0 %v3354
    %v3589 = vpop.f32.mrb[0].mxu0
    %v3590 = vadd.f32 %v3393, %v3589
    %v3591 = vpop.f32.mrb[0].mxu0
    %v3592 = vpop.f32.mrb[0].mxu0
    %v3593 = vadd.f32 %v3393, %v3592
    %v3594 = vpop.f32.mrb[0].mxu0
    %3595 = vmatprep.mubr.bf16.mxu0 0
    %3596 = vmatmul.mubr.bf16.gmra.mrb[0].mxu0 %v3355
    %v3597 = vpop.f32.mrb[0].mxu0
    %v3598 = vadd.f32 %v3393, %v3597
    %v3599 = vpop.f32.mrb[0].mxu0
    %v3600 = vpop.f32.mrb[0].mxu0
    %v3601 = vadd.f32 %v3393, %v3600
    %v3602 = vpop.f32.mrb[0].mxu0
    %3603 = vmatprep.mubr.bf16.mxu0 0
    %3604 = vmatmul.mubr.bf16.gmra.mrb[0].mxu0 %v3356
    %v3605 = vpop.f32.mrb[0].mxu0
    %v3606 = vadd.f32 %v3393, %v3605
    %v3607 = vpop.f32.mrb[0].mxu0
    %v3608 = vpop.f32.mrb[0].mxu0
    %v3609 = vadd.f32 %v3393, %v3608
    %v3610 = vpop.f32.mrb[0].mxu0
    %3611 = vmatprep.mubr.bf16.mxu0 0
    %3612 = vmatmul.mubr.bf16.gmra.mrb[0].mxu0 %v3357
    %v3613 = vpop.f32.mrb[0].mxu0
    %v3614 = vadd.f32 %v3393, %v3613
    %v3615 = vpop.f32.mrb[0].mxu0
    %v3616 = vpop.f32.mrb[0].mxu0
    %v3617 = vadd.f32 %v3393, %v3616
    %v3618 = vpop.f32.mrb[0].mxu0
    %3619 = vmatprep.mubr.bf16.mxu0 0
    %3620 = vmatmul.mubr.bf16.gmra.mrb[0].mxu0 %v3358
    %v3621 = vpop.f32.mrb[0].mxu0
    %v3622 = vadd.f32 %v3393, %v3621
    %v3623 = vpop.f32.mrb[0].mxu0
    %v3624 = vpop.f32.mrb[0].mxu0
    %v3625 = vadd.f32 %v3393, %v3624
    %v3626 = vpop.f32.mrb[0].mxu0
    %3627 = vmatprep.mubr.bf16.mxu0 0
    %3628 = vmatmul.mubr.bf16.gmra.mrb[0].mxu0 %v3359
    %v3629 = vpop.f32.mrb[0].mxu0
    %v3630 = vadd.f32 %v3393, %v3629
    %v3631 = vpop.f32.mrb[0].mxu0
    %v3632 = vpop.f32.mrb[0].mxu0
    %v3633 = vadd.f32 %v3393, %v3632
    %v3634 = vpop.f32.mrb[0].mxu0
    %3635 = vmatprep.mubr.bf16.mxu0 0
    %3636 = vmatmul.mubr.bf16.gmra.mrb[0].mxu0 %v3360
    %v3637 = vpop.f32.mrb[0].mxu0
    %v3638 = vadd.f32 %v3393, %v3637
    %v3639 = vpop.f32.mrb[0].mxu0
    %v3640 = vpop.f32.mrb[0].mxu0
    %v3641 = vadd.f32 %v3393, %v3640
    %v3642 = vpop.f32.mrb[0].mxu0
    %3643 = vmatprep.mubr.bf16.mxu0 0
    %3644 = vmatmul.mubr.bf16.gmra.mrb[0].mxu0 %v3361
    %v3645 = vpop.f32.mrb[0].mxu0
    %v3646 = vadd.f32 %v3393, %v3645
    %v3647 = vpop.f32.mrb[0].mxu0
    %v3648 = vpop.f32.mrb[0].mxu0
    %v3649 = vadd.f32 %v3393, %v3648
    %v3650 = vpop.f32.mrb[0].mxu0
    %3651 = vmatprep.mubr.bf16.mxu0 0
    %3652 = vmatmul.mubr.bf16.gmra.mrb[0].mxu0 %v3362
    %v3653 = vpop.f32.mrb[0].mxu0
    %v3654 = vadd.f32 %v3393, %v3653
    %v3655 = vpop.f32.mrb[0].mxu0
    %v3656 = vpop.f32.mrb[0].mxu0
    %v3657 = vadd.f32 %v3393, %v3656
    %v3658 = vpop.f32.mrb[0].mxu0
    %3659 = vmatprep.mubr.bf16.mxu0 0
    %3660 = vmatmul.mubr.bf16.gmra.mrb[0].mxu0 %v3363
    %v3661 = vpop.f32.mrb[0].mxu0
    %v3662 = vadd.f32 %v3393, %v3661
    %v3663 = vpop.f32.mrb[0].mxu0
    %v3664 = vpop.f32.mrb[0].mxu0
    %v3665 = vadd.f32 %v3393, %v3664
    %v3666 = vpop.f32.mrb[0].mxu0
    %3667 = vmatprep.mubr.bf16.mxu0 0
    %3668 = vmatmul.mubr.bf16.gmra.mrb[0].mxu0 %v3364
    %v3669 = vpop.f32.mrb[0].mxu0
    %v3670 = vadd.f32 %v3393, %v3669
    %v3671 = vpop.f32.mrb[0].mxu0
    %v3672 = vpop.f32.mrb[0].mxu0
    %v3673 = vadd.f32 %v3393, %v3672
    %v3674 = vpop.f32.mrb[0].mxu0
    %3675 = vmatprep.mubr.bf16.mxu0 0
    %3676 = vmatmul.mubr.bf16.gmra.mrb[0].mxu0 %v3365
    %v3677 = vpop.f32.mrb[0].mxu0
    %v3678 = vadd.f32 %v3393, %v3677
    %v3679 = vpop.f32.mrb[0].mxu0
    %v3680 = vpop.f32.mrb[0].mxu0
    %v3681 = vadd.f32 %v3393, %v3680
    %v3682 = vpop.f32.mrb[0].mxu0
    %3683 = vmatprep.mubr.bf16.mxu0 0
    %3684 = vmatmul.mubr.bf16.gmra.mrb[0].mxu0 %v3366
    %v3685 = vpop.f32.mrb[0].mxu0
    %v3686 = vadd.f32 %v3393, %v3685
    %v3687 = vpop.f32.mrb[0].mxu0
    %v3688 = vpop.f32.mrb[0].mxu0
    %v3689 = vadd.f32 %v3393, %v3688
    %v3690 = vpop.f32.mrb[0].mxu0
    %3691 = vmatprep.mubr.bf16.mxu0 0
    %3692 = vmatmul.mubr.bf16.gmra.mrb[0].mxu0 %v3367
    %v3693 = vpop.f32.mrb[0].mxu0
    %v3694 = vadd.f32 %v3393, %v3693
    %v3695 = vpop.f32.mrb[0].mxu0
    %v3696 = vpop.f32.mrb[0].mxu0
    %v3697 = vadd.f32 %v3393, %v3696
    %v3698 = vpop.f32.mrb[0].mxu0
    %3699 = vmatprep.mubr.bf16.mxu0 0
    %3700 = vmatmul.mubr.bf16.gmra.mrb[0].mxu0 %v3368
    %v3701 = vpop.f32.mrb[0].mxu0
    %v3702 = vadd.f32 %v3393, %v3701
    %v3703 = vpop.f32.mrb[0].mxu0
    %v3704 = vpop.f32.mrb[0].mxu0
    %v3705 = vadd.f32 %v3393, %v3704
    %v3706 = vpop.f32.mrb[0].mxu0
    %3707 = vmatprep.mubr.bf16.mxu0 0
    %3708 = vmatmul.mubr.bf16.gmra.mrb[0].mxu0 %v3369
    %v3709 = vpop.f32.mrb[0].mxu0
    %v3710 = vadd.f32 %v3393, %v3709
    %v3711 = vpop.f32.mrb[0].mxu0
    %v3712 = vpop.f32.mrb[0].mxu0
    %v3713 = vadd.f32 %v3393, %v3712
    %v3714 = vpop.f32.mrb[0].mxu0
    %3715 = vmatprep.mubr.bf16.mxu0 0
    %3716 = vmatmul.mubr.bf16.gmra.mrb[0].mxu0 %v3370
    %v3717 = vpop.f32.mrb[0].mxu0
    %v3718 = vadd.f32 %v3393, %v3717
    %v3719 = vpop.f32.mrb[0].mxu0
    %v3720 = vpop.f32.mrb[0].mxu0
    %v3721 = vadd.f32 %v3393, %v3720
    %v3722 = vpop.f32.mrb[0].mxu0
    %3723 = vmatprep.mubr.bf16.mxu0 0
    %3724 = vmatmul.mubr.bf16.gmra.mrb[0].mxu0 %v3371
    %v3725 = vpop.f32.mrb[0].mxu0
    %v3726 = vadd.f32 %v3393, %v3725
    %v3727 = vpop.f32.mrb[0].mxu0
    %v3728 = vpop.f32.mrb[0].mxu0
    %v3729 = vadd.f32 %v3393, %v3728
    %v3730 = vpop.f32.mrb[0].mxu0
    %3731 = vdwg.mxu0
    %v3732 = vmax.f32 %v3478, 0.0
    %v3733 = vmax.f32 %v3481, 0.0
    %v3734 = vmax.f32 %v3486, 0.0
    %v3735 = vmax.f32 %v3489, 0.0
    %v3736 = vmax.f32 %v3494, 0.0
    %v3737 = vmax.f32 %v3497, 0.0
    %v3738 = vmax.f32 %v3502, 0.0
    %v3739 = vmax.f32 %v3505, 0.0
    %v3740 = vmax.f32 %v3510, 0.0
    %v3741 = vmax.f32 %v3513, 0.0
    %v3742 = vmax.f32 %v3518, 0.0
    %v3743 = vmax.f32 %v3521, 0.0
    %v3744 = vmax.f32 %v3526, 0.0
    %v3745 = vmax.f32 %v3529, 0.0
    %v3746 = vmax.f32 %v3534, 0.0
    %v3747 = vmax.f32 %v3537, 0.0
    %v3748 = vmax.f32 %v3542, 0.0
    %v3749 = vmax.f32 %v3545, 0.0
    %v3750 = vmax.f32 %v3550, 0.0
    %v3751 = vmax.f32 %v3553, 0.0
    %v3752 = vmax.f32 %v3558, 0.0
    %v3753 = vmax.f32 %v3561, 0.0
    %v3754 = vmax.f32 %v3566, 0.0
    %v3755 = vmax.f32 %v3569, 0.0
    %v3756 = vmax.f32 %v3574, 0.0
    %v3757 = vmax.f32 %v3577, 0.0
    %v3758 = vmax.f32 %v3582, 0.0
    %v3759 = vmax.f32 %v3585, 0.0
    %v3760 = vmax.f32 %v3590, 0.0
    %v3761 = vmax.f32 %v3593, 0.0
    %v3762 = vmax.f32 %v3598, 0.0
    %v3763 = vmax.f32 %v3601, 0.0
    %v3764 = vmax.f32 %v3606, 0.0
    %v3765 = vmax.f32 %v3609, 0.0
    %v3766 = vmax.f32 %v3614, 0.0
    %v3767 = vmax.f32 %v3617, 0.0
    %v3768 = vmax.f32 %v3622, 0.0
    %v3769 = vmax.f32 %v3625, 0.0
    %v3770 = vmax.f32 %v3630, 0.0
    %v3771 = vmax.f32 %v3633, 0.0
    %v3772 = vmax.f32 %v3638, 0.0
    %v3773 = vmax.f32 %v3641, 0.0
    %v3774 = vmax.f32 %v3646, 0.0
    %v3775 = vmax.f32 %v3649, 0.0
    %v3776 = vmax.f32 %v3654, 0.0
    %v3777 = vmax.f32 %v3657, 0.0
    %v3778 = vmax.f32 %v3662, 0.0
    %v3779 = vmax.f32 %v3665, 0.0
    %v3780 = vmax.f32 %v3670, 0.0
    %v3781 = vmax.f32 %v3673, 0.0
    %v3782 = vmax.f32 %v3678, 0.0
    %v3783 = vmax.f32 %v3681, 0.0
    %v3784 = vmax.f32 %v3686, 0.0
    %v3785 = vmax.f32 %v3689, 0.0
    %v3786 = vmax.f32 %v3694, 0.0
    %v3787 = vmax.f32 %v3697, 0.0
    %v3788 = vmax.f32 %v3702, 0.0
    %v3789 = vmax.f32 %v3705, 0.0
    %v3790 = vmax.f32 %v3710, 0.0
    %v3791 = vmax.f32 %v3713, 0.0
    %v3792 = vmax.f32 %v3718, 0.0
    %v3793 = vmax.f32 %v3721, 0.0
    %v3794 = vmax.f32 %v3726, 0.0
    %v3795 = vmax.f32 %v3729, 0.0
    %v3796 = vpack.c.bf16 %v3733, %v3732
    %v3797 = vpack.c.bf16 %v3735, %v3734
    %v3798 = vpack.c.bf16 %v3737, %v3736
    %v3799 = vpack.c.bf16 %v3739, %v3738
    %v3800 = vpack.c.bf16 %v3741, %v3740
    %v3801 = vpack.c.bf16 %v3743, %v3742
    %v3802 = vpack.c.bf16 %v3745, %v3744
    %v3803 = vpack.c.bf16 %v3747, %v3746
    %v3804 = vpack.c.bf16 %v3749, %v3748
    %v3805 = vpack.c.bf16 %v3751, %v3750
    %v3806 = vpack.c.bf16 %v3753, %v3752
    %v3807 = vpack.c.bf16 %v3755, %v3754
    %v3808 = vpack.c.bf16 %v3757, %v3756
    %v3809 = vpack.c.bf16 %v3759, %v3758
    %v3810 = vpack.c.bf16 %v3761, %v3760
    %v3811 = vpack.c.bf16 %v3763, %v3762
    %v3812 = vpack.c.bf16 %v3765, %v3764
    %v3813 = vpack.c.bf16 %v3767, %v3766
    %v3814 = vpack.c.bf16 %v3769, %v3768
    %v3815 = vpack.c.bf16 %v3771, %v3770
    %v3816 = vpack.c.bf16 %v3773, %v3772
    %v3817 = vpack.c.bf16 %v3775, %v3774
    %v3818 = vpack.c.bf16 %v3777, %v3776
    %v3819 = vpack.c.bf16 %v3779, %v3778
    %v3820 = vpack.c.bf16 %v3781, %v3780
    %v3821 = vpack.c.bf16 %v3783, %v3782
    %v3822 = vpack.c.bf16 %v3785, %v3784
    %v3823 = vpack.c.bf16 %v3787, %v3786
    %v3824 = vpack.c.bf16 %v3789, %v3788
    %v3825 = vpack.c.bf16 %v3791, %v3790
    %v3826 = vpack.c.bf16 %v3793, %v3792
    %v3827 = vpack.c.bf16 %v3795, %v3794
    %v3828 = vld [vmem:[%s9] sm:$0xf]
    %v3829 = vld [vmem:[%s9 + $0x4] sm:$0xf]
    %v3830 = vld [vmem:[%s9 + $0x8] sm:$0xf]
    %v3831 = vld [vmem:[%s9 + $0xc] sm:$0xf]
    %v3832 = vld [vmem:[%s9 + $0x10] sm:$0xf]
    %v3833 = vld [vmem:[%s9 + $0x14] sm:$0xf]
    %v3834 = vld [vmem:[%s9 + $0x18] sm:$0xf]
    %v3835 = vld [vmem:[%s9 + $0x1c] sm:$0xf]
    %v3836 = vld [vmem:[%s9 + $0x20] sm:$0xf]
    %v3837 = vld [vmem:[%s9 + $0x24] sm:$0xf]
    %v3838 = vld [vmem:[%s9 + $0x28] sm:$0xf]
    %v3839 = vld [vmem:[%s9 + $0x2c] sm:$0xf]
    %v3840 = vld [vmem:[%s9 + $0x30] sm:$0xf]
    %v3841 = vld [vmem:[%s9 + $0x34] sm:$0xf]
    %v3842 = vld [vmem:[%s9 + $0x38] sm:$0xf]
    %v3843 = vld [vmem:[%s9 + $0x3c] sm:$0xf]
    %v3844 = vld [vmem:[%s10] sm:$0x1]
    %v3846 = vlaneseq
    %v3847 = vshrl.u32 %v3846, 7
    %v3848 = vsub.s32 0, %v3847
    %v3849 = vrot.slane %v3844, %v3848
    %v3867 = vunpack.c.l.b16 %v3828
    %v3868 = vunpack.c.l.b16 %v3829
    %v3869 = vunpack.c.l.b16 %v3830
    %v3870 = vunpack.c.l.b16 %v3831
    %v3871 = vunpack.c.l.b16 %v3832
    %v3872 = vunpack.c.l.b16 %v3833
    %v3873 = vunpack.c.l.b16 %v3834
    %v3874 = vunpack.c.l.b16 %v3835
    %v3875 = vunpack.c.l.b16 %v3836
    %v3876 = vunpack.c.l.b16 %v3837
    %v3877 = vunpack.c.l.b16 %v3838
    %v3878 = vunpack.c.l.b16 %v3839
    %v3879 = vunpack.c.l.b16 %v3840
    %v3880 = vunpack.c.l.b16 %v3841
    %v3881 = vunpack.c.l.b16 %v3842
    %v3882 = vunpack.c.l.b16 %v3843
    %v3883 = vpack.c.b16 %v3868, %v3867
    %v3884 = vpack.c.b16 %v3870, %v3869
    %v3885 = vpack.c.b16 %v3872, %v3871
    %v3886 = vpack.c.b16 %v3874, %v3873
    %v3887 = vpack.c.b16 %v3876, %v3875
    %v3888 = vpack.c.b16 %v3878, %v3877
    %v3889 = vpack.c.b16 %v3880, %v3879
    %v3890 = vpack.c.b16 %v3882, %v3881
    %3899 = vmatprep.subr.bf16.mxu0 0
    %3900 = vmatpush1.bf16.msra.mxu0 %v3883
    %3901 = vmatprep.subr.bf16.mxu0 0
    %3902 = vmatpush1.bf16.msra.mxu0 %v3884
    %3903 = vmatprep.subr.bf16.mxu0 0
    %3904 = vmatpush1.bf16.msra.mxu0 %v3885
    %3905 = vmatprep.subr.bf16.mxu0 0
    %3906 = vmatpush1.bf16.msra.mxu0 %v3886
    %3907 = vmatprep.subr.bf16.mxu0 0
    %3908 = vmatpush1.bf16.msra.mxu0 %v3887
    %3909 = vmatprep.subr.bf16.mxu0 0
    %3910 = vmatpush1.bf16.msra.mxu0 %v3888
    %3911 = vmatprep.subr.bf16.mxu0 0
    %3912 = vmatpush1.bf16.msra.mxu0 %v3889
    %3913 = vmatprep.subr.bf16.mxu0 0
    %3914 = vmatpush1.bf16.msra.mxu0 %v3890
    %3915 = vmatprep.subr.bf16.mxu0 0
    %3916 = vmatpush1.bf16.msra.mxu0 0
    %3917 = vmatprep.subr.bf16.mxu0 0
    %3918 = vmatpush1.bf16.msra.mxu0 0
    %3919 = vmatprep.subr.bf16.mxu0 0
    %3920 = vmatpush1.bf16.msra.mxu0 0
    %3921 = vmatprep.subr.bf16.mxu0 0
    %3922 = vmatpush1.bf16.msra.mxu0 0
    %3923 = vmatprep.subr.bf16.mxu0 0
    %3924 = vmatpush1.bf16.msra.mxu0 0
    %3925 = vmatprep.subr.bf16.mxu0 0
    %3926 = vmatpush1.bf16.msra.mxu0 0
    %3927 = vmatprep.subr.bf16.mxu0 0
    %3928 = vmatpush1.bf16.msra.mxu0 0
    %3929 = vmatprep.subr.bf16.mxu0 0
    %3930 = vmatpush1.bf16.msra.mxu0 0
    %3931 = vmatprep.mubr.bf16.mxu0 0
    %3932 = vmatmul.mubr.bf16.gmra.mrb[0].mxu0 %v3796
    %v3933 = vpop.f32.mrb[0].mxu0
    %v3934 = vadd.f32 %v3849, %v3933
    %v3935 = vpop.f32.mrb[0].mxu0
    %v3936 = vpop.f32.mrb[0].mxu0
    %v3937 = vadd.f32 %v3849, %v3936
    %v3938 = vpop.f32.mrb[0].mxu0
    %3939 = vmatprep.mubr.bf16.mxu0 0
    %3940 = vmatmul.mubr.bf16.gmra.mrb[0].mxu0 %v3797
    %v3941 = vpop.f32.mrb[0].mxu0
    %v3942 = vadd.f32 %v3849, %v3941
    %v3943 = vpop.f32.mrb[0].mxu0
    %v3944 = vpop.f32.mrb[0].mxu0
    %v3945 = vadd.f32 %v3849, %v3944
    %v3946 = vpop.f32.mrb[0].mxu0
    %3947 = vmatprep.mubr.bf16.mxu0 0
    %3948 = vmatmul.mubr.bf16.gmra.mrb[0].mxu0 %v3798
    %v3949 = vpop.f32.mrb[0].mxu0
    %v3950 = vadd.f32 %v3849, %v3949
    %v3951 = vpop.f32.mrb[0].mxu0
    %v3952 = vpop.f32.mrb[0].mxu0
    %v3953 = vadd.f32 %v3849, %v3952
    %v3954 = vpop.f32.mrb[0].mxu0
    %3955 = vmatprep.mubr.bf16.mxu0 0
    %3956 = vmatmul.mubr.bf16.gmra.mrb[0].mxu0 %v3799
    %v3957 = vpop.f32.mrb[0].mxu0
    %v3958 = vadd.f32 %v3849, %v3957
    %v3959 = vpop.f32.mrb[0].mxu0
    %v3960 = vpop.f32.mrb[0].mxu0
    %v3961 = vadd.f32 %v3849, %v3960
    %v3962 = vpop.f32.mrb[0].mxu0
    %3963 = vmatprep.mubr.bf16.mxu0 0
    %3964 = vmatmul.mubr.bf16.gmra.mrb[0].mxu0 %v3800
    %v3965 = vpop.f32.mrb[0].mxu0
    %v3966 = vadd.f32 %v3849, %v3965
    %v3967 = vpop.f32.mrb[0].mxu0
    %v3968 = vpop.f32.mrb[0].mxu0
    %v3969 = vadd.f32 %v3849, %v3968
    %v3970 = vpop.f32.mrb[0].mxu0
    %3971 = vmatprep.mubr.bf16.mxu0 0
    %3972 = vmatmul.mubr.bf16.gmra.mrb[0].mxu0 %v3801
    %v3973 = vpop.f32.mrb[0].mxu0
    %v3974 = vadd.f32 %v3849, %v3973
    %v3975 = vpop.f32.mrb[0].mxu0
    %v3976 = vpop.f32.mrb[0].mxu0
    %v3977 = vadd.f32 %v3849, %v3976
    %v3978 = vpop.f32.mrb[0].mxu0
    %3979 = vmatprep.mubr.bf16.mxu0 0
    %3980 = vmatmul.mubr.bf16.gmra.mrb[0].mxu0 %v3802
    %v3981 = vpop.f32.mrb[0].mxu0
    %v3982 = vadd.f32 %v3849, %v3981
    %v3983 = vpop.f32.mrb[0].mxu0
    %v3984 = vpop.f32.mrb[0].mxu0
    %v3985 = vadd.f32 %v3849, %v3984
    %v3986 = vpop.f32.mrb[0].mxu0
    %3987 = vmatprep.mubr.bf16.mxu0 0
    %3988 = vmatmul.mubr.bf16.gmra.mrb[0].mxu0 %v3803
    %v3989 = vpop.f32.mrb[0].mxu0
    %v3990 = vadd.f32 %v3849, %v3989
    %v3991 = vpop.f32.mrb[0].mxu0
    %v3992 = vpop.f32.mrb[0].mxu0
    %v3993 = vadd.f32 %v3849, %v3992
    %v3994 = vpop.f32.mrb[0].mxu0
    %3995 = vmatprep.mubr.bf16.mxu0 0
    %3996 = vmatmul.mubr.bf16.gmra.mrb[0].mxu0 %v3804
    %v3997 = vpop.f32.mrb[0].mxu0
    %v3998 = vadd.f32 %v3849, %v3997
    %v3999 = vpop.f32.mrb[0].mxu0
    %v4000 = vpop.f32.mrb[0].mxu0
    %v4001 = vadd.f32 %v3849, %v4000
    %v4002 = vpop.f32.mrb[0].mxu0
    %4003 = vmatprep.mubr.bf16.mxu0 0
    %4004 = vmatmul.mubr.bf16.gmra.mrb[0].mxu0 %v3805
    %v4005 = vpop.f32.mrb[0].mxu0
    %v4006 = vadd.f32 %v3849, %v4005
    %v4007 = vpop.f32.mrb[0].mxu0
    %v4008 = vpop.f32.mrb[0].mxu0
    %v4009 = vadd.f32 %v3849, %v4008
    %v4010 = vpop.f32.mrb[0].mxu0
    %4011 = vmatprep.mubr.bf16.mxu0 0
    %4012 = vmatmul.mubr.bf16.gmra.mrb[0].mxu0 %v3806
    %v4013 = vpop.f32.mrb[0].mxu0
    %v4014 = vadd.f32 %v3849, %v4013
    %v4015 = vpop.f32.mrb[0].mxu0
    %v4016 = vpop.f32.mrb[0].mxu0
    %v4017 = vadd.f32 %v3849, %v4016
    %v4018 = vpop.f32.mrb[0].mxu0
    %4019 = vmatprep.mubr.bf16.mxu0 0
    %4020 = vmatmul.mubr.bf16.gmra.mrb[0].mxu0 %v3807
    %v4021 = vpop.f32.mrb[0].mxu0
    %v4022 = vadd.f32 %v3849, %v4021
    %v4023 = vpop.f32.mrb[0].mxu0
    %v4024 = vpop.f32.mrb[0].mxu0
    %v4025 = vadd.f32 %v3849, %v4024
    %v4026 = vpop.f32.mrb[0].mxu0
    %4027 = vmatprep.mubr.bf16.mxu0 0
    %4028 = vmatmul.mubr.bf16.gmra.mrb[0].mxu0 %v3808
    %v4029 = vpop.f32.mrb[0].mxu0
    %v4030 = vadd.f32 %v3849, %v4029
    %v4031 = vpop.f32.mrb[0].mxu0
    %v4032 = vpop.f32.mrb[0].mxu0
    %v4033 = vadd.f32 %v3849, %v4032
    %v4034 = vpop.f32.mrb[0].mxu0
    %4035 = vmatprep.mubr.bf16.mxu0 0
    %4036 = vmatmul.mubr.bf16.gmra.mrb[0].mxu0 %v3809
    %v4037 = vpop.f32.mrb[0].mxu0
    %v4038 = vadd.f32 %v3849, %v4037
    %v4039 = vpop.f32.mrb[0].mxu0
    %v4040 = vpop.f32.mrb[0].mxu0
    %v4041 = vadd.f32 %v3849, %v4040
    %v4042 = vpop.f32.mrb[0].mxu0
    %4043 = vmatprep.mubr.bf16.mxu0 0
    %4044 = vmatmul.mubr.bf16.gmra.mrb[0].mxu0 %v3810
    %v4045 = vpop.f32.mrb[0].mxu0
    %v4046 = vadd.f32 %v3849, %v4045
    %v4047 = vpop.f32.mrb[0].mxu0
    %v4048 = vpop.f32.mrb[0].mxu0
    %v4049 = vadd.f32 %v3849, %v4048
    %v4050 = vpop.f32.mrb[0].mxu0
    %4051 = vmatprep.mubr.bf16.mxu0 0
    %4052 = vmatmul.mubr.bf16.gmra.mrb[0].mxu0 %v3811
    %v4053 = vpop.f32.mrb[0].mxu0
    %v4054 = vadd.f32 %v3849, %v4053
    %v4055 = vpop.f32.mrb[0].mxu0
    %v4056 = vpop.f32.mrb[0].mxu0
    %v4057 = vadd.f32 %v3849, %v4056
    %v4058 = vpop.f32.mrb[0].mxu0
    %4059 = vmatprep.mubr.bf16.mxu0 0
    %4060 = vmatmul.mubr.bf16.gmra.mrb[0].mxu0 %v3812
    %v4061 = vpop.f32.mrb[0].mxu0
    %v4062 = vadd.f32 %v3849, %v4061
    %v4063 = vpop.f32.mrb[0].mxu0
    %v4064 = vpop.f32.mrb[0].mxu0
    %v4065 = vadd.f32 %v3849, %v4064
    %v4066 = vpop.f32.mrb[0].mxu0
    %4067 = vmatprep.mubr.bf16.mxu0 0
    %4068 = vmatmul.mubr.bf16.gmra.mrb[0].mxu0 %v3813
    %v4069 = vpop.f32.mrb[0].mxu0
    %v4070 = vadd.f32 %v3849, %v4069
    %v4071 = vpop.f32.mrb[0].mxu0
    %v4072 = vpop.f32.mrb[0].mxu0
    %v4073 = vadd.f32 %v3849, %v4072
    %v4074 = vpop.f32.mrb[0].mxu0
    %4075 = vmatprep.mubr.bf16.mxu0 0
    %4076 = vmatmul.mubr.bf16.gmra.mrb[0].mxu0 %v3814
    %v4077 = vpop.f32.mrb[0].mxu0
    %v4078 = vadd.f32 %v3849, %v4077
    %v4079 = vpop.f32.mrb[0].mxu0
    %v4080 = vpop.f32.mrb[0].mxu0
    %v4081 = vadd.f32 %v3849, %v4080
    %v4082 = vpop.f32.mrb[0].mxu0
    %4083 = vmatprep.mubr.bf16.mxu0 0
    %4084 = vmatmul.mubr.bf16.gmra.mrb[0].mxu0 %v3815
    %v4085 = vpop.f32.mrb[0].mxu0
    %v4086 = vadd.f32 %v3849, %v4085
    %v4087 = vpop.f32.mrb[0].mxu0
    %v4088 = vpop.f32.mrb[0].mxu0
    %v4089 = vadd.f32 %v3849, %v4088
    %v4090 = vpop.f32.mrb[0].mxu0
    %4091 = vmatprep.mubr.bf16.mxu0 0
    %4092 = vmatmul.mubr.bf16.gmra.mrb[0].mxu0 %v3816
    %v4093 = vpop.f32.mrb[0].mxu0
    %v4094 = vadd.f32 %v3849, %v4093
    %v4095 = vpop.f32.mrb[0].mxu0
    %v4096 = vpop.f32.mrb[0].mxu0
    %v4097 = vadd.f32 %v3849, %v4096
    %v4098 = vpop.f32.mrb[0].mxu0
    %4099 = vmatprep.mubr.bf16.mxu0 0
    %4100 = vmatmul.mubr.bf16.gmra.mrb[0].mxu0 %v3817
    %v4101 = vpop.f32.mrb[0].mxu0
    %v4102 = vadd.f32 %v3849, %v4101
    %v4103 = vpop.f32.mrb[0].mxu0
    %v4104 = vpop.f32.mrb[0].mxu0
    %v4105 = vadd.f32 %v3849, %v4104
    %v4106 = vpop.f32.mrb[0].mxu0
    %4107 = vmatprep.mubr.bf16.mxu0 0
    %4108 = vmatmul.mubr.bf16.gmra.mrb[0].mxu0 %v3818
    %v4109 = vpop.f32.mrb[0].mxu0
    %v4110 = vadd.f32 %v3849, %v4109
    %v4111 = vpop.f32.mrb[0].mxu0
    %v4112 = vpop.f32.mrb[0].mxu0
    %v4113 = vadd.f32 %v3849, %v4112
    %v4114 = vpop.f32.mrb[0].mxu0
    %4115 = vmatprep.mubr.bf16.mxu0 0
    %4116 = vmatmul.mubr.bf16.gmra.mrb[0].mxu0 %v3819
    %v4117 = vpop.f32.mrb[0].mxu0
    %v4118 = vadd.f32 %v3849, %v4117
    %v4119 = vpop.f32.mrb[0].mxu0
    %v4120 = vpop.f32.mrb[0].mxu0
    %v4121 = vadd.f32 %v3849, %v4120
    %v4122 = vpop.f32.mrb[0].mxu0
    %4123 = vmatprep.mubr.bf16.mxu0 0
    %4124 = vmatmul.mubr.bf16.gmra.mrb[0].mxu0 %v3820
    %v4125 = vpop.f32.mrb[0].mxu0
    %v4126 = vadd.f32 %v3849, %v4125
    %v4127 = vpop.f32.mrb[0].mxu0
    %v4128 = vpop.f32.mrb[0].mxu0
    %v4129 = vadd.f32 %v3849, %v4128
    %v4130 = vpop.f32.mrb[0].mxu0
    %4131 = vmatprep.mubr.bf16.mxu0 0
    %4132 = vmatmul.mubr.bf16.gmra.mrb[0].mxu0 %v3821
    %v4133 = vpop.f32.mrb[0].mxu0
    %v4134 = vadd.f32 %v3849, %v4133
    %v4135 = vpop.f32.mrb[0].mxu0
    %v4136 = vpop.f32.mrb[0].mxu0
    %v4137 = vadd.f32 %v3849, %v4136
    %v4138 = vpop.f32.mrb[0].mxu0
    %4139 = vmatprep.mubr.bf16.mxu0 0
    %4140 = vmatmul.mubr.bf16.gmra.mrb[0].mxu0 %v3822
    %v4141 = vpop.f32.mrb[0].mxu0
    %v4142 = vadd.f32 %v3849, %v4141
    %v4143 = vpop.f32.mrb[0].mxu0
    %v4144 = vpop.f32.mrb[0].mxu0
    %v4145 = vadd.f32 %v3849, %v4144
    %v4146 = vpop.f32.mrb[0].mxu0
    %4147 = vmatprep.mubr.bf16.mxu0 0
    %4148 = vmatmul.mubr.bf16.gmra.mrb[0].mxu0 %v3823
    %v4149 = vpop.f32.mrb[0].mxu0
    %v4150 = vadd.f32 %v3849, %v4149
    %v4151 = vpop.f32.mrb[0].mxu0
    %v4152 = vpop.f32.mrb[0].mxu0
    %v4153 = vadd.f32 %v3849, %v4152
    %v4154 = vpop.f32.mrb[0].mxu0
    %4155 = vmatprep.mubr.bf16.mxu0 0
    %4156 = vmatmul.mubr.bf16.gmra.mrb[0].mxu0 %v3824
    %v4157 = vpop.f32.mrb[0].mxu0
    %v4158 = vadd.f32 %v3849, %v4157
    %v4159 = vpop.f32.mrb[0].mxu0
    %v4160 = vpop.f32.mrb[0].mxu0
    %v4161 = vadd.f32 %v3849, %v4160
    %v4162 = vpop.f32.mrb[0].mxu0
    %4163 = vmatprep.mubr.bf16.mxu0 0
    %4164 = vmatmul.mubr.bf16.gmra.mrb[0].mxu0 %v3825
    %v4165 = vpop.f32.mrb[0].mxu0
    %v4166 = vadd.f32 %v3849, %v4165
    %v4167 = vpop.f32.mrb[0].mxu0
    %v4168 = vpop.f32.mrb[0].mxu0
    %v4169 = vadd.f32 %v3849, %v4168
    %v4170 = vpop.f32.mrb[0].mxu0
    %4171 = vmatprep.mubr.bf16.mxu0 0
    %4172 = vmatmul.mubr.bf16.gmra.mrb[0].mxu0 %v3826
    %v4173 = vpop.f32.mrb[0].mxu0
    %v4174 = vadd.f32 %v3849, %v4173
    %v4175 = vpop.f32.mrb[0].mxu0
    %v4176 = vpop.f32.mrb[0].mxu0
    %v4177 = vadd.f32 %v3849, %v4176
    %v4178 = vpop.f32.mrb[0].mxu0
    %4179 = vmatprep.mubr.bf16.mxu0 0
    %4180 = vmatmul.mubr.bf16.gmra.mrb[0].mxu0 %v3827
    %v4181 = vpop.f32.mrb[0].mxu0
    %v4182 = vadd.f32 %v3849, %v4181
    %v4183 = vpop.f32.mrb[0].mxu0
    %v4184 = vpop.f32.mrb[0].mxu0
    %v4185 = vadd.f32 %v3849, %v4184
    %v4186 = vpop.f32.mrb[0].mxu0
    %4187 = vdwg.mxu0
    %4188 = vmax.xlane.f32.xlu0 %v3934
    %v4189 = vpop.xlane.xlu0 %4188
    %4190 = vmax.xlane.f32.xlu0 %v3937
    %v4191 = vpop.xlane.xlu0 %4190
    %4192 = vmax.xlane.f32.xlu0 %v3942
    %v4193 = vpop.xlane.xlu0 %4192
    %4194 = vmax.xlane.f32.xlu0 %v3945
    %v4195 = vpop.xlane.xlu0 %4194
    %4196 = vmax.xlane.f32.xlu0 %v3950
    %v4197 = vpop.xlane.xlu0 %4196
    %4198 = vmax.xlane.f32.xlu0 %v3953
    %v4199 = vpop.xlane.xlu0 %4198
    %4200 = vmax.xlane.f32.xlu0 %v3958
    %v4201 = vpop.xlane.xlu0 %4200
    %4202 = vmax.xlane.f32.xlu0 %v3961
    %v4203 = vpop.xlane.xlu0 %4202
    %4204 = vmax.xlane.f32.xlu0 %v3966
    %v4205 = vpop.xlane.xlu0 %4204
    %4206 = vmax.xlane.f32.xlu0 %v3969
    %v4207 = vpop.xlane.xlu0 %4206
    %4208 = vmax.xlane.f32.xlu0 %v3974
    %v4209 = vpop.xlane.xlu0 %4208
    %4210 = vmax.xlane.f32.xlu0 %v3977
    %v4211 = vpop.xlane.xlu0 %4210
    %4212 = vmax.xlane.f32.xlu0 %v3982
    %v4213 = vpop.xlane.xlu0 %4212
    %4214 = vmax.xlane.f32.xlu0 %v3985
    %v4215 = vpop.xlane.xlu0 %4214
    %4216 = vmax.xlane.f32.xlu0 %v3990
    %v4217 = vpop.xlane.xlu0 %4216
    %4218 = vmax.xlane.f32.xlu0 %v3993
    %v4219 = vpop.xlane.xlu0 %4218
    %4220 = vmax.xlane.f32.xlu0 %v3998
    %v4221 = vpop.xlane.xlu0 %4220
    %4222 = vmax.xlane.f32.xlu0 %v4001
    %v4223 = vpop.xlane.xlu0 %4222
    %4224 = vmax.xlane.f32.xlu0 %v4006
    %v4225 = vpop.xlane.xlu0 %4224
    %4226 = vmax.xlane.f32.xlu0 %v4009
    %v4227 = vpop.xlane.xlu0 %4226
    %4228 = vmax.xlane.f32.xlu0 %v4014
    %v4229 = vpop.xlane.xlu0 %4228
    %4230 = vmax.xlane.f32.xlu0 %v4017
    %v4231 = vpop.xlane.xlu0 %4230
    %4232 = vmax.xlane.f32.xlu0 %v4022
    %v4233 = vpop.xlane.xlu0 %4232
    %4234 = vmax.xlane.f32.xlu0 %v4025
    %v4235 = vpop.xlane.xlu0 %4234
    %4236 = vmax.xlane.f32.xlu0 %v4030
    %v4237 = vpop.xlane.xlu0 %4236
    %4238 = vmax.xlane.f32.xlu0 %v4033
    %v4239 = vpop.xlane.xlu0 %4238
    %4240 = vmax.xlane.f32.xlu0 %v4038
    %v4241 = vpop.xlane.xlu0 %4240
    %4242 = vmax.xlane.f32.xlu0 %v4041
    %v4243 = vpop.xlane.xlu0 %4242
    %4244 = vmax.xlane.f32.xlu0 %v4046
    %v4245 = vpop.xlane.xlu0 %4244
    %4246 = vmax.xlane.f32.xlu0 %v4049
    %v4247 = vpop.xlane.xlu0 %4246
    %4248 = vmax.xlane.f32.xlu0 %v4054
    %v4249 = vpop.xlane.xlu0 %4248
    %4250 = vmax.xlane.f32.xlu0 %v4057
    %v4251 = vpop.xlane.xlu0 %4250
    %4252 = vmax.xlane.f32.xlu0 %v4062
    %v4253 = vpop.xlane.xlu0 %4252
    %4254 = vmax.xlane.f32.xlu0 %v4065
    %v4255 = vpop.xlane.xlu0 %4254
    %4256 = vmax.xlane.f32.xlu0 %v4070
    %v4257 = vpop.xlane.xlu0 %4256
    %4258 = vmax.xlane.f32.xlu0 %v4073
    %v4259 = vpop.xlane.xlu0 %4258
    %4260 = vmax.xlane.f32.xlu0 %v4078
    %v4261 = vpop.xlane.xlu0 %4260
    %4262 = vmax.xlane.f32.xlu0 %v4081
    %v4263 = vpop.xlane.xlu0 %4262
    %4264 = vmax.xlane.f32.xlu0 %v4086
    %v4265 = vpop.xlane.xlu0 %4264
    %4266 = vmax.xlane.f32.xlu0 %v4089
    %v4267 = vpop.xlane.xlu0 %4266
    %4268 = vmax.xlane.f32.xlu0 %v4094
    %v4269 = vpop.xlane.xlu0 %4268
    %4270 = vmax.xlane.f32.xlu0 %v4097
    %v4271 = vpop.xlane.xlu0 %4270
    %4272 = vmax.xlane.f32.xlu0 %v4102
    %v4273 = vpop.xlane.xlu0 %4272
    %4274 = vmax.xlane.f32.xlu0 %v4105
    %v4275 = vpop.xlane.xlu0 %4274
    %4276 = vmax.xlane.f32.xlu0 %v4110
    %v4277 = vpop.xlane.xlu0 %4276
    %4278 = vmax.xlane.f32.xlu0 %v4113
    %v4279 = vpop.xlane.xlu0 %4278
    %4280 = vmax.xlane.f32.xlu0 %v4118
    %v4281 = vpop.xlane.xlu0 %4280
    %4282 = vmax.xlane.f32.xlu0 %v4121
    %v4283 = vpop.xlane.xlu0 %4282
    %4284 = vmax.xlane.f32.xlu0 %v4126
    %v4285 = vpop.xlane.xlu0 %4284
    %4286 = vmax.xlane.f32.xlu0 %v4129
    %v4287 = vpop.xlane.xlu0 %4286
    %4288 = vmax.xlane.f32.xlu0 %v4134
    %v4289 = vpop.xlane.xlu0 %4288
    %4290 = vmax.xlane.f32.xlu0 %v4137
    %v4291 = vpop.xlane.xlu0 %4290
    %4292 = vmax.xlane.f32.xlu0 %v4142
    %v4293 = vpop.xlane.xlu0 %4292
    %4294 = vmax.xlane.f32.xlu0 %v4145
    %v4295 = vpop.xlane.xlu0 %4294
    %4296 = vmax.xlane.f32.xlu0 %v4150
    %v4297 = vpop.xlane.xlu0 %4296
    %4298 = vmax.xlane.f32.xlu0 %v4153
    %v4299 = vpop.xlane.xlu0 %4298
    %4300 = vmax.xlane.f32.xlu0 %v4158
    %v4301 = vpop.xlane.xlu0 %4300
    %4302 = vmax.xlane.f32.xlu0 %v4161
    %v4303 = vpop.xlane.xlu0 %4302
    %4304 = vmax.xlane.f32.xlu0 %v4166
    %v4305 = vpop.xlane.xlu0 %4304
    %4306 = vmax.xlane.f32.xlu0 %v4169
    %v4307 = vpop.xlane.xlu0 %4306
    %4308 = vmax.xlane.f32.xlu0 %v4174
    %v4309 = vpop.xlane.xlu0 %4308
    %4310 = vmax.xlane.f32.xlu0 %v4177
    %v4311 = vpop.xlane.xlu0 %4310
    %4312 = vmax.xlane.f32.xlu0 %v4182
    %v4313 = vpop.xlane.xlu0 %4312
    %4314 = vmax.xlane.f32.xlu0 %v4185
    %v4315 = vpop.xlane.xlu0 %4314
    %v4316 = vsub.f32 %v3934, %v4189
    %v4317 = vsub.f32 %v3937, %v4191
    %v4318 = vsub.f32 %v3942, %v4193
    %v4319 = vsub.f32 %v3945, %v4195
    %v4320 = vsub.f32 %v3950, %v4197
    %v4321 = vsub.f32 %v3953, %v4199
    %v4322 = vsub.f32 %v3958, %v4201
    %v4323 = vsub.f32 %v3961, %v4203
    %v4324 = vsub.f32 %v3966, %v4205
    %v4325 = vsub.f32 %v3969, %v4207
    %v4326 = vsub.f32 %v3974, %v4209
    %v4327 = vsub.f32 %v3977, %v4211
    %v4328 = vsub.f32 %v3982, %v4213
    %v4329 = vsub.f32 %v3985, %v4215
    %v4330 = vsub.f32 %v3990, %v4217
    %v4331 = vsub.f32 %v3993, %v4219
    %v4332 = vsub.f32 %v3998, %v4221
    %v4333 = vsub.f32 %v4001, %v4223
    %v4334 = vsub.f32 %v4006, %v4225
    %v4335 = vsub.f32 %v4009, %v4227
    %v4336 = vsub.f32 %v4014, %v4229
    %v4337 = vsub.f32 %v4017, %v4231
    %v4338 = vsub.f32 %v4022, %v4233
    %v4339 = vsub.f32 %v4025, %v4235
    %v4340 = vsub.f32 %v4030, %v4237
    %v4341 = vsub.f32 %v4033, %v4239
    %v4342 = vsub.f32 %v4038, %v4241
    %v4343 = vsub.f32 %v4041, %v4243
    %v4344 = vsub.f32 %v4046, %v4245
    %v4345 = vsub.f32 %v4049, %v4247
    %v4346 = vsub.f32 %v4054, %v4249
    %v4347 = vsub.f32 %v4057, %v4251
    %v4348 = vsub.f32 %v4062, %v4253
    %v4349 = vsub.f32 %v4065, %v4255
    %v4350 = vsub.f32 %v4070, %v4257
    %v4351 = vsub.f32 %v4073, %v4259
    %v4352 = vsub.f32 %v4078, %v4261
    %v4353 = vsub.f32 %v4081, %v4263
    %v4354 = vsub.f32 %v4086, %v4265
    %v4355 = vsub.f32 %v4089, %v4267
    %v4356 = vsub.f32 %v4094, %v4269
    %v4357 = vsub.f32 %v4097, %v4271
    %v4358 = vsub.f32 %v4102, %v4273
    %v4359 = vsub.f32 %v4105, %v4275
    %v4360 = vsub.f32 %v4110, %v4277
    %v4361 = vsub.f32 %v4113, %v4279
    %v4362 = vsub.f32 %v4118, %v4281
    %v4363 = vsub.f32 %v4121, %v4283
    %v4364 = vsub.f32 %v4126, %v4285
    %v4365 = vsub.f32 %v4129, %v4287
    %v4366 = vsub.f32 %v4134, %v4289
    %v4367 = vsub.f32 %v4137, %v4291
    %v4368 = vsub.f32 %v4142, %v4293
    %v4369 = vsub.f32 %v4145, %v4295
    %v4370 = vsub.f32 %v4150, %v4297
    %v4371 = vsub.f32 %v4153, %v4299
    %v4372 = vsub.f32 %v4158, %v4301
    %v4373 = vsub.f32 %v4161, %v4303
    %v4374 = vsub.f32 %v4166, %v4305
    %v4375 = vsub.f32 %v4169, %v4307
    %v4376 = vsub.f32 %v4174, %v4309
    %v4377 = vsub.f32 %v4177, %v4311
    %v4378 = vsub.f32 %v4182, %v4313
    %v4379 = vsub.f32 %v4185, %v4315
    %v4380 = vmul.f32 %v4316, 1.442695
    %v4381 = vpow.pop %v4380
    %v4382 = vmul.f32 %v4317, 1.442695
    %v4383 = vpow.pop %v4382
    %v4384 = vmul.f32 %v4318, 1.442695
    %v4385 = vpow.pop %v4384
    %v4386 = vmul.f32 %v4319, 1.442695
    %v4387 = vpow.pop %v4386
    %v4388 = vmul.f32 %v4320, 1.442695
    %v4389 = vpow.pop %v4388
    %v4390 = vmul.f32 %v4321, 1.442695
    %v4391 = vpow.pop %v4390
    %v4392 = vmul.f32 %v4322, 1.442695
    %v4393 = vpow.pop %v4392
    %v4394 = vmul.f32 %v4323, 1.442695
    %v4395 = vpow.pop %v4394
    %v4396 = vmul.f32 %v4324, 1.442695
    %v4397 = vpow.pop %v4396
    %v4398 = vmul.f32 %v4325, 1.442695
    %v4399 = vpow.pop %v4398
    %v4400 = vmul.f32 %v4326, 1.442695
    %v4401 = vpow.pop %v4400
    %v4402 = vmul.f32 %v4327, 1.442695
    %v4403 = vpow.pop %v4402
    %v4404 = vmul.f32 %v4328, 1.442695
    %v4405 = vpow.pop %v4404
    %v4406 = vmul.f32 %v4329, 1.442695
    %v4407 = vpow.pop %v4406
    %v4408 = vmul.f32 %v4330, 1.442695
    %v4409 = vpow.pop %v4408
    %v4410 = vmul.f32 %v4331, 1.442695
    %v4411 = vpow.pop %v4410
    %v4412 = vmul.f32 %v4332, 1.442695
    %v4413 = vpow.pop %v4412
    %v4414 = vmul.f32 %v4333, 1.442695
    %v4415 = vpow.pop %v4414
    %v4416 = vmul.f32 %v4334, 1.442695
    %v4417 = vpow.pop %v4416
    %v4418 = vmul.f32 %v4335, 1.442695
    %v4419 = vpow.pop %v4418
    %v4420 = vmul.f32 %v4336, 1.442695
    %v4421 = vpow.pop %v4420
    %v4422 = vmul.f32 %v4337, 1.442695
    %v4423 = vpow.pop %v4422
    %v4424 = vmul.f32 %v4338, 1.442695
    %v4425 = vpow.pop %v4424
    %v4426 = vmul.f32 %v4339, 1.442695
    %v4427 = vpow.pop %v4426
    %v4428 = vmul.f32 %v4340, 1.442695
    %v4429 = vpow.pop %v4428
    %v4430 = vmul.f32 %v4341, 1.442695
    %v4431 = vpow.pop %v4430
    %v4432 = vmul.f32 %v4342, 1.442695
    %v4433 = vpow.pop %v4432
    %v4434 = vmul.f32 %v4343, 1.442695
    %v4435 = vpow.pop %v4434
    %v4436 = vmul.f32 %v4344, 1.442695
    %v4437 = vpow.pop %v4436
    %v4438 = vmul.f32 %v4345, 1.442695
    %v4439 = vpow.pop %v4438
    %v4440 = vmul.f32 %v4346, 1.442695
    %v4441 = vpow.pop %v4440
    %v4442 = vmul.f32 %v4347, 1.442695
    %v4443 = vpow.pop %v4442
    %v4444 = vmul.f32 %v4348, 1.442695
    %v4445 = vpow.pop %v4444
    %v4446 = vmul.f32 %v4349, 1.442695
    %v4447 = vpow.pop %v4446
    %v4448 = vmul.f32 %v4350, 1.442695
    %v4449 = vpow.pop %v4448
    %v4450 = vmul.f32 %v4351, 1.442695
    %v4451 = vpow.pop %v4450
    %v4452 = vmul.f32 %v4352, 1.442695
    %v4453 = vpow.pop %v4452
    %v4454 = vmul.f32 %v4353, 1.442695
    %v4455 = vpow.pop %v4454
    %v4456 = vmul.f32 %v4354, 1.442695
    %v4457 = vpow.pop %v4456
    %v4458 = vmul.f32 %v4355, 1.442695
    %v4459 = vpow.pop %v4458
    %v4460 = vmul.f32 %v4356, 1.442695
    %v4461 = vpow.pop %v4460
    %v4462 = vmul.f32 %v4357, 1.442695
    %v4463 = vpow.pop %v4462
    %v4464 = vmul.f32 %v4358, 1.442695
    %v4465 = vpow.pop %v4464
    %v4466 = vmul.f32 %v4359, 1.442695
    %v4467 = vpow.pop %v4466
    %v4468 = vmul.f32 %v4360, 1.442695
    %v4469 = vpow.pop %v4468
    %v4470 = vmul.f32 %v4361, 1.442695
    %v4471 = vpow.pop %v4470
    %v4472 = vmul.f32 %v4362, 1.442695
    %v4473 = vpow.pop %v4472
    %v4474 = vmul.f32 %v4363, 1.442695
    %v4475 = vpow.pop %v4474
    %v4476 = vmul.f32 %v4364, 1.442695
    %v4477 = vpow.pop %v4476
    %v4478 = vmul.f32 %v4365, 1.442695
    %v4479 = vpow.pop %v4478
    %v4480 = vmul.f32 %v4366, 1.442695
    %v4481 = vpow.pop %v4480
    %v4482 = vmul.f32 %v4367, 1.442695
    %v4483 = vpow.pop %v4482
    %v4484 = vmul.f32 %v4368, 1.442695
    %v4485 = vpow.pop %v4484
    %v4486 = vmul.f32 %v4369, 1.442695
    %v4487 = vpow.pop %v4486
    %v4488 = vmul.f32 %v4370, 1.442695
    %v4489 = vpow.pop %v4488
    %v4490 = vmul.f32 %v4371, 1.442695
    %v4491 = vpow.pop %v4490
    %v4492 = vmul.f32 %v4372, 1.442695
    %v4493 = vpow.pop %v4492
    %v4494 = vmul.f32 %v4373, 1.442695
    %v4495 = vpow.pop %v4494
    %v4496 = vmul.f32 %v4374, 1.442695
    %v4497 = vpow.pop %v4496
    %v4498 = vmul.f32 %v4375, 1.442695
    %v4499 = vpow.pop %v4498
    %v4500 = vmul.f32 %v4376, 1.442695
    %v4501 = vpow.pop %v4500
    %v4502 = vmul.f32 %v4377, 1.442695
    %v4503 = vpow.pop %v4502
    %v4504 = vmul.f32 %v4378, 1.442695
    %v4505 = vpow.pop %v4504
    %v4506 = vmul.f32 %v4379, 1.442695
    %v4507 = vpow.pop %v4506
    %4508 = vadd.xlane.f32.xlu0 %v4381
    %v4509 = vpop.xlane.xlu0 %4508
    %4510 = vadd.xlane.f32.xlu0 %v4383
    %v4511 = vpop.xlane.xlu0 %4510
    %4512 = vadd.xlane.f32.xlu0 %v4385
    %v4513 = vpop.xlane.xlu0 %4512
    %4514 = vadd.xlane.f32.xlu0 %v4387
    %v4515 = vpop.xlane.xlu0 %4514
    %4516 = vadd.xlane.f32.xlu0 %v4389
    %v4517 = vpop.xlane.xlu0 %4516
    %4518 = vadd.xlane.f32.xlu0 %v4391
    %v4519 = vpop.xlane.xlu0 %4518
    %4520 = vadd.xlane.f32.xlu0 %v4393
    %v4521 = vpop.xlane.xlu0 %4520
    %4522 = vadd.xlane.f32.xlu0 %v4395
    %v4523 = vpop.xlane.xlu0 %4522
    %4524 = vadd.xlane.f32.xlu0 %v4397
    %v4525 = vpop.xlane.xlu0 %4524
    %4526 = vadd.xlane.f32.xlu0 %v4399
    %v4527 = vpop.xlane.xlu0 %4526
    %4528 = vadd.xlane.f32.xlu0 %v4401
    %v4529 = vpop.xlane.xlu0 %4528
    %4530 = vadd.xlane.f32.xlu0 %v4403
    %v4531 = vpop.xlane.xlu0 %4530
    %4532 = vadd.xlane.f32.xlu0 %v4405
    %v4533 = vpop.xlane.xlu0 %4532
    %4534 = vadd.xlane.f32.xlu0 %v4407
    %v4535 = vpop.xlane.xlu0 %4534
    %4536 = vadd.xlane.f32.xlu0 %v4409
    %v4537 = vpop.xlane.xlu0 %4536
    %4538 = vadd.xlane.f32.xlu0 %v4411
    %v4539 = vpop.xlane.xlu0 %4538
    %4540 = vadd.xlane.f32.xlu0 %v4413
    %v4541 = vpop.xlane.xlu0 %4540
    %4542 = vadd.xlane.f32.xlu0 %v4415
    %v4543 = vpop.xlane.xlu0 %4542
    %4544 = vadd.xlane.f32.xlu0 %v4417
    %v4545 = vpop.xlane.xlu0 %4544
    %4546 = vadd.xlane.f32.xlu0 %v4419
    %v4547 = vpop.xlane.xlu0 %4546
    %4548 = vadd.xlane.f32.xlu0 %v4421
    %v4549 = vpop.xlane.xlu0 %4548
    %4550 = vadd.xlane.f32.xlu0 %v4423
    %v4551 = vpop.xlane.xlu0 %4550
    %4552 = vadd.xlane.f32.xlu0 %v4425
    %v4553 = vpop.xlane.xlu0 %4552
    %4554 = vadd.xlane.f32.xlu0 %v4427
    %v4555 = vpop.xlane.xlu0 %4554
    %4556 = vadd.xlane.f32.xlu0 %v4429
    %v4557 = vpop.xlane.xlu0 %4556
    %4558 = vadd.xlane.f32.xlu0 %v4431
    %v4559 = vpop.xlane.xlu0 %4558
    %4560 = vadd.xlane.f32.xlu0 %v4433
    %v4561 = vpop.xlane.xlu0 %4560
    %4562 = vadd.xlane.f32.xlu0 %v4435
    %v4563 = vpop.xlane.xlu0 %4562
    %4564 = vadd.xlane.f32.xlu0 %v4437
    %v4565 = vpop.xlane.xlu0 %4564
    %4566 = vadd.xlane.f32.xlu0 %v4439
    %v4567 = vpop.xlane.xlu0 %4566
    %4568 = vadd.xlane.f32.xlu0 %v4441
    %v4569 = vpop.xlane.xlu0 %4568
    %4570 = vadd.xlane.f32.xlu0 %v4443
    %v4571 = vpop.xlane.xlu0 %4570
    %4572 = vadd.xlane.f32.xlu0 %v4445
    %v4573 = vpop.xlane.xlu0 %4572
    %4574 = vadd.xlane.f32.xlu0 %v4447
    %v4575 = vpop.xlane.xlu0 %4574
    %4576 = vadd.xlane.f32.xlu0 %v4449
    %v4577 = vpop.xlane.xlu0 %4576
    %4578 = vadd.xlane.f32.xlu0 %v4451
    %v4579 = vpop.xlane.xlu0 %4578
    %4580 = vadd.xlane.f32.xlu0 %v4453
    %v4581 = vpop.xlane.xlu0 %4580
    %4582 = vadd.xlane.f32.xlu0 %v4455
    %v4583 = vpop.xlane.xlu0 %4582
    %4584 = vadd.xlane.f32.xlu0 %v4457
    %v4585 = vpop.xlane.xlu0 %4584
    %4586 = vadd.xlane.f32.xlu0 %v4459
    %v4587 = vpop.xlane.xlu0 %4586
    %4588 = vadd.xlane.f32.xlu0 %v4461
    %v4589 = vpop.xlane.xlu0 %4588
    %4590 = vadd.xlane.f32.xlu0 %v4463
    %v4591 = vpop.xlane.xlu0 %4590
    %4592 = vadd.xlane.f32.xlu0 %v4465
    %v4593 = vpop.xlane.xlu0 %4592
    %4594 = vadd.xlane.f32.xlu0 %v4467
    %v4595 = vpop.xlane.xlu0 %4594
    %4596 = vadd.xlane.f32.xlu0 %v4469
    %v4597 = vpop.xlane.xlu0 %4596
    %4598 = vadd.xlane.f32.xlu0 %v4471
    %v4599 = vpop.xlane.xlu0 %4598
    %4600 = vadd.xlane.f32.xlu0 %v4473
    %v4601 = vpop.xlane.xlu0 %4600
    %4602 = vadd.xlane.f32.xlu0 %v4475
    %v4603 = vpop.xlane.xlu0 %4602
    %4604 = vadd.xlane.f32.xlu0 %v4477
    %v4605 = vpop.xlane.xlu0 %4604
    %4606 = vadd.xlane.f32.xlu0 %v4479
    %v4607 = vpop.xlane.xlu0 %4606
    %4608 = vadd.xlane.f32.xlu0 %v4481
    %v4609 = vpop.xlane.xlu0 %4608
    %4610 = vadd.xlane.f32.xlu0 %v4483
    %v4611 = vpop.xlane.xlu0 %4610
    %4612 = vadd.xlane.f32.xlu0 %v4485
    %v4613 = vpop.xlane.xlu0 %4612
    %4614 = vadd.xlane.f32.xlu0 %v4487
    %v4615 = vpop.xlane.xlu0 %4614
    %4616 = vadd.xlane.f32.xlu0 %v4489
    %v4617 = vpop.xlane.xlu0 %4616
    %4618 = vadd.xlane.f32.xlu0 %v4491
    %v4619 = vpop.xlane.xlu0 %4618
    %4620 = vadd.xlane.f32.xlu0 %v4493
    %v4621 = vpop.xlane.xlu0 %4620
    %4622 = vadd.xlane.f32.xlu0 %v4495
    %v4623 = vpop.xlane.xlu0 %4622
    %4624 = vadd.xlane.f32.xlu0 %v4497
    %v4625 = vpop.xlane.xlu0 %4624
    %4626 = vadd.xlane.f32.xlu0 %v4499
    %v4627 = vpop.xlane.xlu0 %4626
    %4628 = vadd.xlane.f32.xlu0 %v4501
    %v4629 = vpop.xlane.xlu0 %4628
    %4630 = vadd.xlane.f32.xlu0 %v4503
    %v4631 = vpop.xlane.xlu0 %4630
    %4632 = vadd.xlane.f32.xlu0 %v4505
    %v4633 = vpop.xlane.xlu0 %4632
    %4634 = vadd.xlane.f32.xlu0 %v4507
    %v4635 = vpop.xlane.xlu0 %4634
    %v4636 = vlog2.pop %v4509
    %v4637 = vmul.f32 %v4636, 0.6931472
    %v4638 = vlog2.pop %v4511
    %v4639 = vmul.f32 %v4638, 0.6931472
    %v4640 = vlog2.pop %v4513
    %v4641 = vmul.f32 %v4640, 0.6931472
    %v4642 = vlog2.pop %v4515
    %v4643 = vmul.f32 %v4642, 0.6931472
    %v4644 = vlog2.pop %v4517
    %v4645 = vmul.f32 %v4644, 0.6931472
    %v4646 = vlog2.pop %v4519
    %v4647 = vmul.f32 %v4646, 0.6931472
    %v4648 = vlog2.pop %v4521
    %v4649 = vmul.f32 %v4648, 0.6931472
    %v4650 = vlog2.pop %v4523
    %v4651 = vmul.f32 %v4650, 0.6931472
    %v4652 = vlog2.pop %v4525
    %v4653 = vmul.f32 %v4652, 0.6931472
    %v4654 = vlog2.pop %v4527
    %v4655 = vmul.f32 %v4654, 0.6931472
    %v4656 = vlog2.pop %v4529
    %v4657 = vmul.f32 %v4656, 0.6931472
    %v4658 = vlog2.pop %v4531
    %v4659 = vmul.f32 %v4658, 0.6931472
    %v4660 = vlog2.pop %v4533
    %v4661 = vmul.f32 %v4660, 0.6931472
    %v4662 = vlog2.pop %v4535
    %v4663 = vmul.f32 %v4662, 0.6931472
    %v4664 = vlog2.pop %v4537
    %v4665 = vmul.f32 %v4664, 0.6931472
    %v4666 = vlog2.pop %v4539
    %v4667 = vmul.f32 %v4666, 0.6931472
    %v4668 = vlog2.pop %v4541
    %v4669 = vmul.f32 %v4668, 0.6931472
    %v4670 = vlog2.pop %v4543
    %v4671 = vmul.f32 %v4670, 0.6931472
    %v4672 = vlog2.pop %v4545
    %v4673 = vmul.f32 %v4672, 0.6931472
    %v4674 = vlog2.pop %v4547
    %v4675 = vmul.f32 %v4674, 0.6931472
    %v4676 = vlog2.pop %v4549
    %v4677 = vmul.f32 %v4676, 0.6931472
    %v4678 = vlog2.pop %v4551
    %v4679 = vmul.f32 %v4678, 0.6931472
    %v4680 = vlog2.pop %v4553
    %v4681 = vmul.f32 %v4680, 0.6931472
    %v4682 = vlog2.pop %v4555
    %v4683 = vmul.f32 %v4682, 0.6931472
    %v4684 = vlog2.pop %v4557
    %v4685 = vmul.f32 %v4684, 0.6931472
    %v4686 = vlog2.pop %v4559
    %v4687 = vmul.f32 %v4686, 0.6931472
    %v4688 = vlog2.pop %v4561
    %v4689 = vmul.f32 %v4688, 0.6931472
    %v4690 = vlog2.pop %v4563
    %v4691 = vmul.f32 %v4690, 0.6931472
    %v4692 = vlog2.pop %v4565
    %v4693 = vmul.f32 %v4692, 0.6931472
    %v4694 = vlog2.pop %v4567
    %v4695 = vmul.f32 %v4694, 0.6931472
    %v4696 = vlog2.pop %v4569
    %v4697 = vmul.f32 %v4696, 0.6931472
    %v4698 = vlog2.pop %v4571
    %v4699 = vmul.f32 %v4698, 0.6931472
    %v4700 = vlog2.pop %v4573
    %v4701 = vmul.f32 %v4700, 0.6931472
    %v4702 = vlog2.pop %v4575
    %v4703 = vmul.f32 %v4702, 0.6931472
    %v4704 = vlog2.pop %v4577
    %v4705 = vmul.f32 %v4704, 0.6931472
    %v4706 = vlog2.pop %v4579
    %v4707 = vmul.f32 %v4706, 0.6931472
    %v4708 = vlog2.pop %v4581
    %v4709 = vmul.f32 %v4708, 0.6931472
    %v4710 = vlog2.pop %v4583
    %v4711 = vmul.f32 %v4710, 0.6931472
    %v4712 = vlog2.pop %v4585
    %v4713 = vmul.f32 %v4712, 0.6931472
    %v4714 = vlog2.pop %v4587
    %v4715 = vmul.f32 %v4714, 0.6931472
    %v4716 = vlog2.pop %v4589
    %v4717 = vmul.f32 %v4716, 0.6931472
    %v4718 = vlog2.pop %v4591
    %v4719 = vmul.f32 %v4718, 0.6931472
    %v4720 = vlog2.pop %v4593
    %v4721 = vmul.f32 %v4720, 0.6931472
    %v4722 = vlog2.pop %v4595
    %v4723 = vmul.f32 %v4722, 0.6931472
    %v4724 = vlog2.pop %v4597
    %v4725 = vmul.f32 %v4724, 0.6931472
    %v4726 = vlog2.pop %v4599
    %v4727 = vmul.f32 %v4726, 0.6931472
    %v4728 = vlog2.pop %v4601
    %v4729 = vmul.f32 %v4728, 0.6931472
    %v4730 = vlog2.pop %v4603
    %v4731 = vmul.f32 %v4730, 0.6931472
    %v4732 = vlog2.pop %v4605
    %v4733 = vmul.f32 %v4732, 0.6931472
    %v4734 = vlog2.pop %v4607
    %v4735 = vmul.f32 %v4734, 0.6931472
    %v4736 = vlog2.pop %v4609
    %v4737 = vmul.f32 %v4736, 0.6931472
    %v4738 = vlog2.pop %v4611
    %v4739 = vmul.f32 %v4738, 0.6931472
    %v4740 = vlog2.pop %v4613
    %v4741 = vmul.f32 %v4740, 0.6931472
    %v4742 = vlog2.pop %v4615
    %v4743 = vmul.f32 %v4742, 0.6931472
    %v4744 = vlog2.pop %v4617
    %v4745 = vmul.f32 %v4744, 0.6931472
    %v4746 = vlog2.pop %v4619
    %v4747 = vmul.f32 %v4746, 0.6931472
    %v4748 = vlog2.pop %v4621
    %v4749 = vmul.f32 %v4748, 0.6931472
    %v4750 = vlog2.pop %v4623
    %v4751 = vmul.f32 %v4750, 0.6931472
    %v4752 = vlog2.pop %v4625
    %v4753 = vmul.f32 %v4752, 0.6931472
    %v4754 = vlog2.pop %v4627
    %v4755 = vmul.f32 %v4754, 0.6931472
    %v4756 = vlog2.pop %v4629
    %v4757 = vmul.f32 %v4756, 0.6931472
    %v4758 = vlog2.pop %v4631
    %v4759 = vmul.f32 %v4758, 0.6931472
    %v4760 = vlog2.pop %v4633
    %v4761 = vmul.f32 %v4760, 0.6931472
    %v4762 = vlog2.pop %v4635
    %v4763 = vmul.f32 %v4762, 0.6931472
    %v4764 = vsub.f32 %v4316, %v4637
    %v4765 = vsub.f32 %v4317, %v4639
    %v4766 = vsub.f32 %v4318, %v4641
    %v4767 = vsub.f32 %v4319, %v4643
    %v4768 = vsub.f32 %v4320, %v4645
    %v4769 = vsub.f32 %v4321, %v4647
    %v4770 = vsub.f32 %v4322, %v4649
    %v4771 = vsub.f32 %v4323, %v4651
    %v4772 = vsub.f32 %v4324, %v4653
    %v4773 = vsub.f32 %v4325, %v4655
    %v4774 = vsub.f32 %v4326, %v4657
    %v4775 = vsub.f32 %v4327, %v4659
    %v4776 = vsub.f32 %v4328, %v4661
    %v4777 = vsub.f32 %v4329, %v4663
    %v4778 = vsub.f32 %v4330, %v4665
    %v4779 = vsub.f32 %v4331, %v4667
    %v4780 = vsub.f32 %v4332, %v4669
    %v4781 = vsub.f32 %v4333, %v4671
    %v4782 = vsub.f32 %v4334, %v4673
    %v4783 = vsub.f32 %v4335, %v4675
    %v4784 = vsub.f32 %v4336, %v4677
    %v4785 = vsub.f32 %v4337, %v4679
    %v4786 = vsub.f32 %v4338, %v4681
    %v4787 = vsub.f32 %v4339, %v4683
    %v4788 = vsub.f32 %v4340, %v4685
    %v4789 = vsub.f32 %v4341, %v4687
    %v4790 = vsub.f32 %v4342, %v4689
    %v4791 = vsub.f32 %v4343, %v4691
    %v4792 = vsub.f32 %v4344, %v4693
    %v4793 = vsub.f32 %v4345, %v4695
    %v4794 = vsub.f32 %v4346, %v4697
    %v4795 = vsub.f32 %v4347, %v4699
    %v4796 = vsub.f32 %v4348, %v4701
    %v4797 = vsub.f32 %v4349, %v4703
    %v4798 = vsub.f32 %v4350, %v4705
    %v4799 = vsub.f32 %v4351, %v4707
    %v4800 = vsub.f32 %v4352, %v4709
    %v4801 = vsub.f32 %v4353, %v4711
    %v4802 = vsub.f32 %v4354, %v4713
    %v4803 = vsub.f32 %v4355, %v4715
    %v4804 = vsub.f32 %v4356, %v4717
    %v4805 = vsub.f32 %v4357, %v4719
    %v4806 = vsub.f32 %v4358, %v4721
    %v4807 = vsub.f32 %v4359, %v4723
    %v4808 = vsub.f32 %v4360, %v4725
    %v4809 = vsub.f32 %v4361, %v4727
    %v4810 = vsub.f32 %v4362, %v4729
    %v4811 = vsub.f32 %v4363, %v4731
    %v4812 = vsub.f32 %v4364, %v4733
    %v4813 = vsub.f32 %v4365, %v4735
    %v4814 = vsub.f32 %v4366, %v4737
    %v4815 = vsub.f32 %v4367, %v4739
    %v4816 = vsub.f32 %v4368, %v4741
    %v4817 = vsub.f32 %v4369, %v4743
    %v4818 = vsub.f32 %v4370, %v4745
    %v4819 = vsub.f32 %v4371, %v4747
    %v4820 = vsub.f32 %v4372, %v4749
    %v4821 = vsub.f32 %v4373, %v4751
    %v4822 = vsub.f32 %v4374, %v4753
    %v4823 = vsub.f32 %v4375, %v4755
    %v4824 = vsub.f32 %v4376, %v4757
    %v4825 = vsub.f32 %v4377, %v4759
    %v4826 = vsub.f32 %v4378, %v4761
    %v4827 = vsub.f32 %v4379, %v4763
    %4828 = vst [vmem:[#allocation2] sm:$0xff] %v4764
    %4829 = vst [vmem:[#allocation2 + $0x8] sm:$0xff] %v4765
    %4830 = vst [vmem:[#allocation2 + $0x10] sm:$0xff] %v4766
    %4831 = vst [vmem:[#allocation2 + $0x18] sm:$0xff] %v4767
    %4832 = vst [vmem:[#allocation2 + $0x20] sm:$0xff] %v4768
    %4833 = vst [vmem:[#allocation2 + $0x28] sm:$0xff] %v4769
    %4834 = vst [vmem:[#allocation2 + $0x30] sm:$0xff] %v4770
    %4835 = vst [vmem:[#allocation2 + $0x38] sm:$0xff] %v4771
    %4836 = vst [vmem:[#allocation2 + $0x40] sm:$0xff] %v4772
    %4837 = vst [vmem:[#allocation2 + $0x48] sm:$0xff] %v4773
    %4838 = vst [vmem:[#allocation2 + $0x50] sm:$0xff] %v4774
    %4839 = vst [vmem:[#allocation2 + $0x58] sm:$0xff] %v4775
    %4840 = vst [vmem:[#allocation2 + $0x60] sm:$0xff] %v4776
    %4841 = vst [vmem:[#allocation2 + $0x68] sm:$0xff] %v4777
    %4842 = vst [vmem:[#allocation2 + $0x70] sm:$0xff] %v4778
    %4843 = vst [vmem:[#allocation2 + $0x78] sm:$0xff] %v4779
    %4844 = vst [vmem:[#allocation2 + $0x80] sm:$0xff] %v4780
    %4845 = vst [vmem:[#allocation2 + $0x88] sm:$0xff] %v4781
    %4846 = vst [vmem:[#allocation2 + $0x90] sm:$0xff] %v4782
    %4847 = vst [vmem:[#allocation2 + $0x98] sm:$0xff] %v4783
    %4848 = vst [vmem:[#allocation2 + $0xa0] sm:$0xff] %v4784
    %4849 = vst [vmem:[#allocation2 + $0xa8] sm:$0xff] %v4785
    %4850 = vst [vmem:[#allocation2 + $0xb0] sm:$0xff] %v4786
    %4851 = vst [vmem:[#allocation2 + $0xb8] sm:$0xff] %v4787
    %4852 = vst [vmem:[#allocation2 + $0xc0] sm:$0xff] %v4788
    %4853 = vst [vmem:[#allocation2 + $0xc8] sm:$0xff] %v4789
    %4854 = vst [vmem:[#allocation2 + $0xd0] sm:$0xff] %v4790
    %4855 = vst [vmem:[#allocation2 + $0xd8] sm:$0xff] %v4791
    %4856 = vst [vmem:[#allocation2 + $0xe0] sm:$0xff] %v4792
    %4857 = vst [vmem:[#allocation2 + $0xe8] sm:$0xff] %v4793
    %4858 = vst [vmem:[#allocation2 + $0xf0] sm:$0xff] %v4794
    %4859 = vst [vmem:[#allocation2 + $0xf8] sm:$0xff] %v4795
    %4860 = vst [vmem:[#allocation2 + $0x100] sm:$0xff] %v4796
    %4861 = vst [vmem:[#allocation2 + $0x108] sm:$0xff] %v4797
    %4862 = vst [vmem:[#allocation2 + $0x110] sm:$0xff] %v4798
    %4863 = vst [vmem:[#allocation2 + $0x118] sm:$0xff] %v4799
    %4864 = vst [vmem:[#allocation2 + $0x120] sm:$0xff] %v4800
    %4865 = vst [vmem:[#allocation2 + $0x128] sm:$0xff] %v4801
    %4866 = vst [vmem:[#allocation2 + $0x130] sm:$0xff] %v4802
    %4867 = vst [vmem:[#allocation2 + $0x138] sm:$0xff] %v4803
    %4868 = vst [vmem:[#allocation2 + $0x140] sm:$0xff] %v4804
    %4869 = vst [vmem:[#allocation2 + $0x148] sm:$0xff] %v4805
    %4870 = vst [vmem:[#allocation2 + $0x150] sm:$0xff] %v4806
    %4871 = vst [vmem:[#allocation2 + $0x158] sm:$0xff] %v4807
    %4872 = vst [vmem:[#allocation2 + $0x160] sm:$0xff] %v4808
    %4873 = vst [vmem:[#allocation2 + $0x168] sm:$0xff] %v4809
    %4874 = vst [vmem:[#allocation2 + $0x170] sm:$0xff] %v4810
    %4875 = vst [vmem:[#allocation2 + $0x178] sm:$0xff] %v4811
    %4876 = vst [vmem:[#allocation2 + $0x180] sm:$0xff] %v4812
    %4877 = vst [vmem:[#allocation2 + $0x188] sm:$0xff] %v4813
    %4878 = vst [vmem:[#allocation2 + $0x190] sm:$0xff] %v4814
    %4879 = vst [vmem:[#allocation2 + $0x198] sm:$0xff] %v4815
    %4880 = vst [vmem:[#allocation2 + $0x1a0] sm:$0xff] %v4816
    %4881 = vst [vmem:[#allocation2 + $0x1a8] sm:$0xff] %v4817
    %4882 = vst [vmem:[#allocation2 + $0x1b0] sm:$0xff] %v4818
    %4883 = vst [vmem:[#allocation2 + $0x1b8] sm:$0xff] %v4819
    %4884 = vst [vmem:[#allocation2 + $0x1c0] sm:$0xff] %v4820
    %4885 = vst [vmem:[#allocation2 + $0x1c8] sm:$0xff] %v4821
    %4886 = vst [vmem:[#allocation2 + $0x1d0] sm:$0xff] %v4822
    %4887 = vst [vmem:[#allocation2 + $0x1d8] sm:$0xff] %v4823
    %4888 = vst [vmem:[#allocation2 + $0x1e0] sm:$0xff] %v4824
    %4889 = vst [vmem:[#allocation2 + $0x1e8] sm:$0xff] %v4825
    %4890 = vst [vmem:[#allocation2 + $0x1f0] sm:$0xff] %v4826
    %4891 = vst [vmem:[#allocation2 + $0x1f8] sm:$0xff] %v4827
    // Predicated region
    $region46: #{tpu_custom_call.1} parent=1 // pred_check
      _
    $region47: #{tpu_custom_call.1} parent=1 // pred_check_branch
      %4893 = sbr.rel (0) target = $region49
    $region48: #{tpu_custom_call.1} parent=1 // pred_region
      %s4895 = ssub.s32 8192, 8192
      %4896 = vsyncadd [#allocation3], %s4895
      %s4897 = sshll.u32 [#allocation2], 4
      %s4898 = int_to_ptr.vmem [resolvable:$true] %s4897
      %4903 = dma.vmem_to_hbm [thread:$0]  %s4898, 8192, %s11, [#allocation3], 128, 128, 8
    $region49: #{tpu_custom_call.1} parent=1 // pred_fallthru
      _
    // Predicated region
    $region50: #{tpu_custom_call.1} parent=1 // pred_check
      _
    $region51: #{tpu_custom_call.1} parent=1 // pred_check_branch
      %4905 = sbr.rel (0) target = $region53
    $region52: #{tpu_custom_call.1} parent=1 // pred_region
      %4906 = dma.done [#allocation3], 8192
    $region53: #{tpu_custom_call.1} parent=1 // pred_fallthru
      _
    %4907 = vsyncpa [#allocation3], 1

// kernel: tpu_custom_call.1
$region0: #{tpu_custom_call.1}
  #allocation0 [shape = 'u32[]', space=smem, size = 0x4, offset = 0x4, fixed_abs, tag = 'smem constant byte address 0x4 - core index']
  #allocation1 [shape = 'u32[144,128]{1,0:T(1,128)}', space=vmem, size = 0x12000, scoped, tag = 'internal scratch']
  %s0 = inlined_call_operand.vmem [shape: f32[512,784], index: 0, kind: input, shape index: {}]
  %s1 = inlined_call_operand.vmem [shape: bf16[784,128], index: 1, kind: input, shape index: {}]
  %s2 = inlined_call_operand.vmem [shape: f32[1,128], index: 2, kind: input, shape index: {}]
  %s3 = inlined_call_operand.vmem [shape: bf16[128,128], index: 3, kind: input, shape index: {}]
  %s4 = inlined_call_operand.vmem [shape: f32[1,128], index: 4, kind: input, shape index: {}]
  %s5 = inlined_call_operand.vmem [shape: bf16[128,128], index: 5, kind: input, shape index: {}]
  %s6 = inlined_call_operand.vmem [shape: f32[1,128], index: 6, kind: input, shape index: {}]
  %s7 = inlined_call_operand.vmem [shape: bf16[128,128], index: 7, kind: input, shape index: {}]
  %s8 = inlined_call_operand.vmem [shape: f32[1,128], index: 8, kind: input, shape index: {}]
  %s9 = inlined_call_operand.vmem [shape: bf16[128,128], index: 9, kind: input, shape index: {}]
  %s10 = inlined_call_operand.vmem [shape: f32[1,128], index: 10, kind: input, shape index: {}]
  %s11 = inlined_call_operand.hbm [shape: f32[512,128], index: 11, kind: output, shape index: {}]
  %s12 = sld [smem:[#allocation0]]
  $region54: #{tpu_custom_call.1} parent=0
    _
  %s14 = ssub.s32 1, %s12
  %s15 = scalar_select 0, %s14, %s12
  $region1: #{tpu_custom_call.1} parent=0
    #allocation2 [shape = 'u8[262144]{0}', space=vmem, size = 0x40000, scoped, tag = 'output window, operand 0, single buffered']
    #allocation3 [shape = 's32[1]{0}', space=sflag, size = 0x4, scoped, tag = 'scoped memory for tpu_custom_call.1']
    %16 = vsyncpa [#allocation3], 0
    // Predicated region
    $region2: #{tpu_custom_call.1} parent=1 // pred_check
      _
    $region3: #{tpu_custom_call.1} parent=1 // pred_check_branch
      %18 = sbr.rel (0) target = $region5
    $region4: #{tpu_custom_call.1} parent=1 // pred_region
      _
    $region5: #{tpu_custom_call.1} parent=1 // pred_fallthru
      _
    // Predicated region
    $region6: #{tpu_custom_call.1} parent=1 // pred_check
      _
    $region7: #{tpu_custom_call.1} parent=1 // pred_check_branch
      %20 = sbr.rel (0) target = $region9
    $region8: #{tpu_custom_call.1} parent=1 // pred_region
      _
    $region9: #{tpu_custom_call.1} parent=1 // pred_fallthru
      _
    // Predicated region
    $region10: #{tpu_custom_call.1} parent=1 // pred_check
      _
    $region11: #{tpu_custom_call.1} parent=1 // pred_check_branch
      %22 = sbr.rel (0) target = $region13
    $region12: #{tpu_custom_call.1} parent=1 // pred_region
      _
    $region13: #{tpu_custom_call.1} parent=1 // pred_fallthru
      _
    // Predicated region
    $region14: #{tpu_custom_call.1} parent=1 // pred_check
      _
    $region15: #{tpu_custom_call.1} parent=1 // pred_check_branch
      %24 = sbr.rel (0) target = $region17
    $region16: #{tpu_custom_call.1} parent=1 // pred_region
      _
    $region17: #{tpu_custom_call.1} parent=1 // pred_fallthru
      _
    // Predicated region
    $region18: #{tpu_custom_call.1} parent=1 // pred_check
      _
    $region19: #{tpu_custom_call.1} parent=1 // pred_check_branch
      %26 = sbr.rel (0) target = $region21
    $region20: #{tpu_custom_call.1} parent=1 // pred_region
      _
    $region21: #{tpu_custom_call.1} parent=1 // pred_fallthru
      _
    // Predicated region
    $region22: #{tpu_custom_call.1} parent=1 // pred_check
      _
    $region23: #{tpu_custom_call.1} parent=1 // pred_check_branch
      %28 = sbr.rel (0) target = $region25
    $region24: #{tpu_custom_call.1} parent=1 // pred_region
      _
    $region25: #{tpu_custom_call.1} parent=1 // pred_fallthru
      _
    // Predicated region
    $region26: #{tpu_custom_call.1} parent=1 // pred_check
      _
    $region27: #{tpu_custom_call.1} parent=1 // pred_check_branch
      %30 = sbr.rel (0) target = $region29
    $region28: #{tpu_custom_call.1} parent=1 // pred_region
      _
    $region29: #{tpu_custom_call.1} parent=1 // pred_fallthru
      _
    // Predicated region
    $region30: #{tpu_custom_call.1} parent=1 // pred_check
      _
    $region31: #{tpu_custom_call.1} parent=1 // pred_check_branch
      %32 = sbr.rel (0) target = $region33
    $region32: #{tpu_custom_call.1} parent=1 // pred_region
      _
    $region33: #{tpu_custom_call.1} parent=1 // pred_fallthru
      _
    // Predicated region
    $region34: #{tpu_custom_call.1} parent=1 // pred_check
      _
    $region35: #{tpu_custom_call.1} parent=1 // pred_check_branch
      %34 = sbr.rel (0) target = $region37
    $region36: #{tpu_custom_call.1} parent=1 // pred_region
      _
    $region37: #{tpu_custom_call.1} parent=1 // pred_fallthru
      _
    // Predicated region
    $region38: #{tpu_custom_call.1} parent=1 // pred_check
      _
    $region39: #{tpu_custom_call.1} parent=1 // pred_check_branch
      %36 = sbr.rel (0) target = $region41
    $region40: #{tpu_custom_call.1} parent=1 // pred_region
      _
    $region41: #{tpu_custom_call.1} parent=1 // pred_fallthru
      _
    // Predicated region
    $region42: #{tpu_custom_call.1} parent=1 // pred_check
      _
    $region43: #{tpu_custom_call.1} parent=1 // pred_check_branch
      %38 = sbr.rel (0) target = $region45
    $region44: #{tpu_custom_call.1} parent=1 // pred_region
      _
    $region45: #{tpu_custom_call.1} parent=1 // pred_fallthru
      _
    %v40 = vld [vmem:[%s0] sm:$0xff]
    %v41 = vld [vmem:[%s0 + $0x8] sm:$0xff]
    %v42 = vld [vmem:[%s0 + $0x10] sm:$0xff]
    %v43 = vld [vmem:[%s0 + $0x18] sm:$0xff]
    %v44 = vld [vmem:[%s0 + $0x20] sm:$0xff]
    %v45 = vld [vmem:[%s0 + $0x28] sm:$0xff]
    %v46 = vld [vmem:[%s0 + $0x30] sm:$0xff]
    %v47 = vld [vmem:[%s0 + $0x38] sm:$0xff]
    %v48 = vld [vmem:[%s0 + $0x40] sm:$0xff]
    %v49 = vld [vmem:[%s0 + $0x48] sm:$0xff]
    %v50 = vld [vmem:[%s0 + $0x50] sm:$0xff]
    %v51 = vld [vmem:[%s0 + $0x58] sm:$0xff]
    %v52 = vld [vmem:[%s0 + $0x60] sm:$0xff]
    %v53 = vld [vmem:[%s0 + $0x68] sm:$0xff]
    %v54 = vld [vmem:[%s0 + $0x70] sm:$0xff]
    %v55 = vld [vmem:[%s0 + $0x78] sm:$0xff]
    %v56 = vld [vmem:[%s0 + $0x80] sm:$0xff]
    %v57 = vld [vmem:[%s0 + $0x88] sm:$0xff]
    %v58 = vld [vmem:[%s0 + $0x90] sm:$0xff]
    %v59 = vld [vmem:[%s0 + $0x98] sm:$0xff]
    %v60 = vld [vmem:[%s0 + $0xa0] sm:$0xff]
    %v61 = vld [vmem:[%s0 + $0xa8] sm:$0xff]
    %v62 = vld [vmem:[%s0 + $0xb0] sm:$0xff]
    %v63 = vld [vmem:[%s0 + $0xb8] sm:$0xff]
    %v64 = vld [vmem:[%s0 + $0xc0] sm:$0xff]
    %v65 = vld [vmem:[%s0 + $0xc8] sm:$0xff]
    %v66 = vld [vmem:[%s0 + $0xd0] sm:$0xff]
    %v67 = vld [vmem:[%s0 + $0xd8] sm:$0xff]
    %v68 = vld [vmem:[%s0 + $0xe0] sm:$0xff]
    %v69 = vld [vmem:[%s0 + $0xe8] sm:$0xff]
    %v70 = vld [vmem:[%s0 + $0xf0] sm:$0xff]
    %v71 = vld [vmem:[%s0 + $0xf8] sm:$0xff]
    %v72 = vld [vmem:[%s0 + $0x100] sm:$0xff]
    %v73 = vld [vmem:[%s0 + $0x108] sm:$0xff]
    %v74 = vld [vmem:[%s0 + $0x110] sm:$0xff]
    %v75 = vld [vmem:[%s0 + $0x118] sm:$0xff]
    %v76 = vld [vmem:[%s0 + $0x120] sm:$0xff]
    %v77 = vld [vmem:[%s0 + $0x128] sm:$0xff]
    %v78 = vld [vmem:[%s0 + $0x130] sm:$0xff]
    %v79 = vld [vmem:[%s0 + $0x138] sm:$0xff]
    %v80 = vld [vmem:[%s0 + $0x140] sm:$0xff]
    %v81 = vld [vmem:[%s0 + $0x148] sm:$0xff]
    %v82 = vld [vmem:[%s0 + $0x150] sm:$0xff]
    %v83 = vld [vmem:[%s0 + $0x158] sm:$0xff]
    %v84 = vld [vmem:[%s0 + $0x160] sm:$0xff]
    %v85 = vld [vmem:[%s0 + $0x168] sm:$0xff]
    %v86 = vld [vmem:[%s0 + $0x170] sm:$0xff]
    %v87 = vld [vmem:[%s0 + $0x178] sm:$0xff]
    %v88 = vld [vmem:[%s0 + $0x180] sm:$0xff]
    %v89 = vld [vmem:[%s0 + $0x188] sm:$0xff]
    %v90 = vld [vmem:[%s0 + $0x190] sm:$0xff]
    %v91 = vld [vmem:[%s0 + $0x198] sm:$0xff]
    %v92 = vld [vmem:[%s0 + $0x1a0] sm:$0xff]
    %v93 = vld [vmem:[%s0 + $0x1a8] sm:$0xff]
    %v94 = vld [vmem:[%s0 + $0x1b0] sm:$0xff]
    %v95 = vld [vmem:[%s0 + $0x1b8] sm:$0xff]
    %v96 = vld [vmem:[%s0 + $0x1c0] sm:$0xff]
    %v97 = vld [vmem:[%s0 + $0x1c8] sm:$0xff]
    %v98 = vld [vmem:[%s0 + $0x1d0] sm:$0xff]
    %v99 = vld [vmem:[%s0 + $0x1d8] sm:$0xff]
    %v100 = vld [vmem:[%s0 + $0x1e0] sm:$0xff]
    %v101 = vld [vmem:[%s0 + $0x1e8] sm:$0xff]
    %v102 = vld [vmem:[%s0 + $0x1f0] sm:$0xff]
    %v103 = vld [vmem:[%s0 + $0x1f8] sm:$0xff]
    %v104 = vld [vmem:[%s0 + $0x200] sm:$0xff]
    %v105 = vld [vmem:[%s0 + $0x208] sm:$0xff]
    %v106 = vld [vmem:[%s0 + $0x210] sm:$0xff]
    %v107 = vld [vmem:[%s0 + $0x218] sm:$0xff]
    %v108 = vld [vmem:[%s0 + $0x220] sm:$0xff]
    %v109 = vld [vmem:[%s0 + $0x228] sm:$0xff]
    %v110 = vld [vmem:[%s0 + $0x230] sm:$0xff]
    %v111 = vld [vmem:[%s0 + $0x238] sm:$0xff]
    %v112 = vld [vmem:[%s0 + $0x240] sm:$0xff]
    %v113 = vld [vmem:[%s0 + $0x248] sm:$0xff]
    %v114 = vld [vmem:[%s0 + $0x250] sm:$0xff]
    %v115 = vld [vmem:[%s0 + $0x258] sm:$0xff]
    %v116 = vld [vmem:[%s0 + $0x260] sm:$0xff]
    %v117 = vld [vmem:[%s0 + $0x268] sm:$0xff]
    %v118 = vld [vmem:[%s0 + $0x270] sm:$0xff]
    %v119 = vld [vmem:[%s0 + $0x278] sm:$0xff]
    %v120 = vld [vmem:[%s0 + $0x280] sm:$0xff]
    %v121 = vld [vmem:[%s0 + $0x288] sm:$0xff]
    %v122 = vld [vmem:[%s0 + $0x290] sm:$0xff]
    %v123 = vld [vmem:[%s0 + $0x298] sm:$0xff]
    %v124 = vld [vmem:[%s0 + $0x2a0] sm:$0xff]
    %v125 = vld [vmem:[%s0 + $0x2a8] sm:$0xff]
    %v126 = vld [vmem:[%s0 + $0x2b0] sm:$0xff]
    %v127 = vld [vmem:[%s0 + $0x2b8] sm:$0xff]
    %v128 = vld [vmem:[%s0 + $0x2c0] sm:$0xff]
    %v129 = vld [vmem:[%s0 + $0x2c8] sm:$0xff]
    %v130 = vld [vmem:[%s0 + $0x2d0] sm:$0xff]
    %v131 = vld [vmem:[%s0 + $0x2d8] sm:$0xff]
    %v132 = vld [vmem:[%s0 + $0x2e0] sm:$0xff]
    %v133 = vld [vmem:[%s0 + $0x2e8] sm:$0xff]
    %v134 = vld [vmem:[%s0 + $0x2f0] sm:$0xff]
    %v135 = vld [vmem:[%s0 + $0x2f8] sm:$0xff]
    %v136 = vld [vmem:[%s0 + $0x300] sm:$0xff]
    %v137 = vld [vmem:[%s0 + $0x308] sm:$0xff]
    %v138 = vld [vmem:[%s0 + $0x310] sm:$0xff]
    %v139 = vld [vmem:[%s0 + $0x318] sm:$0xff]
    %v140 = vld [vmem:[%s0 + $0x320] sm:$0xff]
    %v141 = vld [vmem:[%s0 + $0x328] sm:$0xff]
    %v142 = vld [vmem:[%s0 + $0x330] sm:$0xff]
    %v143 = vld [vmem:[%s0 + $0x338] sm:$0xff]
    %v144 = vld [vmem:[%s0 + $0x340] sm:$0xff]
    %v145 = vld [vmem:[%s0 + $0x348] sm:$0xff]
    %v146 = vld [vmem:[%s0 + $0x350] sm:$0xff]
    %v147 = vld [vmem:[%s0 + $0x358] sm:$0xff]
    %v148 = vld [vmem:[%s0 + $0x360] sm:$0xff]
    %v149 = vld [vmem:[%s0 + $0x368] sm:$0xff]
    %v150 = vld [vmem:[%s0 + $0x370] sm:$0xff]
    %v151 = vld [vmem:[%s0 + $0x378] sm:$0xff]
    %v152 = vld [vmem:[%s0 + $0x380] sm:$0xff]
    %v153 = vld [vmem:[%s0 + $0x388] sm:$0xff]
    %v154 = vld [vmem:[%s0 + $0x390] sm:$0xff]
    %v155 = vld [vmem:[%s0 + $0x398] sm:$0xff]
    %v156 = vld [vmem:[%s0 + $0x3a0] sm:$0xff]
    %v157 = vld [vmem:[%s0 + $0x3a8] sm:$0xff]
    %v158 = vld [vmem:[%s0 + $0x3b0] sm:$0xff]
    %v159 = vld [vmem:[%s0 + $0x3b8] sm:$0xff]
    %v160 = vld [vmem:[%s0 + $0x3c0] sm:$0xff]
    %v161 = vld [vmem:[%s0 + $0x3c8] sm:$0xff]
    %v162 = vld [vmem:[%s0 + $0x3d0] sm:$0xff]
    %v163 = vld [vmem:[%s0 + $0x3d8] sm:$0xff]
    %v164 = vld [vmem:[%s0 + $0x3e0] sm:$0xff]
    %v165 = vld [vmem:[%s0 + $0x3e8] sm:$0xff]
    %v166 = vld [vmem:[%s0 + $0x3f0] sm:$0xff]
    %v167 = vld [vmem:[%s0 + $0x3f8] sm:$0xff]
    %v168 = vld [vmem:[%s0 + $0x400] sm:$0xff]
    %v169 = vld [vmem:[%s0 + $0x408] sm:$0xff]
    %v170 = vld [vmem:[%s0 + $0x410] sm:$0xff]
    %v171 = vld [vmem:[%s0 + $0x418] sm:$0xff]
    %v172 = vld [vmem:[%s0 + $0x420] sm:$0xff]
    %v173 = vld [vmem:[%s0 + $0x428] sm:$0xff]
    %v174 = vld [vmem:[%s0 + $0x430] sm:$0xff]
    %v175 = vld [vmem:[%s0 + $0x438] sm:$0xff]
    %v176 = vld [vmem:[%s0 + $0x440] sm:$0xff]
    %v177 = vld [vmem:[%s0 + $0x448] sm:$0xff]
    %v178 = vld [vmem:[%s0 + $0x450] sm:$0xff]
    %v179 = vld [vmem:[%s0 + $0x458] sm:$0xff]
    %v180 = vld [vmem:[%s0 + $0x460] sm:$0xff]
    %v181 = vld [vmem:[%s0 + $0x468] sm:$0xff]
    %v182 = vld [vmem:[%s0 + $0x470] sm:$0xff]
    %v183 = vld [vmem:[%s0 + $0x478] sm:$0xff]
    %v184 = vld [vmem:[%s0 + $0x480] sm:$0xff]
    %v185 = vld [vmem:[%s0 + $0x488] sm:$0xff]
    %v186 = vld [vmem:[%s0 + $0x490] sm:$0xff]
    %v187 = vld [vmem:[%s0 + $0x498] sm:$0xff]
    %v188 = vld [vmem:[%s0 + $0x4a0] sm:$0xff]
    %v189 = vld [vmem:[%s0 + $0x4a8] sm:$0xff]
    %v190 = vld [vmem:[%s0 + $0x4b0] sm:$0xff]
    %v191 = vld [vmem:[%s0 + $0x4b8] sm:$0xff]
    %v192 = vld [vmem:[%s0 + $0x4c0] sm:$0xff]
    %v193 = vld [vmem:[%s0 + $0x4c8] sm:$0xff]
    %v194 = vld [vmem:[%s0 + $0x4d0] sm:$0xff]
    %v195 = vld [vmem:[%s0 + $0x4d8] sm:$0xff]
    %v196 = vld [vmem:[%s0 + $0x4e0] sm:$0xff]
    %v197 = vld [vmem:[%s0 + $0x4e8] sm:$0xff]
    %v198 = vld [vmem:[%s0 + $0x4f0] sm:$0xff]
    %v199 = vld [vmem:[%s0 + $0x4f8] sm:$0xff]
    %v200 = vld [vmem:[%s0 + $0x500] sm:$0xff]
    %v201 = vld [vmem:[%s0 + $0x508] sm:$0xff]
    %v202 = vld [vmem:[%s0 + $0x510] sm:$0xff]
    %v203 = vld [vmem:[%s0 + $0x518] sm:$0xff]
    %v204 = vld [vmem:[%s0 + $0x520] sm:$0xff]
    %v205 = vld [vmem:[%s0 + $0x528] sm:$0xff]
    %v206 = vld [vmem:[%s0 + $0x530] sm:$0xff]
    %v207 = vld [vmem:[%s0 + $0x538] sm:$0xff]
    %v208 = vld [vmem:[%s0 + $0x540] sm:$0xff]
    %v209 = vld [vmem:[%s0 + $0x548] sm:$0xff]
    %v210 = vld [vmem:[%s0 + $0x550] sm:$0xff]
    %v211 = vld [vmem:[%s0 + $0x558] sm:$0xff]
    %v212 = vld [vmem:[%s0 + $0x560] sm:$0xff]
    %v213 = vld [vmem:[%s0 + $0x568] sm:$0xff]
    %v214 = vld [vmem:[%s0 + $0x570] sm:$0xff]
    %v215 = vld [vmem:[%s0 + $0x578] sm:$0xff]
    %v216 = vld [vmem:[%s0 + $0x580] sm:$0xff]
    %v217 = vld [vmem:[%s0 + $0x588] sm:$0xff]
    %v218 = vld [vmem:[%s0 + $0x590] sm:$0xff]
    %v219 = vld [vmem:[%s0 + $0x598] sm:$0xff]
    %v220 = vld [vmem:[%s0 + $0x5a0] sm:$0xff]
    %v221 = vld [vmem:[%s0 + $0x5a8] sm:$0xff]
    %v222 = vld [vmem:[%s0 + $0x5b0] sm:$0xff]
    %v223 = vld [vmem:[%s0 + $0x5b8] sm:$0xff]
    %v224 = vld [vmem:[%s0 + $0x5c0] sm:$0xff]
    %v225 = vld [vmem:[%s0 + $0x5c8] sm:$0xff]
    %v226 = vld [vmem:[%s0 + $0x5d0] sm:$0xff]
    %v227 = vld [vmem:[%s0 + $0x5d8] sm:$0xff]
    %v228 = vld [vmem:[%s0 + $0x5e0] sm:$0xff]
    %v229 = vld [vmem:[%s0 + $0x5e8] sm:$0xff]
    %v230 = vld [vmem:[%s0 + $0x5f0] sm:$0xff]
    %v231 = vld [vmem:[%s0 + $0x5f8] sm:$0xff]
    %v232 = vld [vmem:[%s0 + $0x600] sm:$0xff]
    %v233 = vld [vmem:[%s0 + $0x608] sm:$0xff]
    %v234 = vld [vmem:[%s0 + $0x610] sm:$0xff]
    %v235 = vld [vmem:[%s0 + $0x618] sm:$0xff]
    %v236 = vld [vmem:[%s0 + $0x620] sm:$0xff]
    %v237 = vld [vmem:[%s0 + $0x628] sm:$0xff]
    %v238 = vld [vmem:[%s0 + $0x630] sm:$0xff]
    %v239 = vld [vmem:[%s0 + $0x638] sm:$0xff]
    %v240 = vld [vmem:[%s0 + $0x640] sm:$0xff]
    %v241 = vld [vmem:[%s0 + $0x648] sm:$0xff]
    %v242 = vld [vmem:[%s0 + $0x650] sm:$0xff]
    %v243 = vld [vmem:[%s0 + $0x658] sm:$0xff]
    %v244 = vld [vmem:[%s0 + $0x660] sm:$0xff]
    %v245 = vld [vmem:[%s0 + $0x668] sm:$0xff]
    %v246 = vld [vmem:[%s0 + $0x670] sm:$0xff]
    %v247 = vld [vmem:[%s0 + $0x678] sm:$0xff]
    %v248 = vld [vmem:[%s0 + $0x680] sm:$0xff]
    %v249 = vld [vmem:[%s0 + $0x688] sm:$0xff]
    %v250 = vld [vmem:[%s0 + $0x690] sm:$0xff]
    %v251 = vld [vmem:[%s0 + $0x698] sm:$0xff]
    %v252 = vld [vmem:[%s0 + $0x6a0] sm:$0xff]
    %v253 = vld [vmem:[%s0 + $0x6a8] sm:$0xff]
    %v254 = vld [vmem:[%s0 + $0x6b0] sm:$0xff]
    %v255 = vld [vmem:[%s0 + $0x6b8] sm:$0xff]
    %v256 = vld [vmem:[%s0 + $0x6c0] sm:$0xff]
    %v257 = vld [vmem:[%s0 + $0x6c8] sm:$0xff]
    %v258 = vld [vmem:[%s0 + $0x6d0] sm:$0xff]
    %v259 = vld [vmem:[%s0 + $0x6d8] sm:$0xff]
    %v260 = vld [vmem:[%s0 + $0x6e0] sm:$0xff]
    %v261 = vld [vmem:[%s0 + $0x6e8] sm:$0xff]
    %v262 = vld [vmem:[%s0 + $0x6f0] sm:$0xff]
    %v263 = vld [vmem:[%s0 + $0x6f8] sm:$0xff]
    %v264 = vld [vmem:[%s0 + $0x700] sm:$0xff]
    %v265 = vld [vmem:[%s0 + $0x708] sm:$0xff]
    %v266 = vld [vmem:[%s0 + $0x710] sm:$0xff]
    %v267 = vld [vmem:[%s0 + $0x718] sm:$0xff]
    %v268 = vld [vmem:[%s0 + $0x720] sm:$0xff]
    %v269 = vld [vmem:[%s0 + $0x728] sm:$0xff]
    %v270 = vld [vmem:[%s0 + $0x730] sm:$0xff]
    %v271 = vld [vmem:[%s0 + $0x738] sm:$0xff]
    %v272 = vld [vmem:[%s0 + $0x740] sm:$0xff]
    %v273 = vld [vmem:[%s0 + $0x748] sm:$0xff]
    %v274 = vld [vmem:[%s0 + $0x750] sm:$0xff]
    %v275 = vld [vmem:[%s0 + $0x758] sm:$0xff]
    %v276 = vld [vmem:[%s0 + $0x760] sm:$0xff]
    %v277 = vld [vmem:[%s0 + $0x768] sm:$0xff]
    %v278 = vld [vmem:[%s0 + $0x770] sm:$0xff]
    %v279 = vld [vmem:[%s0 + $0x778] sm:$0xff]
    %v280 = vld [vmem:[%s0 + $0x780] sm:$0xff]
    %v281 = vld [vmem:[%s0 + $0x788] sm:$0xff]
    %v282 = vld [vmem:[%s0 + $0x790] sm:$0xff]
    %v283 = vld [vmem:[%s0 + $0x798] sm:$0xff]
    %v284 = vld [vmem:[%s0 + $0x7a0] sm:$0xff]
    %v285 = vld [vmem:[%s0 + $0x7a8] sm:$0xff]
    %v286 = vld [vmem:[%s0 + $0x7b0] sm:$0xff]
    %v287 = vld [vmem:[%s0 + $0x7b8] sm:$0xff]
    %v288 = vld [vmem:[%s0 + $0x7c0] sm:$0xff]
    %v289 = vld [vmem:[%s0 + $0x7c8] sm:$0xff]
    %v290 = vld [vmem:[%s0 + $0x7d0] sm:$0xff]
    %v291 = vld [vmem:[%s0 + $0x7d8] sm:$0xff]
    %v292 = vld [vmem:[%s0 + $0x7e0] sm:$0xff]
    %v293 = vld [vmem:[%s0 + $0x7e8] sm:$0xff]
    %v294 = vld [vmem:[%s0 + $0x7f0] sm:$0xff]
    %v295 = vld [vmem:[%s0 + $0x7f8] sm:$0xff]
    %v296 = vld [vmem:[%s0 + $0x800] sm:$0xff]
    %v297 = vld [vmem:[%s0 + $0x808] sm:$0xff]
    %v298 = vld [vmem:[%s0 + $0x810] sm:$0xff]
    %v299 = vld [vmem:[%s0 + $0x818] sm:$0xff]
    %v300 = vld [vmem:[%s0 + $0x820] sm:$0xff]
    %v301 = vld [vmem:[%s0 + $0x828] sm:$0xff]
    %v302 = vld [vmem:[%s0 + $0x830] sm:$0xff]
    %v303 = vld [vmem:[%s0 + $0x838] sm:$0xff]
    %v304 = vld [vmem:[%s0 + $0x840] sm:$0xff]
    %v305 = vld [vmem:[%s0 + $0x848] sm:$0xff]
    %v306 = vld [vmem:[%s0 + $0x850] sm:$0xff]
    %v307 = vld [vmem:[%s0 + $0x858] sm:$0xff]
    %v308 = vld [vmem:[%s0 + $0x860] sm:$0xff]
    %v309 = vld [vmem:[%s0 + $0x868] sm:$0xff]
    %v310 = vld [vmem:[%s0 + $0x870] sm:$0xff]
    %v311 = vld [vmem:[%s0 + $0x878] sm:$0xff]
    %v312 = vld [vmem:[%s0 + $0x880] sm:$0xff]
    %v313 = vld [vmem:[%s0 + $0x888] sm:$0xff]
    %v314 = vld [vmem:[%s0 + $0x890] sm:$0xff]
    %v315 = vld [vmem:[%s0 + $0x898] sm:$0xff]
    %v316 = vld [vmem:[%s0 + $0x8a0] sm:$0xff]
    %v317 = vld [vmem:[%s0 + $0x8a8] sm:$0xff]
    %v318 = vld [vmem:[%s0 + $0x8b0] sm:$0xff]
    %v319 = vld [vmem:[%s0 + $0x8b8] sm:$0xff]
    %v320 = vld [vmem:[%s0 + $0x8c0] sm:$0xff]
    %v321 = vld [vmem:[%s0 + $0x8c8] sm:$0xff]
    %v322 = vld [vmem:[%s0 + $0x8d0] sm:$0xff]
    %v323 = vld [vmem:[%s0 + $0x8d8] sm:$0xff]
    %v324 = vld [vmem:[%s0 + $0x8e0] sm:$0xff]
    %v325 = vld [vmem:[%s0 + $0x8e8] sm:$0xff]
    %v326 = vld [vmem:[%s0 + $0x8f0] sm:$0xff]
    %v327 = vld [vmem:[%s0 + $0x8f8] sm:$0xff]
    %v328 = vld [vmem:[%s0 + $0x900] sm:$0xff]
    %v329 = vld [vmem:[%s0 + $0x908] sm:$0xff]
    %v330 = vld [vmem:[%s0 + $0x910] sm:$0xff]
    %v331 = vld [vmem:[%s0 + $0x918] sm:$0xff]
    %v332 = vld [vmem:[%s0 + $0x920] sm:$0xff]
    %v333 = vld [vmem:[%s0 + $0x928] sm:$0xff]
    %v334 = vld [vmem:[%s0 + $0x930] sm:$0xff]
    %v335 = vld [vmem:[%s0 + $0x938] sm:$0xff]
    %v336 = vld [vmem:[%s0 + $0x940] sm:$0xff]
    %v337 = vld [vmem:[%s0 + $0x948] sm:$0xff]
    %v338 = vld [vmem:[%s0 + $0x950] sm:$0xff]
    %v339 = vld [vmem:[%s0 + $0x958] sm:$0xff]
    %v340 = vld [vmem:[%s0 + $0x960] sm:$0xff]
    %v341 = vld [vmem:[%s0 + $0x968] sm:$0xff]
    %v342 = vld [vmem:[%s0 + $0x970] sm:$0xff]
    %v343 = vld [vmem:[%s0 + $0x978] sm:$0xff]
    %v344 = vld [vmem:[%s0 + $0x980] sm:$0xff]
    %v345 = vld [vmem:[%s0 + $0x988] sm:$0xff]
    %v346 = vld [vmem:[%s0 + $0x990] sm:$0xff]
    %v347 = vld [vmem:[%s0 + $0x998] sm:$0xff]
    %v348 = vld [vmem:[%s0 + $0x9a0] sm:$0xff]
    %v349 = vld [vmem:[%s0 + $0x9a8] sm:$0xff]
    %v350 = vld [vmem:[%s0 + $0x9b0] sm:$0xff]
    %v351 = vld [vmem:[%s0 + $0x9b8] sm:$0xff]
    %v352 = vld [vmem:[%s0 + $0x9c0] sm:$0xff]
    %v353 = vld [vmem:[%s0 + $0x9c8] sm:$0xff]
    %v354 = vld [vmem:[%s0 + $0x9d0] sm:$0xff]
    %v355 = vld [vmem:[%s0 + $0x9d8] sm:$0xff]
    %v356 = vld [vmem:[%s0 + $0x9e0] sm:$0xff]
    %v357 = vld [vmem:[%s0 + $0x9e8] sm:$0xff]
    %v358 = vld [vmem:[%s0 + $0x9f0] sm:$0xff]
    %v359 = vld [vmem:[%s0 + $0x9f8] sm:$0xff]
    %v360 = vld [vmem:[%s0 + $0xa00] sm:$0xff]
    %v361 = vld [vmem:[%s0 + $0xa08] sm:$0xff]
    %v362 = vld [vmem:[%s0 + $0xa10] sm:$0xff]
    %v363 = vld [vmem:[%s0 + $0xa18] sm:$0xff]
    %v364 = vld [vmem:[%s0 + $0xa20] sm:$0xff]
    %v365 = vld [vmem:[%s0 + $0xa28] sm:$0xff]
    %v366 = vld [vmem:[%s0 + $0xa30] sm:$0xff]
    %v367 = vld [vmem:[%s0 + $0xa38] sm:$0xff]
    %v368 = vld [vmem:[%s0 + $0xa40] sm:$0xff]
    %v369 = vld [vmem:[%s0 + $0xa48] sm:$0xff]
    %v370 = vld [vmem:[%s0 + $0xa50] sm:$0xff]
    %v371 = vld [vmem:[%s0 + $0xa58] sm:$0xff]
    %v372 = vld [vmem:[%s0 + $0xa60] sm:$0xff]
    %v373 = vld [vmem:[%s0 + $0xa68] sm:$0xff]
    %v374 = vld [vmem:[%s0 + $0xa70] sm:$0xff]
    %v375 = vld [vmem:[%s0 + $0xa78] sm:$0xff]
    %v376 = vld [vmem:[%s0 + $0xa80] sm:$0xff]
    %v377 = vld [vmem:[%s0 + $0xa88] sm:$0xff]
    %v378 = vld [vmem:[%s0 + $0xa90] sm:$0xff]
    %v379 = vld [vmem:[%s0 + $0xa98] sm:$0xff]
    %v380 = vld [vmem:[%s0 + $0xaa0] sm:$0xff]
    %v381 = vld [vmem:[%s0 + $0xaa8] sm:$0xff]
    %v382 = vld [vmem:[%s0 + $0xab0] sm:$0xff]
    %v383 = vld [vmem:[%s0 + $0xab8] sm:$0xff]
    %v384 = vld [vmem:[%s0 + $0xac0] sm:$0xff]
    %v385 = vld [vmem:[%s0 + $0xac8] sm:$0xff]
    %v386 = vld [vmem:[%s0 + $0xad0] sm:$0xff]
    %v387 = vld [vmem:[%s0 + $0xad8] sm:$0xff]
    %v388 = vld [vmem:[%s0 + $0xae0] sm:$0xff]
    %v389 = vld [vmem:[%s0 + $0xae8] sm:$0xff]
    %v390 = vld [vmem:[%s0 + $0xaf0] sm:$0xff]
    %v391 = vld [vmem:[%s0 + $0xaf8] sm:$0xff]
    %v392 = vld [vmem:[%s0 + $0xb00] sm:$0xff]
    %v393 = vld [vmem:[%s0 + $0xb08] sm:$0xff]
    %v394 = vld [vmem:[%s0 + $0xb10] sm:$0xff]
    %v395 = vld [vmem:[%s0 + $0xb18] sm:$0xff]
    %v396 = vld [vmem:[%s0 + $0xb20] sm:$0xff]
    %v397 = vld [vmem:[%s0 + $0xb28] sm:$0xff]
    %v398 = vld [vmem:[%s0 + $0xb30] sm:$0xff]
    %v399 = vld [vmem:[%s0 + $0xb38] sm:$0xff]
    %v400 = vld [vmem:[%s0 + $0xb40] sm:$0xff]
    %v401 = vld [vmem:[%s0 + $0xb48] sm:$0xff]
    %v402 = vld [vmem:[%s0 + $0xb50] sm:$0xff]
    %v403 = vld [vmem:[%s0 + $0xb58] sm:$0xff]
    %v404 = vld [vmem:[%s0 + $0xb60] sm:$0xff]
    %v405 = vld [vmem:[%s0 + $0xb68] sm:$0xff]
    %v406 = vld [vmem:[%s0 + $0xb70] sm:$0xff]
    %v407 = vld [vmem:[%s0 + $0xb78] sm:$0xff]
    %v408 = vld [vmem:[%s0 + $0xb80] sm:$0xff]
    %v409 = vld [vmem:[%s0 + $0xb88] sm:$0xff]
    %v410 = vld [vmem:[%s0 + $0xb90] sm:$0xff]
    %v411 = vld [vmem:[%s0 + $0xb98] sm:$0xff]
    %v412 = vld [vmem:[%s0 + $0xba0] sm:$0xff]
    %v413 = vld [vmem:[%s0 + $0xba8] sm:$0xff]
    %v414 = vld [vmem:[%s0 + $0xbb0] sm:$0xff]
    %v415 = vld [vmem:[%s0 + $0xbb8] sm:$0xff]
    %v416 = vld [vmem:[%s0 + $0xbc0] sm:$0xff]
    %v417 = vld [vmem:[%s0 + $0xbc8] sm:$0xff]
    %v418 = vld [vmem:[%s0 + $0xbd0] sm:$0xff]
    %v419 = vld [vmem:[%s0 + $0xbd8] sm:$0xff]
    %v420 = vld [vmem:[%s0 + $0xbe0] sm:$0xff]
    %v421 = vld [vmem:[%s0 + $0xbe8] sm:$0xff]
    %v422 = vld [vmem:[%s0 + $0xbf0] sm:$0xff]
    %v423 = vld [vmem:[%s0 + $0xbf8] sm:$0xff]
    %v424 = vld [vmem:[%s0 + $0xc00] sm:$0xff]
    %v425 = vld [vmem:[%s0 + $0xc08] sm:$0xff]
    %v426 = vld [vmem:[%s0 + $0xc10] sm:$0xff]
    %v427 = vld [vmem:[%s0 + $0xc18] sm:$0xff]
    %v428 = vld [vmem:[%s0 + $0xc20] sm:$0xff]
    %v429 = vld [vmem:[%s0 + $0xc28] sm:$0xff]
    %v430 = vld [vmem:[%s0 + $0xc30] sm:$0xff]
    %v431 = vld [vmem:[%s0 + $0xc38] sm:$0xff]
    %v432 = vld [vmem:[%s0 + $0xc40] sm:$0xff]
    %v433 = vld [vmem:[%s0 + $0xc48] sm:$0xff]
    %v434 = vld [vmem:[%s0 + $0xc50] sm:$0xff]
    %v435 = vld [vmem:[%s0 + $0xc58] sm:$0xff]
    %v436 = vld [vmem:[%s0 + $0xc60] sm:$0xff]
    %v437 = vld [vmem:[%s0 + $0xc68] sm:$0xff]
    %v438 = vld [vmem:[%s0 + $0xc70] sm:$0xff]
    %v439 = vld [vmem:[%s0 + $0xc78] sm:$0xff]
    %v440 = vld [vmem:[%s0 + $0xc80] sm:$0xff]
    %v441 = vld [vmem:[%s0 + $0xc88] sm:$0xff]
    %v442 = vld [vmem:[%s0 + $0xc90] sm:$0xff]
    %v443 = vld [vmem:[%s0 + $0xc98] sm:$0xff]
    %v444 = vld [vmem:[%s0 + $0xca0] sm:$0xff]
    %v445 = vld [vmem:[%s0 + $0xca8] sm:$0xff]
    %v446 = vld [vmem:[%s0 + $0xcb0] sm:$0xff]
    %v447 = vld [vmem:[%s0 + $0xcb8] sm:$0xff]
    %v448 = vld [vmem:[%s0 + $0xcc0] sm:$0xff]
    %v449 = vld [vmem:[%s0 + $0xcc8] sm:$0xff]
    %v450 = vld [vmem:[%s0 + $0xcd0] sm:$0xff]
    %v451 = vld [vmem:[%s0 + $0xcd8] sm:$0xff]
    %v452 = vld [vmem:[%s0 + $0xce0] sm:$0xff]
    %v453 = vld [vmem:[%s0 + $0xce8] sm:$0xff]
    %v454 = vld [vmem:[%s0 + $0xcf0] sm:$0xff]
    %v455 = vld [vmem:[%s0 + $0xcf8] sm:$0xff]
    %v456 = vld [vmem:[%s0 + $0xd00] sm:$0xff]
    %v457 = vld [vmem:[%s0 + $0xd08] sm:$0xff]
    %v458 = vld [vmem:[%s0 + $0xd10] sm:$0xff]
    %v459 = vld [vmem:[%s0 + $0xd18] sm:$0xff]
    %v460 = vld [vmem:[%s0 + $0xd20] sm:$0xff]
    %v461 = vld [vmem:[%s0 + $0xd28] sm:$0xff]
    %v462 = vld [vmem:[%s0 + $0xd30] sm:$0xff]
    %v463 = vld [vmem:[%s0 + $0xd38] sm:$0xff]
    %v464 = vld [vmem:[%s0 + $0xd40] sm:$0xff]
    %v465 = vld [vmem:[%s0 + $0xd48] sm:$0xff]
    %v466 = vld [vmem:[%s0 + $0xd50] sm:$0xff]
    %v467 = vld [vmem:[%s0 + $0xd58] sm:$0xff]
    %v468 = vld [vmem:[%s0 + $0xd60] sm:$0xff]
    %v469 = vld [vmem:[%s0 + $0xd68] sm:$0xff]
    %v470 = vld [vmem:[%s0 + $0xd70] sm:$0xff]
    %v471 = vld [vmem:[%s0 + $0xd78] sm:$0xff]
    %v472 = vld [vmem:[%s0 + $0xd80] sm:$0xff]
    %v473 = vld [vmem:[%s0 + $0xd88] sm:$0xff]
    %v474 = vld [vmem:[%s0 + $0xd90] sm:$0xff]
    %v475 = vld [vmem:[%s0 + $0xd98] sm:$0xff]
    %v476 = vld [vmem:[%s0 + $0xda0] sm:$0xff]
    %v477 = vld [vmem:[%s0 + $0xda8] sm:$0xff]
    %v478 = vld [vmem:[%s0 + $0xdb0] sm:$0xff]
    %v479 = vld [vmem:[%s0 + $0xdb8] sm:$0xff]
    %v480 = vld [vmem:[%s0 + $0xdc0] sm:$0xff]
    %v481 = vld [vmem:[%s0 + $0xdc8] sm:$0xff]
    %v482 = vld [vmem:[%s0 + $0xdd0] sm:$0xff]
    %v483 = vld [vmem:[%s0 + $0xdd8] sm:$0xff]
    %v484 = vld [vmem:[%s0 + $0xde0] sm:$0xff]
    %v485 = vld [vmem:[%s0 + $0xde8] sm:$0xff]
    %v486 = vld [vmem:[%s0 + $0xdf0] sm:$0xff]
    %v487 = vld [vmem:[%s0 + $0xdf8] sm:$0xff]
    %v488 = vpack.c.bf16 %v47, %v40
    %v489 = vpack.c.bf16 %v48, %v41
    %v490 = vpack.c.bf16 %v49, %v42
    %v491 = vpack.c.bf16 %v50, %v43
    %v492 = vpack.c.bf16 %v51, %v44
    %v493 = vpack.c.bf16 %v52, %v45
    %v494 = vpack.c.bf16 %v53, %v46
    %v495 = vpack.c.bf16 %v61, %v54
    %v496 = vpack.c.bf16 %v62, %v55
    %v497 = vpack.c.bf16 %v63, %v56
    %v498 = vpack.c.bf16 %v64, %v57
    %v499 = vpack.c.bf16 %v65, %v58
    %v500 = vpack.c.bf16 %v66, %v59
    %v501 = vpack.c.bf16 %v67, %v60
    %v502 = vpack.c.bf16 %v75, %v68
    %v503 = vpack.c.bf16 %v76, %v69
    %v504 = vpack.c.bf16 %v77, %v70
    %v505 = vpack.c.bf16 %v78, %v71
    %v506 = vpack.c.bf16 %v79, %v72
    %v507 = vpack.c.bf16 %v80, %v73
    %v508 = vpack.c.bf16 %v81, %v74
    %v509 = vpack.c.bf16 %v89, %v82
    %v510 = vpack.c.bf16 %v90, %v83
    %v511 = vpack.c.bf16 %v91, %v84
    %v512 = vpack.c.bf16 %v92, %v85
    %v513 = vpack.c.bf16 %v93, %v86
    %v514 = vpack.c.bf16 %v94, %v87
    %v515 = vpack.c.bf16 %v95, %v88
    %v516 = vpack.c.bf16 %v103, %v96
    %v517 = vpack.c.bf16 %v104, %v97
    %v518 = vpack.c.bf16 %v105, %v98
    %v519 = vpack.c.bf16 %v106, %v99
    %v520 = vpack.c.bf16 %v107, %v100
    %v521 = vpack.c.bf16 %v108, %v101
    %v522 = vpack.c.bf16 %v109, %v102
    %v523 = vpack.c.bf16 %v117, %v110
    %v524 = vpack.c.bf16 %v118, %v111
    %v525 = vpack.c.bf16 %v119, %v112
    %v526 = vpack.c.bf16 %v120, %v113
    %v527 = vpack.c.bf16 %v121, %v114
    %v528 = vpack.c.bf16 %v122, %v115
    %v529 = vpack.c.bf16 %v123, %v116
    %v530 = vpack.c.bf16 %v131, %v124
    %v531 = vpack.c.bf16 %v132, %v125
    %v532 = vpack.c.bf16 %v133, %v126
    %v533 = vpack.c.bf16 %v134, %v127
    %v534 = vpack.c.bf16 %v135, %v128
    %v535 = vpack.c.bf16 %v136, %v129
    %v536 = vpack.c.bf16 %v137, %v130
    %v537 = vpack.c.bf16 %v145, %v138
    %v538 = vpack.c.bf16 %v146, %v139
    %v539 = vpack.c.bf16 %v147, %v140
    %v540 = vpack.c.bf16 %v148, %v141
    %v541 = vpack.c.bf16 %v149, %v142
    %v542 = vpack.c.bf16 %v150, %v143
    %v543 = vpack.c.bf16 %v151, %v144
    %v544 = vpack.c.bf16 %v159, %v152
    %v545 = vpack.c.bf16 %v160, %v153
    %v546 = vpack.c.bf16 %v161, %v154
    %v547 = vpack.c.bf16 %v162, %v155
    %v548 = vpack.c.bf16 %v163, %v156
    %v549 = vpack.c.bf16 %v164, %v157
    %v550 = vpack.c.bf16 %v165, %v158
    %v551 = vpack.c.bf16 %v173, %v166
    %v552 = vpack.c.bf16 %v174, %v167
    %v553 = vpack.c.bf16 %v175, %v168
    %v554 = vpack.c.bf16 %v176, %v169
    %v555 = vpack.c.bf16 %v177, %v170
    %v556 = vpack.c.bf16 %v178, %v171
    %v557 = vpack.c.bf16 %v179, %v172
    %v558 = vpack.c.bf16 %v187, %v180
    %v559 = vpack.c.bf16 %v188, %v181
    %v560 = vpack.c.bf16 %v189, %v182
    %v561 = vpack.c.bf16 %v190, %v183
    %v562 = vpack.c.bf16 %v191, %v184
    %v563 = vpack.c.bf16 %v192, %v185
    %v564 = vpack.c.bf16 %v193, %v186
    %v565 = vpack.c.bf16 %v201, %v194
    %v566 = vpack.c.bf16 %v202, %v195
    %v567 = vpack.c.bf16 %v203, %v196
    %v568 = vpack.c.bf16 %v204, %v197
    %v569 = vpack.c.bf16 %v205, %v198
    %v570 = vpack.c.bf16 %v206, %v199
    %v571 = vpack.c.bf16 %v207, %v200
    %v572 = vpack.c.bf16 %v215, %v208
    %v573 = vpack.c.bf16 %v216, %v209
    %v574 = vpack.c.bf16 %v217, %v210
    %v575 = vpack.c.bf16 %v218, %v211
    %v576 = vpack.c.bf16 %v219, %v212
    %v577 = vpack.c.bf16 %v220, %v213
    %v578 = vpack.c.bf16 %v221, %v214
    %v579 = vpack.c.bf16 %v229, %v222
    %v580 = vpack.c.bf16 %v230, %v223
    %v581 = vpack.c.bf16 %v231, %v224
    %v582 = vpack.c.bf16 %v232, %v225
    %v583 = vpack.c.bf16 %v233, %v226
    %v584 = vpack.c.bf16 %v234, %v227
    %v585 = vpack.c.bf16 %v235, %v228
    %v586 = vpack.c.bf16 %v243, %v236
    %v587 = vpack.c.bf16 %v244, %v237
    %v588 = vpack.c.bf16 %v245, %v238
    %v589 = vpack.c.bf16 %v246, %v239
    %v590 = vpack.c.bf16 %v247, %v240
    %v591 = vpack.c.bf16 %v248, %v241
    %v592 = vpack.c.bf16 %v249, %v242
    %v593 = vpack.c.bf16 %v257, %v250
    %v594 = vpack.c.bf16 %v258, %v251
    %v595 = vpack.c.bf16 %v259, %v252
    %v596 = vpack.c.bf16 %v260, %v253
    %v597 = vpack.c.bf16 %v261, %v254
    %v598 = vpack.c.bf16 %v262, %v255
    %v599 = vpack.c.bf16 %v263, %v256
    %v600 = vpack.c.bf16 %v271, %v264
    %v601 = vpack.c.bf16 %v272, %v265
    %v602 = vpack.c.bf16 %v273, %v266
    %v603 = vpack.c.bf16 %v274, %v267
    %v604 = vpack.c.bf16 %v275, %v268
    %v605 = vpack.c.bf16 %v276, %v269
    %v606 = vpack.c.bf16 %v277, %v270
    %v607 = vpack.c.bf16 %v285, %v278
    %v608 = vpack.c.bf16 %v286, %v279
    %v609 = vpack.c.bf16 %v287, %v280
    %v610 = vpack.c.bf16 %v288, %v281
    %v611 = vpack.c.bf16 %v289, %v282
    %v612 = vpack.c.bf16 %v290, %v283
    %v613 = vpack.c.bf16 %v291, %v284
    %v614 = vpack.c.bf16 %v299, %v292
    %v615 = vpack.c.bf16 %v300, %v293
    %v616 = vpack.c.bf16 %v301, %v294
    %v617 = vpack.c.bf16 %v302, %v295
    %v618 = vpack.c.bf16 %v303, %v296
    %v619 = vpack.c.bf16 %v304, %v297
    %v620 = vpack.c.bf16 %v305, %v298
    %v621 = vpack.c.bf16 %v313, %v306
    %v622 = vpack.c.bf16 %v314, %v307
    %v623 = vpack.c.bf16 %v315, %v308
    %v624 = vpack.c.bf16 %v316, %v309
    %v625 = vpack.c.bf16 %v317, %v310
    %v626 = vpack.c.bf16 %v318, %v311
    %v627 = vpack.c.bf16 %v319, %v312
    %v628 = vpack.c.bf16 %v327, %v320
    %v629 = vpack.c.bf16 %v328, %v321
    %v630 = vpack.c.bf16 %v329, %v322
    %v631 = vpack.c.bf16 %v330, %v323
    %v632 = vpack.c.bf16 %v331, %v324
    %v633 = vpack.c.bf16 %v332, %v325
    %v634 = vpack.c.bf16 %v333, %v326
    %v635 = vpack.c.bf16 %v341, %v334
    %v636 = vpack.c.bf16 %v342, %v335
    %v637 = vpack.c.bf16 %v343, %v336
    %v638 = vpack.c.bf16 %v344, %v337
    %v639 = vpack.c.bf16 %v345, %v338
    %v640 = vpack.c.bf16 %v346, %v339
    %v641 = vpack.c.bf16 %v347, %v340
    %v642 = vpack.c.bf16 %v355, %v348
    %v643 = vpack.c.bf16 %v356, %v349
    %v644 = vpack.c.bf16 %v357, %v350
    %v645 = vpack.c.bf16 %v358, %v351
    %v646 = vpack.c.bf16 %v359, %v352
    %v647 = vpack.c.bf16 %v360, %v353
    %v648 = vpack.c.bf16 %v361, %v354
    %v649 = vpack.c.bf16 %v369, %v362
    %v650 = vpack.c.bf16 %v370, %v363
    %v651 = vpack.c.bf16 %v371, %v364
    %v652 = vpack.c.bf16 %v372, %v365
    %v653 = vpack.c.bf16 %v373, %v366
    %v654 = vpack.c.bf16 %v374, %v367
    %v655 = vpack.c.bf16 %v375, %v368
    %v656 = vpack.c.bf16 %v383, %v376
    %v657 = vpack.c.bf16 %v384, %v377
    %v658 = vpack.c.bf16 %v385, %v378
    %v659 = vpack.c.bf16 %v386, %v379
    %v660 = vpack.c.bf16 %v387, %v380
    %v661 = vpack.c.bf16 %v388, %v381
    %v662 = vpack.c.bf16 %v389, %v382
    %v663 = vpack.c.bf16 %v397, %v390
    %v664 = vpack.c.bf16 %v398, %v391
    %v665 = vpack.c.bf16 %v399, %v392
    %v666 = vpack.c.bf16 %v400, %v393
    %v667 = vpack.c.bf16 %v401, %v394
    %v668 = vpack.c.bf16 %v402, %v395
    %v669 = vpack.c.bf16 %v403, %v396
    %v670 = vpack.c.bf16 %v411, %v404
    %v671 = vpack.c.bf16 %v412, %v405
    %v672 = vpack.c.bf16 %v413, %v406
    %v673 = vpack.c.bf16 %v414, %v407
    %v674 = vpack.c.bf16 %v415, %v408
    %v675 = vpack.c.bf16 %v416, %v409
    %v676 = vpack.c.bf16 %v417, %v410
    %v677 = vpack.c.bf16 %v425, %v418
    %v678 = vpack.c.bf16 %v426, %v419
    %v679 = vpack.c.bf16 %v427, %v420
    %v680 = vpack.c.bf16 %v428, %v421
    %v681 = vpack.c.bf16 %v429, %v422
    %v682 = vpack.c.bf16 %v430, %v423
    %v683 = vpack.c.bf16 %v431, %v424
    %v684 = vpack.c.bf16 %v439, %v432
    %v685 = vpack.c.bf16 %v440, %v433
    %v686 = vpack.c.bf16 %v441, %v434
    %v687 = vpack.c.bf16 %v442, %v435
    %v688 = vpack.c.bf16 %v443, %v436
    %v689 = vpack.c.bf16 %v444, %v437
    %v690 = vpack.c.bf16 %v445, %v438
    %v691 = vpack.c.bf16 %v453, %v446
    %v692 = vpack.c.bf16 %v454, %v447
    %v693 = vpack.c.bf16 %v455, %v448
    %v694 = vpack.c.bf16 %v456, %v449
    %v695 = vpack.c.bf16 %v457, %v450
    %v696 = vpack.c.bf16 %v458, %v451
    %v697 = vpack.c.bf16 %v459, %v452
    %v698 = vpack.c.bf16 %v467, %v460
    %v699 = vpack.c.bf16 %v468, %v461
    %v700 = vpack.c.bf16 %v469, %v462
    %v701 = vpack.c.bf16 %v470, %v463
    %v702 = vpack.c.bf16 %v471, %v464
    %v703 = vpack.c.bf16 %v472, %v465
    %v704 = vpack.c.bf16 %v473, %v466
    %v705 = vpack.c.bf16 %v481, %v474
    %v706 = vpack.c.bf16 %v482, %v475
    %v707 = vpack.c.bf16 %v483, %v476
    %v708 = vpack.c.bf16 %v484, %v477
    %v709 = vpack.c.bf16 %v485, %v478
    %v710 = vpack.c.bf16 %v486, %v479
    %v711 = vpack.c.bf16 %v487, %v480
    %v712 = vld [vmem:[%s1] sm:$0xf]
    %v713 = vld [vmem:[%s1 + $0x4] sm:$0xf]
    %v714 = vld [vmem:[%s1 + $0x8] sm:$0xf]
    %v715 = vld [vmem:[%s1 + $0xc] sm:$0xf]
    %v716 = vld [vmem:[%s1 + $0x10] sm:$0xf]
    %v717 = vld [vmem:[%s1 + $0x14] sm:$0xf]
    %v718 = vld [vmem:[%s1 + $0x18] sm:$0xf]
    %v719 = vld [vmem:[%s1 + $0x1c] sm:$0xf]
    %v720 = vld [vmem:[%s1 + $0x20] sm:$0xf]
    %v721 = vld [vmem:[%s1 + $0x24] sm:$0xf]
    %v722 = vld [vmem:[%s1 + $0x28] sm:$0xf]
    %v723 = vld [vmem:[%s1 + $0x2c] sm:$0xf]
    %v724 = vld [vmem:[%s1 + $0x30] sm:$0xf]
    %v725 = vld [vmem:[%s1 + $0x34] sm:$0xf]
    %v726 = vld [vmem:[%s1 + $0x38] sm:$0xf]
    %v727 = vld [vmem:[%s1 + $0x3c] sm:$0xf]
    %v728 = vld [vmem:[%s1 + $0x40] sm:$0xf]
    %v729 = vld [vmem:[%s1 + $0x44] sm:$0xf]
    %v730 = vld [vmem:[%s1 + $0x48] sm:$0xf]
    %v731 = vld [vmem:[%s1 + $0x4c] sm:$0xf]
    %v732 = vld [vmem:[%s1 + $0x50] sm:$0xf]
    %v733 = vld [vmem:[%s1 + $0x54] sm:$0xf]
    %v734 = vld [vmem:[%s1 + $0x58] sm:$0xf]
    %v735 = vld [vmem:[%s1 + $0x5c] sm:$0xf]
    %v736 = vld [vmem:[%s1 + $0x60] sm:$0xf]
    %v737 = vld [vmem:[%s1 + $0x64] sm:$0xf]
    %v738 = vld [vmem:[%s1 + $0x68] sm:$0xf]
    %v739 = vld [vmem:[%s1 + $0x6c] sm:$0xf]
    %v740 = vld [vmem:[%s1 + $0x70] sm:$0xf]
    %v741 = vld [vmem:[%s1 + $0x74] sm:$0xf]
    %v742 = vld [vmem:[%s1 + $0x78] sm:$0xf]
    %v743 = vld [vmem:[%s1 + $0x7c] sm:$0xf]
    %v744 = vld [vmem:[%s1 + $0x80] sm:$0xf]
    %v745 = vld [vmem:[%s1 + $0x84] sm:$0xf]
    %v746 = vld [vmem:[%s1 + $0x88] sm:$0xf]
    %v747 = vld [vmem:[%s1 + $0x8c] sm:$0xf]
    %v748 = vld [vmem:[%s1 + $0x90] sm:$0xf]
    %v749 = vld [vmem:[%s1 + $0x94] sm:$0xf]
    %v750 = vld [vmem:[%s1 + $0x98] sm:$0xf]
    %v751 = vld [vmem:[%s1 + $0x9c] sm:$0xf]
    %v752 = vld [vmem:[%s1 + $0xa0] sm:$0xf]
    %v753 = vld [vmem:[%s1 + $0xa4] sm:$0xf]
    %v754 = vld [vmem:[%s1 + $0xa8] sm:$0xf]
    %v755 = vld [vmem:[%s1 + $0xac] sm:$0xf]
    %v756 = vld [vmem:[%s1 + $0xb0] sm:$0xf]
    %v757 = vld [vmem:[%s1 + $0xb4] sm:$0xf]
    %v758 = vld [vmem:[%s1 + $0xb8] sm:$0xf]
    %v759 = vld [vmem:[%s1 + $0xbc] sm:$0xf]
    %v760 = vld [vmem:[%s1 + $0xc0] sm:$0xf]
    %v761 = vld [vmem:[%s1 + $0xc4] sm:$0xf]
    %v762 = vld [vmem:[%s1 + $0xc8] sm:$0xf]
    %v763 = vld [vmem:[%s1 + $0xcc] sm:$0xf]
    %v764 = vld [vmem:[%s1 + $0xd0] sm:$0xf]
    %v765 = vld [vmem:[%s1 + $0xd4] sm:$0xf]
    %v766 = vld [vmem:[%s1 + $0xd8] sm:$0xf]
    %v767 = vld [vmem:[%s1 + $0xdc] sm:$0xf]
    %v768 = vld [vmem:[%s1 + $0xe0] sm:$0xf]
    %v769 = vld [vmem:[%s1 + $0xe4] sm:$0xf]
    %v770 = vld [vmem:[%s1 + $0xe8] sm:$0xf]
    %v771 = vld [vmem:[%s1 + $0xec] sm:$0xf]
    %v772 = vld [vmem:[%s1 + $0xf0] sm:$0xf]
    %v773 = vld [vmem:[%s1 + $0xf4] sm:$0xf]
    %v774 = vld [vmem:[%s1 + $0xf8] sm:$0xf]
    %v775 = vld [vmem:[%s1 + $0xfc] sm:$0xf]
    %v776 = vld [vmem:[%s1 + $0x100] sm:$0xf]
    %v777 = vld [vmem:[%s1 + $0x104] sm:$0xf]
    %v778 = vld [vmem:[%s1 + $0x108] sm:$0xf]
    %v779 = vld [vmem:[%s1 + $0x10c] sm:$0xf]
    %v780 = vld [vmem:[%s1 + $0x110] sm:$0xf]
    %v781 = vld [vmem:[%s1 + $0x114] sm:$0xf]
    %v782 = vld [vmem:[%s1 + $0x118] sm:$0xf]
    %v783 = vld [vmem:[%s1 + $0x11c] sm:$0xf]
    %v784 = vld [vmem:[%s1 + $0x120] sm:$0xf]
    %v785 = vld [vmem:[%s1 + $0x124] sm:$0xf]
    %v786 = vld [vmem:[%s1 + $0x128] sm:$0xf]
    %v787 = vld [vmem:[%s1 + $0x12c] sm:$0xf]
    %v788 = vld [vmem:[%s1 + $0x130] sm:$0xf]
    %v789 = vld [vmem:[%s1 + $0x134] sm:$0xf]
    %v790 = vld [vmem:[%s1 + $0x138] sm:$0xf]
    %v791 = vld [vmem:[%s1 + $0x13c] sm:$0xf]
    %v792 = vld [vmem:[%s1 + $0x140] sm:$0xf]
    %v793 = vld [vmem:[%s1 + $0x144] sm:$0xf]
    %v794 = vld [vmem:[%s1 + $0x148] sm:$0xf]
    %v795 = vld [vmem:[%s1 + $0x14c] sm:$0xf]
    %v796 = vld [vmem:[%s1 + $0x150] sm:$0xf]
    %v797 = vld [vmem:[%s1 + $0x154] sm:$0xf]
    %v798 = vld [vmem:[%s1 + $0x158] sm:$0xf]
    %v799 = vld [vmem:[%s1 + $0x15c] sm:$0xf]
    %v800 = vld [vmem:[%s1 + $0x160] sm:$0xf]
    %v801 = vld [vmem:[%s1 + $0x164] sm:$0xf]
    %v802 = vld [vmem:[%s1 + $0x168] sm:$0xf]
    %v803 = vld [vmem:[%s1 + $0x16c] sm:$0xf]
    %v804 = vld [vmem:[%s1 + $0x170] sm:$0xf]
    %v805 = vld [vmem:[%s1 + $0x174] sm:$0xf]
    %v806 = vld [vmem:[%s1 + $0x178] sm:$0xf]
    %v807 = vld [vmem:[%s1 + $0x17c] sm:$0xf]
    %v808 = vld [vmem:[%s1 + $0x180] sm:$0xf]
    %v809 = vld [vmem:[%s1 + $0x184] sm:$0xf]
    %v810 = vld [vmem:[%s2] sm:$0x1]
    %v812 = vlaneseq
    %v813 = vshrl.u32 %v812, 7
    %v814 = vsub.s32 0, %v813
    %v815 = vrot.slane %v810, %v814
    %v915 = vunpack.c.l.b16 %v712
    %v916 = vunpack.c.l.b16 %v713
    %v917 = vunpack.c.l.b16 %v714
    %v918 = vunpack.c.l.b16 %v715
    %v919 = vunpack.c.l.b16 %v716
    %v920 = vunpack.c.l.b16 %v717
    %v921 = vunpack.c.l.b16 %v718
    %v922 = vunpack.c.l.b16 %v719
    %v923 = vunpack.c.l.b16 %v720
    %v924 = vunpack.c.l.b16 %v721
    %v925 = vunpack.c.l.b16 %v722
    %v926 = vunpack.c.l.b16 %v723
    %v927 = vunpack.c.l.b16 %v724
    %v928 = vunpack.c.l.b16 %v725
    %v929 = vunpack.c.l.b16 %v726
    %v930 = vunpack.c.l.b16 %v727
    %v931 = vunpack.c.l.b16 %v728
    %v932 = vunpack.c.l.b16 %v729
    %v933 = vunpack.c.l.b16 %v730
    %v934 = vunpack.c.l.b16 %v731
    %v935 = vunpack.c.l.b16 %v732
    %v936 = vunpack.c.l.b16 %v733
    %v937 = vunpack.c.l.b16 %v734
    %v938 = vunpack.c.l.b16 %v735
    %v939 = vunpack.c.l.b16 %v736
    %v940 = vunpack.c.l.b16 %v737
    %v941 = vunpack.c.l.b16 %v738
    %v942 = vunpack.c.l.b16 %v739
    %v943 = vunpack.c.l.b16 %v740
    %v944 = vunpack.c.l.b16 %v741
    %v945 = vunpack.c.l.b16 %v742
    %v946 = vunpack.c.l.b16 %v743
    %v947 = vunpack.c.l.b16 %v744
    %v948 = vunpack.c.l.b16 %v745
    %v949 = vunpack.c.l.b16 %v746
    %v950 = vunpack.c.l.b16 %v747
    %v951 = vunpack.c.l.b16 %v748
    %v952 = vunpack.c.l.b16 %v749
    %v953 = vunpack.c.l.b16 %v750
    %v954 = vunpack.c.l.b16 %v751
    %v955 = vunpack.c.l.b16 %v752
    %v956 = vunpack.c.l.b16 %v753
    %v957 = vunpack.c.l.b16 %v754
    %v958 = vunpack.c.l.b16 %v755
    %v959 = vunpack.c.l.b16 %v756
    %v960 = vunpack.c.l.b16 %v757
    %v961 = vunpack.c.l.b16 %v758
    %v962 = vunpack.c.l.b16 %v759
    %v963 = vunpack.c.l.b16 %v760
    %v964 = vunpack.c.l.b16 %v761
    %v965 = vunpack.c.l.b16 %v762
    %v966 = vunpack.c.l.b16 %v763
    %v967 = vunpack.c.l.b16 %v764
    %v968 = vunpack.c.l.b16 %v765
    %v969 = vunpack.c.l.b16 %v766
    %v970 = vunpack.c.l.b16 %v767
    %v971 = vunpack.c.l.b16 %v768
    %v972 = vunpack.c.l.b16 %v769
    %v973 = vunpack.c.l.b16 %v770
    %v974 = vunpack.c.l.b16 %v771
    %v975 = vunpack.c.l.b16 %v772
    %v976 = vunpack.c.l.b16 %v773
    %v977 = vunpack.c.l.b16 %v774
    %v978 = vunpack.c.l.b16 %v775
    %v979 = vunpack.c.l.b16 %v776
    %v980 = vunpack.c.l.b16 %v777
    %v981 = vunpack.c.l.b16 %v778
    %v982 = vunpack.c.l.b16 %v779
    %v983 = vunpack.c.l.b16 %v780
    %v984 = vunpack.c.l.b16 %v781
    %v985 = vunpack.c.l.b16 %v782
    %v986 = vunpack.c.l.b16 %v783
    %v987 = vunpack.c.l.b16 %v784
    %v988 = vunpack.c.l.b16 %v785
    %v989 = vunpack.c.l.b16 %v786
    %v990 = vunpack.c.l.b16 %v787
    %v991 = vunpack.c.l.b16 %v788
    %v992 = vunpack.c.l.b16 %v789
    %v993 = vunpack.c.l.b16 %v790
    %v994 = vunpack.c.l.b16 %v791
    %v995 = vunpack.c.l.b16 %v792
    %v996 = vunpack.c.l.b16 %v793
    %v997 = vunpack.c.l.b16 %v794
    %v998 = vunpack.c.l.b16 %v795
    %v999 = vunpack.c.l.b16 %v796
    %v1000 = vunpack.c.l.b16 %v797
    %v1001 = vunpack.c.l.b16 %v798
    %v1002 = vunpack.c.l.b16 %v799
    %v1003 = vunpack.c.l.b16 %v800
    %v1004 = vunpack.c.l.b16 %v801
    %v1005 = vunpack.c.l.b16 %v802
    %v1006 = vunpack.c.l.b16 %v803
    %v1007 = vunpack.c.l.b16 %v804
    %v1008 = vunpack.c.l.b16 %v805
    %v1009 = vunpack.c.l.b16 %v806
    %v1010 = vunpack.c.l.b16 %v807
    %v1011 = vunpack.c.l.b16 %v808
    %v1012 = vunpack.c.l.b16 %v809
    %v1013 = vpack.c.b16 %v916, %v915
    %v1014 = vpack.c.b16 %v918, %v917
    %v1015 = vpack.c.b16 %v920, %v919
    %v1016 = vpack.c.b16 %v922, %v921
    %v1017 = vpack.c.b16 %v924, %v923
    %v1018 = vpack.c.b16 %v926, %v925
    %v1019 = vpack.c.b16 %v928, %v927
    %v1020 = vpack.c.b16 %v930, %v929
    %v1021 = vpack.c.b16 %v932, %v931
    %v1022 = vpack.c.b16 %v934, %v933
    %v1023 = vpack.c.b16 %v936, %v935
    %v1024 = vpack.c.b16 %v938, %v937
    %v1025 = vpack.c.b16 %v940, %v939
    %v1026 = vpack.c.b16 %v942, %v941
    %v1027 = vpack.c.b16 %v944, %v943
    %v1028 = vpack.c.b16 %v946, %v945
    %v1029 = vpack.c.b16 %v948, %v947
    %v1030 = vpack.c.b16 %v950, %v949
    %v1031 = vpack.c.b16 %v952, %v951
    %v1032 = vpack.c.b16 %v954, %v953
    %v1033 = vpack.c.b16 %v956, %v955
    %v1034 = vpack.c.b16 %v958, %v957
    %v1035 = vpack.c.b16 %v960, %v959
    %v1036 = vpack.c.b16 %v962, %v961
    %v1037 = vpack.c.b16 %v964, %v963
    %v1038 = vpack.c.b16 %v966, %v965
    %v1039 = vpack.c.b16 %v968, %v967
    %v1040 = vpack.c.b16 %v970, %v969
    %v1041 = vpack.c.b16 %v972, %v971
    %v1042 = vpack.c.b16 %v974, %v973
    %v1043 = vpack.c.b16 %v976, %v975
    %v1044 = vpack.c.b16 %v978, %v977
    %v1045 = vpack.c.b16 %v980, %v979
    %v1046 = vpack.c.b16 %v982, %v981
    %v1047 = vpack.c.b16 %v984, %v983
    %v1048 = vpack.c.b16 %v986, %v985
    %v1049 = vpack.c.b16 %v988, %v987
    %v1050 = vpack.c.b16 %v990, %v989
    %v1051 = vpack.c.b16 %v992, %v991
    %v1052 = vpack.c.b16 %v994, %v993
    %v1053 = vpack.c.b16 %v996, %v995
    %v1054 = vpack.c.b16 %v998, %v997
    %v1055 = vpack.c.b16 %v1000, %v999
    %v1056 = vpack.c.b16 %v1002, %v1001
    %v1057 = vpack.c.b16 %v1004, %v1003
    %v1058 = vpack.c.b16 %v1006, %v1005
    %v1059 = vpack.c.b16 %v1008, %v1007
    %v1060 = vpack.c.b16 %v1010, %v1009
    %v1061 = vpack.c.b16 %v1012, %v1011
    %vm1111 = vcmask 130048
    %v1113 = vsel %vm1111, %v494, 0
    %v1116 = vsel %vm1111, %v501, 0
    %v1119 = vsel %vm1111, %v508, 0
    %v1122 = vsel %vm1111, %v515, 0
    %v1125 = vsel %vm1111, %v522, 0
    %v1128 = vsel %vm1111, %v529, 0
    %v1131 = vsel %vm1111, %v536, 0
    %v1134 = vsel %vm1111, %v543, 0
    %v1137 = vsel %vm1111, %v550, 0
    %v1140 = vsel %vm1111, %v557, 0
    %v1143 = vsel %vm1111, %v564, 0
    %v1146 = vsel %vm1111, %v571, 0
    %v1149 = vsel %vm1111, %v578, 0
    %v1152 = vsel %vm1111, %v585, 0
    %v1155 = vsel %vm1111, %v592, 0
    %v1158 = vsel %vm1111, %v599, 0
    %v1161 = vsel %vm1111, %v606, 0
    %v1164 = vsel %vm1111, %v613, 0
    %v1167 = vsel %vm1111, %v620, 0
    %v1170 = vsel %vm1111, %v627, 0
    %v1173 = vsel %vm1111, %v634, 0
    %v1176 = vsel %vm1111, %v641, 0
    %v1179 = vsel %vm1111, %v648, 0
    %v1182 = vsel %vm1111, %v655, 0
    %v1185 = vsel %vm1111, %v662, 0
    %v1188 = vsel %vm1111, %v669, 0
    %v1191 = vsel %vm1111, %v676, 0
    %v1194 = vsel %vm1111, %v683, 0
    %v1197 = vsel %vm1111, %v690, 0
    %v1200 = vsel %vm1111, %v697, 0
    %v1203 = vsel %vm1111, %v704, 0
    %v1206 = vsel %vm1111, %v711, 0
    %1208 = vmatprep.subr.bf16.mxu0 0
    %1209 = vmatpush1.bf16.msra.mxu0 %v1013
    %1210 = vmatprep.subr.bf16.mxu0 0
    %1211 = vmatpush1.bf16.msra.mxu0 %v1014
    %1212 = vmatprep.subr.bf16.mxu0 0
    %1213 = vmatpush1.bf16.msra.mxu0 %v1015
    %1214 = vmatprep.subr.bf16.mxu0 0
    %1215 = vmatpush1.bf16.msra.mxu0 %v1016
    %1216 = vmatprep.subr.bf16.mxu0 0
    %1217 = vmatpush1.bf16.msra.mxu0 %v1017
    %1218 = vmatprep.subr.bf16.mxu0 0
    %1219 = vmatpush1.bf16.msra.mxu0 %v1018
    %1220 = vmatprep.subr.bf16.mxu0 0
    %1221 = vmatpush1.bf16.msra.mxu0 %v1019
    %1222 = vmatprep.subr.bf16.mxu0 0
    %1223 = vmatpush1.bf16.msra.mxu0 %v1020
    %1224 = vmatprep.subr.bf16.mxu0 0
    %1225 = vmatpush1.bf16.msra.mxu0 %v1021
    %1226 = vmatprep.subr.bf16.mxu0 0
    %1227 = vmatpush1.bf16.msra.mxu0 %v1022
    %1228 = vmatprep.subr.bf16.mxu0 0
    %1229 = vmatpush1.bf16.msra.mxu0 %v1023
    %1230 = vmatprep.subr.bf16.mxu0 0
    %1231 = vmatpush1.bf16.msra.mxu0 %v1024
    %1232 = vmatprep.subr.bf16.mxu0 0
    %1233 = vmatpush1.bf16.msra.mxu0 %v1025
    %1234 = vmatprep.subr.bf16.mxu0 0
    %1235 = vmatpush1.bf16.msra.mxu0 %v1026
    %1236 = vmatprep.subr.bf16.mxu0 0
    %1237 = vmatpush1.bf16.msra.mxu0 %v1027
    %1238 = vmatprep.subr.bf16.mxu0 0
    %1239 = vmatpush1.bf16.msra.mxu0 %v1028
    %1240 = vmatprep.mubr.bf16.mxu0 %v489
    %1241 = vmatmul.mubr.bf16.gmra.mrb[0].mxu0 %v488
    %v1242 = vpop.f32.mrb[0].mxu0
    %v1243 = vadd.f32 %v815, %v1242
    %v1244 = vpop.f32.mrb[0].mxu0
    %v1245 = vpop.f32.mrb[0].mxu0
    %v1246 = vadd.f32 %v815, %v1245
    %v1247 = vpop.f32.mrb[0].mxu0
    %1248 = vmatprep.mubr.bf16.mxu0 %v496
    %1249 = vmatmul.mubr.bf16.gmra.mrb[0].mxu0 %v495
    %v1250 = vpop.f32.mrb[0].mxu0
    %v1251 = vadd.f32 %v815, %v1250
    %v1252 = vpop.f32.mrb[0].mxu0
    %v1253 = vpop.f32.mrb[0].mxu0
    %v1254 = vadd.f32 %v815, %v1253
    %v1255 = vpop.f32.mrb[0].mxu0
    %1256 = vmatprep.mubr.bf16.mxu0 %v503
    %1257 = vmatmul.mubr.bf16.gmra.mrb[0].mxu0 %v502
    %v1258 = vpop.f32.mrb[0].mxu0
    %v1259 = vadd.f32 %v815, %v1258
    %v1260 = vpop.f32.mrb[0].mxu0
    %v1261 = vpop.f32.mrb[0].mxu0
    %v1262 = vadd.f32 %v815, %v1261
    %v1263 = vpop.f32.mrb[0].mxu0
    %1264 = vmatprep.mubr.bf16.mxu0 %v510
    %1265 = vmatmul.mubr.bf16.gmra.mrb[0].mxu0 %v509
    %v1266 = vpop.f32.mrb[0].mxu0
    %v1267 = vadd.f32 %v815, %v1266
    %v1268 = vpop.f32.mrb[0].mxu0
    %v1269 = vpop.f32.mrb[0].mxu0
    %v1270 = vadd.f32 %v815, %v1269
    %v1271 = vpop.f32.mrb[0].mxu0
    %1272 = vmatprep.mubr.bf16.mxu0 %v517
    %1273 = vmatmul.mubr.bf16.gmra.mrb[0].mxu0 %v516
    %v1274 = vpop.f32.mrb[0].mxu0
    %v1275 = vadd.f32 %v815, %v1274
    %v1276 = vpop.f32.mrb[0].mxu0
    %v1277 = vpop.f32.mrb[0].mxu0
    %v1278 = vadd.f32 %v815, %v1277
    %v1279 = vpop.f32.mrb[0].mxu0
    %1280 = vmatprep.mubr.bf16.mxu0 %v524
    %1281 = vmatmul.mubr.bf16.gmra.mrb[0].mxu0 %v523
    %v1282 = vpop.f32.mrb[0].mxu0
    %v1283 = vadd.f32 %v815, %v1282
    %v1284 = vpop.f32.mrb[0].mxu0
    %v1285 = vpop.f32.mrb[0].mxu0
    %v1286 = vadd.f32 %v815, %v1285
    %v1287 = vpop.f32.mrb[0].mxu0
    %1288 = vmatprep.mubr.bf16.mxu0 %v531
    %1289 = vmatmul.mubr.bf16.gmra.mrb[0].mxu0 %v530
    %v1290 = vpop.f32.mrb[0].mxu0
    %v1291 = vadd.f32 %v815, %v1290
    %v1292 = vpop.f32.mrb[0].mxu0
    %v1293 = vpop.f32.mrb[0].mxu0
    %v1294 = vadd.f32 %v815, %v1293
    %v1295 = vpop.f32.mrb[0].mxu0
    %1296 = vmatprep.mubr.bf16.mxu0 %v538
    %1297 = vmatmul.mubr.bf16.gmra.mrb[0].mxu0 %v537
    %v1298 = vpop.f32.mrb[0].mxu0
    %v1299 = vadd.f32 %v815, %v1298
    %v1300 = vpop.f32.mrb[0].mxu0
    %v1301 = vpop.f32.mrb[0].mxu0
    %v1302 = vadd.f32 %v815, %v1301
    %v1303 = vpop.f32.mrb[0].mxu0
    %1304 = vmatprep.mubr.bf16.mxu0 %v545
    %1305 = vmatmul.mubr.bf16.gmra.mrb[0].mxu0 %v544
    %v1306 = vpop.f32.mrb[0].mxu0
    %v1307 = vadd.f32 %v815, %v1306
    %v1308 = vpop.f32.mrb[0].mxu0
    %v1309 = vpop.f32.mrb[0].mxu0
    %v1310 = vadd.f32 %v815, %v1309
    %v1311 = vpop.f32.mrb[0].mxu0
    %1312 = vmatprep.mubr.bf16.mxu0 %v552
    %1313 = vmatmul.mubr.bf16.gmra.mrb[0].mxu0 %v551
    %v1314 = vpop.f32.mrb[0].mxu0
    %v1315 = vadd.f32 %v815, %v1314
    %v1316 = vpop.f32.mrb[0].mxu0
    %v1317 = vpop.f32.mrb[0].mxu0
    %v1318 = vadd.f32 %v815, %v1317
    %v1319 = vpop.f32.mrb[0].mxu0
    %1320 = vmatprep.mubr.bf16.mxu0 %v559
    %1321 = vmatmul.mubr.bf16.gmra.mrb[0].mxu0 %v558
    %v1322 = vpop.f32.mrb[0].mxu0
    %v1323 = vadd.f32 %v815, %v1322
    %v1324 = vpop.f32.mrb[0].mxu0
    %v1325 = vpop.f32.mrb[0].mxu0
    %v1326 = vadd.f32 %v815, %v1325
    %v1327 = vpop.f32.mrb[0].mxu0
    %1328 = vmatprep.mubr.bf16.mxu0 %v566
    %1329 = vmatmul.mubr.bf16.gmra.mrb[0].mxu0 %v565
    %v1330 = vpop.f32.mrb[0].mxu0
    %v1331 = vadd.f32 %v815, %v1330
    %v1332 = vpop.f32.mrb[0].mxu0
    %v1333 = vpop.f32.mrb[0].mxu0
    %v1334 = vadd.f32 %v815, %v1333
    %v1335 = vpop.f32.mrb[0].mxu0
    %1336 = vmatprep.mubr.bf16.mxu0 %v573
    %1337 = vmatmul.mubr.bf16.gmra.mrb[0].mxu0 %v572
    %v1338 = vpop.f32.mrb[0].mxu0
    %v1339 = vadd.f32 %v815, %v1338
    %v1340 = vpop.f32.mrb[0].mxu0
    %v1341 = vpop.f32.mrb[0].mxu0
    %v1342 = vadd.f32 %v815, %v1341
    %v1343 = vpop.f32.mrb[0].mxu0
    %1344 = vmatprep.mubr.bf16.mxu0 %v580
    %1345 = vmatmul.mubr.bf16.gmra.mrb[0].mxu0 %v579
    %v1346 = vpop.f32.mrb[0].mxu0
    %v1347 = vadd.f32 %v815, %v1346
    %v1348 = vpop.f32.mrb[0].mxu0
    %v1349 = vpop.f32.mrb[0].mxu0
    %v1350 = vadd.f32 %v815, %v1349
    %v1351 = vpop.f32.mrb[0].mxu0
    %1352 = vmatprep.mubr.bf16.mxu0 %v587
    %1353 = vmatmul.mubr.bf16.gmra.mrb[0].mxu0 %v586
    %v1354 = vpop.f32.mrb[0].mxu0
    %v1355 = vadd.f32 %v815, %v1354
    %v1356 = vpop.f32.mrb[0].mxu0
    %v1357 = vpop.f32.mrb[0].mxu0
    %v1358 = vadd.f32 %v815, %v1357
    %v1359 = vpop.f32.mrb[0].mxu0
    %1360 = vmatprep.mubr.bf16.mxu0 %v594
    %1361 = vmatmul.mubr.bf16.gmra.mrb[0].mxu0 %v593
    %v1362 = vpop.f32.mrb[0].mxu0
    %v1363 = vadd.f32 %v815, %v1362
    %v1364 = vpop.f32.mrb[0].mxu0
    %v1365 = vpop.f32.mrb[0].mxu0
    %v1366 = vadd.f32 %v815, %v1365
    %v1367 = vpop.f32.mrb[0].mxu0
    %1368 = vmatprep.mubr.bf16.mxu0 %v601
    %1369 = vmatmul.mubr.bf16.gmra.mrb[0].mxu0 %v600
    %v1370 = vpop.f32.mrb[0].mxu0
    %v1371 = vadd.f32 %v815, %v1370
    %v1372 = vpop.f32.mrb[0].mxu0
    %v1373 = vpop.f32.mrb[0].mxu0
    %v1374 = vadd.f32 %v815, %v1373
    %v1375 = vpop.f32.mrb[0].mxu0
    %1376 = vmatprep.mubr.bf16.mxu0 %v608
    %1377 = vmatmul.mubr.bf16.gmra.mrb[0].mxu0 %v607
    %v1378 = vpop.f32.mrb[0].mxu0
    %v1379 = vadd.f32 %v815, %v1378
    %v1380 = vpop.f32.mrb[0].mxu0
    %v1381 = vpop.f32.mrb[0].mxu0
    %v1382 = vadd.f32 %v815, %v1381
    %v1383 = vpop.f32.mrb[0].mxu0
    %1384 = vmatprep.mubr.bf16.mxu0 %v615
    %1385 = vmatmul.mubr.bf16.gmra.mrb[0].mxu0 %v614
    %v1386 = vpop.f32.mrb[0].mxu0
    %v1387 = vadd.f32 %v815, %v1386
    %v1388 = vpop.f32.mrb[0].mxu0
    %v1389 = vpop.f32.mrb[0].mxu0
    %v1390 = vadd.f32 %v815, %v1389
    %v1391 = vpop.f32.mrb[0].mxu0
    %1392 = vmatprep.mubr.bf16.mxu0 %v622
    %1393 = vmatmul.mubr.bf16.gmra.mrb[0].mxu0 %v621
    %v1394 = vpop.f32.mrb[0].mxu0
    %v1395 = vadd.f32 %v815, %v1394
    %v1396 = vpop.f32.mrb[0].mxu0
    %v1397 = vpop.f32.mrb[0].mxu0
    %v1398 = vadd.f32 %v815, %v1397
    %v1399 = vpop.f32.mrb[0].mxu0
    %1400 = vmatprep.mubr.bf16.mxu0 %v629
    %1401 = vmatmul.mubr.bf16.gmra.mrb[0].mxu0 %v628
    %v1402 = vpop.f32.mrb[0].mxu0
    %v1403 = vadd.f32 %v815, %v1402
    %v1404 = vpop.f32.mrb[0].mxu0
    %v1405 = vpop.f32.mrb[0].mxu0
    %v1406 = vadd.f32 %v815, %v1405
    %v1407 = vpop.f32.mrb[0].mxu0
    %1408 = vmatprep.mubr.bf16.mxu0 %v636
    %1409 = vmatmul.mubr.bf16.gmra.mrb[0].mxu0 %v635
    %v1410 = vpop.f32.mrb[0].mxu0
    %v1411 = vadd.f32 %v815, %v1410
    %v1412 = vpop.f32.mrb[0].mxu0
    %v1413 = vpop.f32.mrb[0].mxu0
    %v1414 = vadd.f32 %v815, %v1413
    %v1415 = vpop.f32.mrb[0].mxu0
    %1416 = vmatprep.mubr.bf16.mxu0 %v643
    %1417 = vmatmul.mubr.bf16.gmra.mrb[0].mxu0 %v642
    %v1418 = vpop.f32.mrb[0].mxu0
    %v1419 = vadd.f32 %v815, %v1418
    %v1420 = vpop.f32.mrb[0].mxu0
    %v1421 = vpop.f32.mrb[0].mxu0
    %v1422 = vadd.f32 %v815, %v1421
    %v1423 = vpop.f32.mrb[0].mxu0
    %1424 = vmatprep.mubr.bf16.mxu0 %v650
    %1425 = vmatmul.mubr.bf16.gmra.mrb[0].mxu0 %v649
    %v1426 = vpop.f32.mrb[0].mxu0
    %v1427 = vadd.f32 %v815, %v1426
    %v1428 = vpop.f32.mrb[0].mxu0
    %v1429 = vpop.f32.mrb[0].mxu0
    %v1430 = vadd.f32 %v815, %v1429
    %v1431 = vpop.f32.mrb[0].mxu0
    %1432 = vmatprep.mubr.bf16.mxu0 %v657
    %1433 = vmatmul.mubr.bf16.gmra.mrb[0].mxu0 %v656
    %v1434 = vpop.f32.mrb[0].mxu0
    %v1435 = vadd.f32 %v815, %v1434
    %v1436 = vpop.f32.mrb[0].mxu0
    %v1437 = vpop.f32.mrb[0].mxu0
    %v1438 = vadd.f32 %v815, %v1437
    %v1439 = vpop.f32.mrb[0].mxu0
    %1440 = vmatprep.mubr.bf16.mxu0 %v664
    %1441 = vmatmul.mubr.bf16.gmra.mrb[0].mxu0 %v663
    %v1442 = vpop.f32.mrb[0].mxu0
    %v1443 = vadd.f32 %v815, %v1442
    %v1444 = vpop.f32.mrb[0].mxu0
    %v1445 = vpop.f32.mrb[0].mxu0
    %v1446 = vadd.f32 %v815, %v1445
    %v1447 = vpop.f32.mrb[0].mxu0
    %1448 = vmatprep.mubr.bf16.mxu0 %v671
    %1449 = vmatmul.mubr.bf16.gmra.mrb[0].mxu0 %v670
    %v1450 = vpop.f32.mrb[0].mxu0
    %v1451 = vadd.f32 %v815, %v1450
    %v1452 = vpop.f32.mrb[0].mxu0
    %v1453 = vpop.f32.mrb[0].mxu0
    %v1454 = vadd.f32 %v815, %v1453
    %v1455 = vpop.f32.mrb[0].mxu0
    %1456 = vmatprep.mubr.bf16.mxu0 %v678
    %1457 = vmatmul.mubr.bf16.gmra.mrb[0].mxu0 %v677
    %v1458 = vpop.f32.mrb[0].mxu0
    %v1459 = vadd.f32 %v815, %v1458
    %v1460 = vpop.f32.mrb[0].mxu0
    %v1461 = vpop.f32.mrb[0].mxu0
    %v1462 = vadd.f32 %v815, %v1461
    %v1463 = vpop.f32.mrb[0].mxu0
    %1464 = vmatprep.mubr.bf16.mxu0 %v685
    %1465 = vmatmul.mubr.bf16.gmra.mrb[0].mxu0 %v684
    %v1466 = vpop.f32.mrb[0].mxu0
    %v1467 = vadd.f32 %v815, %v1466
    %v1468 = vpop.f32.mrb[0].mxu0
    %v1469 = vpop.f32.mrb[0].mxu0
    %v1470 = vadd.f32 %v815, %v1469
    %v1471 = vpop.f32.mrb[0].mxu0
    %1472 = vmatprep.mubr.bf16.mxu0 %v692
    %1473 = vmatmul.mubr.bf16.gmra.mrb[0].mxu0 %v691
    %v1474 = vpop.f32.mrb[0].mxu0
    %v1475 = vadd.f32 %v815, %v1474
    %v1476 = vpop.f32.mrb[0].mxu0
    %v1477 = vpop.f32.mrb[0].mxu0
    %v1478 = vadd.f32 %v815, %v1477
    %v1479 = vpop.f32.mrb[0].mxu0
    %1480 = vmatprep.mubr.bf16.mxu0 %v699
    %1481 = vmatmul.mubr.bf16.gmra.mrb[0].mxu0 %v698
    %v1482 = vpop.f32.mrb[0].mxu0
    %v1483 = vadd.f32 %v815, %v1482
    %v1484 = vpop.f32.mrb[0].mxu0
    %v1485 = vpop.f32.mrb[0].mxu0
    %v1486 = vadd.f32 %v815, %v1485
    %v1487 = vpop.f32.mrb[0].mxu0
    %1488 = vmatprep.mubr.bf16.mxu0 %v706
    %1489 = vmatmul.mubr.bf16.gmra.mrb[0].mxu0 %v705
    %v1490 = vpop.f32.mrb[0].mxu0
    %v1491 = vadd.f32 %v815, %v1490
    %v1492 = vpop.f32.mrb[0].mxu0
    %v1493 = vpop.f32.mrb[0].mxu0
    %v1494 = vadd.f32 %v815, %v1493
    %v1495 = vpop.f32.mrb[0].mxu0
    %1496 = vdwg.mxu0
    %1497 = vmatprep.subr.bf16.mxu0 0
    %1498 = vmatpush1.bf16.msra.mxu0 %v1029
    %1499 = vmatprep.subr.bf16.mxu0 0
    %1500 = vmatpush1.bf16.msra.mxu0 %v1030
    %1501 = vmatprep.subr.bf16.mxu0 0
    %1502 = vmatpush1.bf16.msra.mxu0 %v1031
    %1503 = vmatprep.subr.bf16.mxu0 0
    %1504 = vmatpush1.bf16.msra.mxu0 %v1032
    %1505 = vmatprep.subr.bf16.mxu0 0
    %1506 = vmatpush1.bf16.msra.mxu0 %v1033
    %1507 = vmatprep.subr.bf16.mxu0 0
    %1508 = vmatpush1.bf16.msra.mxu0 %v1034
    %1509 = vmatprep.subr.bf16.mxu0 0
    %1510 = vmatpush1.bf16.msra.mxu0 %v1035
    %1511 = vmatprep.subr.bf16.mxu0 0
    %1512 = vmatpush1.bf16.msra.mxu0 %v1036
    %1513 = vmatprep.subr.bf16.mxu0 0
    %1514 = vmatpush1.bf16.msra.mxu0 %v1037
    %1515 = vmatprep.subr.bf16.mxu0 0
    %1516 = vmatpush1.bf16.msra.mxu0 %v1038
    %1517 = vmatprep.subr.bf16.mxu0 0
    %1518 = vmatpush1.bf16.msra.mxu0 %v1039
    %1519 = vmatprep.subr.bf16.mxu0 0
    %1520 = vmatpush1.bf16.msra.mxu0 %v1040
    %1521 = vmatprep.subr.bf16.mxu0 0
    %1522 = vmatpush1.bf16.msra.mxu0 %v1041
    %1523 = vmatprep.subr.bf16.mxu0 0
    %1524 = vmatpush1.bf16.msra.mxu0 %v1042
    %1525 = vmatprep.subr.bf16.mxu0 0
    %1526 = vmatpush1.bf16.msra.mxu0 %v1043
    %1527 = vmatprep.subr.bf16.mxu0 0
    %1528 = vmatpush1.bf16.msra.mxu0 %v1044
    %1529 = vmatprep.mubr.bf16.mxu0 %v491
    %1530 = vmatmul.mubr.bf16.gmra.mrb[0].mxu0 %v490
    %v1531 = vpop.f32.mrb[0].mxu0
    %v1532 = vadd.f32 %v1243, %v1531
    %v1533 = vpop.f32.mrb[0].mxu0
    %v1534 = vpop.f32.mrb[0].mxu0
    %v1535 = vadd.f32 %v1246, %v1534
    %v1536 = vpop.f32.mrb[0].mxu0
    %1537 = vmatprep.mubr.bf16.mxu0 %v498
    %1538 = vmatmul.mubr.bf16.gmra.mrb[0].mxu0 %v497
    %v1539 = vpop.f32.mrb[0].mxu0
    %v1540 = vadd.f32 %v1251, %v1539
    %v1541 = vpop.f32.mrb[0].mxu0
    %v1542 = vpop.f32.mrb[0].mxu0
    %v1543 = vadd.f32 %v1254, %v1542
    %v1544 = vpop.f32.mrb[0].mxu0
    %1545 = vmatprep.mubr.bf16.mxu0 %v505
    %1546 = vmatmul.mubr.bf16.gmra.mrb[0].mxu0 %v504
    %v1547 = vpop.f32.mrb[0].mxu0
    %v1548 = vadd.f32 %v1259, %v1547
    %v1549 = vpop.f32.mrb[0].mxu0
    %v1550 = vpop.f32.mrb[0].mxu0
    %v1551 = vadd.f32 %v1262, %v1550
    %v1552 = vpop.f32.mrb[0].mxu0
    %1553 = vmatprep.mubr.bf16.mxu0 %v512
    %1554 = vmatmul.mubr.bf16.gmra.mrb[0].mxu0 %v511
    %v1555 = vpop.f32.mrb[0].mxu0
    %v1556 = vadd.f32 %v1267, %v1555
    %v1557 = vpop.f32.mrb[0].mxu0
    %v1558 = vpop.f32.mrb[0].mxu0
    %v1559 = vadd.f32 %v1270, %v1558
    %v1560 = vpop.f32.mrb[0].mxu0
    %1561 = vmatprep.mubr.bf16.mxu0 %v519
    %1562 = vmatmul.mubr.bf16.gmra.mrb[0].mxu0 %v518
    %v1563 = vpop.f32.mrb[0].mxu0
    %v1564 = vadd.f32 %v1275, %v1563
    %v1565 = vpop.f32.mrb[0].mxu0
    %v1566 = vpop.f32.mrb[0].mxu0
    %v1567 = vadd.f32 %v1278, %v1566
    %v1568 = vpop.f32.mrb[0].mxu0
    %1569 = vmatprep.mubr.bf16.mxu0 %v526
    %1570 = vmatmul.mubr.bf16.gmra.mrb[0].mxu0 %v525
    %v1571 = vpop.f32.mrb[0].mxu0
    %v1572 = vadd.f32 %v1283, %v1571
    %v1573 = vpop.f32.mrb[0].mxu0
    %v1574 = vpop.f32.mrb[0].mxu0
    %v1575 = vadd.f32 %v1286, %v1574
    %v1576 = vpop.f32.mrb[0].mxu0
    %1577 = vmatprep.mubr.bf16.mxu0 %v533
    %1578 = vmatmul.mubr.bf16.gmra.mrb[0].mxu0 %v532
    %v1579 = vpop.f32.mrb[0].mxu0
    %v1580 = vadd.f32 %v1291, %v1579
    %v1581 = vpop.f32.mrb[0].mxu0
    %v1582 = vpop.f32.mrb[0].mxu0
    %v1583 = vadd.f32 %v1294, %v1582
    %v1584 = vpop.f32.mrb[0].mxu0
    %1585 = vmatprep.mubr.bf16.mxu0 %v540
    %1586 = vmatmul.mubr.bf16.gmra.mrb[0].mxu0 %v539
    %v1587 = vpop.f32.mrb[0].mxu0
    %v1588 = vadd.f32 %v1299, %v1587
    %v1589 = vpop.f32.mrb[0].mxu0
    %v1590 = vpop.f32.mrb[0].mxu0
    %v1591 = vadd.f32 %v1302, %v1590
    %v1592 = vpop.f32.mrb[0].mxu0
    %1593 = vmatprep.mubr.bf16.mxu0 %v547
    %1594 = vmatmul.mubr.bf16.gmra.mrb[0].mxu0 %v546
    %v1595 = vpop.f32.mrb[0].mxu0
    %v1596 = vadd.f32 %v1307, %v1595
    %v1597 = vpop.f32.mrb[0].mxu0
    %v1598 = vpop.f32.mrb[0].mxu0
    %v1599 = vadd.f32 %v1310, %v1598
    %v1600 = vpop.f32.mrb[0].mxu0
    %1601 = vmatprep.mubr.bf16.mxu0 %v554
    %1602 = vmatmul.mubr.bf16.gmra.mrb[0].mxu0 %v553
    %v1603 = vpop.f32.mrb[0].mxu0
    %v1604 = vadd.f32 %v1315, %v1603
    %v1605 = vpop.f32.mrb[0].mxu0
    %v1606 = vpop.f32.mrb[0].mxu0
    %v1607 = vadd.f32 %v1318, %v1606
    %v1608 = vpop.f32.mrb[0].mxu0
    %1609 = vmatprep.mubr.bf16.mxu0 %v561
    %1610 = vmatmul.mubr.bf16.gmra.mrb[0].mxu0 %v560
    %v1611 = vpop.f32.mrb[0].mxu0
    %v1612 = vadd.f32 %v1323, %v1611
    %v1613 = vpop.f32.mrb[0].mxu0
    %v1614 = vpop.f32.mrb[0].mxu0
    %v1615 = vadd.f32 %v1326, %v1614
    %v1616 = vpop.f32.mrb[0].mxu0
    %1617 = vmatprep.mubr.bf16.mxu0 %v568
    %1618 = vmatmul.mubr.bf16.gmra.mrb[0].mxu0 %v567
    %v1619 = vpop.f32.mrb[0].mxu0
    %v1620 = vadd.f32 %v1331, %v1619
    %v1621 = vpop.f32.mrb[0].mxu0
    %v1622 = vpop.f32.mrb[0].mxu0
    %v1623 = vadd.f32 %v1334, %v1622
    %v1624 = vpop.f32.mrb[0].mxu0
    %1625 = vmatprep.mubr.bf16.mxu0 %v575
    %1626 = vmatmul.mubr.bf16.gmra.mrb[0].mxu0 %v574
    %v1627 = vpop.f32.mrb[0].mxu0
    %v1628 = vadd.f32 %v1339, %v1627
    %v1629 = vpop.f32.mrb[0].mxu0
    %v1630 = vpop.f32.mrb[0].mxu0
    %v1631 = vadd.f32 %v1342, %v1630
    %v1632 = vpop.f32.mrb[0].mxu0
    %1633 = vmatprep.mubr.bf16.mxu0 %v582
    %1634 = vmatmul.mubr.bf16.gmra.mrb[0].mxu0 %v581
    %v1635 = vpop.f32.mrb[0].mxu0
    %v1636 = vadd.f32 %v1347, %v1635
    %v1637 = vpop.f32.mrb[0].mxu0
    %v1638 = vpop.f32.mrb[0].mxu0
    %v1639 = vadd.f32 %v1350, %v1638
    %v1640 = vpop.f32.mrb[0].mxu0
    %1641 = vmatprep.mubr.bf16.mxu0 %v589
    %1642 = vmatmul.mubr.bf16.gmra.mrb[0].mxu0 %v588
    %v1643 = vpop.f32.mrb[0].mxu0
    %v1644 = vadd.f32 %v1355, %v1643
    %v1645 = vpop.f32.mrb[0].mxu0
    %v1646 = vpop.f32.mrb[0].mxu0
    %v1647 = vadd.f32 %v1358, %v1646
    %v1648 = vpop.f32.mrb[0].mxu0
    %1649 = vmatprep.mubr.bf16.mxu0 %v596
    %1650 = vmatmul.mubr.bf16.gmra.mrb[0].mxu0 %v595
    %v1651 = vpop.f32.mrb[0].mxu0
    %v1652 = vadd.f32 %v1363, %v1651
    %v1653 = vpop.f32.mrb[0].mxu0
    %v1654 = vpop.f32.mrb[0].mxu0
    %v1655 = vadd.f32 %v1366, %v1654
    %v1656 = vpop.f32.mrb[0].mxu0
    %1657 = vmatprep.mubr.bf16.mxu0 %v603
    %1658 = vmatmul.mubr.bf16.gmra.mrb[0].mxu0 %v602
    %v1659 = vpop.f32.mrb[0].mxu0
    %v1660 = vadd.f32 %v1371, %v1659
    %v1661 = vpop.f32.mrb[0].mxu0
    %v1662 = vpop.f32.mrb[0].mxu0
    %v1663 = vadd.f32 %v1374, %v1662
    %v1664 = vpop.f32.mrb[0].mxu0
    %1665 = vmatprep.mubr.bf16.mxu0 %v610
    %1666 = vmatmul.mubr.bf16.gmra.mrb[0].mxu0 %v609
    %v1667 = vpop.f32.mrb[0].mxu0
    %v1668 = vadd.f32 %v1379, %v1667
    %v1669 = vpop.f32.mrb[0].mxu0
    %v1670 = vpop.f32.mrb[0].mxu0
    %v1671 = vadd.f32 %v1382, %v1670
    %v1672 = vpop.f32.mrb[0].mxu0
    %1673 = vmatprep.mubr.bf16.mxu0 %v617
    %1674 = vmatmul.mubr.bf16.gmra.mrb[0].mxu0 %v616
    %v1675 = vpop.f32.mrb[0].mxu0
    %v1676 = vadd.f32 %v1387, %v1675
    %v1677 = vpop.f32.mrb[0].mxu0
    %v1678 = vpop.f32.mrb[0].mxu0
    %v1679 = vadd.f32 %v1390, %v1678
    %v1680 = vpop.f32.mrb[0].mxu0
    %1681 = vmatprep.mubr.bf16.mxu0 %v624
    %1682 = vmatmul.mubr.bf16.gmra.mrb[0].mxu0 %v623
    %v1683 = vpop.f32.mrb[0].mxu0
    %v1684 = vadd.f32 %v1395, %v1683
    %v1685 = vpop.f32.mrb[0].mxu0
    %v1686 = vpop.f32.mrb[0].mxu0
    %v1687 = vadd.f32 %v1398, %v1686
    %v1688 = vpop.f32.mrb[0].mxu0
    %1689 = vmatprep.mubr.bf16.mxu0 %v631
    %1690 = vmatmul.mubr.bf16.gmra.mrb[0].mxu0 %v630
    %v1691 = vpop.f32.mrb[0].mxu0
    %v1692 = vadd.f32 %v1403, %v1691
    %v1693 = vpop.f32.mrb[0].mxu0
    %v1694 = vpop.f32.mrb[0].mxu0
    %v1695 = vadd.f32 %v1406, %v1694
    %v1696 = vpop.f32.mrb[0].mxu0
    %1697 = vmatprep.mubr.bf16.mxu0 %v638
    %1698 = vmatmul.mubr.bf16.gmra.mrb[0].mxu0 %v637
    %v1699 = vpop.f32.mrb[0].mxu0
    %v1700 = vadd.f32 %v1411, %v1699
    %v1701 = vpop.f32.mrb[0].mxu0
    %v1702 = vpop.f32.mrb[0].mxu0
    %v1703 = vadd.f32 %v1414, %v1702
    %v1704 = vpop.f32.mrb[0].mxu0
    %1705 = vmatprep.mubr.bf16.mxu0 %v645
    %1706 = vmatmul.mubr.bf16.gmra.mrb[0].mxu0 %v644
    %v1707 = vpop.f32.mrb[0].mxu0
    %v1708 = vadd.f32 %v1419, %v1707
    %v1709 = vpop.f32.mrb[0].mxu0
    %v1710 = vpop.f32.mrb[0].mxu0
    %v1711 = vadd.f32 %v1422, %v1710
    %v1712 = vpop.f32.mrb[0].mxu0
    %1713 = vmatprep.mubr.bf16.mxu0 %v652
    %1714 = vmatmul.mubr.bf16.gmra.mrb[0].mxu0 %v651
    %v1715 = vpop.f32.mrb[0].mxu0
    %v1716 = vadd.f32 %v1427, %v1715
    %v1717 = vpop.f32.mrb[0].mxu0
    %v1718 = vpop.f32.mrb[0].mxu0
    %v1719 = vadd.f32 %v1430, %v1718
    %v1720 = vpop.f32.mrb[0].mxu0
    %1721 = vmatprep.mubr.bf16.mxu0 %v659
    %1722 = vmatmul.mubr.bf16.gmra.mrb[0].mxu0 %v658
    %v1723 = vpop.f32.mrb[0].mxu0
    %v1724 = vadd.f32 %v1435, %v1723
    %v1725 = vpop.f32.mrb[0].mxu0
    %v1726 = vpop.f32.mrb[0].mxu0
    %v1727 = vadd.f32 %v1438, %v1726
    %v1728 = vpop.f32.mrb[0].mxu0
    %1729 = vmatprep.mubr.bf16.mxu0 %v666
    %1730 = vmatmul.mubr.bf16.gmra.mrb[0].mxu0 %v665
    %v1731 = vpop.f32.mrb[0].mxu0
    %v1732 = vadd.f32 %v1443, %v1731
    %v1733 = vpop.f32.mrb[0].mxu0
    %v1734 = vpop.f32.mrb[0].mxu0
    %v1735 = vadd.f32 %v1446, %v1734
    %v1736 = vpop.f32.mrb[0].mxu0
    %1737 = vmatprep.mubr.bf16.mxu0 %v673
    %1738 = vmatmul.mubr.bf16.gmra.mrb[0].mxu0 %v672
    %v1739 = vpop.f32.mrb[0].mxu0
    %v1740 = vadd.f32 %v1451, %v1739
    %v1741 = vpop.f32.mrb[0].mxu0
    %v1742 = vpop.f32.mrb[0].mxu0
    %v1743 = vadd.f32 %v1454, %v1742
    %v1744 = vpop.f32.mrb[0].mxu0
    %1745 = vmatprep.mubr.bf16.mxu0 %v680
    %1746 = vmatmul.mubr.bf16.gmra.mrb[0].mxu0 %v679
    %v1747 = vpop.f32.mrb[0].mxu0
    %v1748 = vadd.f32 %v1459, %v1747
    %v1749 = vpop.f32.mrb[0].mxu0
    %v1750 = vpop.f32.mrb[0].mxu0
    %v1751 = vadd.f32 %v1462, %v1750
    %v1752 = vpop.f32.mrb[0].mxu0
    %1753 = vmatprep.mubr.bf16.mxu0 %v687
    %1754 = vmatmul.mubr.bf16.gmra.mrb[0].mxu0 %v686
    %v1755 = vpop.f32.mrb[0].mxu0
    %v1756 = vadd.f32 %v1467, %v1755
    %v1757 = vpop.f32.mrb[0].mxu0
    %v1758 = vpop.f32.mrb[0].mxu0
    %v1759 = vadd.f32 %v1470, %v1758
    %v1760 = vpop.f32.mrb[0].mxu0
    %1761 = vmatprep.mubr.bf16.mxu0 %v694
    %1762 = vmatmul.mubr.bf16.gmra.mrb[0].mxu0 %v693
    %v1763 = vpop.f32.mrb[0].mxu0
    %v1764 = vadd.f32 %v1475, %v1763
    %v1765 = vpop.f32.mrb[0].mxu0
    %v1766 = vpop.f32.mrb[0].mxu0
    %v1767 = vadd.f32 %v1478, %v1766
    %v1768 = vpop.f32.mrb[0].mxu0
    %1769 = vmatprep.mubr.bf16.mxu0 %v701
    %1770 = vmatmul.mubr.bf16.gmra.mrb[0].mxu0 %v700
    %v1771 = vpop.f32.mrb[0].mxu0
    %v1772 = vadd.f32 %v1483, %v1771
    %v1773 = vpop.f32.mrb[0].mxu0
    %v1774 = vpop.f32.mrb[0].mxu0
    %v1775 = vadd.f32 %v1486, %v1774
    %v1776 = vpop.f32.mrb[0].mxu0
    %1777 = vmatprep.mubr.bf16.mxu0 %v708
    %1778 = vmatmul.mubr.bf16.gmra.mrb[0].mxu0 %v707
    %v1779 = vpop.f32.mrb[0].mxu0
    %v1780 = vadd.f32 %v1491, %v1779
    %v1781 = vpop.f32.mrb[0].mxu0
    %v1782 = vpop.f32.mrb[0].mxu0
    %v1783 = vadd.f32 %v1494, %v1782
    %v1784 = vpop.f32.mrb[0].mxu0
    %1785 = vdwg.mxu0
    %1786 = vmatprep.subr.bf16.mxu0 0
    %1787 = vmatpush1.bf16.msra.mxu0 %v1045
    %1788 = vmatprep.subr.bf16.mxu0 0
    %1789 = vmatpush1.bf16.msra.mxu0 %v1046
    %1790 = vmatprep.subr.bf16.mxu0 0
    %1791 = vmatpush1.bf16.msra.mxu0 %v1047
    %1792 = vmatprep.subr.bf16.mxu0 0
    %1793 = vmatpush1.bf16.msra.mxu0 %v1048
    %1794 = vmatprep.subr.bf16.mxu0 0
    %1795 = vmatpush1.bf16.msra.mxu0 %v1049
    %1796 = vmatprep.subr.bf16.mxu0 0
    %1797 = vmatpush1.bf16.msra.mxu0 %v1050
    %1798 = vmatprep.subr.bf16.mxu0 0
    %1799 = vmatpush1.bf16.msra.mxu0 %v1051
    %1800 = vmatprep.subr.bf16.mxu0 0
    %1801 = vmatpush1.bf16.msra.mxu0 %v1052
    %1802 = vmatprep.subr.bf16.mxu0 0
    %1803 = vmatpush1.bf16.msra.mxu0 %v1053
    %1804 = vmatprep.subr.bf16.mxu0 0
    %1805 = vmatpush1.bf16.msra.mxu0 %v1054
    %1806 = vmatprep.subr.bf16.mxu0 0
    %1807 = vmatpush1.bf16.msra.mxu0 %v1055
    %1808 = vmatprep.subr.bf16.mxu0 0
    %1809 = vmatpush1.bf16.msra.mxu0 %v1056
    %1810 = vmatprep.subr.bf16.mxu0 0
    %1811 = vmatpush1.bf16.msra.mxu0 %v1057
    %1812 = vmatprep.subr.bf16.mxu0 0
    %1813 = vmatpush1.bf16.msra.mxu0 %v1058
    %1814 = vmatprep.subr.bf16.mxu0 0
    %1815 = vmatpush1.bf16.msra.mxu0 %v1059
    %1816 = vmatprep.subr.bf16.mxu0 0
    %1817 = vmatpush1.bf16.msra.mxu0 %v1060
    %1818 = vmatprep.mubr.bf16.mxu0 %v493
    %1819 = vmatmul.mubr.bf16.gmra.mrb[0].mxu0 %v492
    %v1820 = vpop.f32.mrb[0].mxu0
    %v1821 = vadd.f32 %v1532, %v1820
    %v1822 = vpop.f32.mrb[0].mxu0
    %v1823 = vpop.f32.mrb[0].mxu0
    %v1824 = vadd.f32 %v1535, %v1823
    %v1825 = vpop.f32.mrb[0].mxu0
    %1826 = vmatprep.mubr.bf16.mxu0 %v500
    %1827 = vmatmul.mubr.bf16.gmra.mrb[0].mxu0 %v499
    %v1828 = vpop.f32.mrb[0].mxu0
    %v1829 = vadd.f32 %v1540, %v1828
    %v1830 = vpop.f32.mrb[0].mxu0
    %v1831 = vpop.f32.mrb[0].mxu0
    %v1832 = vadd.f32 %v1543, %v1831
    %v1833 = vpop.f32.mrb[0].mxu0
    %1834 = vmatprep.mubr.bf16.mxu0 %v507
    %1835 = vmatmul.mubr.bf16.gmra.mrb[0].mxu0 %v506
    %v1836 = vpop.f32.mrb[0].mxu0
    %v1837 = vadd.f32 %v1548, %v1836
    %v1838 = vpop.f32.mrb[0].mxu0
    %v1839 = vpop.f32.mrb[0].mxu0
    %v1840 = vadd.f32 %v1551, %v1839
    %v1841 = vpop.f32.mrb[0].mxu0
    %1842 = vmatprep.mubr.bf16.mxu0 %v514
    %1843 = vmatmul.mubr.bf16.gmra.mrb[0].mxu0 %v513
    %v1844 = vpop.f32.mrb[0].mxu0
    %v1845 = vadd.f32 %v1556, %v1844
    %v1846 = vpop.f32.mrb[0].mxu0
    %v1847 = vpop.f32.mrb[0].mxu0
    %v1848 = vadd.f32 %v1559, %v1847
    %v1849 = vpop.f32.mrb[0].mxu0
    %1850 = vmatprep.mubr.bf16.mxu0 %v521
    %1851 = vmatmul.mubr.bf16.gmra.mrb[0].mxu0 %v520
    %v1852 = vpop.f32.mrb[0].mxu0
    %v1853 = vadd.f32 %v1564, %v1852
    %v1854 = vpop.f32.mrb[0].mxu0
    %v1855 = vpop.f32.mrb[0].mxu0
    %v1856 = vadd.f32 %v1567, %v1855
    %v1857 = vpop.f32.mrb[0].mxu0
    %1858 = vmatprep.mubr.bf16.mxu0 %v528
    %1859 = vmatmul.mubr.bf16.gmra.mrb[0].mxu0 %v527
    %v1860 = vpop.f32.mrb[0].mxu0
    %v1861 = vadd.f32 %v1572, %v1860
    %v1862 = vpop.f32.mrb[0].mxu0
    %v1863 = vpop.f32.mrb[0].mxu0
    %v1864 = vadd.f32 %v1575, %v1863
    %v1865 = vpop.f32.mrb[0].mxu0
    %1866 = vmatprep.mubr.bf16.mxu0 %v535
    %1867 = vmatmul.mubr.bf16.gmra.mrb[0].mxu0 %v534
    %v1868 = vpop.f32.mrb[0].mxu0
    %v1869 = vadd.f32 %v1580, %v1868
    %v1870 = vpop.f32.mrb[0].mxu0
    %v1871 = vpop.f32.mrb[0].mxu0
    %v1872 = vadd.f32 %v1583, %v1871
    %v1873 = vpop.f32.mrb[0].mxu0
    %1874 = vmatprep.mubr.bf16.mxu0 %v542
    %1875 = vmatmul.mubr.bf16.gmra.mrb[0].mxu0 %v541
    %v1876 = vpop.f32.mrb[0].mxu0
    %v1877 = vadd.f32 %v1588, %v1876
    %v1878 = vpop.f32.mrb[0].mxu0
    %v1879 = vpop.f32.mrb[0].mxu0
    %v1880 = vadd.f32 %v1591, %v1879
    %v1881 = vpop.f32.mrb[0].mxu0
    %1882 = vmatprep.mubr.bf16.mxu0 %v549
    %1883 = vmatmul.mubr.bf16.gmra.mrb[0].mxu0 %v548
    %v1884 = vpop.f32.mrb[0].mxu0
    %v1885 = vadd.f32 %v1596, %v1884
    %v1886 = vpop.f32.mrb[0].mxu0
    %v1887 = vpop.f32.mrb[0].mxu0
    %v1888 = vadd.f32 %v1599, %v1887
    %v1889 = vpop.f32.mrb[0].mxu0
    %1890 = vmatprep.mubr.bf16.mxu0 %v556
    %1891 = vmatmul.mubr.bf16.gmra.mrb[0].mxu0 %v555
    %v1892 = vpop.f32.mrb[0].mxu0
    %v1893 = vadd.f32 %v1604, %v1892
    %v1894 = vpop.f32.mrb[0].mxu0
    %v1895 = vpop.f32.mrb[0].mxu0
    %v1896 = vadd.f32 %v1607, %v1895
    %v1897 = vpop.f32.mrb[0].mxu0
    %1898 = vmatprep.mubr.bf16.mxu0 %v563
    %1899 = vmatmul.mubr.bf16.gmra.mrb[0].mxu0 %v562
    %v1900 = vpop.f32.mrb[0].mxu0
    %v1901 = vadd.f32 %v1612, %v1900
    %v1902 = vpop.f32.mrb[0].mxu0
    %v1903 = vpop.f32.mrb[0].mxu0
    %v1904 = vadd.f32 %v1615, %v1903
    %v1905 = vpop.f32.mrb[0].mxu0
    %1906 = vmatprep.mubr.bf16.mxu0 %v570
    %1907 = vmatmul.mubr.bf16.gmra.mrb[0].mxu0 %v569
    %v1908 = vpop.f32.mrb[0].mxu0
    %v1909 = vadd.f32 %v1620, %v1908
    %v1910 = vpop.f32.mrb[0].mxu0
    %v1911 = vpop.f32.mrb[0].mxu0
    %v1912 = vadd.f32 %v1623, %v1911
    %v1913 = vpop.f32.mrb[0].mxu0
    %1914 = vmatprep.mubr.bf16.mxu0 %v577
    %1915 = vmatmul.mubr.bf16.gmra.mrb[0].mxu0 %v576
    %v1916 = vpop.f32.mrb[0].mxu0
    %v1917 = vadd.f32 %v1628, %v1916
    %v1918 = vpop.f32.mrb[0].mxu0
    %v1919 = vpop.f32.mrb[0].mxu0
    %v1920 = vadd.f32 %v1631, %v1919
    %v1921 = vpop.f32.mrb[0].mxu0
    %1922 = vmatprep.mubr.bf16.mxu0 %v584
    %1923 = vmatmul.mubr.bf16.gmra.mrb[0].mxu0 %v583
    %v1924 = vpop.f32.mrb[0].mxu0
    %v1925 = vadd.f32 %v1636, %v1924
    %v1926 = vpop.f32.mrb[0].mxu0
    %v1927 = vpop.f32.mrb[0].mxu0
    %v1928 = vadd.f32 %v1639, %v1927
    %v1929 = vpop.f32.mrb[0].mxu0
    %1930 = vmatprep.mubr.bf16.mxu0 %v591
    %1931 = vmatmul.mubr.bf16.gmra.mrb[0].mxu0 %v590
    %v1932 = vpop.f32.mrb[0].mxu0
    %v1933 = vadd.f32 %v1644, %v1932
    %v1934 = vpop.f32.mrb[0].mxu0
    %v1935 = vpop.f32.mrb[0].mxu0
    %v1936 = vadd.f32 %v1647, %v1935
    %v1937 = vpop.f32.mrb[0].mxu0
    %1938 = vmatprep.mubr.bf16.mxu0 %v598
    %1939 = vmatmul.mubr.bf16.gmra.mrb[0].mxu0 %v597
    %v1940 = vpop.f32.mrb[0].mxu0
    %v1941 = vadd.f32 %v1652, %v1940
    %v1942 = vpop.f32.mrb[0].mxu0
    %v1943 = vpop.f32.mrb[0].mxu0
    %v1944 = vadd.f32 %v1655, %v1943
    %v1945 = vpop.f32.mrb[0].mxu0
    %1946 = vmatprep.mubr.bf16.mxu0 %v605
    %1947 = vmatmul.mubr.bf16.gmra.mrb[0].mxu0 %v604
    %v1948 = vpop.f32.mrb[0].mxu0
    %v1949 = vadd.f32 %v1660, %v1948
    %v1950 = vpop.f32.mrb[0].mxu0
    %v1951 = vpop.f32.mrb[0].mxu0
    %v1952 = vadd.f32 %v1663, %v1951
    %v1953 = vpop.f32.mrb[0].mxu0
    %1954 = vmatprep.mubr.bf16.mxu0 %v612
    %1955 = vmatmul.mubr.bf16.gmra.mrb[0].mxu0 %v611
    %v1956 = vpop.f32.mrb[0].mxu0
    %v1957 = vadd.f32 %v1668, %v1956
    %v1958 = vpop.f32.mrb[0].mxu0
    %v1959 = vpop.f32.mrb[0].mxu0
    %v1960 = vadd.f32 %v1671, %v1959
    %v1961 = vpop.f32.mrb[0].mxu0
    %1962 = vmatprep.mubr.bf16.mxu0 %v619
    %1963 = vmatmul.mubr.bf16.gmra.mrb[0].mxu0 %v618
    %v1964 = vpop.f32.mrb[0].mxu0
    %v1965 = vadd.f32 %v1676, %v1964
    %v1966 = vpop.f32.mrb[0].mxu0
    %v1967 = vpop.f32.mrb[0].mxu0
    %v1968 = vadd.f32 %v1679, %v1967
    %v1969 = vpop.f32.mrb[0].mxu0
    %1970 = vmatprep.mubr.bf16.mxu0 %v626
    %1971 = vmatmul.mubr.bf16.gmra.mrb[0].mxu0 %v625
    %v1972 = vpop.f32.mrb[0].mxu0
    %v1973 = vadd.f32 %v1684, %v1972
    %v1974 = vpop.f32.mrb[0].mxu0
    %v1975 = vpop.f32.mrb[0].mxu0
    %v1976 = vadd.f32 %v1687, %v1975
    %v1977 = vpop.f32.mrb[0].mxu0
    %1978 = vmatprep.mubr.bf16.mxu0 %v633
    %1979 = vmatmul.mubr.bf16.gmra.mrb[0].mxu0 %v632
    %v1980 = vpop.f32.mrb[0].mxu0
    %v1981 = vadd.f32 %v1692, %v1980
    %v1982 = vpop.f32.mrb[0].mxu0
    %v1983 = vpop.f32.mrb[0].mxu0
    %v1984 = vadd.f32 %v1695, %v1983
    %v1985 = vpop.f32.mrb[0].mxu0
    %1986 = vmatprep.mubr.bf16.mxu0 %v640
    %1987 = vmatmul.mubr.bf16.gmra.mrb[0].mxu0 %v639
    %v1988 = vpop.f32.mrb[0].mxu0
    %v1989 = vadd.f32 %v1700, %v1988
    %v1990 = vpop.f32.mrb[0].mxu0
    %v1991 = vpop.f32.mrb[0].mxu0
    %v1992 = vadd.f32 %v1703, %v1991
    %v1993 = vpop.f32.mrb[0].mxu0
    %1994 = vmatprep.mubr.bf16.mxu0 %v647
    %1995 = vmatmul.mubr.bf16.gmra.mrb[0].mxu0 %v646
    %v1996 = vpop.f32.mrb[0].mxu0
    %v1997 = vadd.f32 %v1708, %v1996
    %v1998 = vpop.f32.mrb[0].mxu0
    %v1999 = vpop.f32.mrb[0].mxu0
    %v2000 = vadd.f32 %v1711, %v1999
    %v2001 = vpop.f32.mrb[0].mxu0
    %2002 = vmatprep.mubr.bf16.mxu0 %v654
    %2003 = vmatmul.mubr.bf16.gmra.mrb[0].mxu0 %v653
    %v2004 = vpop.f32.mrb[0].mxu0
    %v2005 = vadd.f32 %v1716, %v2004
    %v2006 = vpop.f32.mrb[0].mxu0
    %v2007 = vpop.f32.mrb[0].mxu0
    %v2008 = vadd.f32 %v1719, %v2007
    %v2009 = vpop.f32.mrb[0].mxu0
    %2010 = vmatprep.mubr.bf16.mxu0 %v661
    %2011 = vmatmul.mubr.bf16.gmra.mrb[0].mxu0 %v660
    %v2012 = vpop.f32.mrb[0].mxu0
    %v2013 = vadd.f32 %v1724, %v2012
    %v2014 = vpop.f32.mrb[0].mxu0
    %v2015 = vpop.f32.mrb[0].mxu0
    %v2016 = vadd.f32 %v1727, %v2015
    %v2017 = vpop.f32.mrb[0].mxu0
    %2018 = vmatprep.mubr.bf16.mxu0 %v668
    %2019 = vmatmul.mubr.bf16.gmra.mrb[0].mxu0 %v667
    %v2020 = vpop.f32.mrb[0].mxu0
    %v2021 = vadd.f32 %v1732, %v2020
    %v2022 = vpop.f32.mrb[0].mxu0
    %v2023 = vpop.f32.mrb[0].mxu0
    %v2024 = vadd.f32 %v1735, %v2023
    %v2025 = vpop.f32.mrb[0].mxu0
    %2026 = vmatprep.mubr.bf16.mxu0 %v675
    %2027 = vmatmul.mubr.bf16.gmra.mrb[0].mxu0 %v674
    %v2028 = vpop.f32.mrb[0].mxu0
    %v2029 = vadd.f32 %v1740, %v2028
    %v2030 = vpop.f32.mrb[0].mxu0
    %v2031 = vpop.f32.mrb[0].mxu0
    %v2032 = vadd.f32 %v1743, %v2031
    %v2033 = vpop.f32.mrb[0].mxu0
    %2034 = vmatprep.mubr.bf16.mxu0 %v682
    %2035 = vmatmul.mubr.bf16.gmra.mrb[0].mxu0 %v681
    %v2036 = vpop.f32.mrb[0].mxu0
    %v2037 = vadd.f32 %v1748, %v2036
    %v2038 = vpop.f32.mrb[0].mxu0
    %v2039 = vpop.f32.mrb[0].mxu0
    %v2040 = vadd.f32 %v1751, %v2039
    %v2041 = vpop.f32.mrb[0].mxu0
    %2042 = vmatprep.mubr.bf16.mxu0 %v689
    %2043 = vmatmul.mubr.bf16.gmra.mrb[0].mxu0 %v688
    %v2044 = vpop.f32.mrb[0].mxu0
    %v2045 = vadd.f32 %v1756, %v2044
    %v2046 = vpop.f32.mrb[0].mxu0
    %v2047 = vpop.f32.mrb[0].mxu0
    %v2048 = vadd.f32 %v1759, %v2047
    %v2049 = vpop.f32.mrb[0].mxu0
    %2050 = vmatprep.mubr.bf16.mxu0 %v696
    %2051 = vmatmul.mubr.bf16.gmra.mrb[0].mxu0 %v695
    %v2052 = vpop.f32.mrb[0].mxu0
    %v2053 = vadd.f32 %v1764, %v2052
    %v2054 = vpop.f32.mrb[0].mxu0
    %v2055 = vpop.f32.mrb[0].mxu0
    %v2056 = vadd.f32 %v1767, %v2055
    %v2057 = vpop.f32.mrb[0].mxu0
    %2058 = vmatprep.mubr.bf16.mxu0 %v703
    %2059 = vmatmul.mubr.bf16.gmra.mrb[0].mxu0 %v702
    %v2060 = vpop.f32.mrb[0].mxu0
    %v2061 = vadd.f32 %v1772, %v2060
    %v2062 = vpop.f32.mrb[0].mxu0
    %v2063 = vpop.f32.mrb[0].mxu0
    %v2064 = vadd.f32 %v1775, %v2063
    %v2065 = vpop.f32.mrb[0].mxu0
    %2066 = vmatprep.mubr.bf16.mxu0 %v710
    %2067 = vmatmul.mubr.bf16.gmra.mrb[0].mxu0 %v709
    %v2068 = vpop.f32.mrb[0].mxu0
    %v2069 = vadd.f32 %v1780, %v2068
    %v2070 = vpop.f32.mrb[0].mxu0
    %v2071 = vpop.f32.mrb[0].mxu0
    %v2072 = vadd.f32 %v1783, %v2071
    %v2073 = vpop.f32.mrb[0].mxu0
    %2074 = vdwg.mxu0
    %2075 = vmatprep.subr.bf16.mxu0 0
    %2076 = vmatpush1.bf16.msra.mxu0 %v1061
    %2077 = vmatprep.subr.bf16.mxu0 0
    %2078 = vmatpush1.bf16.msra.mxu0 0
    %2079 = vmatprep.subr.bf16.mxu0 0
    %2080 = vmatpush1.bf16.msra.mxu0 0
    %2081 = vmatprep.subr.bf16.mxu0 0
    %2082 = vmatpush1.bf16.msra.mxu0 0
    %2083 = vmatprep.subr.bf16.mxu0 0
    %2084 = vmatpush1.bf16.msra.mxu0 0
    %2085 = vmatprep.subr.bf16.mxu0 0
    %2086 = vmatpush1.bf16.msra.mxu0 0
    %2087 = vmatprep.subr.bf16.mxu0 0
    %2088 = vmatpush1.bf16.msra.mxu0 0
    %2089 = vmatprep.subr.bf16.mxu0 0
    %2090 = vmatpush1.bf16.msra.mxu0 0
    %2091 = vmatprep.subr.bf16.mxu0 0
    %2092 = vmatpush1.bf16.msra.mxu0 0
    %2093 = vmatprep.subr.bf16.mxu0 0
    %2094 = vmatpush1.bf16.msra.mxu0 0
    %2095 = vmatprep.subr.bf16.mxu0 0
    %2096 = vmatpush1.bf16.msra.mxu0 0
    %2097 = vmatprep.subr.bf16.mxu0 0
    %2098 = vmatpush1.bf16.msra.mxu0 0
    %2099 = vmatprep.subr.bf16.mxu0 0
    %2100 = vmatpush1.bf16.msra.mxu0 0
    %2101 = vmatprep.subr.bf16.mxu0 0
    %2102 = vmatpush1.bf16.msra.mxu0 0
    %2103 = vmatprep.subr.bf16.mxu0 0
    %2104 = vmatpush1.bf16.msra.mxu0 0
    %2105 = vmatprep.subr.bf16.mxu0 0
    %2106 = vmatpush1.bf16.msra.mxu0 0
    %2107 = vmatprep.mubr.bf16.mxu0 0
    %2108 = vmatmul.mubr.bf16.gmra.mrb[0].mxu0 %v1113
    %v2109 = vpop.f32.mrb[0].mxu0
    %v2110 = vadd.f32 %v1821, %v2109
    %v2111 = vpop.f32.mrb[0].mxu0
    %v2112 = vpop.f32.mrb[0].mxu0
    %v2113 = vadd.f32 %v1824, %v2112
    %v2114 = vpop.f32.mrb[0].mxu0
    %2115 = vmatprep.mubr.bf16.mxu0 0
    %2116 = vmatmul.mubr.bf16.gmra.mrb[0].mxu0 %v1116
    %v2117 = vpop.f32.mrb[0].mxu0
    %v2118 = vadd.f32 %v1829, %v2117
    %v2119 = vpop.f32.mrb[0].mxu0
    %v2120 = vpop.f32.mrb[0].mxu0
    %v2121 = vadd.f32 %v1832, %v2120
    %v2122 = vpop.f32.mrb[0].mxu0
    %2123 = vmatprep.mubr.bf16.mxu0 0
    %2124 = vmatmul.mubr.bf16.gmra.mrb[0].mxu0 %v1119
    %v2125 = vpop.f32.mrb[0].mxu0
    %v2126 = vadd.f32 %v1837, %v2125
    %v2127 = vpop.f32.mrb[0].mxu0
    %v2128 = vpop.f32.mrb[0].mxu0
    %v2129 = vadd.f32 %v1840, %v2128
    %v2130 = vpop.f32.mrb[0].mxu0
    %2131 = vmatprep.mubr.bf16.mxu0 0
    %2132 = vmatmul.mubr.bf16.gmra.mrb[0].mxu0 %v1122
    %v2133 = vpop.f32.mrb[0].mxu0
    %v2134 = vadd.f32 %v1845, %v2133
    %v2135 = vpop.f32.mrb[0].mxu0
    %v2136 = vpop.f32.mrb[0].mxu0
    %v2137 = vadd.f32 %v1848, %v2136
    %v2138 = vpop.f32.mrb[0].mxu0
    %2139 = vmatprep.mubr.bf16.mxu0 0
    %2140 = vmatmul.mubr.bf16.gmra.mrb[0].mxu0 %v1125
    %v2141 = vpop.f32.mrb[0].mxu0
    %v2142 = vadd.f32 %v1853, %v2141
    %v2143 = vpop.f32.mrb[0].mxu0
    %v2144 = vpop.f32.mrb[0].mxu0
    %v2145 = vadd.f32 %v1856, %v2144
    %v2146 = vpop.f32.mrb[0].mxu0
    %2147 = vmatprep.mubr.bf16.mxu0 0
    %2148 = vmatmul.mubr.bf16.gmra.mrb[0].mxu0 %v1128
    %v2149 = vpop.f32.mrb[0].mxu0
    %v2150 = vadd.f32 %v1861, %v2149
    %v2151 = vpop.f32.mrb[0].mxu0
    %v2152 = vpop.f32.mrb[0].mxu0
    %v2153 = vadd.f32 %v1864, %v2152
    %v2154 = vpop.f32.mrb[0].mxu0
    %2155 = vmatprep.mubr.bf16.mxu0 0
    %2156 = vmatmul.mubr.bf16.gmra.mrb[0].mxu0 %v1131
    %v2157 = vpop.f32.mrb[0].mxu0
    %v2158 = vadd.f32 %v1869, %v2157
    %v2159 = vpop.f32.mrb[0].mxu0
    %v2160 = vpop.f32.mrb[0].mxu0
    %v2161 = vadd.f32 %v1872, %v2160
    %v2162 = vpop.f32.mrb[0].mxu0
    %2163 = vmatprep.mubr.bf16.mxu0 0
    %2164 = vmatmul.mubr.bf16.gmra.mrb[0].mxu0 %v1134
    %v2165 = vpop.f32.mrb[0].mxu0
    %v2166 = vadd.f32 %v1877, %v2165
    %v2167 = vpop.f32.mrb[0].mxu0
    %v2168 = vpop.f32.mrb[0].mxu0
    %v2169 = vadd.f32 %v1880, %v2168
    %v2170 = vpop.f32.mrb[0].mxu0
    %2171 = vmatprep.mubr.bf16.mxu0 0
    %2172 = vmatmul.mubr.bf16.gmra.mrb[0].mxu0 %v1137
    %v2173 = vpop.f32.mrb[0].mxu0
    %v2174 = vadd.f32 %v1885, %v2173
    %v2175 = vpop.f32.mrb[0].mxu0
    %v2176 = vpop.f32.mrb[0].mxu0
    %v2177 = vadd.f32 %v1888, %v2176
    %v2178 = vpop.f32.mrb[0].mxu0
    %2179 = vmatprep.mubr.bf16.mxu0 0
    %2180 = vmatmul.mubr.bf16.gmra.mrb[0].mxu0 %v1140
    %v2181 = vpop.f32.mrb[0].mxu0
    %v2182 = vadd.f32 %v1893, %v2181
    %v2183 = vpop.f32.mrb[0].mxu0
    %v2184 = vpop.f32.mrb[0].mxu0
    %v2185 = vadd.f32 %v1896, %v2184
    %v2186 = vpop.f32.mrb[0].mxu0
    %2187 = vmatprep.mubr.bf16.mxu0 0
    %2188 = vmatmul.mubr.bf16.gmra.mrb[0].mxu0 %v1143
    %v2189 = vpop.f32.mrb[0].mxu0
    %v2190 = vadd.f32 %v1901, %v2189
    %v2191 = vpop.f32.mrb[0].mxu0
    %v2192 = vpop.f32.mrb[0].mxu0
    %v2193 = vadd.f32 %v1904, %v2192
    %v2194 = vpop.f32.mrb[0].mxu0
    %2195 = vmatprep.mubr.bf16.mxu0 0
    %2196 = vmatmul.mubr.bf16.gmra.mrb[0].mxu0 %v1146
    %v2197 = vpop.f32.mrb[0].mxu0
    %v2198 = vadd.f32 %v1909, %v2197
    %v2199 = vpop.f32.mrb[0].mxu0
    %v2200 = vpop.f32.mrb[0].mxu0
    %v2201 = vadd.f32 %v1912, %v2200
    %v2202 = vpop.f32.mrb[0].mxu0
    %2203 = vmatprep.mubr.bf16.mxu0 0
    %2204 = vmatmul.mubr.bf16.gmra.mrb[0].mxu0 %v1149
    %v2205 = vpop.f32.mrb[0].mxu0
    %v2206 = vadd.f32 %v1917, %v2205
    %v2207 = vpop.f32.mrb[0].mxu0
    %v2208 = vpop.f32.mrb[0].mxu0
    %v2209 = vadd.f32 %v1920, %v2208
    %v2210 = vpop.f32.mrb[0].mxu0
    %2211 = vmatprep.mubr.bf16.mxu0 0
    %2212 = vmatmul.mubr.bf16.gmra.mrb[0].mxu0 %v1152
    %v2213 = vpop.f32.mrb[0].mxu0
    %v2214 = vadd.f32 %v1925, %v2213
    %v2215 = vpop.f32.mrb[0].mxu0
    %v2216 = vpop.f32.mrb[0].mxu0
    %v2217 = vadd.f32 %v1928, %v2216
    %v2218 = vpop.f32.mrb[0].mxu0
    %2219 = vmatprep.mubr.bf16.mxu0 0
    %2220 = vmatmul.mubr.bf16.gmra.mrb[0].mxu0 %v1155
    %v2221 = vpop.f32.mrb[0].mxu0
    %v2222 = vadd.f32 %v1933, %v2221
    %v2223 = vpop.f32.mrb[0].mxu0
    %v2224 = vpop.f32.mrb[0].mxu0
    %v2225 = vadd.f32 %v1936, %v2224
    %v2226 = vpop.f32.mrb[0].mxu0
    %2227 = vmatprep.mubr.bf16.mxu0 0
    %2228 = vmatmul.mubr.bf16.gmra.mrb[0].mxu0 %v1158
    %v2229 = vpop.f32.mrb[0].mxu0
    %v2230 = vadd.f32 %v1941, %v2229
    %v2231 = vpop.f32.mrb[0].mxu0
    %v2232 = vpop.f32.mrb[0].mxu0
    %v2233 = vadd.f32 %v1944, %v2232
    %v2234 = vpop.f32.mrb[0].mxu0
    %2235 = vmatprep.mubr.bf16.mxu0 0
    %2236 = vmatmul.mubr.bf16.gmra.mrb[0].mxu0 %v1161
    %v2237 = vpop.f32.mrb[0].mxu0
    %v2238 = vadd.f32 %v1949, %v2237
    %v2239 = vpop.f32.mrb[0].mxu0
    %v2240 = vpop.f32.mrb[0].mxu0
    %v2241 = vadd.f32 %v1952, %v2240
    %v2242 = vpop.f32.mrb[0].mxu0
    %2243 = vmatprep.mubr.bf16.mxu0 0
    %2244 = vmatmul.mubr.bf16.gmra.mrb[0].mxu0 %v1164
    %v2245 = vpop.f32.mrb[0].mxu0
    %v2246 = vadd.f32 %v1957, %v2245
    %v2247 = vpop.f32.mrb[0].mxu0
    %v2248 = vpop.f32.mrb[0].mxu0
    %v2249 = vadd.f32 %v1960, %v2248
    %v2250 = vpop.f32.mrb[0].mxu0
    %2251 = vmatprep.mubr.bf16.mxu0 0
    %2252 = vmatmul.mubr.bf16.gmra.mrb[0].mxu0 %v1167
    %v2253 = vpop.f32.mrb[0].mxu0
    %v2254 = vadd.f32 %v1965, %v2253
    %v2255 = vpop.f32.mrb[0].mxu0
    %v2256 = vpop.f32.mrb[0].mxu0
    %v2257 = vadd.f32 %v1968, %v2256
    %v2258 = vpop.f32.mrb[0].mxu0
    %2259 = vmatprep.mubr.bf16.mxu0 0
    %2260 = vmatmul.mubr.bf16.gmra.mrb[0].mxu0 %v1170
    %v2261 = vpop.f32.mrb[0].mxu0
    %v2262 = vadd.f32 %v1973, %v2261
    %v2263 = vpop.f32.mrb[0].mxu0
    %v2264 = vpop.f32.mrb[0].mxu0
    %v2265 = vadd.f32 %v1976, %v2264
    %v2266 = vpop.f32.mrb[0].mxu0
    %2267 = vmatprep.mubr.bf16.mxu0 0
    %2268 = vmatmul.mubr.bf16.gmra.mrb[0].mxu0 %v1173
    %v2269 = vpop.f32.mrb[0].mxu0
    %v2270 = vadd.f32 %v1981, %v2269
    %v2271 = vpop.f32.mrb[0].mxu0
    %v2272 = vpop.f32.mrb[0].mxu0
    %v2273 = vadd.f32 %v1984, %v2272
    %v2274 = vpop.f32.mrb[0].mxu0
    %2275 = vmatprep.mubr.bf16.mxu0 0
    %2276 = vmatmul.mubr.bf16.gmra.mrb[0].mxu0 %v1176
    %v2277 = vpop.f32.mrb[0].mxu0
    %v2278 = vadd.f32 %v1989, %v2277
    %v2279 = vpop.f32.mrb[0].mxu0
    %v2280 = vpop.f32.mrb[0].mxu0
    %v2281 = vadd.f32 %v1992, %v2280
    %v2282 = vpop.f32.mrb[0].mxu0
    %2283 = vmatprep.mubr.bf16.mxu0 0
    %2284 = vmatmul.mubr.bf16.gmra.mrb[0].mxu0 %v1179
    %v2285 = vpop.f32.mrb[0].mxu0
    %v2286 = vadd.f32 %v1997, %v2285
    %v2287 = vpop.f32.mrb[0].mxu0
    %v2288 = vpop.f32.mrb[0].mxu0
    %v2289 = vadd.f32 %v2000, %v2288
    %v2290 = vpop.f32.mrb[0].mxu0
    %2291 = vmatprep.mubr.bf16.mxu0 0
    %2292 = vmatmul.mubr.bf16.gmra.mrb[0].mxu0 %v1182
    %v2293 = vpop.f32.mrb[0].mxu0
    %v2294 = vadd.f32 %v2005, %v2293
    %v2295 = vpop.f32.mrb[0].mxu0
    %v2296 = vpop.f32.mrb[0].mxu0
    %v2297 = vadd.f32 %v2008, %v2296
    %v2298 = vpop.f32.mrb[0].mxu0
    %2299 = vmatprep.mubr.bf16.mxu0 0
    %2300 = vmatmul.mubr.bf16.gmra.mrb[0].mxu0 %v1185
    %v2301 = vpop.f32.mrb[0].mxu0
    %v2302 = vadd.f32 %v2013, %v2301
    %v2303 = vpop.f32.mrb[0].mxu0
    %v2304 = vpop.f32.mrb[0].mxu0
    %v2305 = vadd.f32 %v2016, %v2304
    %v2306 = vpop.f32.mrb[0].mxu0
    %2307 = vmatprep.mubr.bf16.mxu0 0
    %2308 = vmatmul.mubr.bf16.gmra.mrb[0].mxu0 %v1188
    %v2309 = vpop.f32.mrb[0].mxu0
    %v2310 = vadd.f32 %v2021, %v2309
    %v2311 = vpop.f32.mrb[0].mxu0
    %v2312 = vpop.f32.mrb[0].mxu0
    %v2313 = vadd.f32 %v2024, %v2312
    %v2314 = vpop.f32.mrb[0].mxu0
    %2315 = vmatprep.mubr.bf16.mxu0 0
    %2316 = vmatmul.mubr.bf16.gmra.mrb[0].mxu0 %v1191
    %v2317 = vpop.f32.mrb[0].mxu0
    %v2318 = vadd.f32 %v2029, %v2317
    %v2319 = vpop.f32.mrb[0].mxu0
    %v2320 = vpop.f32.mrb[0].mxu0
    %v2321 = vadd.f32 %v2032, %v2320
    %v2322 = vpop.f32.mrb[0].mxu0
    %2323 = vmatprep.mubr.bf16.mxu0 0
    %2324 = vmatmul.mubr.bf16.gmra.mrb[0].mxu0 %v1194
    %v2325 = vpop.f32.mrb[0].mxu0
    %v2326 = vadd.f32 %v2037, %v2325
    %v2327 = vpop.f32.mrb[0].mxu0
    %v2328 = vpop.f32.mrb[0].mxu0
    %v2329 = vadd.f32 %v2040, %v2328
    %v2330 = vpop.f32.mrb[0].mxu0
    %2331 = vmatprep.mubr.bf16.mxu0 0
    %2332 = vmatmul.mubr.bf16.gmra.mrb[0].mxu0 %v1197
    %v2333 = vpop.f32.mrb[0].mxu0
    %v2334 = vadd.f32 %v2045, %v2333
    %v2335 = vpop.f32.mrb[0].mxu0
    %v2336 = vpop.f32.mrb[0].mxu0
    %v2337 = vadd.f32 %v2048, %v2336
    %v2338 = vpop.f32.mrb[0].mxu0
    %2339 = vmatprep.mubr.bf16.mxu0 0
    %2340 = vmatmul.mubr.bf16.gmra.mrb[0].mxu0 %v1200
    %v2341 = vpop.f32.mrb[0].mxu0
    %v2342 = vadd.f32 %v2053, %v2341
    %v2343 = vpop.f32.mrb[0].mxu0
    %v2344 = vpop.f32.mrb[0].mxu0
    %v2345 = vadd.f32 %v2056, %v2344
    %v2346 = vpop.f32.mrb[0].mxu0
    %2347 = vmatprep.mubr.bf16.mxu0 0
    %2348 = vmatmul.mubr.bf16.gmra.mrb[0].mxu0 %v1203
    %v2349 = vpop.f32.mrb[0].mxu0
    %v2350 = vadd.f32 %v2061, %v2349
    %v2351 = vpop.f32.mrb[0].mxu0
    %v2352 = vpop.f32.mrb[0].mxu0
    %v2353 = vadd.f32 %v2064, %v2352
    %v2354 = vpop.f32.mrb[0].mxu0
    %2355 = vmatprep.mubr.bf16.mxu0 0
    %2356 = vmatmul.mubr.bf16.gmra.mrb[0].mxu0 %v1206
    %v2357 = vpop.f32.mrb[0].mxu0
    %v2358 = vadd.f32 %v2069, %v2357
    %v2359 = vpop.f32.mrb[0].mxu0
    %v2360 = vpop.f32.mrb[0].mxu0
    %v2361 = vadd.f32 %v2072, %v2360
    %v2362 = vpop.f32.mrb[0].mxu0
    %2363 = vdwg.mxu0
    %v2364 = vmax.f32 %v2110, 0.0
    %v2365 = vmax.f32 %v2113, 0.0
    %v2366 = vmax.f32 %v2118, 0.0
    %v2367 = vmax.f32 %v2121, 0.0
    %v2368 = vmax.f32 %v2126, 0.0
    %v2369 = vmax.f32 %v2129, 0.0
    %v2370 = vmax.f32 %v2134, 0.0
    %v2371 = vmax.f32 %v2137, 0.0
    %v2372 = vmax.f32 %v2142, 0.0
    %v2373 = vmax.f32 %v2145, 0.0
    %v2374 = vmax.f32 %v2150, 0.0
    %v2375 = vmax.f32 %v2153, 0.0
    %v2376 = vmax.f32 %v2158, 0.0
    %v2377 = vmax.f32 %v2161, 0.0
    %v2378 = vmax.f32 %v2166, 0.0
    %v2379 = vmax.f32 %v2169, 0.0
    %v2380 = vmax.f32 %v2174, 0.0
    %v2381 = vmax.f32 %v2177, 0.0
    %v2382 = vmax.f32 %v2182, 0.0
    %v2383 = vmax.f32 %v2185, 0.0
    %v2384 = vmax.f32 %v2190, 0.0
    %v2385 = vmax.f32 %v2193, 0.0
    %v2386 = vmax.f32 %v2198, 0.0
    %v2387 = vmax.f32 %v2201, 0.0
    %v2388 = vmax.f32 %v2206, 0.0
    %v2389 = vmax.f32 %v2209, 0.0
    %v2390 = vmax.f32 %v2214, 0.0
    %v2391 = vmax.f32 %v2217, 0.0
    %v2392 = vmax.f32 %v2222, 0.0
    %v2393 = vmax.f32 %v2225, 0.0
    %v2394 = vmax.f32 %v2230, 0.0
    %v2395 = vmax.f32 %v2233, 0.0
    %v2396 = vmax.f32 %v2238, 0.0
    %v2397 = vmax.f32 %v2241, 0.0
    %v2398 = vmax.f32 %v2246, 0.0
    %v2399 = vmax.f32 %v2249, 0.0
    %v2400 = vmax.f32 %v2254, 0.0
    %v2401 = vmax.f32 %v2257, 0.0
    %v2402 = vmax.f32 %v2262, 0.0
    %v2403 = vmax.f32 %v2265, 0.0
    %v2404 = vmax.f32 %v2270, 0.0
    %v2405 = vmax.f32 %v2273, 0.0
    %v2406 = vmax.f32 %v2278, 0.0
    %v2407 = vmax.f32 %v2281, 0.0
    %v2408 = vmax.f32 %v2286, 0.0
    %v2409 = vmax.f32 %v2289, 0.0
    %v2410 = vmax.f32 %v2294, 0.0
    %v2411 = vmax.f32 %v2297, 0.0
    %v2412 = vmax.f32 %v2302, 0.0
    %v2413 = vmax.f32 %v2305, 0.0
    %v2414 = vmax.f32 %v2310, 0.0
    %v2415 = vmax.f32 %v2313, 0.0
    %v2416 = vmax.f32 %v2318, 0.0
    %v2417 = vmax.f32 %v2321, 0.0
    %v2418 = vmax.f32 %v2326, 0.0
    %v2419 = vmax.f32 %v2329, 0.0
    %v2420 = vmax.f32 %v2334, 0.0
    %v2421 = vmax.f32 %v2337, 0.0
    %v2422 = vmax.f32 %v2342, 0.0
    %v2423 = vmax.f32 %v2345, 0.0
    %v2424 = vmax.f32 %v2350, 0.0
    %v2425 = vmax.f32 %v2353, 0.0
    %v2426 = vmax.f32 %v2358, 0.0
    %v2427 = vmax.f32 %v2361, 0.0
    %v2428 = vpack.c.bf16 %v2365, %v2364
    %v2429 = vpack.c.bf16 %v2367, %v2366
    %v2430 = vpack.c.bf16 %v2369, %v2368
    %v2431 = vpack.c.bf16 %v2371, %v2370
    %v2432 = vpack.c.bf16 %v2373, %v2372
    %v2433 = vpack.c.bf16 %v2375, %v2374
    %v2434 = vpack.c.bf16 %v2377, %v2376
    %v2435 = vpack.c.bf16 %v2379, %v2378
    %v2436 = vpack.c.bf16 %v2381, %v2380
    %v2437 = vpack.c.bf16 %v2383, %v2382
    %v2438 = vpack.c.bf16 %v2385, %v2384
    %v2439 = vpack.c.bf16 %v2387, %v2386
    %v2440 = vpack.c.bf16 %v2389, %v2388
    %v2441 = vpack.c.bf16 %v2391, %v2390
    %v2442 = vpack.c.bf16 %v2393, %v2392
    %v2443 = vpack.c.bf16 %v2395, %v2394
    %v2444 = vpack.c.bf16 %v2397, %v2396
    %v2445 = vpack.c.bf16 %v2399, %v2398
    %v2446 = vpack.c.bf16 %v2401, %v2400
    %v2447 = vpack.c.bf16 %v2403, %v2402
    %v2448 = vpack.c.bf16 %v2405, %v2404
    %v2449 = vpack.c.bf16 %v2407, %v2406
    %v2450 = vpack.c.bf16 %v2409, %v2408
    %v2451 = vpack.c.bf16 %v2411, %v2410
    %v2452 = vpack.c.bf16 %v2413, %v2412
    %v2453 = vpack.c.bf16 %v2415, %v2414
    %v2454 = vpack.c.bf16 %v2417, %v2416
    %v2455 = vpack.c.bf16 %v2419, %v2418
    %v2456 = vpack.c.bf16 %v2421, %v2420
    %v2457 = vpack.c.bf16 %v2423, %v2422
    %v2458 = vpack.c.bf16 %v2425, %v2424
    %v2459 = vpack.c.bf16 %v2427, %v2426
    %v2460 = vld [vmem:[%s3] sm:$0xf]
    %v2461 = vld [vmem:[%s3 + $0x4] sm:$0xf]
    %v2462 = vld [vmem:[%s3 + $0x8] sm:$0xf]
    %v2463 = vld [vmem:[%s3 + $0xc] sm:$0xf]
    %v2464 = vld [vmem:[%s3 + $0x10] sm:$0xf]
    %v2465 = vld [vmem:[%s3 + $0x14] sm:$0xf]
    %v2466 = vld [vmem:[%s3 + $0x18] sm:$0xf]
    %v2467 = vld [vmem:[%s3 + $0x1c] sm:$0xf]
    %v2468 = vld [vmem:[%s3 + $0x20] sm:$0xf]
    %v2469 = vld [vmem:[%s3 + $0x24] sm:$0xf]
    %v2470 = vld [vmem:[%s3 + $0x28] sm:$0xf]
    %v2471 = vld [vmem:[%s3 + $0x2c] sm:$0xf]
    %v2472 = vld [vmem:[%s3 + $0x30] sm:$0xf]
    %v2473 = vld [vmem:[%s3 + $0x34] sm:$0xf]
    %v2474 = vld [vmem:[%s3 + $0x38] sm:$0xf]
    %v2475 = vld [vmem:[%s3 + $0x3c] sm:$0xf]
    %v2476 = vld [vmem:[%s4] sm:$0x1]
    %v2478 = vlaneseq
    %v2479 = vshrl.u32 %v2478, 7
    %v2480 = vsub.s32 0, %v2479
    %v2481 = vrot.slane %v2476, %v2480
    %v2499 = vunpack.c.l.b16 %v2460
    %v2500 = vunpack.c.l.b16 %v2461
    %v2501 = vunpack.c.l.b16 %v2462
    %v2502 = vunpack.c.l.b16 %v2463
    %v2503 = vunpack.c.l.b16 %v2464
    %v2504 = vunpack.c.l.b16 %v2465
    %v2505 = vunpack.c.l.b16 %v2466
    %v2506 = vunpack.c.l.b16 %v2467
    %v2507 = vunpack.c.l.b16 %v2468
    %v2508 = vunpack.c.l.b16 %v2469
    %v2509 = vunpack.c.l.b16 %v2470
    %v2510 = vunpack.c.l.b16 %v2471
    %v2511 = vunpack.c.l.b16 %v2472
    %v2512 = vunpack.c.l.b16 %v2473
    %v2513 = vunpack.c.l.b16 %v2474
    %v2514 = vunpack.c.l.b16 %v2475
    %v2515 = vpack.c.b16 %v2500, %v2499
    %v2516 = vpack.c.b16 %v2502, %v2501
    %v2517 = vpack.c.b16 %v2504, %v2503
    %v2518 = vpack.c.b16 %v2506, %v2505
    %v2519 = vpack.c.b16 %v2508, %v2507
    %v2520 = vpack.c.b16 %v2510, %v2509
    %v2521 = vpack.c.b16 %v2512, %v2511
    %v2522 = vpack.c.b16 %v2514, %v2513
    %2531 = vmatprep.subr.bf16.mxu0 0
    %2532 = vmatpush1.bf16.msra.mxu0 %v2515
    %2533 = vmatprep.subr.bf16.mxu0 0
    %2534 = vmatpush1.bf16.msra.mxu0 %v2516
    %2535 = vmatprep.subr.bf16.mxu0 0
    %2536 = vmatpush1.bf16.msra.mxu0 %v2517
    %2537 = vmatprep.subr.bf16.mxu0 0
    %2538 = vmatpush1.bf16.msra.mxu0 %v2518
    %2539 = vmatprep.subr.bf16.mxu0 0
    %2540 = vmatpush1.bf16.msra.mxu0 %v2519
    %2541 = vmatprep.subr.bf16.mxu0 0
    %2542 = vmatpush1.bf16.msra.mxu0 %v2520
    %2543 = vmatprep.subr.bf16.mxu0 0
    %2544 = vmatpush1.bf16.msra.mxu0 %v2521
    %2545 = vmatprep.subr.bf16.mxu0 0
    %2546 = vmatpush1.bf16.msra.mxu0 %v2522
    %2547 = vmatprep.subr.bf16.mxu0 0
    %2548 = vmatpush1.bf16.msra.mxu0 0
    %2549 = vmatprep.subr.bf16.mxu0 0
    %2550 = vmatpush1.bf16.msra.mxu0 0
    %2551 = vmatprep.subr.bf16.mxu0 0
    %2552 = vmatpush1.bf16.msra.mxu0 0
    %2553 = vmatprep.subr.bf16.mxu0 0
    %2554 = vmatpush1.bf16.msra.mxu0 0
    %2555 = vmatprep.subr.bf16.mxu0 0
    %2556 = vmatpush1.bf16.msra.mxu0 0
    %2557 = vmatprep.subr.bf16.mxu0 0
    %2558 = vmatpush1.bf16.msra.mxu0 0
    %2559 = vmatprep.subr.bf16.mxu0 0
    %2560 = vmatpush1.bf16.msra.mxu0 0
    %2561 = vmatprep.subr.bf16.mxu0 0
    %2562 = vmatpush1.bf16.msra.mxu0 0
    %2563 = vmatprep.mubr.bf16.mxu0 0
    %2564 = vmatmul.mubr.bf16.gmra.mrb[0].mxu0 %v2428
    %v2565 = vpop.f32.mrb[0].mxu0
    %v2566 = vadd.f32 %v2481, %v2565
    %v2567 = vpop.f32.mrb[0].mxu0
    %v2568 = vpop.f32.mrb[0].mxu0
    %v2569 = vadd.f32 %v2481, %v2568
    %v2570 = vpop.f32.mrb[0].mxu0
    %2571 = vmatprep.mubr.bf16.mxu0 0
    %2572 = vmatmul.mubr.bf16.gmra.mrb[0].mxu0 %v2429
    %v2573 = vpop.f32.mrb[0].mxu0
    %v2574 = vadd.f32 %v2481, %v2573
    %v2575 = vpop.f32.mrb[0].mxu0
    %v2576 = vpop.f32.mrb[0].mxu0
    %v2577 = vadd.f32 %v2481, %v2576
    %v2578 = vpop.f32.mrb[0].mxu0
    %2579 = vmatprep.mubr.bf16.mxu0 0
    %2580 = vmatmul.mubr.bf16.gmra.mrb[0].mxu0 %v2430
    %v2581 = vpop.f32.mrb[0].mxu0
    %v2582 = vadd.f32 %v2481, %v2581
    %v2583 = vpop.f32.mrb[0].mxu0
    %v2584 = vpop.f32.mrb[0].mxu0
    %v2585 = vadd.f32 %v2481, %v2584
    %v2586 = vpop.f32.mrb[0].mxu0
    %2587 = vmatprep.mubr.bf16.mxu0 0
    %2588 = vmatmul.mubr.bf16.gmra.mrb[0].mxu0 %v2431
    %v2589 = vpop.f32.mrb[0].mxu0
    %v2590 = vadd.f32 %v2481, %v2589
    %v2591 = vpop.f32.mrb[0].mxu0
    %v2592 = vpop.f32.mrb[0].mxu0
    %v2593 = vadd.f32 %v2481, %v2592
    %v2594 = vpop.f32.mrb[0].mxu0
    %2595 = vmatprep.mubr.bf16.mxu0 0
    %2596 = vmatmul.mubr.bf16.gmra.mrb[0].mxu0 %v2432
    %v2597 = vpop.f32.mrb[0].mxu0
    %v2598 = vadd.f32 %v2481, %v2597
    %v2599 = vpop.f32.mrb[0].mxu0
    %v2600 = vpop.f32.mrb[0].mxu0
    %v2601 = vadd.f32 %v2481, %v2600
    %v2602 = vpop.f32.mrb[0].mxu0
    %2603 = vmatprep.mubr.bf16.mxu0 0
    %2604 = vmatmul.mubr.bf16.gmra.mrb[0].mxu0 %v2433
    %v2605 = vpop.f32.mrb[0].mxu0
    %v2606 = vadd.f32 %v2481, %v2605
    %v2607 = vpop.f32.mrb[0].mxu0
    %v2608 = vpop.f32.mrb[0].mxu0
    %v2609 = vadd.f32 %v2481, %v2608
    %v2610 = vpop.f32.mrb[0].mxu0
    %2611 = vmatprep.mubr.bf16.mxu0 0
    %2612 = vmatmul.mubr.bf16.gmra.mrb[0].mxu0 %v2434
    %v2613 = vpop.f32.mrb[0].mxu0
    %v2614 = vadd.f32 %v2481, %v2613
    %v2615 = vpop.f32.mrb[0].mxu0
    %v2616 = vpop.f32.mrb[0].mxu0
    %v2617 = vadd.f32 %v2481, %v2616
    %v2618 = vpop.f32.mrb[0].mxu0
    %2619 = vmatprep.mubr.bf16.mxu0 0
    %2620 = vmatmul.mubr.bf16.gmra.mrb[0].mxu0 %v2435
    %v2621 = vpop.f32.mrb[0].mxu0
    %v2622 = vadd.f32 %v2481, %v2621
    %v2623 = vpop.f32.mrb[0].mxu0
    %v2624 = vpop.f32.mrb[0].mxu0
    %v2625 = vadd.f32 %v2481, %v2624
    %v2626 = vpop.f32.mrb[0].mxu0
    %2627 = vmatprep.mubr.bf16.mxu0 0
    %2628 = vmatmul.mubr.bf16.gmra.mrb[0].mxu0 %v2436
    %v2629 = vpop.f32.mrb[0].mxu0
    %v2630 = vadd.f32 %v2481, %v2629
    %v2631 = vpop.f32.mrb[0].mxu0
    %v2632 = vpop.f32.mrb[0].mxu0
    %v2633 = vadd.f32 %v2481, %v2632
    %v2634 = vpop.f32.mrb[0].mxu0
    %2635 = vmatprep.mubr.bf16.mxu0 0
    %2636 = vmatmul.mubr.bf16.gmra.mrb[0].mxu0 %v2437
    %v2637 = vpop.f32.mrb[0].mxu0
    %v2638 = vadd.f32 %v2481, %v2637
    %v2639 = vpop.f32.mrb[0].mxu0
    %v2640 = vpop.f32.mrb[0].mxu0
    %v2641 = vadd.f32 %v2481, %v2640
    %v2642 = vpop.f32.mrb[0].mxu0
    %2643 = vmatprep.mubr.bf16.mxu0 0
    %2644 = vmatmul.mubr.bf16.gmra.mrb[0].mxu0 %v2438
    %v2645 = vpop.f32.mrb[0].mxu0
    %v2646 = vadd.f32 %v2481, %v2645
    %v2647 = vpop.f32.mrb[0].mxu0
    %v2648 = vpop.f32.mrb[0].mxu0
    %v2649 = vadd.f32 %v2481, %v2648
    %v2650 = vpop.f32.mrb[0].mxu0
    %2651 = vmatprep.mubr.bf16.mxu0 0
    %2652 = vmatmul.mubr.bf16.gmra.mrb[0].mxu0 %v2439
    %v2653 = vpop.f32.mrb[0].mxu0
    %v2654 = vadd.f32 %v2481, %v2653
    %v2655 = vpop.f32.mrb[0].mxu0
    %v2656 = vpop.f32.mrb[0].mxu0
    %v2657 = vadd.f32 %v2481, %v2656
    %v2658 = vpop.f32.mrb[0].mxu0
    %2659 = vmatprep.mubr.bf16.mxu0 0
    %2660 = vmatmul.mubr.bf16.gmra.mrb[0].mxu0 %v2440
    %v2661 = vpop.f32.mrb[0].mxu0
    %v2662 = vadd.f32 %v2481, %v2661
    %v2663 = vpop.f32.mrb[0].mxu0
    %v2664 = vpop.f32.mrb[0].mxu0
    %v2665 = vadd.f32 %v2481, %v2664
    %v2666 = vpop.f32.mrb[0].mxu0
    %2667 = vmatprep.mubr.bf16.mxu0 0
    %2668 = vmatmul.mubr.bf16.gmra.mrb[0].mxu0 %v2441
    %v2669 = vpop.f32.mrb[0].mxu0
    %v2670 = vadd.f32 %v2481, %v2669
    %v2671 = vpop.f32.mrb[0].mxu0
    %v2672 = vpop.f32.mrb[0].mxu0
    %v2673 = vadd.f32 %v2481, %v2672
    %v2674 = vpop.f32.mrb[0].mxu0
    %2675 = vmatprep.mubr.bf16.mxu0 0
    %2676 = vmatmul.mubr.bf16.gmra.mrb[0].mxu0 %v2442
    %v2677 = vpop.f32.mrb[0].mxu0
    %v2678 = vadd.f32 %v2481, %v2677
    %v2679 = vpop.f32.mrb[0].mxu0
    %v2680 = vpop.f32.mrb[0].mxu0
    %v2681 = vadd.f32 %v2481, %v2680
    %v2682 = vpop.f32.mrb[0].mxu0
    %2683 = vmatprep.mubr.bf16.mxu0 0
    %2684 = vmatmul.mubr.bf16.gmra.mrb[0].mxu0 %v2443
    %v2685 = vpop.f32.mrb[0].mxu0
    %v2686 = vadd.f32 %v2481, %v2685
    %v2687 = vpop.f32.mrb[0].mxu0
    %v2688 = vpop.f32.mrb[0].mxu0
    %v2689 = vadd.f32 %v2481, %v2688
    %v2690 = vpop.f32.mrb[0].mxu0
    %2691 = vmatprep.mubr.bf16.mxu0 0
    %2692 = vmatmul.mubr.bf16.gmra.mrb[0].mxu0 %v2444
    %v2693 = vpop.f32.mrb[0].mxu0
    %v2694 = vadd.f32 %v2481, %v2693
    %v2695 = vpop.f32.mrb[0].mxu0
    %v2696 = vpop.f32.mrb[0].mxu0
    %v2697 = vadd.f32 %v2481, %v2696
    %v2698 = vpop.f32.mrb[0].mxu0
    %2699 = vmatprep.mubr.bf16.mxu0 0
    %2700 = vmatmul.mubr.bf16.gmra.mrb[0].mxu0 %v2445
    %v2701 = vpop.f32.mrb[0].mxu0
    %v2702 = vadd.f32 %v2481, %v2701
    %v2703 = vpop.f32.mrb[0].mxu0
    %v2704 = vpop.f32.mrb[0].mxu0
    %v2705 = vadd.f32 %v2481, %v2704
    %v2706 = vpop.f32.mrb[0].mxu0
    %2707 = vmatprep.mubr.bf16.mxu0 0
    %2708 = vmatmul.mubr.bf16.gmra.mrb[0].mxu0 %v2446
    %v2709 = vpop.f32.mrb[0].mxu0
    %v2710 = vadd.f32 %v2481, %v2709
    %v2711 = vpop.f32.mrb[0].mxu0
    %v2712 = vpop.f32.mrb[0].mxu0
    %v2713 = vadd.f32 %v2481, %v2712
    %v2714 = vpop.f32.mrb[0].mxu0
    %2715 = vmatprep.mubr.bf16.mxu0 0
    %2716 = vmatmul.mubr.bf16.gmra.mrb[0].mxu0 %v2447
    %v2717 = vpop.f32.mrb[0].mxu0
    %v2718 = vadd.f32 %v2481, %v2717
    %v2719 = vpop.f32.mrb[0].mxu0
    %v2720 = vpop.f32.mrb[0].mxu0
    %v2721 = vadd.f32 %v2481, %v2720
    %v2722 = vpop.f32.mrb[0].mxu0
    %2723 = vmatprep.mubr.bf16.mxu0 0
    %2724 = vmatmul.mubr.bf16.gmra.mrb[0].mxu0 %v2448
    %v2725 = vpop.f32.mrb[0].mxu0
    %v2726 = vadd.f32 %v2481, %v2725
    %v2727 = vpop.f32.mrb[0].mxu0
    %v2728 = vpop.f32.mrb[0].mxu0
    %v2729 = vadd.f32 %v2481, %v2728
    %v2730 = vpop.f32.mrb[0].mxu0
    %2731 = vmatprep.mubr.bf16.mxu0 0
    %2732 = vmatmul.mubr.bf16.gmra.mrb[0].mxu0 %v2449
    %v2733 = vpop.f32.mrb[0].mxu0
    %v2734 = vadd.f32 %v2481, %v2733
    %v2735 = vpop.f32.mrb[0].mxu0
    %v2736 = vpop.f32.mrb[0].mxu0
    %v2737 = vadd.f32 %v2481, %v2736
    %v2738 = vpop.f32.mrb[0].mxu0
    %2739 = vmatprep.mubr.bf16.mxu0 0
    %2740 = vmatmul.mubr.bf16.gmra.mrb[0].mxu0 %v2450
    %v2741 = vpop.f32.mrb[0].mxu0
    %v2742 = vadd.f32 %v2481, %v2741
    %v2743 = vpop.f32.mrb[0].mxu0
    %v2744 = vpop.f32.mrb[0].mxu0
    %v2745 = vadd.f32 %v2481, %v2744
    %v2746 = vpop.f32.mrb[0].mxu0
    %2747 = vmatprep.mubr.bf16.mxu0 0
    %2748 = vmatmul.mubr.bf16.gmra.mrb[0].mxu0 %v2451
    %v2749 = vpop.f32.mrb[0].mxu0
    %v2750 = vadd.f32 %v2481, %v2749
    %v2751 = vpop.f32.mrb[0].mxu0
    %v2752 = vpop.f32.mrb[0].mxu0
    %v2753 = vadd.f32 %v2481, %v2752
    %v2754 = vpop.f32.mrb[0].mxu0
    %2755 = vmatprep.mubr.bf16.mxu0 0
    %2756 = vmatmul.mubr.bf16.gmra.mrb[0].mxu0 %v2452
    %v2757 = vpop.f32.mrb[0].mxu0
    %v2758 = vadd.f32 %v2481, %v2757
    %v2759 = vpop.f32.mrb[0].mxu0
    %v2760 = vpop.f32.mrb[0].mxu0
    %v2761 = vadd.f32 %v2481, %v2760
    %v2762 = vpop.f32.mrb[0].mxu0
    %2763 = vmatprep.mubr.bf16.mxu0 0
    %2764 = vmatmul.mubr.bf16.gmra.mrb[0].mxu0 %v2453
    %v2765 = vpop.f32.mrb[0].mxu0
    %v2766 = vadd.f32 %v2481, %v2765
    %v2767 = vpop.f32.mrb[0].mxu0
    %v2768 = vpop.f32.mrb[0].mxu0
    %v2769 = vadd.f32 %v2481, %v2768
    %v2770 = vpop.f32.mrb[0].mxu0
    %2771 = vmatprep.mubr.bf16.mxu0 0
    %2772 = vmatmul.mubr.bf16.gmra.mrb[0].mxu0 %v2454
    %v2773 = vpop.f32.mrb[0].mxu0
    %v2774 = vadd.f32 %v2481, %v2773
    %v2775 = vpop.f32.mrb[0].mxu0
    %v2776 = vpop.f32.mrb[0].mxu0
    %v2777 = vadd.f32 %v2481, %v2776
    %v2778 = vpop.f32.mrb[0].mxu0
    %2779 = vmatprep.mubr.bf16.mxu0 0
    %2780 = vmatmul.mubr.bf16.gmra.mrb[0].mxu0 %v2455
    %v2781 = vpop.f32.mrb[0].mxu0
    %v2782 = vadd.f32 %v2481, %v2781
    %v2783 = vpop.f32.mrb[0].mxu0
    %v2784 = vpop.f32.mrb[0].mxu0
    %v2785 = vadd.f32 %v2481, %v2784
    %v2786 = vpop.f32.mrb[0].mxu0
    %2787 = vmatprep.mubr.bf16.mxu0 0
    %2788 = vmatmul.mubr.bf16.gmra.mrb[0].mxu0 %v2456
    %v2789 = vpop.f32.mrb[0].mxu0
    %v2790 = vadd.f32 %v2481, %v2789
    %v2791 = vpop.f32.mrb[0].mxu0
    %v2792 = vpop.f32.mrb[0].mxu0
    %v2793 = vadd.f32 %v2481, %v2792
    %v2794 = vpop.f32.mrb[0].mxu0
    %2795 = vmatprep.mubr.bf16.mxu0 0
    %2796 = vmatmul.mubr.bf16.gmra.mrb[0].mxu0 %v2457
    %v2797 = vpop.f32.mrb[0].mxu0
    %v2798 = vadd.f32 %v2481, %v2797
    %v2799 = vpop.f32.mrb[0].mxu0
    %v2800 = vpop.f32.mrb[0].mxu0
    %v2801 = vadd.f32 %v2481, %v2800
    %v2802 = vpop.f32.mrb[0].mxu0
    %2803 = vmatprep.mubr.bf16.mxu0 0
    %2804 = vmatmul.mubr.bf16.gmra.mrb[0].mxu0 %v2458
    %v2805 = vpop.f32.mrb[0].mxu0
    %v2806 = vadd.f32 %v2481, %v2805
    %v2807 = vpop.f32.mrb[0].mxu0
    %v2808 = vpop.f32.mrb[0].mxu0
    %v2809 = vadd.f32 %v2481, %v2808
    %v2810 = vpop.f32.mrb[0].mxu0
    %2811 = vmatprep.mubr.bf16.mxu0 0
    %2812 = vmatmul.mubr.bf16.gmra.mrb[0].mxu0 %v2459
    %v2813 = vpop.f32.mrb[0].mxu0
    %v2814 = vadd.f32 %v2481, %v2813
    %v2815 = vpop.f32.mrb[0].mxu0
    %v2816 = vpop.f32.mrb[0].mxu0
    %v2817 = vadd.f32 %v2481, %v2816
    %v2818 = vpop.f32.mrb[0].mxu0
    %2819 = vdwg.mxu0
    %v2820 = vmax.f32 %v2566, 0.0
    %v2821 = vmax.f32 %v2569, 0.0
    %v2822 = vmax.f32 %v2574, 0.0
    %v2823 = vmax.f32 %v2577, 0.0
    %v2824 = vmax.f32 %v2582, 0.0
    %v2825 = vmax.f32 %v2585, 0.0
    %v2826 = vmax.f32 %v2590, 0.0
    %v2827 = vmax.f32 %v2593, 0.0
    %v2828 = vmax.f32 %v2598, 0.0
    %v2829 = vmax.f32 %v2601, 0.0
    %v2830 = vmax.f32 %v2606, 0.0
    %v2831 = vmax.f32 %v2609, 0.0
    %v2832 = vmax.f32 %v2614, 0.0
    %v2833 = vmax.f32 %v2617, 0.0
    %v2834 = vmax.f32 %v2622, 0.0
    %v2835 = vmax.f32 %v2625, 0.0
    %v2836 = vmax.f32 %v2630, 0.0
    %v2837 = vmax.f32 %v2633, 0.0
    %v2838 = vmax.f32 %v2638, 0.0
    %v2839 = vmax.f32 %v2641, 0.0
    %v2840 = vmax.f32 %v2646, 0.0
    %v2841 = vmax.f32 %v2649, 0.0
    %v2842 = vmax.f32 %v2654, 0.0
    %v2843 = vmax.f32 %v2657, 0.0
    %v2844 = vmax.f32 %v2662, 0.0
    %v2845 = vmax.f32 %v2665, 0.0
    %v2846 = vmax.f32 %v2670, 0.0
    %v2847 = vmax.f32 %v2673, 0.0
    %v2848 = vmax.f32 %v2678, 0.0
    %v2849 = vmax.f32 %v2681, 0.0
    %v2850 = vmax.f32 %v2686, 0.0
    %v2851 = vmax.f32 %v2689, 0.0
    %v2852 = vmax.f32 %v2694, 0.0
    %v2853 = vmax.f32 %v2697, 0.0
    %v2854 = vmax.f32 %v2702, 0.0
    %v2855 = vmax.f32 %v2705, 0.0
    %v2856 = vmax.f32 %v2710, 0.0
    %v2857 = vmax.f32 %v2713, 0.0
    %v2858 = vmax.f32 %v2718, 0.0
    %v2859 = vmax.f32 %v2721, 0.0
    %v2860 = vmax.f32 %v2726, 0.0
    %v2861 = vmax.f32 %v2729, 0.0
    %v2862 = vmax.f32 %v2734, 0.0
    %v2863 = vmax.f32 %v2737, 0.0
    %v2864 = vmax.f32 %v2742, 0.0
    %v2865 = vmax.f32 %v2745, 0.0
    %v2866 = vmax.f32 %v2750, 0.0
    %v2867 = vmax.f32 %v2753, 0.0
    %v2868 = vmax.f32 %v2758, 0.0
    %v2869 = vmax.f32 %v2761, 0.0
    %v2870 = vmax.f32 %v2766, 0.0
    %v2871 = vmax.f32 %v2769, 0.0
    %v2872 = vmax.f32 %v2774, 0.0
    %v2873 = vmax.f32 %v2777, 0.0
    %v2874 = vmax.f32 %v2782, 0.0
    %v2875 = vmax.f32 %v2785, 0.0
    %v2876 = vmax.f32 %v2790, 0.0
    %v2877 = vmax.f32 %v2793, 0.0
    %v2878 = vmax.f32 %v2798, 0.0
    %v2879 = vmax.f32 %v2801, 0.0
    %v2880 = vmax.f32 %v2806, 0.0
    %v2881 = vmax.f32 %v2809, 0.0
    %v2882 = vmax.f32 %v2814, 0.0
    %v2883 = vmax.f32 %v2817, 0.0
    %v2884 = vpack.c.bf16 %v2821, %v2820
    %v2885 = vpack.c.bf16 %v2823, %v2822
    %v2886 = vpack.c.bf16 %v2825, %v2824
    %v2887 = vpack.c.bf16 %v2827, %v2826
    %v2888 = vpack.c.bf16 %v2829, %v2828
    %v2889 = vpack.c.bf16 %v2831, %v2830
    %v2890 = vpack.c.bf16 %v2833, %v2832
    %v2891 = vpack.c.bf16 %v2835, %v2834
    %v2892 = vpack.c.bf16 %v2837, %v2836
    %v2893 = vpack.c.bf16 %v2839, %v2838
    %v2894 = vpack.c.bf16 %v2841, %v2840
    %v2895 = vpack.c.bf16 %v2843, %v2842
    %v2896 = vpack.c.bf16 %v2845, %v2844
    %v2897 = vpack.c.bf16 %v2847, %v2846
    %v2898 = vpack.c.bf16 %v2849, %v2848
    %v2899 = vpack.c.bf16 %v2851, %v2850
    %v2900 = vpack.c.bf16 %v2853, %v2852
    %v2901 = vpack.c.bf16 %v2855, %v2854
    %v2902 = vpack.c.bf16 %v2857, %v2856
    %v2903 = vpack.c.bf16 %v2859, %v2858
    %v2904 = vpack.c.bf16 %v2861, %v2860
    %v2905 = vpack.c.bf16 %v2863, %v2862
    %v2906 = vpack.c.bf16 %v2865, %v2864
    %v2907 = vpack.c.bf16 %v2867, %v2866
    %v2908 = vpack.c.bf16 %v2869, %v2868
    %v2909 = vpack.c.bf16 %v2871, %v2870
    %v2910 = vpack.c.bf16 %v2873, %v2872
    %v2911 = vpack.c.bf16 %v2875, %v2874
    %v2912 = vpack.c.bf16 %v2877, %v2876
    %v2913 = vpack.c.bf16 %v2879, %v2878
    %v2914 = vpack.c.bf16 %v2881, %v2880
    %v2915 = vpack.c.bf16 %v2883, %v2882
    %v2916 = vld [vmem:[%s5] sm:$0xf]
    %v2917 = vld [vmem:[%s5 + $0x4] sm:$0xf]
    %v2918 = vld [vmem:[%s5 + $0x8] sm:$0xf]
    %v2919 = vld [vmem:[%s5 + $0xc] sm:$0xf]
    %v2920 = vld [vmem:[%s5 + $0x10] sm:$0xf]
    %v2921 = vld [vmem:[%s5 + $0x14] sm:$0xf]
    %v2922 = vld [vmem:[%s5 + $0x18] sm:$0xf]
    %v2923 = vld [vmem:[%s5 + $0x1c] sm:$0xf]
    %v2924 = vld [vmem:[%s5 + $0x20] sm:$0xf]
    %v2925 = vld [vmem:[%s5 + $0x24] sm:$0xf]
    %v2926 = vld [vmem:[%s5 + $0x28] sm:$0xf]
    %v2927 = vld [vmem:[%s5 + $0x2c] sm:$0xf]
    %v2928 = vld [vmem:[%s5 + $0x30] sm:$0xf]
    %v2929 = vld [vmem:[%s5 + $0x34] sm:$0xf]
    %v2930 = vld [vmem:[%s5 + $0x38] sm:$0xf]
    %v2931 = vld [vmem:[%s5 + $0x3c] sm:$0xf]
    %v2932 = vld [vmem:[%s6] sm:$0x1]
    %v2934 = vlaneseq
    %v2935 = vshrl.u32 %v2934, 7
    %v2936 = vsub.s32 0, %v2935
    %v2937 = vrot.slane %v2932, %v2936
    %v2955 = vunpack.c.l.b16 %v2916
    %v2956 = vunpack.c.l.b16 %v2917
    %v2957 = vunpack.c.l.b16 %v2918
    %v2958 = vunpack.c.l.b16 %v2919
    %v2959 = vunpack.c.l.b16 %v2920
    %v2960 = vunpack.c.l.b16 %v2921
    %v2961 = vunpack.c.l.b16 %v2922
    %v2962 = vunpack.c.l.b16 %v2923
    %v2963 = vunpack.c.l.b16 %v2924
    %v2964 = vunpack.c.l.b16 %v2925
    %v2965 = vunpack.c.l.b16 %v2926
    %v2966 = vunpack.c.l.b16 %v2927
    %v2967 = vunpack.c.l.b16 %v2928
    %v2968 = vunpack.c.l.b16 %v2929
    %v2969 = vunpack.c.l.b16 %v2930
    %v2970 = vunpack.c.l.b16 %v2931
    %v2971 = vpack.c.b16 %v2956, %v2955
    %v2972 = vpack.c.b16 %v2958, %v2957
    %v2973 = vpack.c.b16 %v2960, %v2959
    %v2974 = vpack.c.b16 %v2962, %v2961
    %v2975 = vpack.c.b16 %v2964, %v2963
    %v2976 = vpack.c.b16 %v2966, %v2965
    %v2977 = vpack.c.b16 %v2968, %v2967
    %v2978 = vpack.c.b16 %v2970, %v2969
    %2987 = vmatprep.subr.bf16.mxu0 0
    %2988 = vmatpush1.bf16.msra.mxu0 %v2971
    %2989 = vmatprep.subr.bf16.mxu0 0
    %2990 = vmatpush1.bf16.msra.mxu0 %v2972
    %2991 = vmatprep.subr.bf16.mxu0 0
    %2992 = vmatpush1.bf16.msra.mxu0 %v2973
    %2993 = vmatprep.subr.bf16.mxu0 0
    %2994 = vmatpush1.bf16.msra.mxu0 %v2974
    %2995 = vmatprep.subr.bf16.mxu0 0
    %2996 = vmatpush1.bf16.msra.mxu0 %v2975
    %2997 = vmatprep.subr.bf16.mxu0 0
    %2998 = vmatpush1.bf16.msra.mxu0 %v2976
    %2999 = vmatprep.subr.bf16.mxu0 0
    %3000 = vmatpush1.bf16.msra.mxu0 %v2977
    %3001 = vmatprep.subr.bf16.mxu0 0
    %3002 = vmatpush1.bf16.msra.mxu0 %v2978
    %3003 = vmatprep.subr.bf16.mxu0 0
    %3004 = vmatpush1.bf16.msra.mxu0 0
    %3005 = vmatprep.subr.bf16.mxu0 0
    %3006 = vmatpush1.bf16.msra.mxu0 0
    %3007 = vmatprep.subr.bf16.mxu0 0
    %3008 = vmatpush1.bf16.msra.mxu0 0
    %3009 = vmatprep.subr.bf16.mxu0 0
    %3010 = vmatpush1.bf16.msra.mxu0 0
    %3011 = vmatprep.subr.bf16.mxu0 0
    %3012 = vmatpush1.bf16.msra.mxu0 0
    %3013 = vmatprep.subr.bf16.mxu0 0
    %3014 = vmatpush1.bf16.msra.mxu0 0
    %3015 = vmatprep.subr.bf16.mxu0 0
    %3016 = vmatpush1.bf16.msra.mxu0 0
    %3017 = vmatprep.subr.bf16.mxu0 0
    %3018 = vmatpush1.bf16.msra.mxu0 0
    %3019 = vmatprep.mubr.bf16.mxu0 0
    %3020 = vmatmul.mubr.bf16.gmra.mrb[0].mxu0 %v2884
    %v3021 = vpop.f32.mrb[0].mxu0
    %v3022 = vadd.f32 %v2937, %v3021
    %v3023 = vpop.f32.mrb[0].mxu0
    %v3024 = vpop.f32.mrb[0].mxu0
    %v3025 = vadd.f32 %v2937, %v3024
    %v3026 = vpop.f32.mrb[0].mxu0
    %3027 = vmatprep.mubr.bf16.mxu0 0
    %3028 = vmatmul.mubr.bf16.gmra.mrb[0].mxu0 %v2885
    %v3029 = vpop.f32.mrb[0].mxu0
    %v3030 = vadd.f32 %v2937, %v3029
    %v3031 = vpop.f32.mrb[0].mxu0
    %v3032 = vpop.f32.mrb[0].mxu0
    %v3033 = vadd.f32 %v2937, %v3032
    %v3034 = vpop.f32.mrb[0].mxu0
    %3035 = vmatprep.mubr.bf16.mxu0 0
    %3036 = vmatmul.mubr.bf16.gmra.mrb[0].mxu0 %v2886
    %v3037 = vpop.f32.mrb[0].mxu0
    %v3038 = vadd.f32 %v2937, %v3037
    %v3039 = vpop.f32.mrb[0].mxu0
    %v3040 = vpop.f32.mrb[0].mxu0
    %v3041 = vadd.f32 %v2937, %v3040
    %v3042 = vpop.f32.mrb[0].mxu0
    %3043 = vmatprep.mubr.bf16.mxu0 0
    %3044 = vmatmul.mubr.bf16.gmra.mrb[0].mxu0 %v2887
    %v3045 = vpop.f32.mrb[0].mxu0
    %v3046 = vadd.f32 %v2937, %v3045
    %v3047 = vpop.f32.mrb[0].mxu0
    %v3048 = vpop.f32.mrb[0].mxu0
    %v3049 = vadd.f32 %v2937, %v3048
    %v3050 = vpop.f32.mrb[0].mxu0
    %3051 = vmatprep.mubr.bf16.mxu0 0
    %3052 = vmatmul.mubr.bf16.gmra.mrb[0].mxu0 %v2888
    %v3053 = vpop.f32.mrb[0].mxu0
    %v3054 = vadd.f32 %v2937, %v3053
    %v3055 = vpop.f32.mrb[0].mxu0
    %v3056 = vpop.f32.mrb[0].mxu0
    %v3057 = vadd.f32 %v2937, %v3056
    %v3058 = vpop.f32.mrb[0].mxu0
    %3059 = vmatprep.mubr.bf16.mxu0 0
    %3060 = vmatmul.mubr.bf16.gmra.mrb[0].mxu0 %v2889
    %v3061 = vpop.f32.mrb[0].mxu0
    %v3062 = vadd.f32 %v2937, %v3061
    %v3063 = vpop.f32.mrb[0].mxu0
    %v3064 = vpop.f32.mrb[0].mxu0
    %v3065 = vadd.f32 %v2937, %v3064
    %v3066 = vpop.f32.mrb[0].mxu0
    %3067 = vmatprep.mubr.bf16.mxu0 0
    %3068 = vmatmul.mubr.bf16.gmra.mrb[0].mxu0 %v2890
    %v3069 = vpop.f32.mrb[0].mxu0
    %v3070 = vadd.f32 %v2937, %v3069
    %v3071 = vpop.f32.mrb[0].mxu0
    %v3072 = vpop.f32.mrb[0].mxu0
    %v3073 = vadd.f32 %v2937, %v3072
    %v3074 = vpop.f32.mrb[0].mxu0
    %3075 = vmatprep.mubr.bf16.mxu0 0
    %3076 = vmatmul.mubr.bf16.gmra.mrb[0].mxu0 %v2891
    %v3077 = vpop.f32.mrb[0].mxu0
    %v3078 = vadd.f32 %v2937, %v3077
    %v3079 = vpop.f32.mrb[0].mxu0
    %v3080 = vpop.f32.mrb[0].mxu0
    %v3081 = vadd.f32 %v2937, %v3080
    %v3082 = vpop.f32.mrb[0].mxu0
    %3083 = vmatprep.mubr.bf16.mxu0 0
    %3084 = vmatmul.mubr.bf16.gmra.mrb[0].mxu0 %v2892
    %v3085 = vpop.f32.mrb[0].mxu0
    %v3086 = vadd.f32 %v2937, %v3085
    %v3087 = vpop.f32.mrb[0].mxu0
    %v3088 = vpop.f32.mrb[0].mxu0
    %v3089 = vadd.f32 %v2937, %v3088
    %v3090 = vpop.f32.mrb[0].mxu0
    %3091 = vmatprep.mubr.bf16.mxu0 0
    %3092 = vmatmul.mubr.bf16.gmra.mrb[0].mxu0 %v2893
    %v3093 = vpop.f32.mrb[0].mxu0
    %v3094 = vadd.f32 %v2937, %v3093
    %v3095 = vpop.f32.mrb[0].mxu0
    %v3096 = vpop.f32.mrb[0].mxu0
    %v3097 = vadd.f32 %v2937, %v3096
    %v3098 = vpop.f32.mrb[0].mxu0
    %3099 = vmatprep.mubr.bf16.mxu0 0
    %3100 = vmatmul.mubr.bf16.gmra.mrb[0].mxu0 %v2894
    %v3101 = vpop.f32.mrb[0].mxu0
    %v3102 = vadd.f32 %v2937, %v3101
    %v3103 = vpop.f32.mrb[0].mxu0
    %v3104 = vpop.f32.mrb[0].mxu0
    %v3105 = vadd.f32 %v2937, %v3104
    %v3106 = vpop.f32.mrb[0].mxu0
    %3107 = vmatprep.mubr.bf16.mxu0 0
    %3108 = vmatmul.mubr.bf16.gmra.mrb[0].mxu0 %v2895
    %v3109 = vpop.f32.mrb[0].mxu0
    %v3110 = vadd.f32 %v2937, %v3109
    %v3111 = vpop.f32.mrb[0].mxu0
    %v3112 = vpop.f32.mrb[0].mxu0
    %v3113 = vadd.f32 %v2937, %v3112
    %v3114 = vpop.f32.mrb[0].mxu0
    %3115 = vmatprep.mubr.bf16.mxu0 0
    %3116 = vmatmul.mubr.bf16.gmra.mrb[0].mxu0 %v2896
    %v3117 = vpop.f32.mrb[0].mxu0
    %v3118 = vadd.f32 %v2937, %v3117
    %v3119 = vpop.f32.mrb[0].mxu0
    %v3120 = vpop.f32.mrb[0].mxu0
    %v3121 = vadd.f32 %v2937, %v3120
    %v3122 = vpop.f32.mrb[0].mxu0
    %3123 = vmatprep.mubr.bf16.mxu0 0
    %3124 = vmatmul.mubr.bf16.gmra.mrb[0].mxu0 %v2897
    %v3125 = vpop.f32.mrb[0].mxu0
    %v3126 = vadd.f32 %v2937, %v3125
    %v3127 = vpop.f32.mrb[0].mxu0
    %v3128 = vpop.f32.mrb[0].mxu0
    %v3129 = vadd.f32 %v2937, %v3128
    %v3130 = vpop.f32.mrb[0].mxu0
    %3131 = vmatprep.mubr.bf16.mxu0 0
    %3132 = vmatmul.mubr.bf16.gmra.mrb[0].mxu0 %v2898
    %v3133 = vpop.f32.mrb[0].mxu0
    %v3134 = vadd.f32 %v2937, %v3133
    %v3135 = vpop.f32.mrb[0].mxu0
    %v3136 = vpop.f32.mrb[0].mxu0
    %v3137 = vadd.f32 %v2937, %v3136
    %v3138 = vpop.f32.mrb[0].mxu0
    %3139 = vmatprep.mubr.bf16.mxu0 0
    %3140 = vmatmul.mubr.bf16.gmra.mrb[0].mxu0 %v2899
    %v3141 = vpop.f32.mrb[0].mxu0
    %v3142 = vadd.f32 %v2937, %v3141
    %v3143 = vpop.f32.mrb[0].mxu0
    %v3144 = vpop.f32.mrb[0].mxu0
    %v3145 = vadd.f32 %v2937, %v3144
    %v3146 = vpop.f32.mrb[0].mxu0
    %3147 = vmatprep.mubr.bf16.mxu0 0
    %3148 = vmatmul.mubr.bf16.gmra.mrb[0].mxu0 %v2900
    %v3149 = vpop.f32.mrb[0].mxu0
    %v3150 = vadd.f32 %v2937, %v3149
    %v3151 = vpop.f32.mrb[0].mxu0
    %v3152 = vpop.f32.mrb[0].mxu0
    %v3153 = vadd.f32 %v2937, %v3152
    %v3154 = vpop.f32.mrb[0].mxu0
    %3155 = vmatprep.mubr.bf16.mxu0 0
    %3156 = vmatmul.mubr.bf16.gmra.mrb[0].mxu0 %v2901
    %v3157 = vpop.f32.mrb[0].mxu0
    %v3158 = vadd.f32 %v2937, %v3157
    %v3159 = vpop.f32.mrb[0].mxu0
    %v3160 = vpop.f32.mrb[0].mxu0
    %v3161 = vadd.f32 %v2937, %v3160
    %v3162 = vpop.f32.mrb[0].mxu0
    %3163 = vmatprep.mubr.bf16.mxu0 0
    %3164 = vmatmul.mubr.bf16.gmra.mrb[0].mxu0 %v2902
    %v3165 = vpop.f32.mrb[0].mxu0
    %v3166 = vadd.f32 %v2937, %v3165
    %v3167 = vpop.f32.mrb[0].mxu0
    %v3168 = vpop.f32.mrb[0].mxu0
    %v3169 = vadd.f32 %v2937, %v3168
    %v3170 = vpop.f32.mrb[0].mxu0
    %3171 = vmatprep.mubr.bf16.mxu0 0
    %3172 = vmatmul.mubr.bf16.gmra.mrb[0].mxu0 %v2903
    %v3173 = vpop.f32.mrb[0].mxu0
    %v3174 = vadd.f32 %v2937, %v3173
    %v3175 = vpop.f32.mrb[0].mxu0
    %v3176 = vpop.f32.mrb[0].mxu0
    %v3177 = vadd.f32 %v2937, %v3176
    %v3178 = vpop.f32.mrb[0].mxu0
    %3179 = vmatprep.mubr.bf16.mxu0 0
    %3180 = vmatmul.mubr.bf16.gmra.mrb[0].mxu0 %v2904
    %v3181 = vpop.f32.mrb[0].mxu0
    %v3182 = vadd.f32 %v2937, %v3181
    %v3183 = vpop.f32.mrb[0].mxu0
    %v3184 = vpop.f32.mrb[0].mxu0
    %v3185 = vadd.f32 %v2937, %v3184
    %v3186 = vpop.f32.mrb[0].mxu0
    %3187 = vmatprep.mubr.bf16.mxu0 0
    %3188 = vmatmul.mubr.bf16.gmra.mrb[0].mxu0 %v2905
    %v3189 = vpop.f32.mrb[0].mxu0
    %v3190 = vadd.f32 %v2937, %v3189
    %v3191 = vpop.f32.mrb[0].mxu0
    %v3192 = vpop.f32.mrb[0].mxu0
    %v3193 = vadd.f32 %v2937, %v3192
    %v3194 = vpop.f32.mrb[0].mxu0
    %3195 = vmatprep.mubr.bf16.mxu0 0
    %3196 = vmatmul.mubr.bf16.gmra.mrb[0].mxu0 %v2906
    %v3197 = vpop.f32.mrb[0].mxu0
    %v3198 = vadd.f32 %v2937, %v3197
    %v3199 = vpop.f32.mrb[0].mxu0
    %v3200 = vpop.f32.mrb[0].mxu0
    %v3201 = vadd.f32 %v2937, %v3200
    %v3202 = vpop.f32.mrb[0].mxu0
    %3203 = vmatprep.mubr.bf16.mxu0 0
    %3204 = vmatmul.mubr.bf16.gmra.mrb[0].mxu0 %v2907
    %v3205 = vpop.f32.mrb[0].mxu0
    %v3206 = vadd.f32 %v2937, %v3205
    %v3207 = vpop.f32.mrb[0].mxu0
    %v3208 = vpop.f32.mrb[0].mxu0
    %v3209 = vadd.f32 %v2937, %v3208
    %v3210 = vpop.f32.mrb[0].mxu0
    %3211 = vmatprep.mubr.bf16.mxu0 0
    %3212 = vmatmul.mubr.bf16.gmra.mrb[0].mxu0 %v2908
    %v3213 = vpop.f32.mrb[0].mxu0
    %v3214 = vadd.f32 %v2937, %v3213
    %v3215 = vpop.f32.mrb[0].mxu0
    %v3216 = vpop.f32.mrb[0].mxu0
    %v3217 = vadd.f32 %v2937, %v3216
    %v3218 = vpop.f32.mrb[0].mxu0
    %3219 = vmatprep.mubr.bf16.mxu0 0
    %3220 = vmatmul.mubr.bf16.gmra.mrb[0].mxu0 %v2909
    %v3221 = vpop.f32.mrb[0].mxu0
    %v3222 = vadd.f32 %v2937, %v3221
    %v3223 = vpop.f32.mrb[0].mxu0
    %v3224 = vpop.f32.mrb[0].mxu0
    %v3225 = vadd.f32 %v2937, %v3224
    %v3226 = vpop.f32.mrb[0].mxu0
    %3227 = vmatprep.mubr.bf16.mxu0 0
    %3228 = vmatmul.mubr.bf16.gmra.mrb[0].mxu0 %v2910
    %v3229 = vpop.f32.mrb[0].mxu0
    %v3230 = vadd.f32 %v2937, %v3229
    %v3231 = vpop.f32.mrb[0].mxu0
    %v3232 = vpop.f32.mrb[0].mxu0
    %v3233 = vadd.f32 %v2937, %v3232
    %v3234 = vpop.f32.mrb[0].mxu0
    %3235 = vmatprep.mubr.bf16.mxu0 0
    %3236 = vmatmul.mubr.bf16.gmra.mrb[0].mxu0 %v2911
    %v3237 = vpop.f32.mrb[0].mxu0
    %v3238 = vadd.f32 %v2937, %v3237
    %v3239 = vpop.f32.mrb[0].mxu0
    %v3240 = vpop.f32.mrb[0].mxu0
    %v3241 = vadd.f32 %v2937, %v3240
    %v3242 = vpop.f32.mrb[0].mxu0
    %3243 = vmatprep.mubr.bf16.mxu0 0
    %3244 = vmatmul.mubr.bf16.gmra.mrb[0].mxu0 %v2912
    %v3245 = vpop.f32.mrb[0].mxu0
    %v3246 = vadd.f32 %v2937, %v3245
    %v3247 = vpop.f32.mrb[0].mxu0
    %v3248 = vpop.f32.mrb[0].mxu0
    %v3249 = vadd.f32 %v2937, %v3248
    %v3250 = vpop.f32.mrb[0].mxu0
    %3251 = vmatprep.mubr.bf16.mxu0 0
    %3252 = vmatmul.mubr.bf16.gmra.mrb[0].mxu0 %v2913
    %v3253 = vpop.f32.mrb[0].mxu0
    %v3254 = vadd.f32 %v2937, %v3253
    %v3255 = vpop.f32.mrb[0].mxu0
    %v3256 = vpop.f32.mrb[0].mxu0
    %v3257 = vadd.f32 %v2937, %v3256
    %v3258 = vpop.f32.mrb[0].mxu0
    %3259 = vmatprep.mubr.bf16.mxu0 0
    %3260 = vmatmul.mubr.bf16.gmra.mrb[0].mxu0 %v2914
    %v3261 = vpop.f32.mrb[0].mxu0
    %v3262 = vadd.f32 %v2937, %v3261
    %v3263 = vpop.f32.mrb[0].mxu0
    %v3264 = vpop.f32.mrb[0].mxu0
    %v3265 = vadd.f32 %v2937, %v3264
    %v3266 = vpop.f32.mrb[0].mxu0
    %3267 = vmatprep.mubr.bf16.mxu0 0
    %3268 = vmatmul.mubr.bf16.gmra.mrb[0].mxu0 %v2915
    %v3269 = vpop.f32.mrb[0].mxu0
    %v3270 = vadd.f32 %v2937, %v3269
    %v3271 = vpop.f32.mrb[0].mxu0
    %v3272 = vpop.f32.mrb[0].mxu0
    %v3273 = vadd.f32 %v2937, %v3272
    %v3274 = vpop.f32.mrb[0].mxu0
    %3275 = vdwg.mxu0
    %v3276 = vmax.f32 %v3022, 0.0
    %v3277 = vmax.f32 %v3025, 0.0
    %v3278 = vmax.f32 %v3030, 0.0
    %v3279 = vmax.f32 %v3033, 0.0
    %v3280 = vmax.f32 %v3038, 0.0
    %v3281 = vmax.f32 %v3041, 0.0
    %v3282 = vmax.f32 %v3046, 0.0
    %v3283 = vmax.f32 %v3049, 0.0
    %v3284 = vmax.f32 %v3054, 0.0
    %v3285 = vmax.f32 %v3057, 0.0
    %v3286 = vmax.f32 %v3062, 0.0
    %v3287 = vmax.f32 %v3065, 0.0
    %v3288 = vmax.f32 %v3070, 0.0
    %v3289 = vmax.f32 %v3073, 0.0
    %v3290 = vmax.f32 %v3078, 0.0
    %v3291 = vmax.f32 %v3081, 0.0
    %v3292 = vmax.f32 %v3086, 0.0
    %v3293 = vmax.f32 %v3089, 0.0
    %v3294 = vmax.f32 %v3094, 0.0
    %v3295 = vmax.f32 %v3097, 0.0
    %v3296 = vmax.f32 %v3102, 0.0
    %v3297 = vmax.f32 %v3105, 0.0
    %v3298 = vmax.f32 %v3110, 0.0
    %v3299 = vmax.f32 %v3113, 0.0
    %v3300 = vmax.f32 %v3118, 0.0
    %v3301 = vmax.f32 %v3121, 0.0
    %v3302 = vmax.f32 %v3126, 0.0
    %v3303 = vmax.f32 %v3129, 0.0
    %v3304 = vmax.f32 %v3134, 0.0
    %v3305 = vmax.f32 %v3137, 0.0
    %v3306 = vmax.f32 %v3142, 0.0
    %v3307 = vmax.f32 %v3145, 0.0
    %v3308 = vmax.f32 %v3150, 0.0
    %v3309 = vmax.f32 %v3153, 0.0
    %v3310 = vmax.f32 %v3158, 0.0
    %v3311 = vmax.f32 %v3161, 0.0
    %v3312 = vmax.f32 %v3166, 0.0
    %v3313 = vmax.f32 %v3169, 0.0
    %v3314 = vmax.f32 %v3174, 0.0
    %v3315 = vmax.f32 %v3177, 0.0
    %v3316 = vmax.f32 %v3182, 0.0
    %v3317 = vmax.f32 %v3185, 0.0
    %v3318 = vmax.f32 %v3190, 0.0
    %v3319 = vmax.f32 %v3193, 0.0
    %v3320 = vmax.f32 %v3198, 0.0
    %v3321 = vmax.f32 %v3201, 0.0
    %v3322 = vmax.f32 %v3206, 0.0
    %v3323 = vmax.f32 %v3209, 0.0
    %v3324 = vmax.f32 %v3214, 0.0
    %v3325 = vmax.f32 %v3217, 0.0
    %v3326 = vmax.f32 %v3222, 0.0
    %v3327 = vmax.f32 %v3225, 0.0
    %v3328 = vmax.f32 %v3230, 0.0
    %v3329 = vmax.f32 %v3233, 0.0
    %v3330 = vmax.f32 %v3238, 0.0
    %v3331 = vmax.f32 %v3241, 0.0
    %v3332 = vmax.f32 %v3246, 0.0
    %v3333 = vmax.f32 %v3249, 0.0
    %v3334 = vmax.f32 %v3254, 0.0
    %v3335 = vmax.f32 %v3257, 0.0
    %v3336 = vmax.f32 %v3262, 0.0
    %v3337 = vmax.f32 %v3265, 0.0
    %v3338 = vmax.f32 %v3270, 0.0
    %v3339 = vmax.f32 %v3273, 0.0
    %v3340 = vpack.c.bf16 %v3277, %v3276
    %v3341 = vpack.c.bf16 %v3279, %v3278
    %v3342 = vpack.c.bf16 %v3281, %v3280
    %v3343 = vpack.c.bf16 %v3283, %v3282
    %v3344 = vpack.c.bf16 %v3285, %v3284
    %v3345 = vpack.c.bf16 %v3287, %v3286
    %v3346 = vpack.c.bf16 %v3289, %v3288
    %v3347 = vpack.c.bf16 %v3291, %v3290
    %v3348 = vpack.c.bf16 %v3293, %v3292
    %v3349 = vpack.c.bf16 %v3295, %v3294
    %v3350 = vpack.c.bf16 %v3297, %v3296
    %v3351 = vpack.c.bf16 %v3299, %v3298
    %v3352 = vpack.c.bf16 %v3301, %v3300
    %v3353 = vpack.c.bf16 %v3303, %v3302
    %v3354 = vpack.c.bf16 %v3305, %v3304
    %v3355 = vpack.c.bf16 %v3307, %v3306
    %v3356 = vpack.c.bf16 %v3309, %v3308
    %v3357 = vpack.c.bf16 %v3311, %v3310
    %v3358 = vpack.c.bf16 %v3313, %v3312
    %v3359 = vpack.c.bf16 %v3315, %v3314
    %v3360 = vpack.c.bf16 %v3317, %v3316
    %v3361 = vpack.c.bf16 %v3319, %v3318
    %v3362 = vpack.c.bf16 %v3321, %v3320
    %v3363 = vpack.c.bf16 %v3323, %v3322
    %v3364 = vpack.c.bf16 %v3325, %v3324
    %v3365 = vpack.c.bf16 %v3327, %v3326
    %v3366 = vpack.c.bf16 %v3329, %v3328
    %v3367 = vpack.c.bf16 %v3331, %v3330
    %v3368 = vpack.c.bf16 %v3333, %v3332
    %v3369 = vpack.c.bf16 %v3335, %v3334
    %v3370 = vpack.c.bf16 %v3337, %v3336
    %v3371 = vpack.c.bf16 %v3339, %v3338
    %v3372 = vld [vmem:[%s7] sm:$0xf]
    %v3373 = vld [vmem:[%s7 + $0x4] sm:$0xf]
    %v3374 = vld [vmem:[%s7 + $0x8] sm:$0xf]
    %v3375 = vld [vmem:[%s7 + $0xc] sm:$0xf]
    %v3376 = vld [vmem:[%s7 + $0x10] sm:$0xf]
    %v3377 = vld [vmem:[%s7 + $0x14] sm:$0xf]
    %v3378 = vld [vmem:[%s7 + $0x18] sm:$0xf]
    %v3379 = vld [vmem:[%s7 + $0x1c] sm:$0xf]
    %v3380 = vld [vmem:[%s7 + $0x20] sm:$0xf]
    %v3381 = vld [vmem:[%s7 + $0x24] sm:$0xf]
    %v3382 = vld [vmem:[%s7 + $0x28] sm:$0xf]
    %v3383 = vld [vmem:[%s7 + $0x2c] sm:$0xf]
    %v3384 = vld [vmem:[%s7 + $0x30] sm:$0xf]
    %v3385 = vld [vmem:[%s7 + $0x34] sm:$0xf]
    %v3386 = vld [vmem:[%s7 + $0x38] sm:$0xf]
    %v3387 = vld [vmem:[%s7 + $0x3c] sm:$0xf]
    %v3388 = vld [vmem:[%s8] sm:$0x1]
    %v3390 = vlaneseq
    %v3391 = vshrl.u32 %v3390, 7
    %v3392 = vsub.s32 0, %v3391
    %v3393 = vrot.slane %v3388, %v3392
    %v3411 = vunpack.c.l.b16 %v3372
    %v3412 = vunpack.c.l.b16 %v3373
    %v3413 = vunpack.c.l.b16 %v3374
    %v3414 = vunpack.c.l.b16 %v3375
    %v3415 = vunpack.c.l.b16 %v3376
    %v3416 = vunpack.c.l.b16 %v3377
    %v3417 = vunpack.c.l.b16 %v3378
    %v3418 = vunpack.c.l.b16 %v3379
    %v3419 = vunpack.c.l.b16 %v3380
    %v3420 = vunpack.c.l.b16 %v3381
    %v3421 = vunpack.c.l.b16 %v3382
    %v3422 = vunpack.c.l.b16 %v3383
    %v3423 = vunpack.c.l.b16 %v3384
    %v3424 = vunpack.c.l.b16 %v3385
    %v3425 = vunpack.c.l.b16 %v3386
    %v3426 = vunpack.c.l.b16 %v3387
    %v3427 = vpack.c.b16 %v3412, %v3411
    %v3428 = vpack.c.b16 %v3414, %v3413
    %v3429 = vpack.c.b16 %v3416, %v3415
    %v3430 = vpack.c.b16 %v3418, %v3417
    %v3431 = vpack.c.b16 %v3420, %v3419
    %v3432 = vpack.c.b16 %v3422, %v3421
    %v3433 = vpack.c.b16 %v3424, %v3423
    %v3434 = vpack.c.b16 %v3426, %v3425
    %3443 = vmatprep.subr.bf16.mxu0 0
    %3444 = vmatpush1.bf16.msra.mxu0 %v3427
    %3445 = vmatprep.subr.bf16.mxu0 0
    %3446 = vmatpush1.bf16.msra.mxu0 %v3428
    %3447 = vmatprep.subr.bf16.mxu0 0
    %3448 = vmatpush1.bf16.msra.mxu0 %v3429
    %3449 = vmatprep.subr.bf16.mxu0 0
    %3450 = vmatpush1.bf16.msra.mxu0 %v3430
    %3451 = vmatprep.subr.bf16.mxu0 0
    %3452 = vmatpush1.bf16.msra.mxu0 %v3431
    %3453 = vmatprep.subr.bf16.mxu0 0
    %3454 = vmatpush1.bf16.msra.mxu0 %v3432
    %3455 = vmatprep.subr.bf16.mxu0 0
    %3456 = vmatpush1.bf16.msra.mxu0 %v3433
    %3457 = vmatprep.subr.bf16.mxu0 0
    %3458 = vmatpush1.bf16.msra.mxu0 %v3434
    %3459 = vmatprep.subr.bf16.mxu0 0
    %3460 = vmatpush1.bf16.msra.mxu0 0
    %3461 = vmatprep.subr.bf16.mxu0 0
    %3462 = vmatpush1.bf16.msra.mxu0 0
    %3463 = vmatprep.subr.bf16.mxu0 0
    %3464 = vmatpush1.bf16.msra.mxu0 0
    %3465 = vmatprep.subr.bf16.mxu0 0
    %3466 = vmatpush1.bf16.msra.mxu0 0
    %3467 = vmatprep.subr.bf16.mxu0 0
    %3468 = vmatpush1.bf16.msra.mxu0 0
    %3469 = vmatprep.subr.bf16.mxu0 0
    %3470 = vmatpush1.bf16.msra.mxu0 0
    %3471 = vmatprep.subr.bf16.mxu0 0
    %3472 = vmatpush1.bf16.msra.mxu0 0
    %3473 = vmatprep.subr.bf16.mxu0 0
    %3474 = vmatpush1.bf16.msra.mxu0 0
    %3475 = vmatprep.mubr.bf16.mxu0 0
    %3476 = vmatmul.mubr.bf16.gmra.mrb[0].mxu0 %v3340
    %v3477 = vpop.f32.mrb[0].mxu0
    %v3478 = vadd.f32 %v3393, %v3477
    %v3479 = vpop.f32.mrb[0].mxu0
    %v3480 = vpop.f32.mrb[0].mxu0
    %v3481 = vadd.f32 %v3393, %v3480
    %v3482 = vpop.f32.mrb[0].mxu0
    %3483 = vmatprep.mubr.bf16.mxu0 0
    %3484 = vmatmul.mubr.bf16.gmra.mrb[0].mxu0 %v3341
    %v3485 = vpop.f32.mrb[0].mxu0
    %v3486 = vadd.f32 %v3393, %v3485
    %v3487 = vpop.f32.mrb[0].mxu0
    %v3488 = vpop.f32.mrb[0].mxu0
    %v3489 = vadd.f32 %v3393, %v3488
    %v3490 = vpop.f32.mrb[0].mxu0
    %3491 = vmatprep.mubr.bf16.mxu0 0
    %3492 = vmatmul.mubr.bf16.gmra.mrb[0].mxu0 %v3342
    %v3493 = vpop.f32.mrb[0].mxu0
    %v3494 = vadd.f32 %v3393, %v3493
    %v3495 = vpop.f32.mrb[0].mxu0
    %v3496 = vpop.f32.mrb[0].mxu0
    %v3497 = vadd.f32 %v3393, %v3496
    %v3498 = vpop.f32.mrb[0].mxu0
    %3499 = vmatprep.mubr.bf16.mxu0 0
    %3500 = vmatmul.mubr.bf16.gmra.mrb[0].mxu0 %v3343
    %v3501 = vpop.f32.mrb[0].mxu0
    %v3502 = vadd.f32 %v3393, %v3501
    %v3503 = vpop.f32.mrb[0].mxu0
    %v3504 = vpop.f32.mrb[0].mxu0
    %v3505 = vadd.f32 %v3393, %v3504
    %v3506 = vpop.f32.mrb[0].mxu0
    %3507 = vmatprep.mubr.bf16.mxu0 0
    %3508 = vmatmul.mubr.bf16.gmra.mrb[0].mxu0 %v3344
    %v3509 = vpop.f32.mrb[0].mxu0
    %v3510 = vadd.f32 %v3393, %v3509
    %v3511 = vpop.f32.mrb[0].mxu0
    %v3512 = vpop.f32.mrb[0].mxu0
    %v3513 = vadd.f32 %v3393, %v3512
    %v3514 = vpop.f32.mrb[0].mxu0
    %3515 = vmatprep.mubr.bf16.mxu0 0
    %3516 = vmatmul.mubr.bf16.gmra.mrb[0].mxu0 %v3345
    %v3517 = vpop.f32.mrb[0].mxu0
    %v3518 = vadd.f32 %v3393, %v3517
    %v3519 = vpop.f32.mrb[0].mxu0
    %v3520 = vpop.f32.mrb[0].mxu0
    %v3521 = vadd.f32 %v3393, %v3520
    %v3522 = vpop.f32.mrb[0].mxu0
    %3523 = vmatprep.mubr.bf16.mxu0 0
    %3524 = vmatmul.mubr.bf16.gmra.mrb[0].mxu0 %v3346
    %v3525 = vpop.f32.mrb[0].mxu0
    %v3526 = vadd.f32 %v3393, %v3525
    %v3527 = vpop.f32.mrb[0].mxu0
    %v3528 = vpop.f32.mrb[0].mxu0
    %v3529 = vadd.f32 %v3393, %v3528
    %v3530 = vpop.f32.mrb[0].mxu0
    %3531 = vmatprep.mubr.bf16.mxu0 0
    %3532 = vmatmul.mubr.bf16.gmra.mrb[0].mxu0 %v3347
    %v3533 = vpop.f32.mrb[0].mxu0
    %v3534 = vadd.f32 %v3393, %v3533
    %v3535 = vpop.f32.mrb[0].mxu0
    %v3536 = vpop.f32.mrb[0].mxu0
    %v3537 = vadd.f32 %v3393, %v3536
    %v3538 = vpop.f32.mrb[0].mxu0
    %3539 = vmatprep.mubr.bf16.mxu0 0
    %3540 = vmatmul.mubr.bf16.gmra.mrb[0].mxu0 %v3348
    %v3541 = vpop.f32.mrb[0].mxu0
    %v3542 = vadd.f32 %v3393, %v3541
    %v3543 = vpop.f32.mrb[0].mxu0
    %v3544 = vpop.f32.mrb[0].mxu0
    %v3545 = vadd.f32 %v3393, %v3544
    %v3546 = vpop.f32.mrb[0].mxu0
    %3547 = vmatprep.mubr.bf16.mxu0 0
    %3548 = vmatmul.mubr.bf16.gmra.mrb[0].mxu0 %v3349
    %v3549 = vpop.f32.mrb[0].mxu0
    %v3550 = vadd.f32 %v3393, %v3549
    %v3551 = vpop.f32.mrb[0].mxu0
    %v3552 = vpop.f32.mrb[0].mxu0
    %v3553 = vadd.f32 %v3393, %v3552
    %v3554 = vpop.f32.mrb[0].mxu0
    %3555 = vmatprep.mubr.bf16.mxu0 0
    %3556 = vmatmul.mubr.bf16.gmra.mrb[0].mxu0 %v3350
    %v3557 = vpop.f32.mrb[0].mxu0
    %v3558 = vadd.f32 %v3393, %v3557
    %v3559 = vpop.f32.mrb[0].mxu0
    %v3560 = vpop.f32.mrb[0].mxu0
    %v3561 = vadd.f32 %v3393, %v3560
    %v3562 = vpop.f32.mrb[0].mxu0
    %3563 = vmatprep.mubr.bf16.mxu0 0
    %3564 = vmatmul.mubr.bf16.gmra.mrb[0].mxu0 %v3351
    %v3565 = vpop.f32.mrb[0].mxu0
    %v3566 = vadd.f32 %v3393, %v3565
    %v3567 = vpop.f32.mrb[0].mxu0
    %v3568 = vpop.f32.mrb[0].mxu0
    %v3569 = vadd.f32 %v3393, %v3568
    %v3570 = vpop.f32.mrb[0].mxu0
    %3571 = vmatprep.mubr.bf16.mxu0 0
    %3572 = vmatmul.mubr.bf16.gmra.mrb[0].mxu0 %v3352
    %v3573 = vpop.f32.mrb[0].mxu0
    %v3574 = vadd.f32 %v3393, %v3573
    %v3575 = vpop.f32.mrb[0].mxu0
    %v3576 = vpop.f32.mrb[0].mxu0
    %v3577 = vadd.f32 %v3393, %v3576
    %v3578 = vpop.f32.mrb[0].mxu0
    %3579 = vmatprep.mubr.bf16.mxu0 0
    %3580 = vmatmul.mubr.bf16.gmra.mrb[0].mxu0 %v3353
    %v3581 = vpop.f32.mrb[0].mxu0
    %v3582 = vadd.f32 %v3393, %v3581
    %v3583 = vpop.f32.mrb[0].mxu0
    %v3584 = vpop.f32.mrb[0].mxu0
    %v3585 = vadd.f32 %v3393, %v3584
    %v3586 = vpop.f32.mrb[0].mxu0
    %3587 = vmatprep.mubr.bf16.mxu0 0
    %3588 = vmatmul.mubr.bf16.gmra.mrb[0].mxu0 %v3354
    %v3589 = vpop.f32.mrb[0].mxu0
    %v3590 = vadd.f32 %v3393, %v3589
    %v3591 = vpop.f32.mrb[0].mxu0
    %v3592 = vpop.f32.mrb[0].mxu0
    %v3593 = vadd.f32 %v3393, %v3592
    %v3594 = vpop.f32.mrb[0].mxu0
    %3595 = vmatprep.mubr.bf16.mxu0 0
    %3596 = vmatmul.mubr.bf16.gmra.mrb[0].mxu0 %v3355
    %v3597 = vpop.f32.mrb[0].mxu0
    %v3598 = vadd.f32 %v3393, %v3597
    %v3599 = vpop.f32.mrb[0].mxu0
    %v3600 = vpop.f32.mrb[0].mxu0
    %v3601 = vadd.f32 %v3393, %v3600
    %v3602 = vpop.f32.mrb[0].mxu0
    %3603 = vmatprep.mubr.bf16.mxu0 0
    %3604 = vmatmul.mubr.bf16.gmra.mrb[0].mxu0 %v3356
    %v3605 = vpop.f32.mrb[0].mxu0
    %v3606 = vadd.f32 %v3393, %v3605
    %v3607 = vpop.f32.mrb[0].mxu0
    %v3608 = vpop.f32.mrb[0].mxu0
    %v3609 = vadd.f32 %v3393, %v3608
    %v3610 = vpop.f32.mrb[0].mxu0
    %3611 = vmatprep.mubr.bf16.mxu0 0
    %3612 = vmatmul.mubr.bf16.gmra.mrb[0].mxu0 %v3357
    %v3613 = vpop.f32.mrb[0].mxu0
    %v3614 = vadd.f32 %v3393, %v3613
    %v3615 = vpop.f32.mrb[0].mxu0
    %v3616 = vpop.f32.mrb[0].mxu0
    %v3617 = vadd.f32 %v3393, %v3616
    %v3618 = vpop.f32.mrb[0].mxu0
    %3619 = vmatprep.mubr.bf16.mxu0 0
    %3620 = vmatmul.mubr.bf16.gmra.mrb[0].mxu0 %v3358
    %v3621 = vpop.f32.mrb[0].mxu0
    %v3622 = vadd.f32 %v3393, %v3621
    %v3623 = vpop.f32.mrb[0].mxu0
    %v3624 = vpop.f32.mrb[0].mxu0
    %v3625 = vadd.f32 %v3393, %v3624
    %v3626 = vpop.f32.mrb[0].mxu0
    %3627 = vmatprep.mubr.bf16.mxu0 0
    %3628 = vmatmul.mubr.bf16.gmra.mrb[0].mxu0 %v3359
    %v3629 = vpop.f32.mrb[0].mxu0
    %v3630 = vadd.f32 %v3393, %v3629
    %v3631 = vpop.f32.mrb[0].mxu0
    %v3632 = vpop.f32.mrb[0].mxu0
    %v3633 = vadd.f32 %v3393, %v3632
    %v3634 = vpop.f32.mrb[0].mxu0
    %3635 = vmatprep.mubr.bf16.mxu0 0
    %3636 = vmatmul.mubr.bf16.gmra.mrb[0].mxu0 %v3360
    %v3637 = vpop.f32.mrb[0].mxu0
    %v3638 = vadd.f32 %v3393, %v3637
    %v3639 = vpop.f32.mrb[0].mxu0
    %v3640 = vpop.f32.mrb[0].mxu0
    %v3641 = vadd.f32 %v3393, %v3640
    %v3642 = vpop.f32.mrb[0].mxu0
    %3643 = vmatprep.mubr.bf16.mxu0 0
    %3644 = vmatmul.mubr.bf16.gmra.mrb[0].mxu0 %v3361
    %v3645 = vpop.f32.mrb[0].mxu0
    %v3646 = vadd.f32 %v3393, %v3645
    %v3647 = vpop.f32.mrb[0].mxu0
    %v3648 = vpop.f32.mrb[0].mxu0
    %v3649 = vadd.f32 %v3393, %v3648
    %v3650 = vpop.f32.mrb[0].mxu0
    %3651 = vmatprep.mubr.bf16.mxu0 0
    %3652 = vmatmul.mubr.bf16.gmra.mrb[0].mxu0 %v3362
    %v3653 = vpop.f32.mrb[0].mxu0
    %v3654 = vadd.f32 %v3393, %v3653
    %v3655 = vpop.f32.mrb[0].mxu0
    %v3656 = vpop.f32.mrb[0].mxu0
    %v3657 = vadd.f32 %v3393, %v3656
    %v3658 = vpop.f32.mrb[0].mxu0
    %3659 = vmatprep.mubr.bf16.mxu0 0
    %3660 = vmatmul.mubr.bf16.gmra.mrb[0].mxu0 %v3363
    %v3661 = vpop.f32.mrb[0].mxu0
    %v3662 = vadd.f32 %v3393, %v3661
    %v3663 = vpop.f32.mrb[0].mxu0
    %v3664 = vpop.f32.mrb[0].mxu0
    %v3665 = vadd.f32 %v3393, %v3664
    %v3666 = vpop.f32.mrb[0].mxu0
    %3667 = vmatprep.mubr.bf16.mxu0 0
    %3668 = vmatmul.mubr.bf16.gmra.mrb[0].mxu0 %v3364
    %v3669 = vpop.f32.mrb[0].mxu0
    %v3670 = vadd.f32 %v3393, %v3669
    %v3671 = vpop.f32.mrb[0].mxu0
    %v3672 = vpop.f32.mrb[0].mxu0
    %v3673 = vadd.f32 %v3393, %v3672
    %v3674 = vpop.f32.mrb[0].mxu0
    %3675 = vmatprep.mubr.bf16.mxu0 0
    %3676 = vmatmul.mubr.bf16.gmra.mrb[0].mxu0 %v3365
    %v3677 = vpop.f32.mrb[0].mxu0
    %v3678 = vadd.f32 %v3393, %v3677
    %v3679 = vpop.f32.mrb[0].mxu0
    %v3680 = vpop.f32.mrb[0].mxu0
    %v3681 = vadd.f32 %v3393, %v3680
    %v3682 = vpop.f32.mrb[0].mxu0
    %3683 = vmatprep.mubr.bf16.mxu0 0
    %3684 = vmatmul.mubr.bf16.gmra.mrb[0].mxu0 %v3366
    %v3685 = vpop.f32.mrb[0].mxu0
    %v3686 = vadd.f32 %v3393, %v3685
    %v3687 = vpop.f32.mrb[0].mxu0
    %v3688 = vpop.f32.mrb[0].mxu0
    %v3689 = vadd.f32 %v3393, %v3688
    %v3690 = vpop.f32.mrb[0].mxu0
    %3691 = vmatprep.mubr.bf16.mxu0 0
    %3692 = vmatmul.mubr.bf16.gmra.mrb[0].mxu0 %v3367
    %v3693 = vpop.f32.mrb[0].mxu0
    %v3694 = vadd.f32 %v3393, %v3693
    %v3695 = vpop.f32.mrb[0].mxu0
    %v3696 = vpop.f32.mrb[0].mxu0
    %v3697 = vadd.f32 %v3393, %v3696
    %v3698 = vpop.f32.mrb[0].mxu0
    %3699 = vmatprep.mubr.bf16.mxu0 0
    %3700 = vmatmul.mubr.bf16.gmra.mrb[0].mxu0 %v3368
    %v3701 = vpop.f32.mrb[0].mxu0
    %v3702 = vadd.f32 %v3393, %v3701
    %v3703 = vpop.f32.mrb[0].mxu0
    %v3704 = vpop.f32.mrb[0].mxu0
    %v3705 = vadd.f32 %v3393, %v3704
    %v3706 = vpop.f32.mrb[0].mxu0
    %3707 = vmatprep.mubr.bf16.mxu0 0
    %3708 = vmatmul.mubr.bf16.gmra.mrb[0].mxu0 %v3369
    %v3709 = vpop.f32.mrb[0].mxu0
    %v3710 = vadd.f32 %v3393, %v3709
    %v3711 = vpop.f32.mrb[0].mxu0
    %v3712 = vpop.f32.mrb[0].mxu0
    %v3713 = vadd.f32 %v3393, %v3712
    %v3714 = vpop.f32.mrb[0].mxu0
    %3715 = vmatprep.mubr.bf16.mxu0 0
    %3716 = vmatmul.mubr.bf16.gmra.mrb[0].mxu0 %v3370
    %v3717 = vpop.f32.mrb[0].mxu0
    %v3718 = vadd.f32 %v3393, %v3717
    %v3719 = vpop.f32.mrb[0].mxu0
    %v3720 = vpop.f32.mrb[0].mxu0
    %v3721 = vadd.f32 %v3393, %v3720
    %v3722 = vpop.f32.mrb[0].mxu0
    %3723 = vmatprep.mubr.bf16.mxu0 0
    %3724 = vmatmul.mubr.bf16.gmra.mrb[0].mxu0 %v3371
    %v3725 = vpop.f32.mrb[0].mxu0
    %v3726 = vadd.f32 %v3393, %v3725
    %v3727 = vpop.f32.mrb[0].mxu0
    %v3728 = vpop.f32.mrb[0].mxu0
    %v3729 = vadd.f32 %v3393, %v3728
    %v3730 = vpop.f32.mrb[0].mxu0
    %3731 = vdwg.mxu0
    %v3732 = vmax.f32 %v3478, 0.0
    %v3733 = vmax.f32 %v3481, 0.0
    %v3734 = vmax.f32 %v3486, 0.0
    %v3735 = vmax.f32 %v3489, 0.0
    %v3736 = vmax.f32 %v3494, 0.0
    %v3737 = vmax.f32 %v3497, 0.0
    %v3738 = vmax.f32 %v3502, 0.0
    %v3739 = vmax.f32 %v3505, 0.0
    %v3740 = vmax.f32 %v3510, 0.0
    %v3741 = vmax.f32 %v3513, 0.0
    %v3742 = vmax.f32 %v3518, 0.0
    %v3743 = vmax.f32 %v3521, 0.0
    %v3744 = vmax.f32 %v3526, 0.0
    %v3745 = vmax.f32 %v3529, 0.0
    %v3746 = vmax.f32 %v3534, 0.0
    %v3747 = vmax.f32 %v3537, 0.0
    %v3748 = vmax.f32 %v3542, 0.0
    %v3749 = vmax.f32 %v3545, 0.0
    %v3750 = vmax.f32 %v3550, 0.0
    %v3751 = vmax.f32 %v3553, 0.0
    %v3752 = vmax.f32 %v3558, 0.0
    %v3753 = vmax.f32 %v3561, 0.0
    %v3754 = vmax.f32 %v3566, 0.0
    %v3755 = vmax.f32 %v3569, 0.0
    %v3756 = vmax.f32 %v3574, 0.0
    %v3757 = vmax.f32 %v3577, 0.0
    %v3758 = vmax.f32 %v3582, 0.0
    %v3759 = vmax.f32 %v3585, 0.0
    %v3760 = vmax.f32 %v3590, 0.0
    %v3761 = vmax.f32 %v3593, 0.0
    %v3762 = vmax.f32 %v3598, 0.0
    %v3763 = vmax.f32 %v3601, 0.0
    %v3764 = vmax.f32 %v3606, 0.0
    %v3765 = vmax.f32 %v3609, 0.0
    %v3766 = vmax.f32 %v3614, 0.0
    %v3767 = vmax.f32 %v3617, 0.0
    %v3768 = vmax.f32 %v3622, 0.0
    %v3769 = vmax.f32 %v3625, 0.0
    %v3770 = vmax.f32 %v3630, 0.0
    %v3771 = vmax.f32 %v3633, 0.0
    %v3772 = vmax.f32 %v3638, 0.0
    %v3773 = vmax.f32 %v3641, 0.0
    %v3774 = vmax.f32 %v3646, 0.0
    %v3775 = vmax.f32 %v3649, 0.0
    %v3776 = vmax.f32 %v3654, 0.0
    %v3777 = vmax.f32 %v3657, 0.0
    %v3778 = vmax.f32 %v3662, 0.0
    %v3779 = vmax.f32 %v3665, 0.0
    %v3780 = vmax.f32 %v3670, 0.0
    %v3781 = vmax.f32 %v3673, 0.0
    %v3782 = vmax.f32 %v3678, 0.0
    %v3783 = vmax.f32 %v3681, 0.0
    %v3784 = vmax.f32 %v3686, 0.0
    %v3785 = vmax.f32 %v3689, 0.0
    %v3786 = vmax.f32 %v3694, 0.0
    %v3787 = vmax.f32 %v3697, 0.0
    %v3788 = vmax.f32 %v3702, 0.0
    %v3789 = vmax.f32 %v3705, 0.0
    %v3790 = vmax.f32 %v3710, 0.0
    %v3791 = vmax.f32 %v3713, 0.0
    %v3792 = vmax.f32 %v3718, 0.0
    %v3793 = vmax.f32 %v3721, 0.0
    %v3794 = vmax.f32 %v3726, 0.0
    %v3795 = vmax.f32 %v3729, 0.0
    %v3796 = vpack.c.bf16 %v3733, %v3732
    %v3797 = vpack.c.bf16 %v3735, %v3734
    %v3798 = vpack.c.bf16 %v3737, %v3736
    %v3799 = vpack.c.bf16 %v3739, %v3738
    %v3800 = vpack.c.bf16 %v3741, %v3740
    %v3801 = vpack.c.bf16 %v3743, %v3742
    %v3802 = vpack.c.bf16 %v3745, %v3744
    %v3803 = vpack.c.bf16 %v3747, %v3746
    %v3804 = vpack.c.bf16 %v3749, %v3748
    %v3805 = vpack.c.bf16 %v3751, %v3750
    %v3806 = vpack.c.bf16 %v3753, %v3752
    %v3807 = vpack.c.bf16 %v3755, %v3754
    %v3808 = vpack.c.bf16 %v3757, %v3756
    %v3809 = vpack.c.bf16 %v3759, %v3758
    %v3810 = vpack.c.bf16 %v3761, %v3760
    %v3811 = vpack.c.bf16 %v3763, %v3762
    %v3812 = vpack.c.bf16 %v3765, %v3764
    %v3813 = vpack.c.bf16 %v3767, %v3766
    %v3814 = vpack.c.bf16 %v3769, %v3768
    %v3815 = vpack.c.bf16 %v3771, %v3770
    %v3816 = vpack.c.bf16 %v3773, %v3772
    %v3817 = vpack.c.bf16 %v3775, %v3774
    %v3818 = vpack.c.bf16 %v3777, %v3776
    %v3819 = vpack.c.bf16 %v3779, %v3778
    %v3820 = vpack.c.bf16 %v3781, %v3780
    %v3821 = vpack.c.bf16 %v3783, %v3782
    %v3822 = vpack.c.bf16 %v3785, %v3784
    %v3823 = vpack.c.bf16 %v3787, %v3786
    %v3824 = vpack.c.bf16 %v3789, %v3788
    %v3825 = vpack.c.bf16 %v3791, %v3790
    %v3826 = vpack.c.bf16 %v3793, %v3792
    %v3827 = vpack.c.bf16 %v3795, %v3794
    %v3828 = vld [vmem:[%s9] sm:$0xf]
    %v3829 = vld [vmem:[%s9 + $0x4] sm:$0xf]
    %v3830 = vld [vmem:[%s9 + $0x8] sm:$0xf]
    %v3831 = vld [vmem:[%s9 + $0xc] sm:$0xf]
    %v3832 = vld [vmem:[%s9 + $0x10] sm:$0xf]
    %v3833 = vld [vmem:[%s9 + $0x14] sm:$0xf]
    %v3834 = vld [vmem:[%s9 + $0x18] sm:$0xf]
    %v3835 = vld [vmem:[%s9 + $0x1c] sm:$0xf]
    %v3836 = vld [vmem:[%s9 + $0x20] sm:$0xf]
    %v3837 = vld [vmem:[%s9 + $0x24] sm:$0xf]
    %v3838 = vld [vmem:[%s9 + $0x28] sm:$0xf]
    %v3839 = vld [vmem:[%s9 + $0x2c] sm:$0xf]
    %v3840 = vld [vmem:[%s9 + $0x30] sm:$0xf]
    %v3841 = vld [vmem:[%s9 + $0x34] sm:$0xf]
    %v3842 = vld [vmem:[%s9 + $0x38] sm:$0xf]
    %v3843 = vld [vmem:[%s9 + $0x3c] sm:$0xf]
    %v3844 = vld [vmem:[%s10] sm:$0x1]
    %v3846 = vlaneseq
    %v3847 = vshrl.u32 %v3846, 7
    %v3848 = vsub.s32 0, %v3847
    %v3849 = vrot.slane %v3844, %v3848
    %v3867 = vunpack.c.l.b16 %v3828
    %v3868 = vunpack.c.l.b16 %v3829
    %v3869 = vunpack.c.l.b16 %v3830
    %v3870 = vunpack.c.l.b16 %v3831
    %v3871 = vunpack.c.l.b16 %v3832
    %v3872 = vunpack.c.l.b16 %v3833
    %v3873 = vunpack.c.l.b16 %v3834
    %v3874 = vunpack.c.l.b16 %v3835
    %v3875 = vunpack.c.l.b16 %v3836
    %v3876 = vunpack.c.l.b16 %v3837
    %v3877 = vunpack.c.l.b16 %v3838
    %v3878 = vunpack.c.l.b16 %v3839
    %v3879 = vunpack.c.l.b16 %v3840
    %v3880 = vunpack.c.l.b16 %v3841
    %v3881 = vunpack.c.l.b16 %v3842
    %v3882 = vunpack.c.l.b16 %v3843
    %v3883 = vpack.c.b16 %v3868, %v3867
    %v3884 = vpack.c.b16 %v3870, %v3869
    %v3885 = vpack.c.b16 %v3872, %v3871
    %v3886 = vpack.c.b16 %v3874, %v3873
    %v3887 = vpack.c.b16 %v3876, %v3875
    %v3888 = vpack.c.b16 %v3878, %v3877
    %v3889 = vpack.c.b16 %v3880, %v3879
    %v3890 = vpack.c.b16 %v3882, %v3881
    %3899 = vmatprep.subr.bf16.mxu0 0
    %3900 = vmatpush1.bf16.msra.mxu0 %v3883
    %3901 = vmatprep.subr.bf16.mxu0 0
    %3902 = vmatpush1.bf16.msra.mxu0 %v3884
    %3903 = vmatprep.subr.bf16.mxu0 0
    %3904 = vmatpush1.bf16.msra.mxu0 %v3885
    %3905 = vmatprep.subr.bf16.mxu0 0
    %3906 = vmatpush1.bf16.msra.mxu0 %v3886
    %3907 = vmatprep.subr.bf16.mxu0 0
    %3908 = vmatpush1.bf16.msra.mxu0 %v3887
    %3909 = vmatprep.subr.bf16.mxu0 0
    %3910 = vmatpush1.bf16.msra.mxu0 %v3888
    %3911 = vmatprep.subr.bf16.mxu0 0
    %3912 = vmatpush1.bf16.msra.mxu0 %v3889
    %3913 = vmatprep.subr.bf16.mxu0 0
    %3914 = vmatpush1.bf16.msra.mxu0 %v3890
    %3915 = vmatprep.subr.bf16.mxu0 0
    %3916 = vmatpush1.bf16.msra.mxu0 0
    %3917 = vmatprep.subr.bf16.mxu0 0
    %3918 = vmatpush1.bf16.msra.mxu0 0
    %3919 = vmatprep.subr.bf16.mxu0 0
    %3920 = vmatpush1.bf16.msra.mxu0 0
    %3921 = vmatprep.subr.bf16.mxu0 0
    %3922 = vmatpush1.bf16.msra.mxu0 0
    %3923 = vmatprep.subr.bf16.mxu0 0
    %3924 = vmatpush1.bf16.msra.mxu0 0
    %3925 = vmatprep.subr.bf16.mxu0 0
    %3926 = vmatpush1.bf16.msra.mxu0 0
    %3927 = vmatprep.subr.bf16.mxu0 0
    %3928 = vmatpush1.bf16.msra.mxu0 0
    %3929 = vmatprep.subr.bf16.mxu0 0
    %3930 = vmatpush1.bf16.msra.mxu0 0
    %3931 = vmatprep.mubr.bf16.mxu0 0
    %3932 = vmatmul.mubr.bf16.gmra.mrb[0].mxu0 %v3796
    %v3933 = vpop.f32.mrb[0].mxu0
    %v3934 = vadd.f32 %v3849, %v3933
    %v3935 = vpop.f32.mrb[0].mxu0
    %v3936 = vpop.f32.mrb[0].mxu0
    %v3937 = vadd.f32 %v3849, %v3936
    %v3938 = vpop.f32.mrb[0].mxu0
    %3939 = vmatprep.mubr.bf16.mxu0 0
    %3940 = vmatmul.mubr.bf16.gmra.mrb[0].mxu0 %v3797
    %v3941 = vpop.f32.mrb[0].mxu0
    %v3942 = vadd.f32 %v3849, %v3941
    %v3943 = vpop.f32.mrb[0].mxu0
    %v3944 = vpop.f32.mrb[0].mxu0
    %v3945 = vadd.f32 %v3849, %v3944
    %v3946 = vpop.f32.mrb[0].mxu0
    %3947 = vmatprep.mubr.bf16.mxu0 0
    %3948 = vmatmul.mubr.bf16.gmra.mrb[0].mxu0 %v3798
    %v3949 = vpop.f32.mrb[0].mxu0
    %v3950 = vadd.f32 %v3849, %v3949
    %v3951 = vpop.f32.mrb[0].mxu0
    %v3952 = vpop.f32.mrb[0].mxu0
    %v3953 = vadd.f32 %v3849, %v3952
    %v3954 = vpop.f32.mrb[0].mxu0
    %3955 = vmatprep.mubr.bf16.mxu0 0
    %3956 = vmatmul.mubr.bf16.gmra.mrb[0].mxu0 %v3799
    %v3957 = vpop.f32.mrb[0].mxu0
    %v3958 = vadd.f32 %v3849, %v3957
    %v3959 = vpop.f32.mrb[0].mxu0
    %v3960 = vpop.f32.mrb[0].mxu0
    %v3961 = vadd.f32 %v3849, %v3960
    %v3962 = vpop.f32.mrb[0].mxu0
    %3963 = vmatprep.mubr.bf16.mxu0 0
    %3964 = vmatmul.mubr.bf16.gmra.mrb[0].mxu0 %v3800
    %v3965 = vpop.f32.mrb[0].mxu0
    %v3966 = vadd.f32 %v3849, %v3965
    %v3967 = vpop.f32.mrb[0].mxu0
    %v3968 = vpop.f32.mrb[0].mxu0
    %v3969 = vadd.f32 %v3849, %v3968
    %v3970 = vpop.f32.mrb[0].mxu0
    %3971 = vmatprep.mubr.bf16.mxu0 0
    %3972 = vmatmul.mubr.bf16.gmra.mrb[0].mxu0 %v3801
    %v3973 = vpop.f32.mrb[0].mxu0
    %v3974 = vadd.f32 %v3849, %v3973
    %v3975 = vpop.f32.mrb[0].mxu0
    %v3976 = vpop.f32.mrb[0].mxu0
    %v3977 = vadd.f32 %v3849, %v3976
    %v3978 = vpop.f32.mrb[0].mxu0
    %3979 = vmatprep.mubr.bf16.mxu0 0
    %3980 = vmatmul.mubr.bf16.gmra.mrb[0].mxu0 %v3802
    %v3981 = vpop.f32.mrb[0].mxu0
    %v3982 = vadd.f32 %v3849, %v3981
    %v3983 = vpop.f32.mrb[0].mxu0
    %v3984 = vpop.f32.mrb[0].mxu0
    %v3985 = vadd.f32 %v3849, %v3984
    %v3986 = vpop.f32.mrb[0].mxu0
    %3987 = vmatprep.mubr.bf16.mxu0 0
    %3988 = vmatmul.mubr.bf16.gmra.mrb[0].mxu0 %v3803
    %v3989 = vpop.f32.mrb[0].mxu0
    %v3990 = vadd.f32 %v3849, %v3989
    %v3991 = vpop.f32.mrb[0].mxu0
    %v3992 = vpop.f32.mrb[0].mxu0
    %v3993 = vadd.f32 %v3849, %v3992
    %v3994 = vpop.f32.mrb[0].mxu0
    %3995 = vmatprep.mubr.bf16.mxu0 0
    %3996 = vmatmul.mubr.bf16.gmra.mrb[0].mxu0 %v3804
    %v3997 = vpop.f32.mrb[0].mxu0
    %v3998 = vadd.f32 %v3849, %v3997
    %v3999 = vpop.f32.mrb[0].mxu0
    %v4000 = vpop.f32.mrb[0].mxu0
    %v4001 = vadd.f32 %v3849, %v4000
    %v4002 = vpop.f32.mrb[0].mxu0
    %4003 = vmatprep.mubr.bf16.mxu0 0
    %4004 = vmatmul.mubr.bf16.gmra.mrb[0].mxu0 %v3805
    %v4005 = vpop.f32.mrb[0].mxu0
    %v4006 = vadd.f32 %v3849, %v4005
    %v4007 = vpop.f32.mrb[0].mxu0
    %v4008 = vpop.f32.mrb[0].mxu0
    %v4009 = vadd.f32 %v3849, %v4008
    %v4010 = vpop.f32.mrb[0].mxu0
    %4011 = vmatprep.mubr.bf16.mxu0 0
    %4012 = vmatmul.mubr.bf16.gmra.mrb[0].mxu0 %v3806
    %v4013 = vpop.f32.mrb[0].mxu0
    %v4014 = vadd.f32 %v3849, %v4013
    %v4015 = vpop.f32.mrb[0].mxu0
    %v4016 = vpop.f32.mrb[0].mxu0
    %v4017 = vadd.f32 %v3849, %v4016
    %v4018 = vpop.f32.mrb[0].mxu0
    %4019 = vmatprep.mubr.bf16.mxu0 0
    %4020 = vmatmul.mubr.bf16.gmra.mrb[0].mxu0 %v3807
    %v4021 = vpop.f32.mrb[0].mxu0
    %v4022 = vadd.f32 %v3849, %v4021
    %v4023 = vpop.f32.mrb[0].mxu0
    %v4024 = vpop.f32.mrb[0].mxu0
    %v4025 = vadd.f32 %v3849, %v4024
    %v4026 = vpop.f32.mrb[0].mxu0
    %4027 = vmatprep.mubr.bf16.mxu0 0
    %4028 = vmatmul.mubr.bf16.gmra.mrb[0].mxu0 %v3808
    %v4029 = vpop.f32.mrb[0].mxu0
    %v4030 = vadd.f32 %v3849, %v4029
    %v4031 = vpop.f32.mrb[0].mxu0
    %v4032 = vpop.f32.mrb[0].mxu0
    %v4033 = vadd.f32 %v3849, %v4032
    %v4034 = vpop.f32.mrb[0].mxu0
    %4035 = vmatprep.mubr.bf16.mxu0 0
    %4036 = vmatmul.mubr.bf16.gmra.mrb[0].mxu0 %v3809
    %v4037 = vpop.f32.mrb[0].mxu0
    %v4038 = vadd.f32 %v3849, %v4037
    %v4039 = vpop.f32.mrb[0].mxu0
    %v4040 = vpop.f32.mrb[0].mxu0
    %v4041 = vadd.f32 %v3849, %v4040
    %v4042 = vpop.f32.mrb[0].mxu0
    %4043 = vmatprep.mubr.bf16.mxu0 0
    %4044 = vmatmul.mubr.bf16.gmra.mrb[0].mxu0 %v3810
    %v4045 = vpop.f32.mrb[0].mxu0
    %v4046 = vadd.f32 %v3849, %v4045
    %v4047 = vpop.f32.mrb[0].mxu0
    %v4048 = vpop.f32.mrb[0].mxu0
    %v4049 = vadd.f32 %v3849, %v4048
    %v4050 = vpop.f32.mrb[0].mxu0
    %4051 = vmatprep.mubr.bf16.mxu0 0
    %4052 = vmatmul.mubr.bf16.gmra.mrb[0].mxu0 %v3811
    %v4053 = vpop.f32.mrb[0].mxu0
    %v4054 = vadd.f32 %v3849, %v4053
    %v4055 = vpop.f32.mrb[0].mxu0
    %v4056 = vpop.f32.mrb[0].mxu0
    %v4057 = vadd.f32 %v3849, %v4056
    %v4058 = vpop.f32.mrb[0].mxu0
    %4059 = vmatprep.mubr.bf16.mxu0 0
    %4060 = vmatmul.mubr.bf16.gmra.mrb[0].mxu0 %v3812
    %v4061 = vpop.f32.mrb[0].mxu0
    %v4062 = vadd.f32 %v3849, %v4061
    %v4063 = vpop.f32.mrb[0].mxu0
    %v4064 = vpop.f32.mrb[0].mxu0
    %v4065 = vadd.f32 %v3849, %v4064
    %v4066 = vpop.f32.mrb[0].mxu0
    %4067 = vmatprep.mubr.bf16.mxu0 0
    %4068 = vmatmul.mubr.bf16.gmra.mrb[0].mxu0 %v3813
    %v4069 = vpop.f32.mrb[0].mxu0
    %v4070 = vadd.f32 %v3849, %v4069
    %v4071 = vpop.f32.mrb[0].mxu0
    %v4072 = vpop.f32.mrb[0].mxu0
    %v4073 = vadd.f32 %v3849, %v4072
    %v4074 = vpop.f32.mrb[0].mxu0
    %4075 = vmatprep.mubr.bf16.mxu0 0
    %4076 = vmatmul.mubr.bf16.gmra.mrb[0].mxu0 %v3814
    %v4077 = vpop.f32.mrb[0].mxu0
    %v4078 = vadd.f32 %v3849, %v4077
    %v4079 = vpop.f32.mrb[0].mxu0
    %v4080 = vpop.f32.mrb[0].mxu0
    %v4081 = vadd.f32 %v3849, %v4080
    %v4082 = vpop.f32.mrb[0].mxu0
    %4083 = vmatprep.mubr.bf16.mxu0 0
    %4084 = vmatmul.mubr.bf16.gmra.mrb[0].mxu0 %v3815
    %v4085 = vpop.f32.mrb[0].mxu0
    %v4086 = vadd.f32 %v3849, %v4085
    %v4087 = vpop.f32.mrb[0].mxu0
    %v4088 = vpop.f32.mrb[0].mxu0
    %v4089 = vadd.f32 %v3849, %v4088
    %v4090 = vpop.f32.mrb[0].mxu0
    %4091 = vmatprep.mubr.bf16.mxu0 0
    %4092 = vmatmul.mubr.bf16.gmra.mrb[0].mxu0 %v3816
    %v4093 = vpop.f32.mrb[0].mxu0
    %v4094 = vadd.f32 %v3849, %v4093
    %v4095 = vpop.f32.mrb[0].mxu0
    %v4096 = vpop.f32.mrb[0].mxu0
    %v4097 = vadd.f32 %v3849, %v4096
    %v4098 = vpop.f32.mrb[0].mxu0
    %4099 = vmatprep.mubr.bf16.mxu0 0
    %4100 = vmatmul.mubr.bf16.gmra.mrb[0].mxu0 %v3817
    %v4101 = vpop.f32.mrb[0].mxu0
    %v4102 = vadd.f32 %v3849, %v4101
    %v4103 = vpop.f32.mrb[0].mxu0
    %v4104 = vpop.f32.mrb[0].mxu0
    %v4105 = vadd.f32 %v3849, %v4104
    %v4106 = vpop.f32.mrb[0].mxu0
    %4107 = vmatprep.mubr.bf16.mxu0 0
    %4108 = vmatmul.mubr.bf16.gmra.mrb[0].mxu0 %v3818
    %v4109 = vpop.f32.mrb[0].mxu0
    %v4110 = vadd.f32 %v3849, %v4109
    %v4111 = vpop.f32.mrb[0].mxu0
    %v4112 = vpop.f32.mrb[0].mxu0
    %v4113 = vadd.f32 %v3849, %v4112
    %v4114 = vpop.f32.mrb[0].mxu0
    %4115 = vmatprep.mubr.bf16.mxu0 0
    %4116 = vmatmul.mubr.bf16.gmra.mrb[0].mxu0 %v3819
    %v4117 = vpop.f32.mrb[0].mxu0
    %v4118 = vadd.f32 %v3849, %v4117
    %v4119 = vpop.f32.mrb[0].mxu0
    %v4120 = vpop.f32.mrb[0].mxu0
    %v4121 = vadd.f32 %v3849, %v4120
    %v4122 = vpop.f32.mrb[0].mxu0
    %4123 = vmatprep.mubr.bf16.mxu0 0
    %4124 = vmatmul.mubr.bf16.gmra.mrb[0].mxu0 %v3820
    %v4125 = vpop.f32.mrb[0].mxu0
    %v4126 = vadd.f32 %v3849, %v4125
    %v4127 = vpop.f32.mrb[0].mxu0
    %v4128 = vpop.f32.mrb[0].mxu0
    %v4129 = vadd.f32 %v3849, %v4128
    %v4130 = vpop.f32.mrb[0].mxu0
    %4131 = vmatprep.mubr.bf16.mxu0 0
    %4132 = vmatmul.mubr.bf16.gmra.mrb[0].mxu0 %v3821
    %v4133 = vpop.f32.mrb[0].mxu0
    %v4134 = vadd.f32 %v3849, %v4133
    %v4135 = vpop.f32.mrb[0].mxu0
    %v4136 = vpop.f32.mrb[0].mxu0
    %v4137 = vadd.f32 %v3849, %v4136
    %v4138 = vpop.f32.mrb[0].mxu0
    %4139 = vmatprep.mubr.bf16.mxu0 0
    %4140 = vmatmul.mubr.bf16.gmra.mrb[0].mxu0 %v3822
    %v4141 = vpop.f32.mrb[0].mxu0
    %v4142 = vadd.f32 %v3849, %v4141
    %v4143 = vpop.f32.mrb[0].mxu0
    %v4144 = vpop.f32.mrb[0].mxu0
    %v4145 = vadd.f32 %v3849, %v4144
    %v4146 = vpop.f32.mrb[0].mxu0
    %4147 = vmatprep.mubr.bf16.mxu0 0
    %4148 = vmatmul.mubr.bf16.gmra.mrb[0].mxu0 %v3823
    %v4149 = vpop.f32.mrb[0].mxu0
    %v4150 = vadd.f32 %v3849, %v4149
    %v4151 = vpop.f32.mrb[0].mxu0
    %v4152 = vpop.f32.mrb[0].mxu0
    %v4153 = vadd.f32 %v3849, %v4152
    %v4154 = vpop.f32.mrb[0].mxu0
    %4155 = vmatprep.mubr.bf16.mxu0 0
    %4156 = vmatmul.mubr.bf16.gmra.mrb[0].mxu0 %v3824
    %v4157 = vpop.f32.mrb[0].mxu0
    %v4158 = vadd.f32 %v3849, %v4157
    %v4159 = vpop.f32.mrb[0].mxu0
    %v4160 = vpop.f32.mrb[0].mxu0
    %v4161 = vadd.f32 %v3849, %v4160
    %v4162 = vpop.f32.mrb[0].mxu0
    %4163 = vmatprep.mubr.bf16.mxu0 0
    %4164 = vmatmul.mubr.bf16.gmra.mrb[0].mxu0 %v3825
    %v4165 = vpop.f32.mrb[0].mxu0
    %v4166 = vadd.f32 %v3849, %v4165
    %v4167 = vpop.f32.mrb[0].mxu0
    %v4168 = vpop.f32.mrb[0].mxu0
    %v4169 = vadd.f32 %v3849, %v4168
    %v4170 = vpop.f32.mrb[0].mxu0
    %4171 = vmatprep.mubr.bf16.mxu0 0
    %4172 = vmatmul.mubr.bf16.gmra.mrb[0].mxu0 %v3826
    %v4173 = vpop.f32.mrb[0].mxu0
    %v4174 = vadd.f32 %v3849, %v4173
    %v4175 = vpop.f32.mrb[0].mxu0
    %v4176 = vpop.f32.mrb[0].mxu0
    %v4177 = vadd.f32 %v3849, %v4176
    %v4178 = vpop.f32.mrb[0].mxu0
    %4179 = vmatprep.mubr.bf16.mxu0 0
    %4180 = vmatmul.mubr.bf16.gmra.mrb[0].mxu0 %v3827
    %v4181 = vpop.f32.mrb[0].mxu0
    %v4182 = vadd.f32 %v3849, %v4181
    %v4183 = vpop.f32.mrb[0].mxu0
    %v4184 = vpop.f32.mrb[0].mxu0
    %v4185 = vadd.f32 %v3849, %v4184
    %v4186 = vpop.f32.mrb[0].mxu0
    %4187 = vdwg.mxu0
    %4188 = vmax.xlane.f32.xlu0 %v3934
    %v4189 = vpop.xlane.xlu0 %4188
    %4190 = vmax.xlane.f32.xlu0 %v3937
    %v4191 = vpop.xlane.xlu0 %4190
    %4192 = vmax.xlane.f32.xlu0 %v3942
    %v4193 = vpop.xlane.xlu0 %4192
    %4194 = vmax.xlane.f32.xlu0 %v3945
    %v4195 = vpop.xlane.xlu0 %4194
    %4196 = vmax.xlane.f32.xlu0 %v3950
    %v4197 = vpop.xlane.xlu0 %4196
    %4198 = vmax.xlane.f32.xlu0 %v3953
    %v4199 = vpop.xlane.xlu0 %4198
    %4200 = vmax.xlane.f32.xlu0 %v3958
    %v4201 = vpop.xlane.xlu0 %4200
    %4202 = vmax.xlane.f32.xlu0 %v3961
    %v4203 = vpop.xlane.xlu0 %4202
    %4204 = vmax.xlane.f32.xlu0 %v3966
    %v4205 = vpop.xlane.xlu0 %4204
    %4206 = vmax.xlane.f32.xlu0 %v3969
    %v4207 = vpop.xlane.xlu0 %4206
    %4208 = vmax.xlane.f32.xlu0 %v3974
    %v4209 = vpop.xlane.xlu0 %4208
    %4210 = vmax.xlane.f32.xlu0 %v3977
    %v4211 = vpop.xlane.xlu0 %4210
    %4212 = vmax.xlane.f32.xlu0 %v3982
    %v4213 = vpop.xlane.xlu0 %4212
    %4214 = vmax.xlane.f32.xlu0 %v3985
    %v4215 = vpop.xlane.xlu0 %4214
    %4216 = vmax.xlane.f32.xlu0 %v3990
    %v4217 = vpop.xlane.xlu0 %4216
    %4218 = vmax.xlane.f32.xlu0 %v3993
    %v4219 = vpop.xlane.xlu0 %4218
    %4220 = vmax.xlane.f32.xlu0 %v3998
    %v4221 = vpop.xlane.xlu0 %4220
    %4222 = vmax.xlane.f32.xlu0 %v4001
    %v4223 = vpop.xlane.xlu0 %4222
    %4224 = vmax.xlane.f32.xlu0 %v4006
    %v4225 = vpop.xlane.xlu0 %4224
    %4226 = vmax.xlane.f32.xlu0 %v4009
    %v4227 = vpop.xlane.xlu0 %4226
    %4228 = vmax.xlane.f32.xlu0 %v4014
    %v4229 = vpop.xlane.xlu0 %4228
    %4230 = vmax.xlane.f32.xlu0 %v4017
    %v4231 = vpop.xlane.xlu0 %4230
    %4232 = vmax.xlane.f32.xlu0 %v4022
    %v4233 = vpop.xlane.xlu0 %4232
    %4234 = vmax.xlane.f32.xlu0 %v4025
    %v4235 = vpop.xlane.xlu0 %4234
    %4236 = vmax.xlane.f32.xlu0 %v4030
    %v4237 = vpop.xlane.xlu0 %4236
    %4238 = vmax.xlane.f32.xlu0 %v4033
    %v4239 = vpop.xlane.xlu0 %4238
    %4240 = vmax.xlane.f32.xlu0 %v4038
    %v4241 = vpop.xlane.xlu0 %4240
    %4242 = vmax.xlane.f32.xlu0 %v4041
    %v4243 = vpop.xlane.xlu0 %4242
    %4244 = vmax.xlane.f32.xlu0 %v4046
    %v4245 = vpop.xlane.xlu0 %4244
    %4246 = vmax.xlane.f32.xlu0 %v4049
    %v4247 = vpop.xlane.xlu0 %4246
    %4248 = vmax.xlane.f32.xlu0 %v4054
    %v4249 = vpop.xlane.xlu0 %4248
    %4250 = vmax.xlane.f32.xlu0 %v4057
    %v4251 = vpop.xlane.xlu0 %4250
    %4252 = vmax.xlane.f32.xlu0 %v4062
    %v4253 = vpop.xlane.xlu0 %4252
    %4254 = vmax.xlane.f32.xlu0 %v4065
    %v4255 = vpop.xlane.xlu0 %4254
    %4256 = vmax.xlane.f32.xlu0 %v4070
    %v4257 = vpop.xlane.xlu0 %4256
    %4258 = vmax.xlane.f32.xlu0 %v4073
    %v4259 = vpop.xlane.xlu0 %4258
    %4260 = vmax.xlane.f32.xlu0 %v4078
    %v4261 = vpop.xlane.xlu0 %4260
    %4262 = vmax.xlane.f32.xlu0 %v4081
    %v4263 = vpop.xlane.xlu0 %4262
    %4264 = vmax.xlane.f32.xlu0 %v4086
    %v4265 = vpop.xlane.xlu0 %4264
    %4266 = vmax.xlane.f32.xlu0 %v4089
    %v4267 = vpop.xlane.xlu0 %4266
    %4268 = vmax.xlane.f32.xlu0 %v4094
    %v4269 = vpop.xlane.xlu0 %4268
    %4270 = vmax.xlane.f32.xlu0 %v4097
    %v4271 = vpop.xlane.xlu0 %4270
    %4272 = vmax.xlane.f32.xlu0 %v4102
    %v4273 = vpop.xlane.xlu0 %4272
    %4274 = vmax.xlane.f32.xlu0 %v4105
    %v4275 = vpop.xlane.xlu0 %4274
    %4276 = vmax.xlane.f32.xlu0 %v4110
    %v4277 = vpop.xlane.xlu0 %4276
    %4278 = vmax.xlane.f32.xlu0 %v4113
    %v4279 = vpop.xlane.xlu0 %4278
    %4280 = vmax.xlane.f32.xlu0 %v4118
    %v4281 = vpop.xlane.xlu0 %4280
    %4282 = vmax.xlane.f32.xlu0 %v4121
    %v4283 = vpop.xlane.xlu0 %4282
    %4284 = vmax.xlane.f32.xlu0 %v4126
    %v4285 = vpop.xlane.xlu0 %4284
    %4286 = vmax.xlane.f32.xlu0 %v4129
    %v4287 = vpop.xlane.xlu0 %4286
    %4288 = vmax.xlane.f32.xlu0 %v4134
    %v4289 = vpop.xlane.xlu0 %4288
    %4290 = vmax.xlane.f32.xlu0 %v4137
    %v4291 = vpop.xlane.xlu0 %4290
    %4292 = vmax.xlane.f32.xlu0 %v4142
    %v4293 = vpop.xlane.xlu0 %4292
    %4294 = vmax.xlane.f32.xlu0 %v4145
    %v4295 = vpop.xlane.xlu0 %4294
    %4296 = vmax.xlane.f32.xlu0 %v4150
    %v4297 = vpop.xlane.xlu0 %4296
    %4298 = vmax.xlane.f32.xlu0 %v4153
    %v4299 = vpop.xlane.xlu0 %4298
    %4300 = vmax.xlane.f32.xlu0 %v4158
    %v4301 = vpop.xlane.xlu0 %4300
    %4302 = vmax.xlane.f32.xlu0 %v4161
    %v4303 = vpop.xlane.xlu0 %4302
    %4304 = vmax.xlane.f32.xlu0 %v4166
    %v4305 = vpop.xlane.xlu0 %4304
    %4306 = vmax.xlane.f32.xlu0 %v4169
    %v4307 = vpop.xlane.xlu0 %4306
    %4308 = vmax.xlane.f32.xlu0 %v4174
    %v4309 = vpop.xlane.xlu0 %4308
    %4310 = vmax.xlane.f32.xlu0 %v4177
    %v4311 = vpop.xlane.xlu0 %4310
    %4312 = vmax.xlane.f32.xlu0 %v4182
    %v4313 = vpop.xlane.xlu0 %4312
    %4314 = vmax.xlane.f32.xlu0 %v4185
    %v4315 = vpop.xlane.xlu0 %4314
    %v4316 = vsub.f32 %v3934, %v4189
    %v4317 = vsub.f32 %v3937, %v4191
    %v4318 = vsub.f32 %v3942, %v4193
    %v4319 = vsub.f32 %v3945, %v4195
    %v4320 = vsub.f32 %v3950, %v4197
    %v4321 = vsub.f32 %v3953, %v4199
    %v4322 = vsub.f32 %v3958, %v4201
    %v4323 = vsub.f32 %v3961, %v4203
    %v4324 = vsub.f32 %v3966, %v4205
    %v4325 = vsub.f32 %v3969, %v4207
    %v4326 = vsub.f32 %v3974, %v4209
    %v4327 = vsub.f32 %v3977, %v4211
    %v4328 = vsub.f32 %v3982, %v4213
    %v4329 = vsub.f32 %v3985, %v4215
    %v4330 = vsub.f32 %v3990, %v4217
    %v4331 = vsub.f32 %v3993, %v4219
    %v4332 = vsub.f32 %v3998, %v4221
    %v4333 = vsub.f32 %v4001, %v4223
    %v4334 = vsub.f32 %v4006, %v4225
    %v4335 = vsub.f32 %v4009, %v4227
    %v4336 = vsub.f32 %v4014, %v4229
    %v4337 = vsub.f32 %v4017, %v4231
    %v4338 = vsub.f32 %v4022, %v4233
    %v4339 = vsub.f32 %v4025, %v4235
    %v4340 = vsub.f32 %v4030, %v4237
    %v4341 = vsub.f32 %v4033, %v4239
    %v4342 = vsub.f32 %v4038, %v4241
    %v4343 = vsub.f32 %v4041, %v4243
    %v4344 = vsub.f32 %v4046, %v4245
    %v4345 = vsub.f32 %v4049, %v4247
    %v4346 = vsub.f32 %v4054, %v4249
    %v4347 = vsub.f32 %v4057, %v4251
    %v4348 = vsub.f32 %v4062, %v4253
    %v4349 = vsub.f32 %v4065, %v4255
    %v4350 = vsub.f32 %v4070, %v4257
    %v4351 = vsub.f32 %v4073, %v4259
    %v4352 = vsub.f32 %v4078, %v4261
    %v4353 = vsub.f32 %v4081, %v4263
    %v4354 = vsub.f32 %v4086, %v4265
    %v4355 = vsub.f32 %v4089, %v4267
    %v4356 = vsub.f32 %v4094, %v4269
    %v4357 = vsub.f32 %v4097, %v4271
    %v4358 = vsub.f32 %v4102, %v4273
    %v4359 = vsub.f32 %v4105, %v4275
    %v4360 = vsub.f32 %v4110, %v4277
    %v4361 = vsub.f32 %v4113, %v4279
    %v4362 = vsub.f32 %v4118, %v4281
    %v4363 = vsub.f32 %v4121, %v4283
    %v4364 = vsub.f32 %v4126, %v4285
    %v4365 = vsub.f32 %v4129, %v4287
    %v4366 = vsub.f32 %v4134, %v4289
    %v4367 = vsub.f32 %v4137, %v4291
    %v4368 = vsub.f32 %v4142, %v4293
    %v4369 = vsub.f32 %v4145, %v4295
    %v4370 = vsub.f32 %v4150, %v4297
    %v4371 = vsub.f32 %v4153, %v4299
    %v4372 = vsub.f32 %v4158, %v4301
    %v4373 = vsub.f32 %v4161, %v4303
    %v4374 = vsub.f32 %v4166, %v4305
    %v4375 = vsub.f32 %v4169, %v4307
    %v4376 = vsub.f32 %v4174, %v4309
    %v4377 = vsub.f32 %v4177, %v4311
    %v4378 = vsub.f32 %v4182, %v4313
    %v4379 = vsub.f32 %v4185, %v4315
    %v4380 = vmul.f32 %v4316, 1.442695
    %v4381 = vpow.pop %v4380
    %v4382 = vmul.f32 %v4317, 1.442695
    %v4383 = vpow.pop %v4382
    %v4384 = vmul.f32 %v4318, 1.442695
    %v4385 = vpow.pop %v4384
    %v4386 = vmul.f32 %v4319, 1.442695
    %v4387 = vpow.pop %v4386
    %v4388 = vmul.f32 %v4320, 1.442695
    %v4389 = vpow.pop %v4388
    %v4390 = vmul.f32 %v4321, 1.442695
    %v4391 = vpow.pop %v4390
    %v4392 = vmul.f32 %v4322, 1.442695
    %v4393 = vpow.pop %v4392
    %v4394 = vmul.f32 %v4323, 1.442695
    %v4395 = vpow.pop %v4394
    %v4396 = vmul.f32 %v4324, 1.442695
    %v4397 = vpow.pop %v4396
    %v4398 = vmul.f32 %v4325, 1.442695
    %v4399 = vpow.pop %v4398
    %v4400 = vmul.f32 %v4326, 1.442695
    %v4401 = vpow.pop %v4400
    %v4402 = vmul.f32 %v4327, 1.442695
    %v4403 = vpow.pop %v4402
    %v4404 = vmul.f32 %v4328, 1.442695
    %v4405 = vpow.pop %v4404
    %v4406 = vmul.f32 %v4329, 1.442695
    %v4407 = vpow.pop %v4406
    %v4408 = vmul.f32 %v4330, 1.442695
    %v4409 = vpow.pop %v4408
    %v4410 = vmul.f32 %v4331, 1.442695
    %v4411 = vpow.pop %v4410
    %v4412 = vmul.f32 %v4332, 1.442695
    %v4413 = vpow.pop %v4412
    %v4414 = vmul.f32 %v4333, 1.442695
    %v4415 = vpow.pop %v4414
    %v4416 = vmul.f32 %v4334, 1.442695
    %v4417 = vpow.pop %v4416
    %v4418 = vmul.f32 %v4335, 1.442695
    %v4419 = vpow.pop %v4418
    %v4420 = vmul.f32 %v4336, 1.442695
    %v4421 = vpow.pop %v4420
    %v4422 = vmul.f32 %v4337, 1.442695
    %v4423 = vpow.pop %v4422
    %v4424 = vmul.f32 %v4338, 1.442695
    %v4425 = vpow.pop %v4424
    %v4426 = vmul.f32 %v4339, 1.442695
    %v4427 = vpow.pop %v4426
    %v4428 = vmul.f32 %v4340, 1.442695
    %v4429 = vpow.pop %v4428
    %v4430 = vmul.f32 %v4341, 1.442695
    %v4431 = vpow.pop %v4430
    %v4432 = vmul.f32 %v4342, 1.442695
    %v4433 = vpow.pop %v4432
    %v4434 = vmul.f32 %v4343, 1.442695
    %v4435 = vpow.pop %v4434
    %v4436 = vmul.f32 %v4344, 1.442695
    %v4437 = vpow.pop %v4436
    %v4438 = vmul.f32 %v4345, 1.442695
    %v4439 = vpow.pop %v4438
    %v4440 = vmul.f32 %v4346, 1.442695
    %v4441 = vpow.pop %v4440
    %v4442 = vmul.f32 %v4347, 1.442695
    %v4443 = vpow.pop %v4442
    %v4444 = vmul.f32 %v4348, 1.442695
    %v4445 = vpow.pop %v4444
    %v4446 = vmul.f32 %v4349, 1.442695
    %v4447 = vpow.pop %v4446
    %v4448 = vmul.f32 %v4350, 1.442695
    %v4449 = vpow.pop %v4448
    %v4450 = vmul.f32 %v4351, 1.442695
    %v4451 = vpow.pop %v4450
    %v4452 = vmul.f32 %v4352, 1.442695
    %v4453 = vpow.pop %v4452
    %v4454 = vmul.f32 %v4353, 1.442695
    %v4455 = vpow.pop %v4454
    %v4456 = vmul.f32 %v4354, 1.442695
    %v4457 = vpow.pop %v4456
    %v4458 = vmul.f32 %v4355, 1.442695
    %v4459 = vpow.pop %v4458
    %v4460 = vmul.f32 %v4356, 1.442695
    %v4461 = vpow.pop %v4460
    %v4462 = vmul.f32 %v4357, 1.442695
    %v4463 = vpow.pop %v4462
    %v4464 = vmul.f32 %v4358, 1.442695
    %v4465 = vpow.pop %v4464
    %v4466 = vmul.f32 %v4359, 1.442695
    %v4467 = vpow.pop %v4466
    %v4468 = vmul.f32 %v4360, 1.442695
    %v4469 = vpow.pop %v4468
    %v4470 = vmul.f32 %v4361, 1.442695
    %v4471 = vpow.pop %v4470
    %v4472 = vmul.f32 %v4362, 1.442695
    %v4473 = vpow.pop %v4472
    %v4474 = vmul.f32 %v4363, 1.442695
    %v4475 = vpow.pop %v4474
    %v4476 = vmul.f32 %v4364, 1.442695
    %v4477 = vpow.pop %v4476
    %v4478 = vmul.f32 %v4365, 1.442695
    %v4479 = vpow.pop %v4478
    %v4480 = vmul.f32 %v4366, 1.442695
    %v4481 = vpow.pop %v4480
    %v4482 = vmul.f32 %v4367, 1.442695
    %v4483 = vpow.pop %v4482
    %v4484 = vmul.f32 %v4368, 1.442695
    %v4485 = vpow.pop %v4484
    %v4486 = vmul.f32 %v4369, 1.442695
    %v4487 = vpow.pop %v4486
    %v4488 = vmul.f32 %v4370, 1.442695
    %v4489 = vpow.pop %v4488
    %v4490 = vmul.f32 %v4371, 1.442695
    %v4491 = vpow.pop %v4490
    %v4492 = vmul.f32 %v4372, 1.442695
    %v4493 = vpow.pop %v4492
    %v4494 = vmul.f32 %v4373, 1.442695
    %v4495 = vpow.pop %v4494
    %v4496 = vmul.f32 %v4374, 1.442695
    %v4497 = vpow.pop %v4496
    %v4498 = vmul.f32 %v4375, 1.442695
    %v4499 = vpow.pop %v4498
    %v4500 = vmul.f32 %v4376, 1.442695
    %v4501 = vpow.pop %v4500
    %v4502 = vmul.f32 %v4377, 1.442695
    %v4503 = vpow.pop %v4502
    %v4504 = vmul.f32 %v4378, 1.442695
    %v4505 = vpow.pop %v4504
    %v4506 = vmul.f32 %v4379, 1.442695
    %v4507 = vpow.pop %v4506
    %4508 = vadd.xlane.f32.xlu0 %v4381
    %v4509 = vpop.xlane.xlu0 %4508
    %4510 = vadd.xlane.f32.xlu0 %v4383
    %v4511 = vpop.xlane.xlu0 %4510
    %4512 = vadd.xlane.f32.xlu0 %v4385
    %v4513 = vpop.xlane.xlu0 %4512
    %4514 = vadd.xlane.f32.xlu0 %v4387
    %v4515 = vpop.xlane.xlu0 %4514
    %4516 = vadd.xlane.f32.xlu0 %v4389
    %v4517 = vpop.xlane.xlu0 %4516
    %4518 = vadd.xlane.f32.xlu0 %v4391
    %v4519 = vpop.xlane.xlu0 %4518
    %4520 = vadd.xlane.f32.xlu0 %v4393
    %v4521 = vpop.xlane.xlu0 %4520
    %4522 = vadd.xlane.f32.xlu0 %v4395
    %v4523 = vpop.xlane.xlu0 %4522
    %4524 = vadd.xlane.f32.xlu0 %v4397
    %v4525 = vpop.xlane.xlu0 %4524
    %4526 = vadd.xlane.f32.xlu0 %v4399
    %v4527 = vpop.xlane.xlu0 %4526
    %4528 = vadd.xlane.f32.xlu0 %v4401
    %v4529 = vpop.xlane.xlu0 %4528
    %4530 = vadd.xlane.f32.xlu0 %v4403
    %v4531 = vpop.xlane.xlu0 %4530
    %4532 = vadd.xlane.f32.xlu0 %v4405
    %v4533 = vpop.xlane.xlu0 %4532
    %4534 = vadd.xlane.f32.xlu0 %v4407
    %v4535 = vpop.xlane.xlu0 %4534
    %4536 = vadd.xlane.f32.xlu0 %v4409
    %v4537 = vpop.xlane.xlu0 %4536
    %4538 = vadd.xlane.f32.xlu0 %v4411
    %v4539 = vpop.xlane.xlu0 %4538
    %4540 = vadd.xlane.f32.xlu0 %v4413
    %v4541 = vpop.xlane.xlu0 %4540
    %4542 = vadd.xlane.f32.xlu0 %v4415
    %v4543 = vpop.xlane.xlu0 %4542
    %4544 = vadd.xlane.f32.xlu0 %v4417
    %v4545 = vpop.xlane.xlu0 %4544
    %4546 = vadd.xlane.f32.xlu0 %v4419
    %v4547 = vpop.xlane.xlu0 %4546
    %4548 = vadd.xlane.f32.xlu0 %v4421
    %v4549 = vpop.xlane.xlu0 %4548
    %4550 = vadd.xlane.f32.xlu0 %v4423
    %v4551 = vpop.xlane.xlu0 %4550
    %4552 = vadd.xlane.f32.xlu0 %v4425
    %v4553 = vpop.xlane.xlu0 %4552
    %4554 = vadd.xlane.f32.xlu0 %v4427
    %v4555 = vpop.xlane.xlu0 %4554
    %4556 = vadd.xlane.f32.xlu0 %v4429
    %v4557 = vpop.xlane.xlu0 %4556
    %4558 = vadd.xlane.f32.xlu0 %v4431
    %v4559 = vpop.xlane.xlu0 %4558
    %4560 = vadd.xlane.f32.xlu0 %v4433
    %v4561 = vpop.xlane.xlu0 %4560
    %4562 = vadd.xlane.f32.xlu0 %v4435
    %v4563 = vpop.xlane.xlu0 %4562
    %4564 = vadd.xlane.f32.xlu0 %v4437
    %v4565 = vpop.xlane.xlu0 %4564
    %4566 = vadd.xlane.f32.xlu0 %v4439
    %v4567 = vpop.xlane.xlu0 %4566
    %4568 = vadd.xlane.f32.xlu0 %v4441
    %v4569 = vpop.xlane.xlu0 %4568
    %4570 = vadd.xlane.f32.xlu0 %v4443
    %v4571 = vpop.xlane.xlu0 %4570
    %4572 = vadd.xlane.f32.xlu0 %v4445
    %v4573 = vpop.xlane.xlu0 %4572
    %4574 = vadd.xlane.f32.xlu0 %v4447
    %v4575 = vpop.xlane.xlu0 %4574
    %4576 = vadd.xlane.f32.xlu0 %v4449
    %v4577 = vpop.xlane.xlu0 %4576
    %4578 = vadd.xlane.f32.xlu0 %v4451
    %v4579 = vpop.xlane.xlu0 %4578
    %4580 = vadd.xlane.f32.xlu0 %v4453
    %v4581 = vpop.xlane.xlu0 %4580
    %4582 = vadd.xlane.f32.xlu0 %v4455
    %v4583 = vpop.xlane.xlu0 %4582
    %4584 = vadd.xlane.f32.xlu0 %v4457
    %v4585 = vpop.xlane.xlu0 %4584
    %4586 = vadd.xlane.f32.xlu0 %v4459
    %v4587 = vpop.xlane.xlu0 %4586
    %4588 = vadd.xlane.f32.xlu0 %v4461
    %v4589 = vpop.xlane.xlu0 %4588
    %4590 = vadd.xlane.f32.xlu0 %v4463
    %v4591 = vpop.xlane.xlu0 %4590
    %4592 = vadd.xlane.f32.xlu0 %v4465
    %v4593 = vpop.xlane.xlu0 %4592
    %4594 = vadd.xlane.f32.xlu0 %v4467
    %v4595 = vpop.xlane.xlu0 %4594
    %4596 = vadd.xlane.f32.xlu0 %v4469
    %v4597 = vpop.xlane.xlu0 %4596
    %4598 = vadd.xlane.f32.xlu0 %v4471
    %v4599 = vpop.xlane.xlu0 %4598
    %4600 = vadd.xlane.f32.xlu0 %v4473
    %v4601 = vpop.xlane.xlu0 %4600
    %4602 = vadd.xlane.f32.xlu0 %v4475
    %v4603 = vpop.xlane.xlu0 %4602
    %4604 = vadd.xlane.f32.xlu0 %v4477
    %v4605 = vpop.xlane.xlu0 %4604
    %4606 = vadd.xlane.f32.xlu0 %v4479
    %v4607 = vpop.xlane.xlu0 %4606
    %4608 = vadd.xlane.f32.xlu0 %v4481
    %v4609 = vpop.xlane.xlu0 %4608
    %4610 = vadd.xlane.f32.xlu0 %v4483
    %v4611 = vpop.xlane.xlu0 %4610
    %4612 = vadd.xlane.f32.xlu0 %v4485
    %v4613 = vpop.xlane.xlu0 %4612
    %4614 = vadd.xlane.f32.xlu0 %v4487
    %v4615 = vpop.xlane.xlu0 %4614
    %4616 = vadd.xlane.f32.xlu0 %v4489
    %v4617 = vpop.xlane.xlu0 %4616
    %4618 = vadd.xlane.f32.xlu0 %v4491
    %v4619 = vpop.xlane.xlu0 %4618
    %4620 = vadd.xlane.f32.xlu0 %v4493
    %v4621 = vpop.xlane.xlu0 %4620
    %4622 = vadd.xlane.f32.xlu0 %v4495
    %v4623 = vpop.xlane.xlu0 %4622
    %4624 = vadd.xlane.f32.xlu0 %v4497
    %v4625 = vpop.xlane.xlu0 %4624
    %4626 = vadd.xlane.f32.xlu0 %v4499
    %v4627 = vpop.xlane.xlu0 %4626
    %4628 = vadd.xlane.f32.xlu0 %v4501
    %v4629 = vpop.xlane.xlu0 %4628
    %4630 = vadd.xlane.f32.xlu0 %v4503
    %v4631 = vpop.xlane.xlu0 %4630
    %4632 = vadd.xlane.f32.xlu0 %v4505
    %v4633 = vpop.xlane.xlu0 %4632
    %4634 = vadd.xlane.f32.xlu0 %v4507
    %v4635 = vpop.xlane.xlu0 %4634
    %v4636 = vlog2.pop %v4509
    %v4637 = vmul.f32 %v4636, 0.6931472
    %v4638 = vlog2.pop %v4511
    %v4639 = vmul.f32 %v4638, 0.6931472
    %v4640 = vlog2.pop %v4513
    %v4641 = vmul.f32 %v4640, 0.6931472
    %v4642 = vlog2.pop %v4515
    %v4643 = vmul.f32 %v4642, 0.6931472
    %v4644 = vlog2.pop %v4517
    %v4645 = vmul.f32 %v4644, 0.6931472
    %v4646 = vlog2.pop %v4519
    %v4647 = vmul.f32 %v4646, 0.6931472
    %v4648 = vlog2.pop %v4521
    %v4649 = vmul.f32 %v4648, 0.6931472
    %v4650 = vlog2.pop %v4523
    %v4651 = vmul.f32 %v4650, 0.6931472
    %v4652 = vlog2.pop %v4525
    %v4653 = vmul.f32 %v4652, 0.6931472
    %v4654 = vlog2.pop %v4527
    %v4655 = vmul.f32 %v4654, 0.6931472
    %v4656 = vlog2.pop %v4529
    %v4657 = vmul.f32 %v4656, 0.6931472
    %v4658 = vlog2.pop %v4531
    %v4659 = vmul.f32 %v4658, 0.6931472
    %v4660 = vlog2.pop %v4533
    %v4661 = vmul.f32 %v4660, 0.6931472
    %v4662 = vlog2.pop %v4535
    %v4663 = vmul.f32 %v4662, 0.6931472
    %v4664 = vlog2.pop %v4537
    %v4665 = vmul.f32 %v4664, 0.6931472
    %v4666 = vlog2.pop %v4539
    %v4667 = vmul.f32 %v4666, 0.6931472
    %v4668 = vlog2.pop %v4541
    %v4669 = vmul.f32 %v4668, 0.6931472
    %v4670 = vlog2.pop %v4543
    %v4671 = vmul.f32 %v4670, 0.6931472
    %v4672 = vlog2.pop %v4545
    %v4673 = vmul.f32 %v4672, 0.6931472
    %v4674 = vlog2.pop %v4547
    %v4675 = vmul.f32 %v4674, 0.6931472
    %v4676 = vlog2.pop %v4549
    %v4677 = vmul.f32 %v4676, 0.6931472
    %v4678 = vlog2.pop %v4551
    %v4679 = vmul.f32 %v4678, 0.6931472
    %v4680 = vlog2.pop %v4553
    %v4681 = vmul.f32 %v4680, 0.6931472
    %v4682 = vlog2.pop %v4555
    %v4683 = vmul.f32 %v4682, 0.6931472
    %v4684 = vlog2.pop %v4557
    %v4685 = vmul.f32 %v4684, 0.6931472
    %v4686 = vlog2.pop %v4559
    %v4687 = vmul.f32 %v4686, 0.6931472
    %v4688 = vlog2.pop %v4561
    %v4689 = vmul.f32 %v4688, 0.6931472
    %v4690 = vlog2.pop %v4563
    %v4691 = vmul.f32 %v4690, 0.6931472
    %v4692 = vlog2.pop %v4565
    %v4693 = vmul.f32 %v4692, 0.6931472
    %v4694 = vlog2.pop %v4567
    %v4695 = vmul.f32 %v4694, 0.6931472
    %v4696 = vlog2.pop %v4569
    %v4697 = vmul.f32 %v4696, 0.6931472
    %v4698 = vlog2.pop %v4571
    %v4699 = vmul.f32 %v4698, 0.6931472
    %v4700 = vlog2.pop %v4573
    %v4701 = vmul.f32 %v4700, 0.6931472
    %v4702 = vlog2.pop %v4575
    %v4703 = vmul.f32 %v4702, 0.6931472
    %v4704 = vlog2.pop %v4577
    %v4705 = vmul.f32 %v4704, 0.6931472
    %v4706 = vlog2.pop %v4579
    %v4707 = vmul.f32 %v4706, 0.6931472
    %v4708 = vlog2.pop %v4581
    %v4709 = vmul.f32 %v4708, 0.6931472
    %v4710 = vlog2.pop %v4583
    %v4711 = vmul.f32 %v4710, 0.6931472
    %v4712 = vlog2.pop %v4585
    %v4713 = vmul.f32 %v4712, 0.6931472
    %v4714 = vlog2.pop %v4587
    %v4715 = vmul.f32 %v4714, 0.6931472
    %v4716 = vlog2.pop %v4589
    %v4717 = vmul.f32 %v4716, 0.6931472
    %v4718 = vlog2.pop %v4591
    %v4719 = vmul.f32 %v4718, 0.6931472
    %v4720 = vlog2.pop %v4593
    %v4721 = vmul.f32 %v4720, 0.6931472
    %v4722 = vlog2.pop %v4595
    %v4723 = vmul.f32 %v4722, 0.6931472
    %v4724 = vlog2.pop %v4597
    %v4725 = vmul.f32 %v4724, 0.6931472
    %v4726 = vlog2.pop %v4599
    %v4727 = vmul.f32 %v4726, 0.6931472
    %v4728 = vlog2.pop %v4601
    %v4729 = vmul.f32 %v4728, 0.6931472
    %v4730 = vlog2.pop %v4603
    %v4731 = vmul.f32 %v4730, 0.6931472
    %v4732 = vlog2.pop %v4605
    %v4733 = vmul.f32 %v4732, 0.6931472
    %v4734 = vlog2.pop %v4607
    %v4735 = vmul.f32 %v4734, 0.6931472
    %v4736 = vlog2.pop %v4609
    %v4737 = vmul.f32 %v4736, 0.6931472
    %v4738 = vlog2.pop %v4611
    %v4739 = vmul.f32 %v4738, 0.6931472
    %v4740 = vlog2.pop %v4613
    %v4741 = vmul.f32 %v4740, 0.6931472
    %v4742 = vlog2.pop %v4615
    %v4743 = vmul.f32 %v4742, 0.6931472
    %v4744 = vlog2.pop %v4617
    %v4745 = vmul.f32 %v4744, 0.6931472
    %v4746 = vlog2.pop %v4619
    %v4747 = vmul.f32 %v4746, 0.6931472
    %v4748 = vlog2.pop %v4621
    %v4749 = vmul.f32 %v4748, 0.6931472
    %v4750 = vlog2.pop %v4623
    %v4751 = vmul.f32 %v4750, 0.6931472
    %v4752 = vlog2.pop %v4625
    %v4753 = vmul.f32 %v4752, 0.6931472
    %v4754 = vlog2.pop %v4627
    %v4755 = vmul.f32 %v4754, 0.6931472
    %v4756 = vlog2.pop %v4629
    %v4757 = vmul.f32 %v4756, 0.6931472
    %v4758 = vlog2.pop %v4631
    %v4759 = vmul.f32 %v4758, 0.6931472
    %v4760 = vlog2.pop %v4633
    %v4761 = vmul.f32 %v4760, 0.6931472
    %v4762 = vlog2.pop %v4635
    %v4763 = vmul.f32 %v4762, 0.6931472
    %v4764 = vsub.f32 %v4316, %v4637
    %v4765 = vsub.f32 %v4317, %v4639
    %v4766 = vsub.f32 %v4318, %v4641
    %v4767 = vsub.f32 %v4319, %v4643
    %v4768 = vsub.f32 %v4320, %v4645
    %v4769 = vsub.f32 %v4321, %v4647
    %v4770 = vsub.f32 %v4322, %v4649
    %v4771 = vsub.f32 %v4323, %v4651
    %v4772 = vsub.f32 %v4324, %v4653
    %v4773 = vsub.f32 %v4325, %v4655
    %v4774 = vsub.f32 %v4326, %v4657
    %v4775 = vsub.f32 %v4327, %v4659
    %v4776 = vsub.f32 %v4328, %v4661
    %v4777 = vsub.f32 %v4329, %v4663
    %v4778 = vsub.f32 %v4330, %v4665
    %v4779 = vsub.f32 %v4331, %v4667
    %v4780 = vsub.f32 %v4332, %v4669
    %v4781 = vsub.f32 %v4333, %v4671
    %v4782 = vsub.f32 %v4334, %v4673
    %v4783 = vsub.f32 %v4335, %v4675
    %v4784 = vsub.f32 %v4336, %v4677
    %v4785 = vsub.f32 %v4337, %v4679
    %v4786 = vsub.f32 %v4338, %v4681
    %v4787 = vsub.f32 %v4339, %v4683
    %v4788 = vsub.f32 %v4340, %v4685
    %v4789 = vsub.f32 %v4341, %v4687
    %v4790 = vsub.f32 %v4342, %v4689
    %v4791 = vsub.f32 %v4343, %v4691
    %v4792 = vsub.f32 %v4344, %v4693
    %v4793 = vsub.f32 %v4345, %v4695
    %v4794 = vsub.f32 %v4346, %v4697
    %v4795 = vsub.f32 %v4347, %v4699
    %v4796 = vsub.f32 %v4348, %v4701
    %v4797 = vsub.f32 %v4349, %v4703
    %v4798 = vsub.f32 %v4350, %v4705
    %v4799 = vsub.f32 %v4351, %v4707
    %v4800 = vsub.f32 %v4352, %v4709
    %v4801 = vsub.f32 %v4353, %v4711
    %v4802 = vsub.f32 %v4354, %v4713
    %v4803 = vsub.f32 %v4355, %v4715
    %v4804 = vsub.f32 %v4356, %v4717
    %v4805 = vsub.f32 %v4357, %v4719
    %v4806 = vsub.f32 %v4358, %v4721
    %v4807 = vsub.f32 %v4359, %v4723
    %v4808 = vsub.f32 %v4360, %v4725
    %v4809 = vsub.f32 %v4361, %v4727
    %v4810 = vsub.f32 %v4362, %v4729
    %v4811 = vsub.f32 %v4363, %v4731
    %v4812 = vsub.f32 %v4364, %v4733
    %v4813 = vsub.f32 %v4365, %v4735
    %v4814 = vsub.f32 %v4366, %v4737
    %v4815 = vsub.f32 %v4367, %v4739
    %v4816 = vsub.f32 %v4368, %v4741
    %v4817 = vsub.f32 %v4369, %v4743
    %v4818 = vsub.f32 %v4370, %v4745
    %v4819 = vsub.f32 %v4371, %v4747
    %v4820 = vsub.f32 %v4372, %v4749
    %v4821 = vsub.f32 %v4373, %v4751
    %v4822 = vsub.f32 %v4374, %v4753
    %v4823 = vsub.f32 %v4375, %v4755
    %v4824 = vsub.f32 %v4376, %v4757
    %v4825 = vsub.f32 %v4377, %v4759
    %v4826 = vsub.f32 %v4378, %v4761
    %v4827 = vsub.f32 %v4379, %v4763
    %4828 = vst [vmem:[#allocation2] sm:$0xff] %v4764
    %4829 = vst [vmem:[#allocation2 + $0x8] sm:$0xff] %v4765
    %4830 = vst [vmem:[#allocation2 + $0x10] sm:$0xff] %v4766
    %4831 = vst [vmem:[#allocation2 + $0x18] sm:$0xff] %v4767
    %4832 = vst [vmem:[#allocation2 + $0x20] sm:$0xff] %v4768
    %4833 = vst [vmem:[#allocation2 + $0x28] sm:$0xff] %v4769
    %4834 = vst [vmem:[#allocation2 + $0x30] sm:$0xff] %v4770
    %4835 = vst [vmem:[#allocation2 + $0x38] sm:$0xff] %v4771
    %4836 = vst [vmem:[#allocation2 + $0x40] sm:$0xff] %v4772
    %4837 = vst [vmem:[#allocation2 + $0x48] sm:$0xff] %v4773
    %4838 = vst [vmem:[#allocation2 + $0x50] sm:$0xff] %v4774
    %4839 = vst [vmem:[#allocation2 + $0x58] sm:$0xff] %v4775
    %4840 = vst [vmem:[#allocation2 + $0x60] sm:$0xff] %v4776
    %4841 = vst [vmem:[#allocation2 + $0x68] sm:$0xff] %v4777
    %4842 = vst [vmem:[#allocation2 + $0x70] sm:$0xff] %v4778
    %4843 = vst [vmem:[#allocation2 + $0x78] sm:$0xff] %v4779
    %4844 = vst [vmem:[#allocation2 + $0x80] sm:$0xff] %v4780
    %4845 = vst [vmem:[#allocation2 + $0x88] sm:$0xff] %v4781
    %4846 = vst [vmem:[#allocation2 + $0x90] sm:$0xff] %v4782
    %4847 = vst [vmem:[#allocation2 + $0x98] sm:$0xff] %v4783
    %4848 = vst [vmem:[#allocation2 + $0xa0] sm:$0xff] %v4784
    %4849 = vst [vmem:[#allocation2 + $0xa8] sm:$0xff] %v4785
    %4850 = vst [vmem:[#allocation2 + $0xb0] sm:$0xff] %v4786
    %4851 = vst [vmem:[#allocation2 + $0xb8] sm:$0xff] %v4787
    %4852 = vst [vmem:[#allocation2 + $0xc0] sm:$0xff] %v4788
    %4853 = vst [vmem:[#allocation2 + $0xc8] sm:$0xff] %v4789
    %4854 = vst [vmem:[#allocation2 + $0xd0] sm:$0xff] %v4790
    %4855 = vst [vmem:[#allocation2 + $0xd8] sm:$0xff] %v4791
    %4856 = vst [vmem:[#allocation2 + $0xe0] sm:$0xff] %v4792
    %4857 = vst [vmem:[#allocation2 + $0xe8] sm:$0xff] %v4793
    %4858 = vst [vmem:[#allocation2 + $0xf0] sm:$0xff] %v4794
    %4859 = vst [vmem:[#allocation2 + $0xf8] sm:$0xff] %v4795
    %4860 = vst [vmem:[#allocation2 + $0x100] sm:$0xff] %v4796
    %4861 = vst [vmem:[#allocation2 + $0x108] sm:$0xff] %v4797
    %4862 = vst [vmem:[#allocation2 + $0x110] sm:$0xff] %v4798
    %4863 = vst [vmem:[#allocation2 + $0x118] sm:$0xff] %v4799
    %4864 = vst [vmem:[#allocation2 + $0x120] sm:$0xff] %v4800
    %4865 = vst [vmem:[#allocation2 + $0x128] sm:$0xff] %v4801
    %4866 = vst [vmem:[#allocation2 + $0x130] sm:$0xff] %v4802
    %4867 = vst [vmem:[#allocation2 + $0x138] sm:$0xff] %v4803
    %4868 = vst [vmem:[#allocation2 + $0x140] sm:$0xff] %v4804
    %4869 = vst [vmem:[#allocation2 + $0x148] sm:$0xff] %v4805
    %4870 = vst [vmem:[#allocation2 + $0x150] sm:$0xff] %v4806
    %4871 = vst [vmem:[#allocation2 + $0x158] sm:$0xff] %v4807
    %4872 = vst [vmem:[#allocation2 + $0x160] sm:$0xff] %v4808
    %4873 = vst [vmem:[#allocation2 + $0x168] sm:$0xff] %v4809
    %4874 = vst [vmem:[#allocation2 + $0x170] sm:$0xff] %v4810
    %4875 = vst [vmem:[#allocation2 + $0x178] sm:$0xff] %v4811
    %4876 = vst [vmem:[#allocation2 + $0x180] sm:$0xff] %v4812
    %4877 = vst [vmem:[#allocation2 + $0x188] sm:$0xff] %v4813
    %4878 = vst [vmem:[#allocation2 + $0x190] sm:$0xff] %v4814
    %4879 = vst [vmem:[#allocation2 + $0x198] sm:$0xff] %v4815
    %4880 = vst [vmem:[#allocation2 + $0x1a0] sm:$0xff] %v4816
    %4881 = vst [vmem:[#allocation2 + $0x1a8] sm:$0xff] %v4817
    %4882 = vst [vmem:[#allocation2 + $0x1b0] sm:$0xff] %v4818
    %4883 = vst [vmem:[#allocation2 + $0x1b8] sm:$0xff] %v4819
    %4884 = vst [vmem:[#allocation2 + $0x1c0] sm:$0xff] %v4820
    %4885 = vst [vmem:[#allocation2 + $0x1c8] sm:$0xff] %v4821
    %4886 = vst [vmem:[#allocation2 + $0x1d0] sm:$0xff] %v4822
    %4887 = vst [vmem:[#allocation2 + $0x1d8] sm:$0xff] %v4823
    %4888 = vst [vmem:[#allocation2 + $0x1e0] sm:$0xff] %v4824
    %4889 = vst [vmem:[#allocation2 + $0x1e8] sm:$0xff] %v4825
    %4890 = vst [vmem:[#allocation2 + $0x1f0] sm:$0xff] %v4826
    %4891 = vst [vmem:[#allocation2 + $0x1f8] sm:$0xff] %v4827
    // Predicated region
    $region46: #{tpu_custom_call.1} parent=1 // pred_check
      _
    $region47: #{tpu_custom_call.1} parent=1 // pred_check_branch
      %4893 = sbr.rel (0) target = $region49
    $region48: #{tpu_custom_call.1} parent=1 // pred_region
      %s4895 = ssub.s32 8192, 8192
      %4896 = vsyncadd [#allocation3], %s4895
      %s4897 = sshll.u32 [#allocation2], 4
      %s4898 = int_to_ptr.vmem [resolvable:$true] %s4897
      %4903 = dma.vmem_to_hbm [thread:$0]  %s4898, 8192, %s11, [#allocation3], 128, 128, 8
    $region49: #{tpu_custom_call.1} parent=1 // pred_fallthru
      _
    // Predicated region
    $region50: #{tpu_custom_call.1} parent=1 // pred_check
      _
    $region51: #{tpu_custom_call.1} parent=1 // pred_check_branch
      %4905 = sbr.rel (0) target = $region53
    $region52: #{tpu_custom_call.1} parent=1 // pred_region
      %4906 = dma.done [#allocation3], 8192
    $region53: #{tpu_custom_call.1} parent=1 // pred_fallthru
      _
    %4907 = vsyncpa [#allocation3], 1

</llo_original>
